<compile_context>
chip_gen: v7x
topology: tpu7x:2x2x1
jax: 0.10.0
libtpu: 0.0.40
codegen_flags: <defaults>
</compile_context>

<pallas_src>
import numpy as np
import jax
import jax.numpy as jnp
from jax.experimental import pallas as pl
from jax.experimental.pallas import tpu as pltpu

BN_EPS = 1e-5


# ----------------------------------------------------------------------------
# Pallas kernels
# ----------------------------------------------------------------------------
def trunk_kernel(board_ref, w_ref, scale_ref, shift_ref, hout_ref, h_scr, d_scr):
    """One conv of the residual trunk per grid step.

    step 0 (even)      : h = relu(conv(board) * scale + shift + 0)   (stem)
    step 2k+1 (odd)    : d = relu(conv(h) * scale + shift)           (conv1)
    step 2k+2 (even)   : h = relu(conv(d) * scale + shift + h)       (conv2)

    Activations live in zero-halo-padded (N,10,10,C) VMEM scratch buffers; the
    halo is written once at step 0 and only the 8x8 interior is ever rewritten.
    """
    s = pl.program_id(0)
    last = pl.num_programs(0) - 1
    N, _, _, C = board_ref.shape

    @pl.when(s == 0)
    def _init():
        h_scr[...] = jnp.zeros_like(h_scr)      # zero residual for the stem
        d_scr[...] = jnp.zeros_like(d_scr)
        d_scr[:, 1:9, 1:9, :] = board_ref[...]  # stem input (channel padded)

    w = w_ref[0]            # (9*C, C) bf16   -- this step's conv weights
    scale = scale_ref[0]    # (1, C)  f32     -- folded BN scale
    shift = shift_ref[0]    # (1, C)  f32     -- folded BN shift (+ conv bias)

    def conv(src_ref):
        # Build the im2col patch matrix once and do ONE K=9*C MXU matmul.
        taps = []
        for dy in range(3):
            for dx in range(3):
                taps.append(src_ref[:, dy:dy + 8, dx:dx + 8, :]
                            .reshape(N * 64, C).astype(jnp.bfloat16))
        patches = jnp.concatenate(taps, axis=1)               # (N*64, 9*C) bf16
        acc = jnp.dot(patches, w, preferred_element_type=jnp.float32)
        return acc * scale + shift                            # f32 epilogue

    is_conv2 = (s % 2) == 0   # stem behaves like conv2 with a zero residual

    @pl.when(is_conv2)
    def _():  # read d, add residual h, write h
        res = h_scr[:, 1:9, 1:9, :].reshape(N * 64, C)
        y = jnp.maximum(conv(d_scr) + res, 0.0)
        h_scr[:, 1:9, 1:9, :] = y.reshape(N, 8, 8, C)

    @pl.when(jnp.logical_not(is_conv2))
    def _():  # read h, write d
        y = jnp.maximum(conv(h_scr), 0.0)
        d_scr[:, 1:9, 1:9, :] = y.reshape(N, 8, 8, C)

    @pl.when(s == last)
    def _():
        hout_ref[...] = h_scr[:, 1:9, 1:9, :].reshape(N * 64, C)


def heads_kernel(h2_ref, whead_ref, hs_ref, ht_ref, poss_ref,
                 wfc_ref, bfc_ref, wv1_ref, bv1_ref, wv2_ref, bv2_ref,
                 p_ref, v_ref):
    """Fused policy + value heads.

    h2:    (N, 64*C)       trunk output, row-flattened per sample
    whead: (64*C, 192)     block-diagonal 1x1-conv weight producing channel-
                           major head activations [pol0(64) | pol1(64) | val(64)]
    wfc:   (192, 128)      policy FC (zero rows for the value channel, zero
                           columns for lane padding 64->128)
    wv1:   (192, hidden)   value fc1 (zero rows for the policy channels)
    """
    a = jnp.dot(h2_ref[...], whead_ref[...], preferred_element_type=jnp.float32)
    a = jnp.maximum(a * hs_ref[...] + ht_ref[...], 0.0)            # (N, 192)

    logits = jnp.dot(a, wfc_ref[...],
                     preferred_element_type=jnp.float32) + bfc_ref[...]
    e = jnp.exp(logits) * poss_ref[...]                            # (N, 128)
    p_ref[...] = e / jnp.sum(e)        # batch-global sum, mirrors torch x.sum()

    z = jnp.maximum(jnp.dot(a, wv1_ref[...],
                            preferred_element_type=jnp.float32) + bv1_ref[...],
                    0.0)
    v = jnp.dot(z, wv2_ref[...], preferred_element_type=jnp.float32) + bv2_ref[...]
    v_ref[...] = jnp.tanh(v)


# ----------------------------------------------------------------------------
# pallas_call wrappers
# ----------------------------------------------------------------------------
_VMEM_LIMIT = 48 * 1024 * 1024   # > v5e 16MiB scoped default, < v7x 64MiB phys


def _full_spec(shape):
    return pl.BlockSpec(shape, lambda i: (0,) * len(shape))


def run_trunk(board, wstack, scstack, shstack):
    N, _, _, Cp = board.shape
    S = wstack.shape[0]
    return pl.pallas_call(
        trunk_kernel,
        out_shape=jax.ShapeDtypeStruct((N * 64, Cp), jnp.float32),
        grid=(S,),
        in_specs=[
            pl.BlockSpec((N, 8, 8, Cp), lambda s: (0, 0, 0, 0)),      # resident
            pl.BlockSpec((1, 9 * Cp, Cp), lambda s: (s, 0, 0)),       # streamed
            pl.BlockSpec((1, 1, Cp), lambda s: (s, 0, 0)),            # streamed
            pl.BlockSpec((1, 1, Cp), lambda s: (s, 0, 0)),            # streamed
        ],
        out_specs=pl.BlockSpec((N * 64, Cp), lambda s: (0, 0)),       # resident
        scratch_shapes=[pltpu.VMEM((N, 10, 10, Cp), jnp.float32),
                        pltpu.VMEM((N, 10, 10, Cp), jnp.float32)],
        compiler_params=pltpu.CompilerParams(
            dimension_semantics=("arbitrary",),
            vmem_limit_bytes=_VMEM_LIMIT),
    )(board, wstack, scstack, shstack)


def run_heads(h2, whead, hs, ht, poss, wfc, bfc, wv1, bv1, wv2, bv2):
    N = h2.shape[0]
    args = (h2, whead, hs, ht, poss, wfc, bfc, wv1, bv1, wv2, bv2)
    return pl.pallas_call(
        heads_kernel,
        out_shape=(jax.ShapeDtypeStruct((N, 128), jnp.float32),
                   jax.ShapeDtypeStruct((N, 1), jnp.float32)),
        grid=(1,),
        in_specs=[_full_spec(a.shape) for a in args],
        out_specs=(_full_spec((N, 128)), _full_spec((N, 1))),
        compiler_params=pltpu.CompilerParams(
            dimension_semantics=("arbitrary",),
            vmem_limit_bytes=_VMEM_LIMIT),
    )(*args)


# ----------------------------------------------------------------------------
# Parameters (PyTorch-convention shapes), deterministic init
# ----------------------------------------------------------------------------
def init_params(key, channels=32, in_channels=2, res_layers=2, hidden=32):
    keys = iter(jax.random.split(key, 512))

    def nrm(shape, s=0.05):
        return s * jax.random.normal(next(keys), shape, jnp.float32)

    def bn(c):
        return dict(g=1.0 + 0.1 * jax.random.normal(next(keys), (c,), jnp.float32),
                    b=0.1 * jax.random.normal(next(keys), (c,), jnp.float32),
                    m=0.1 * jax.random.normal(next(keys), (c,), jnp.float32),
                    v=0.5 + jax.random.uniform(next(keys), (c,), jnp.float32))

    return dict(
        channels=channels, res_layers=res_layers, hidden=hidden,
        stem_w=nrm((channels, in_channels, 3, 3)), stem_b=nrm((channels,)),
        blocks=[dict(c1_w=nrm((channels, channels, 3, 3)), c1_b=nrm((channels,)),
                     bn1=bn(channels),
                     c2_w=nrm((channels, channels, 3, 3)), c2_b=nrm((channels,)),
                     bn2=bn(channels))
                for _ in range(res_layers)],
        pol_conv_w=nrm((2, channels, 1, 1)), pol_conv_b=nrm((2,)), pol_bn=bn(2),
        pol_fc_w=nrm((64, 128)), pol_fc_b=nrm((64,)),
        val_conv_w=nrm((1, channels, 1, 1)), val_conv_b=nrm((1,)), val_bn=bn(1),
        val_fc1_w=nrm((hidden, 64)), val_fc1_b=nrm((hidden,)),
        val_fc2_w=nrm((1, hidden)), val_fc2_b=nrm((1,)),
    )


def fold_bn(bnp, conv_b):
    scale = bnp['g'] / jnp.sqrt(bnp['v'] + BN_EPS)
    shift = (conv_b - bnp['m']) * scale + bnp['b']
    return scale, shift


def _round_up(x, m):
    return ((x + m - 1) // m) * m


# ----------------------------------------------------------------------------
# Full forward pass (one trunk call + one heads call; glue is layout only)
# ----------------------------------------------------------------------------
def othello_zero_forward(x_nchw, P):
    N = x_nchw.shape[0]
    C = P['channels']
    H = P['hidden']
    Cp = _round_up(max(C, 2), 128)        # lane-dense channel padding

    board = jnp.transpose(x_nchw[:, :2], (0, 2, 3, 1))                 # (N,8,8,2)
    board = jnp.pad(board, ((0, 0), (0, 0), (0, 0), (0, Cp - 2)))      # (N,8,8,Cp)
    possible = x_nchw[:, 2].reshape(N, 64)

    # --- stack trunk weights / folded BN per conv step --------------------
    def conv_w(w_oihw):                   # OIHW -> zero-padded (9*Cp, Cp)
        w = jnp.transpose(w_oihw, (2, 3, 1, 0))                        # HWIO
        ci, co = w.shape[2], w.shape[3]
        w = jnp.pad(w, ((0, 0), (0, 0), (0, Cp - ci), (0, Cp - co)))
        return w.reshape(9 * Cp, Cp)

    def pad_c(v, fill=0.0):
        return jnp.pad(v, (0, Cp - v.shape[0]), constant_values=fill)

    w_l = [conv_w(P['stem_w'])]
    sc_l = [pad_c(jnp.ones((C,), jnp.float32), 1.0)]
    sh_l = [pad_c(P['stem_b'])]
    for blk in P['blocks']:
        s1, t1 = fold_bn(blk['bn1'], blk['c1_b'])
        s2, t2 = fold_bn(blk['bn2'], blk['c2_b'])
        w_l += [conv_w(blk['c1_w']), conv_w(blk['c2_w'])]
        sc_l += [pad_c(s1, 1.0), pad_c(s2, 1.0)]
        sh_l += [pad_c(t1), pad_c(t2)]

    wstack = jnp.stack(w_l).astype(jnp.bfloat16)                       # (S,9Cp,Cp)
    scstack = jnp.stack(sc_l)[:, None, :]                              # (S,1,Cp)
    shstack = jnp.stack(sh_l)[:, None, :]                              # (S,1,Cp)

    h_flat = run_trunk(board, wstack, scstack, shstack)                # (N*64,Cp)
    h2 = h_flat.reshape(N, 64 * Cp)                                    # free reshape

    # --- heads: channel-major block-diagonal 1x1 conv weight --------------
    w_all = jnp.concatenate([P['pol_conv_w'][:, :, 0, 0],
                             P['val_conv_w'][:, :, 0, 0]], axis=0)     # (3, C)
    w_all = jnp.pad(w_all, ((0, 0), (0, Cp - C)))                      # (3, Cp)
    whead = jnp.einsum('kK,ci->kicK', jnp.eye(64, dtype=jnp.float32),
                       w_all).reshape(64 * Cp, 192)                    # (64Cp,192)

    sp, tp = fold_bn(P['pol_bn'], P['pol_conv_b'])
    sv, tv = fold_bn(P['val_bn'], P['val_conv_b'])
    hs = jnp.repeat(jnp.concatenate([sp, sv]), 64)[None, :]            # (1,192)
    ht = jnp.repeat(jnp.concatenate([tp, tv]), 64)[None, :]            # (1,192)

    wfc = jnp.zeros((192, 128), jnp.float32).at[:128, :64].set(P['pol_fc_w'].T)
    bfc = jnp.zeros((1, 128), jnp.float32).at[0, :64].set(P['pol_fc_b'])
    poss_pad = jnp.pad(possible, ((0, 0), (0, 64)))                    # (N,128)

    wv1 = jnp.zeros((192, H), jnp.float32).at[128:, :].set(P['val_fc1_w'].T)
    bv1 = P['val_fc1_b'][None, :]
    wv2 = P['val_fc2_w'].T
    bv2 = P['val_fc2_b'][None, :]

    p_pad, v = run_heads(h2, whead, hs, ht, poss_pad, wfc, bfc,
                         wv1, bv1, wv2, bv2)
    p = p_pad[:, :64].reshape(N, 8, 8)
    return p, v


# ----------------------------------------------------------------------------
# Pure-JAX reference (mirrors the PyTorch graph, NCHW, f32) for validation
# ----------------------------------------------------------------------------
def torch_reference(x_nchw, P):
    def conv(h, w, b, pad):
        out = jax.lax.conv_general_dilated(
            h, w, window_strides=(1, 1), padding=[(pad, pad), (pad, pad)],
            dimension_numbers=('NCHW', 'OIHW', 'NCHW'))
        return out + b[None, :, None, None]

    def bn(h, p):
        return ((h - p['m'][None, :, None, None])
                / jnp.sqrt(p['v'][None, :, None, None] + BN_EPS)
                * p['g'][None, :, None, None] + p['b'][None, :, None, None])

    board, possible = x_nchw[:, :2], x_nchw[:, 2]
    h = jax.nn.relu(conv(board, P['stem_w'], P['stem_b'], 1))
    for blk in P['blocks']:
        d = jax.nn.relu(bn(conv(h, blk['c1_w'], blk['c1_b'], 1), blk['bn1']))
        d = bn(conv(d, blk['c2_w'], blk['c2_b'], 1), blk['bn2'])
        h = jax.nn.relu(h + d)
    pz = jax.nn.relu(bn(conv(h, P['pol_conv_w'], P['pol_conv_b'], 0), P['pol_bn']))
    logits = pz.reshape(-1, 128) @ P['pol_fc_w'].T + P['pol_fc_b']
    e = jnp.exp(logits).reshape(-1, 8, 8) * possible
    p = e / e.sum()
    vz = jax.nn.relu(bn(conv(h, P['val_conv_w'], P['val_conv_b'], 0), P['val_bn']))
    z = jax.nn.relu(vz.reshape(-1, 64) @ P['val_fc1_w'].T + P['val_fc1_b'])
    v = jnp.tanh(z @ P['val_fc2_w'].T + P['val_fc2_b'])
    return p, v


# ----------------------------------------------------------------------------
if __name__ == "__main__":
    key = jax.random.PRNGKey(0)
    k_par, k_board, k_poss = jax.random.split(key, 3)

    # small demo shapes (module defaults are res_layers=40, channels=500)
    N, channels, res_layers, hidden = 2, 32, 2, 32
    P = init_params(k_par, channels=channels, in_channels=2,
                    res_layers=res_layers, hidden=hidden)

    board = jax.random.normal(k_board, (N, 2, 8, 8), jnp.float32)
    possible = (jax.random.uniform(k_poss, (N, 1, 8, 8)) < 0.4).astype(jnp.float32)
    possible = possible.at[:, 0, 0, 0].set(1.0)   # ensure mask is not all-zero
    x = jnp.concatenate([board, possible], axis=1)  # (N, 3, 8, 8) PyTorch layout

    p, v = jax.jit(lambda xx: othello_zero_forward(xx, P))(x)
    p, v = jax.block_until_ready((p, v))

    p_ref, v_ref = torch_reference(x, P)
    assert p.shape == (N, 8, 8) and v.shape == (N, 1)
    # tolerance accounts for bf16 matmul operands in the trunk (f32 accumulate)
    np.testing.assert_allclose(np.asarray(p), np.asarray(p_ref), rtol=3e-2, atol=1e-4)
    np.testing.assert_allclose(np.asarray(v), np.asarray(v_ref), rtol=3e-2, atol=2e-3)
    print("KERNEL_OK")
</pallas_src>

<mosaic_0001>
module attributes {stable_mosaic.version = 11 : i64} {
  func.func @trunk_kernel(%arg0: i32, %arg1: memref<2x8x8x128xf32, #tpu.memory_space<vmem>>, %arg2: memref<1x1152x128xbf16, #tpu.memory_space<vmem>>, %arg3: memref<1x1x128xf32, #tpu.memory_space<vmem>>, %arg4: memref<1x1x128xf32, #tpu.memory_space<vmem>>, %arg5: memref<128x128xf32, #tpu.memory_space<vmem>>, %arg6: memref<2x10x10x128xf32, #tpu.memory_space<vmem>>, %arg7: memref<2x10x10x128xf32, #tpu.memory_space<vmem>>) attributes {dimension_semantics = [#tpu.dimension_semantics<arbitrary>], iteration_bounds = array<i64: 5>, scalar_prefetch = 0 : i64, scratch_operands = 2 : i64, tpu.core_type = #tpu.core_type<tc>, window_params = [{pipeline_mode = #tpu.pipeline_mode<synchronous>, transform_indices = @transform_0, window_bounds = array<i64: 2, 8, 8, 128>}, {transform_indices = @transform_1, window_bounds = array<i64: 1, 1152, 128>}, {transform_indices = @transform_2, window_bounds = array<i64: 1, 1, 128>}, {transform_indices = @transform_3, window_bounds = array<i64: 1, 1, 128>}, {pipeline_mode = #tpu.pipeline_mode<synchronous>, transform_indices = @transform_4, window_bounds = array<i64: 128, 128>}]} {
    %c0_i32 = arith.constant 0 : i32
    %0 = arith.cmpi eq, %arg0, %c0_i32 : i32
    %1 = arith.extui %0 : i1 to i32
    %c0_i32_0 = arith.constant 0 : i32
    %2 = arith.cmpi ne, %1, %c0_i32_0 : i32
    scf.if %2 {
      %cst = arith.constant 0.000000e+00 : f32
      %28 = vector.broadcast %cst : f32 to vector<2x10x10x128xf32>
      %c0_17 = arith.constant 0 : index
      %c0_18 = arith.constant 0 : index
      %c0_19 = arith.constant 0 : index
      %c0_20 = arith.constant 0 : index
      %29 = vector.load %arg6[%c0_17, %c0_18, %c0_19, %c0_20] : memref<2x10x10x128xf32, #tpu.memory_space<vmem>>, vector<2x10x10x128xf32>
      tpu.vector_store %arg6[%c0_17, %c0_18, %c0_19, %c0_20], %28 {strides = array<i32>} : memref<2x10x10x128xf32, #tpu.memory_space<vmem>>, vector<2x10x10x128xf32>,
      %cst_21 = arith.constant 0.000000e+00 : f32
      %30 = vector.broadcast %cst_21 : f32 to vector<2x10x10x128xf32>
      %c0_22 = arith.constant 0 : index
      %c0_23 = arith.constant 0 : index
      %c0_24 = arith.constant 0 : index
      %c0_25 = arith.constant 0 : index
      %31 = vector.load %arg7[%c0_22, %c0_23, %c0_24, %c0_25] : memref<2x10x10x128xf32, #tpu.memory_space<vmem>>, vector<2x10x10x128xf32>
      tpu.vector_store %arg7[%c0_22, %c0_23, %c0_24, %c0_25], %30 {strides = array<i32>} : memref<2x10x10x128xf32, #tpu.memory_space<vmem>>, vector<2x10x10x128xf32>,
      %c0_26 = arith.constant 0 : index
      %c0_27 = arith.constant 0 : index
      %c0_28 = arith.constant 0 : index
      %c0_29 = arith.constant 0 : index
      %32 = vector.load %arg1[%c0_26, %c0_27, %c0_28, %c0_29] : memref<2x8x8x128xf32, #tpu.memory_space<vmem>>, vector<2x8x8x128xf32>
      %c0_30 = arith.constant 0 : index
      %c1 = arith.constant 1 : index
      %c1_31 = arith.constant 1 : index
      %c0_32 = arith.constant 0 : index
      %33 = vector.load %arg7[%c0_30, %c1, %c1_31, %c0_32] : memref<2x10x10x128xf32, #tpu.memory_space<vmem>>, vector<2x8x8x128xf32>
      tpu.vector_store %arg7[%c0_30, %c1, %c1_31, %c0_32], %32 {strides = array<i32>} : memref<2x10x10x128xf32, #tpu.memory_space<vmem>>, vector<2x8x8x128xf32>,
    } else {
    }
    %c0 = arith.constant 0 : index
    %c0_1 = arith.constant 0 : index
    %c0_2 = arith.constant 0 : index
    %3 = vector.load %arg2[%c0, %c0_1, %c0_2] : memref<1x1152x128xbf16, #tpu.memory_space<vmem>>, vector<1x1152x128xbf16>
    %4 = vector.shape_cast %3 : vector<1x1152x128xbf16> to vector<1152x128xbf16>
    %c0_3 = arith.constant 0 : index
    %c0_4 = arith.constant 0 : index
    %c0_5 = arith.constant 0 : index
    %5 = vector.load %arg3[%c0_3, %c0_4, %c0_5] : memref<1x1x128xf32, #tpu.memory_space<vmem>>, vector<1x1x128xf32>
    %6 = vector.shape_cast %5 : vector<1x1x128xf32> to vector<1x128xf32>
    %c0_6 = arith.constant 0 : index
    %c0_7 = arith.constant 0 : index
    %c0_8 = arith.constant 0 : index
    %7 = vector.load %arg4[%c0_6, %c0_7, %c0_8] : memref<1x1x128xf32, #tpu.memory_space<vmem>>, vector<1x1x128xf32>
    %8 = vector.shape_cast %7 : vector<1x1x128xf32> to vector<1x128xf32>
    %c2_i32 = arith.constant 2 : i32
    %c0_i32_9 = arith.constant 0 : i32
    %9 = arith.cmpi eq, %c2_i32, %c0_i32_9 : i32
    %c1_i32 = arith.constant 1 : i32
    %10 = arith.select %9, %c1_i32, %c2_i32 : i32
    %11 = arith.remsi %arg0, %10 : i32
    %c0_i32_10 = arith.constant 0 : i32
    %12 = arith.cmpi ne, %11, %c0_i32_10 : i32
    %c0_i32_11 = arith.constant 0 : i32
    %13 = arith.cmpi slt, %11, %c0_i32_11 : i32
    %c0_i32_12 = arith.constant 0 : i32
    %14 = arith.cmpi slt, %10, %c0_i32_12 : i32
    %15 = arith.xori %13, %14 : i1
    %16 = arith.andi %15, %12 : i1
    %17 = arith.addi %11, %10 : i32
    %18 = arith.select %16, %17, %11 : i32
    %c0_i32_13 = arith.constant 0 : i32
    %19 = arith.cmpi eq, %18, %c0_i32_13 : i32
    %20 = arith.extui %19 : i1 to i32
    %c0_i32_14 = arith.constant 0 : i32
    %21 = arith.cmpi ne, %20, %c0_i32_14 : i32
    scf.if %21 {
      %c0_17 = arith.constant 0 : index
      %c1 = arith.constant 1 : index
      %c1_18 = arith.constant 1 : index
      %c0_19 = arith.constant 0 : index
      %28 = vector.load %arg6[%c0_17, %c1, %c1_18, %c0_19] : memref<2x10x10x128xf32, #tpu.memory_space<vmem>>, vector<2x8x8x128xf32>
      %29 = vector.shape_cast %28 : vector<2x8x8x128xf32> to vector<128x128xf32>
      %c0_20 = arith.constant 0 : index
      %c0_21 = arith.constant 0 : index
      %c0_22 = arith.constant 0 : index
      %c0_23 = arith.constant 0 : index
      %30 = vector.load %arg7[%c0_20, %c0_21, %c0_22, %c0_23] : memref<2x10x10x128xf32, #tpu.memory_space<vmem>>, vector<2x8x8x128xf32>
      %31 = vector.shape_cast %30 : vector<2x8x8x128xf32> to vector<128x128xf32>
      %32 = arith.truncf %31 : vector<128x128xf32> to vector<128x128xbf16>
      %c0_24 = arith.constant 0 : index
      %c0_25 = arith.constant 0 : index
      %c1_26 = arith.constant 1 : index
      %c0_27 = arith.constant 0 : index
      %33 = vector.load %arg7[%c0_24, %c0_25, %c1_26, %c0_27] : memref<2x10x10x128xf32, #tpu.memory_space<vmem>>, vector<2x8x8x128xf32>
      %34 = vector.shape_cast %33 : vector<2x8x8x128xf32> to vector<128x128xf32>
      %35 = arith.truncf %34 : vector<128x128xf32> to vector<128x128xbf16>
      %c0_28 = arith.constant 0 : index
      %c0_29 = arith.constant 0 : index
      %c2 = arith.constant 2 : index
      %c0_30 = arith.constant 0 : index
      %36 = vector.load %arg7[%c0_28, %c0_29, %c2, %c0_30] : memref<2x10x10x128xf32, #tpu.memory_space<vmem>>, vector<2x8x8x128xf32>
      %37 = vector.shape_cast %36 : vector<2x8x8x128xf32> to vector<128x128xf32>
      %38 = arith.truncf %37 : vector<128x128xf32> to vector<128x128xbf16>
      %c0_31 = arith.constant 0 : index
      %c1_32 = arith.constant 1 : index
      %c0_33 = arith.constant 0 : index
      %c0_34 = arith.constant 0 : index
      %39 = vector.load %arg7[%c0_31, %c1_32, %c0_33, %c0_34] : memref<2x10x10x128xf32, #tpu.memory_space<vmem>>, vector<2x8x8x128xf32>
      %40 = vector.shape_cast %39 : vector<2x8x8x128xf32> to vector<128x128xf32>
      %41 = arith.truncf %40 : vector<128x128xf32> to vector<128x128xbf16>
      %c0_35 = arith.constant 0 : index
      %c1_36 = arith.constant 1 : index
      %c1_37 = arith.constant 1 : index
      %c0_38 = arith.constant 0 : index
      %42 = vector.load %arg7[%c0_35, %c1_36, %c1_37, %c0_38] : memref<2x10x10x128xf32, #tpu.memory_space<vmem>>, vector<2x8x8x128xf32>
      %43 = vector.shape_cast %42 : vector<2x8x8x128xf32> to vector<128x128xf32>
      %44 = arith.truncf %43 : vector<128x128xf32> to vector<128x128xbf16>
      %c0_39 = arith.constant 0 : index
      %c1_40 = arith.constant 1 : index
      %c2_41 = arith.constant 2 : index
      %c0_42 = arith.constant 0 : index
      %45 = vector.load %arg7[%c0_39, %c1_40, %c2_41, %c0_42] : memref<2x10x10x128xf32, #tpu.memory_space<vmem>>, vector<2x8x8x128xf32>
      %46 = vector.shape_cast %45 : vector<2x8x8x128xf32> to vector<128x128xf32>
      %47 = arith.truncf %46 : vector<128x128xf32> to vector<128x128xbf16>
      %c0_43 = arith.constant 0 : index
      %c2_44 = arith.constant 2 : index
      %c0_45 = arith.constant 0 : index
      %c0_46 = arith.constant 0 : index
      %48 = vector.load %arg7[%c0_43, %c2_44, %c0_45, %c0_46] : memref<2x10x10x128xf32, #tpu.memory_space<vmem>>, vector<2x8x8x128xf32>
      %49 = vector.shape_cast %48 : vector<2x8x8x128xf32> to vector<128x128xf32>
      %50 = arith.truncf %49 : vector<128x128xf32> to vector<128x128xbf16>
      %c0_47 = arith.constant 0 : index
      %c2_48 = arith.constant 2 : index
      %c1_49 = arith.constant 1 : index
      %c0_50 = arith.constant 0 : index
      %51 = vector.load %arg7[%c0_47, %c2_48, %c1_49, %c0_50] : memref<2x10x10x128xf32, #tpu.memory_space<vmem>>, vector<2x8x8x128xf32>
      %52 = vector.shape_cast %51 : vector<2x8x8x128xf32> to vector<128x128xf32>
      %53 = arith.truncf %52 : vector<128x128xf32> to vector<128x128xbf16>
      %c0_51 = arith.constant 0 : index
      %c2_52 = arith.constant 2 : index
      %c2_53 = arith.constant 2 : index
      %c0_54 = arith.constant 0 : index
      %54 = vector.load %arg7[%c0_51, %c2_52, %c2_53, %c0_54] : memref<2x10x10x128xf32, #tpu.memory_space<vmem>>, vector<2x8x8x128xf32>
      %55 = vector.shape_cast %54 : vector<2x8x8x128xf32> to vector<128x128xf32>
      %56 = arith.truncf %55 : vector<128x128xf32> to vector<128x128xbf16>
      %57 = tpu.concatenate %32, %35, %38, %41, %44, %47, %50, %53, %56 in 1 : vector<128x128xbf16>, vector<128x128xbf16>, vector<128x128xbf16>, vector<128x128xbf16>, vector<128x128xbf16>, vector<128x128xbf16>, vector<128x128xbf16>, vector<128x128xbf16>, vector<128x128xbf16> -> vector<128x1152xbf16>
      %cst = arith.constant dense<0.000000e+00> : vector<128x128xf32>
      %58 = tpu.matmul %57, %4, %cst {dimension_numbers = #tpu.dot_dimension_numbers<[1], [0], [0], [1], [0, 0, 1, 1], [], []>} : vector<128x1152xbf16>, vector<1152x128xbf16>, vector<128x128xf32> -> vector<128x128xf32>
      %59 = vector.broadcast %6 : vector<1x128xf32> to vector<128x128xf32>
      %60 = arith.mulf %58, %59 : vector<128x128xf32>
      %61 = vector.broadcast %8 : vector<1x128xf32> to vector<128x128xf32>
      %62 = arith.addf %60, %61 : vector<128x128xf32>
      %63 = arith.addf %62, %29 : vector<128x128xf32>
      %cst_55 = arith.constant 0.000000e+00 : f32
      %64 = vector.broadcast %cst_55 : f32 to vector<128x128xf32>
      %65 = arith.maximumf %63, %64 : vector<128x128xf32>
      %66 = vector.shape_cast %65 : vector<128x128xf32> to vector<2x8x8x128xf32>
      %c0_56 = arith.constant 0 : index
      %c1_57 = arith.constant 1 : index
      %c1_58 = arith.constant 1 : index
      %c0_59 = arith.constant 0 : index
      %67 = vector.load %arg6[%c0_56, %c1_57, %c1_58, %c0_59] : memref<2x10x10x128xf32, #tpu.memory_space<vmem>>, vector<2x8x8x128xf32>
      tpu.vector_store %arg6[%c0_56, %c1_57, %c1_58, %c0_59], %66 {strides = array<i32>} : memref<2x10x10x128xf32, #tpu.memory_space<vmem>>, vector<2x8x8x128xf32>,
    } else {
    }
    %true = arith.constant true
    %22 = arith.xori %19, %true : i1
    %23 = arith.extui %22 : i1 to i32
    %c0_i32_15 = arith.constant 0 : i32
    %24 = arith.cmpi ne, %23, %c0_i32_15 : i32
    scf.if %24 {
      %c0_17 = arith.constant 0 : index
      %c0_18 = arith.constant 0 : index
      %c0_19 = arith.constant 0 : index
      %c0_20 = arith.constant 0 : index
      %28 = vector.load %arg6[%c0_17, %c0_18, %c0_19, %c0_20] : memref<2x10x10x128xf32, #tpu.memory_space<vmem>>, vector<2x8x8x128xf32>
      %29 = vector.shape_cast %28 : vector<2x8x8x128xf32> to vector<128x128xf32>
      %30 = arith.truncf %29 : vector<128x128xf32> to vector<128x128xbf16>
      %c0_21 = arith.constant 0 : index
      %c0_22 = arith.constant 0 : index
      %c1 = arith.constant 1 : index
      %c0_23 = arith.constant 0 : index
      %31 = vector.load %arg6[%c0_21, %c0_22, %c1, %c0_23] : memref<2x10x10x128xf32, #tpu.memory_space<vmem>>, vector<2x8x8x128xf32>
      %32 = vector.shape_cast %31 : vector<2x8x8x128xf32> to vector<128x128xf32>
      %33 = arith.truncf %32 : vector<128x128xf32> to vector<128x128xbf16>
      %c0_24 = arith.constant 0 : index
      %c0_25 = arith.constant 0 : index
      %c2 = arith.constant 2 : index
      %c0_26 = arith.constant 0 : index
      %34 = vector.load %arg6[%c0_24, %c0_25, %c2, %c0_26] : memref<2x10x10x128xf32, #tpu.memory_space<vmem>>, vector<2x8x8x128xf32>
      %35 = vector.shape_cast %34 : vector<2x8x8x128xf32> to vector<128x128xf32>
      %36 = arith.truncf %35 : vector<128x128xf32> to vector<128x128xbf16>
      %c0_27 = arith.constant 0 : index
      %c1_28 = arith.constant 1 : index
      %c0_29 = arith.constant 0 : index
      %c0_30 = arith.constant 0 : index
      %37 = vector.load %arg6[%c0_27, %c1_28, %c0_29, %c0_30] : memref<2x10x10x128xf32, #tpu.memory_space<vmem>>, vector<2x8x8x128xf32>
      %38 = vector.shape_cast %37 : vector<2x8x8x128xf32> to vector<128x128xf32>
      %39 = arith.truncf %38 : vector<128x128xf32> to vector<128x128xbf16>
      %c0_31 = arith.constant 0 : index
      %c1_32 = arith.constant 1 : index
      %c1_33 = arith.constant 1 : index
      %c0_34 = arith.constant 0 : index
      %40 = vector.load %arg6[%c0_31, %c1_32, %c1_33, %c0_34] : memref<2x10x10x128xf32, #tpu.memory_space<vmem>>, vector<2x8x8x128xf32>
      %41 = vector.shape_cast %40 : vector<2x8x8x128xf32> to vector<128x128xf32>
      %42 = arith.truncf %41 : vector<128x128xf32> to vector<128x128xbf16>
      %c0_35 = arith.constant 0 : index
      %c1_36 = arith.constant 1 : index
      %c2_37 = arith.constant 2 : index
      %c0_38 = arith.constant 0 : index
      %43 = vector.load %arg6[%c0_35, %c1_36, %c2_37, %c0_38] : memref<2x10x10x128xf32, #tpu.memory_space<vmem>>, vector<2x8x8x128xf32>
      %44 = vector.shape_cast %43 : vector<2x8x8x128xf32> to vector<128x128xf32>
      %45 = arith.truncf %44 : vector<128x128xf32> to vector<128x128xbf16>
      %c0_39 = arith.constant 0 : index
      %c2_40 = arith.constant 2 : index
      %c0_41 = arith.constant 0 : index
      %c0_42 = arith.constant 0 : index
      %46 = vector.load %arg6[%c0_39, %c2_40, %c0_41, %c0_42] : memref<2x10x10x128xf32, #tpu.memory_space<vmem>>, vector<2x8x8x128xf32>
      %47 = vector.shape_cast %46 : vector<2x8x8x128xf32> to vector<128x128xf32>
      %48 = arith.truncf %47 : vector<128x128xf32> to vector<128x128xbf16>
      %c0_43 = arith.constant 0 : index
      %c2_44 = arith.constant 2 : index
      %c1_45 = arith.constant 1 : index
      %c0_46 = arith.constant 0 : index
      %49 = vector.load %arg6[%c0_43, %c2_44, %c1_45, %c0_46] : memref<2x10x10x128xf32, #tpu.memory_space<vmem>>, vector<2x8x8x128xf32>
      %50 = vector.shape_cast %49 : vector<2x8x8x128xf32> to vector<128x128xf32>
      %51 = arith.truncf %50 : vector<128x128xf32> to vector<128x128xbf16>
      %c0_47 = arith.constant 0 : index
      %c2_48 = arith.constant 2 : index
      %c2_49 = arith.constant 2 : index
      %c0_50 = arith.constant 0 : index
      %52 = vector.load %arg6[%c0_47, %c2_48, %c2_49, %c0_50] : memref<2x10x10x128xf32, #tpu.memory_space<vmem>>, vector<2x8x8x128xf32>
      %53 = vector.shape_cast %52 : vector<2x8x8x128xf32> to vector<128x128xf32>
      %54 = arith.truncf %53 : vector<128x128xf32> to vector<128x128xbf16>
      %55 = tpu.concatenate %30, %33, %36, %39, %42, %45, %48, %51, %54 in 1 : vector<128x128xbf16>, vector<128x128xbf16>, vector<128x128xbf16>, vector<128x128xbf16>, vector<128x128xbf16>, vector<128x128xbf16>, vector<128x128xbf16>, vector<128x128xbf16>, vector<128x128xbf16> -> vector<128x1152xbf16>
      %cst = arith.constant dense<0.000000e+00> : vector<128x128xf32>
      %56 = tpu.matmul %55, %4, %cst {dimension_numbers = #tpu.dot_dimension_numbers<[1], [0], [0], [1], [0, 0, 1, 1], [], []>} : vector<128x1152xbf16>, vector<1152x128xbf16>, vector<128x128xf32> -> vector<128x128xf32>
      %57 = vector.broadcast %6 : vector<1x128xf32> to vector<128x128xf32>
      %58 = arith.mulf %56, %57 : vector<128x128xf32>
      %59 = vector.broadcast %8 : vector<1x128xf32> to vector<128x128xf32>
      %60 = arith.addf %58, %59 : vector<128x128xf32>
      %cst_51 = arith.constant 0.000000e+00 : f32
      %61 = vector.broadcast %cst_51 : f32 to vector<128x128xf32>
      %62 = arith.maximumf %60, %61 : vector<128x128xf32>
      %63 = vector.shape_cast %62 : vector<128x128xf32> to vector<2x8x8x128xf32>
      %c0_52 = arith.constant 0 : index
      %c1_53 = arith.constant 1 : index
      %c1_54 = arith.constant 1 : index
      %c0_55 = arith.constant 0 : index
      %64 = vector.load %arg7[%c0_52, %c1_53, %c1_54, %c0_55] : memref<2x10x10x128xf32, #tpu.memory_space<vmem>>, vector<2x8x8x128xf32>
      tpu.vector_store %arg7[%c0_52, %c1_53, %c1_54, %c0_55], %63 {strides = array<i32>} : memref<2x10x10x128xf32, #tpu.memory_space<vmem>>, vector<2x8x8x128xf32>,
    } else {
    }
    %c4_i32 = arith.constant 4 : i32
    %25 = arith.cmpi eq, %arg0, %c4_i32 : i32
    %26 = arith.extui %25 : i1 to i32
    %c0_i32_16 = arith.constant 0 : i32
    %27 = arith.cmpi ne, %26, %c0_i32_16 : i32
    scf.if %27 {
      %c0_17 = arith.constant 0 : index
      %c1 = arith.constant 1 : index
      %c1_18 = arith.constant 1 : index
      %c0_19 = arith.constant 0 : index
      %28 = vector.load %arg6[%c0_17, %c1, %c1_18, %c0_19] : memref<2x10x10x128xf32, #tpu.memory_space<vmem>>, vector<2x8x8x128xf32>
      %29 = vector.shape_cast %28 : vector<2x8x8x128xf32> to vector<128x128xf32>
      %c0_20 = arith.constant 0 : index
      %c0_21 = arith.constant 0 : index
      %30 = vector.load %arg5[%c0_20, %c0_21] : memref<128x128xf32, #tpu.memory_space<vmem>>, vector<128x128xf32>
      tpu.vector_store %arg5[%c0_20, %c0_21], %29 {strides = array<i32>} : memref<128x128xf32, #tpu.memory_space<vmem>>, vector<128x128xf32>,
    } else {
    }
    return
  }
  func.func @transform_0(%arg0: i32) -> (i32, i32, i32, i32) {
    %c0_i32 = arith.constant 0 : i32
    %c0_i32_0 = arith.constant 0 : i32
    %c0_i32_1 = arith.constant 0 : i32
    %c0_i32_2 = arith.constant 0 : i32
    %c0_i32_3 = arith.constant 0 : i32
    return %c0_i32, %c0_i32_0, %c0_i32_1, %c0_i32_2 : i32, i32, i32, i32
  }
  func.func @transform_1(%arg0: i32) -> (i32, i32, i32) {
    %c0_i32 = arith.constant 0 : i32
    %c0_i32_0 = arith.constant 0 : i32
    %c0_i32_1 = arith.constant 0 : i32
    return %arg0, %c0_i32, %c0_i32_0 : i32, i32, i32
  }
  func.func @transform_2(%arg0: i32) -> (i32, i32, i32) {
    %c0_i32 = arith.constant 0 : i32
    %c0_i32_0 = arith.constant 0 : i32
    %c0_i32_1 = arith.constant 0 : i32
    return %arg0, %c0_i32, %c0_i32_0 : i32, i32, i32
  }
  func.func @transform_3(%arg0: i32) -> (i32, i32, i32) {
    %c0_i32 = arith.constant 0 : i32
    %c0_i32_0 = arith.constant 0 : i32
    %c0_i32_1 = arith.constant 0 : i32
    return %arg0, %c0_i32, %c0_i32_0 : i32, i32, i32
  }
  func.func @transform_4(%arg0: i32) -> (i32, i32) {
    %c0_i32 = arith.constant 0 : i32
    %c0_i32_0 = arith.constant 0 : i32
    %c0_i32_1 = arith.constant 0 : i32
    return %c0_i32, %c0_i32_0 : i32, i32
  }
}

module attributes {stable_mosaic.version = 11 : i64} {
  func.func @heads_kernel(%arg0: i32, %arg1: memref<2x8192xf32, #tpu.memory_space<vmem>>, %arg2: memref<8192x192xf32, #tpu.memory_space<vmem>>, %arg3: memref<1x192xf32, #tpu.memory_space<vmem>>, %arg4: memref<1x192xf32, #tpu.memory_space<vmem>>, %arg5: memref<2x128xf32, #tpu.memory_space<vmem>>, %arg6: memref<192x128xf32, #tpu.memory_space<vmem>>, %arg7: memref<1x128xf32, #tpu.memory_space<vmem>>, %arg8: memref<192x32xf32, #tpu.memory_space<vmem>>, %arg9: memref<1x32xf32, #tpu.memory_space<vmem>>, %arg10: memref<32x1xf32, #tpu.memory_space<vmem>>, %arg11: memref<1x1xf32, #tpu.memory_space<vmem>>, %arg12: memref<2x128xf32, #tpu.memory_space<vmem>>, %arg13: memref<2x1xf32, #tpu.memory_space<vmem>>) attributes {dimension_semantics = [#tpu.dimension_semantics<arbitrary>], iteration_bounds = array<i64: 1>, scalar_prefetch = 0 : i64, scratch_operands = 0 : i64, tpu.core_type = #tpu.core_type<tc>, window_params = [{pipeline_mode = #tpu.pipeline_mode<synchronous>, transform_indices = @transform_0, window_bounds = array<i64: 2, 8192>}, {pipeline_mode = #tpu.pipeline_mode<synchronous>, transform_indices = @transform_1, window_bounds = array<i64: 8192, 192>}, {pipeline_mode = #tpu.pipeline_mode<synchronous>, transform_indices = @transform_2, window_bounds = array<i64: 1, 192>}, {pipeline_mode = #tpu.pipeline_mode<synchronous>, transform_indices = @transform_3, window_bounds = array<i64: 1, 192>}, {pipeline_mode = #tpu.pipeline_mode<synchronous>, transform_indices = @transform_4, window_bounds = array<i64: 2, 128>}, {pipeline_mode = #tpu.pipeline_mode<synchronous>, transform_indices = @transform_5, window_bounds = array<i64: 192, 128>}, {pipeline_mode = #tpu.pipeline_mode<synchronous>, transform_indices = @transform_6, window_bounds = array<i64: 1, 128>}, {pipeline_mode = #tpu.pipeline_mode<synchronous>, transform_indices = @transform_7, window_bounds = array<i64: 192, 32>}, {pipeline_mode = #tpu.pipeline_mode<synchronous>, transform_indices = @transform_8, window_bounds = array<i64: 1, 32>}, {pipeline_mode = #tpu.pipeline_mode<synchronous>, transform_indices = @transform_9, window_bounds = array<i64: 32, 1>}, {pipeline_mode = #tpu.pipeline_mode<synchronous>, transform_indices = @transform_10, window_bounds = array<i64: 1, 1>}, {pipeline_mode = #tpu.pipeline_mode<synchronous>, transform_indices = @transform_11, window_bounds = array<i64: 2, 128>}, {pipeline_mode = #tpu.pipeline_mode<synchronous>, transform_indices = @transform_12, window_bounds = array<i64: 2, 1>}]} {
    %c0 = arith.constant 0 : index
    %c0_0 = arith.constant 0 : index
    %0 = vector.load %arg1[%c0, %c0_0] : memref<2x8192xf32, #tpu.memory_space<vmem>>, vector<2x8192xf32>
    %c0_1 = arith.constant 0 : index
    %c0_2 = arith.constant 0 : index
    %1 = vector.load %arg2[%c0_1, %c0_2] : memref<8192x192xf32, #tpu.memory_space<vmem>>, vector<8192x192xf32>
    %cst = arith.constant dense<0.000000e+00> : vector<2x192xf32>
    %2 = tpu.matmul %0, %1, %cst {dimension_numbers = #tpu.dot_dimension_numbers<[1], [0], [0], [1], [0, 0, 1, 1], [], []>} : vector<2x8192xf32>, vector<8192x192xf32>, vector<2x192xf32> -> vector<2x192xf32>
    %c0_3 = arith.constant 0 : index
    %c0_4 = arith.constant 0 : index
    %3 = vector.load %arg3[%c0_3, %c0_4] : memref<1x192xf32, #tpu.memory_space<vmem>>, vector<1x192xf32>
    %4 = vector.broadcast %3 : vector<1x192xf32> to vector<2x192xf32>
    %5 = arith.mulf %2, %4 : vector<2x192xf32>
    %c0_5 = arith.constant 0 : index
    %c0_6 = arith.constant 0 : index
    %6 = vector.load %arg4[%c0_5, %c0_6] : memref<1x192xf32, #tpu.memory_space<vmem>>, vector<1x192xf32>
    %7 = vector.broadcast %6 : vector<1x192xf32> to vector<2x192xf32>
    %8 = arith.addf %5, %7 : vector<2x192xf32>
    %cst_7 = arith.constant 0.000000e+00 : f32
    %9 = vector.broadcast %cst_7 : f32 to vector<2x192xf32>
    %10 = arith.maximumf %8, %9 : vector<2x192xf32>
    %c0_8 = arith.constant 0 : index
    %c0_9 = arith.constant 0 : index
    %11 = vector.load %arg6[%c0_8, %c0_9] : memref<192x128xf32, #tpu.memory_space<vmem>>, vector<192x128xf32>
    %cst_10 = arith.constant dense<0.000000e+00> : vector<2x128xf32>
    %12 = tpu.matmul %10, %11, %cst_10 {dimension_numbers = #tpu.dot_dimension_numbers<[1], [0], [0], [1], [0, 0, 1, 1], [], []>} : vector<2x192xf32>, vector<192x128xf32>, vector<2x128xf32> -> vector<2x128xf32>
    %c0_11 = arith.constant 0 : index
    %c0_12 = arith.constant 0 : index
    %13 = vector.load %arg7[%c0_11, %c0_12] : memref<1x128xf32, #tpu.memory_space<vmem>>, vector<1x128xf32>
    %14 = vector.broadcast %13 : vector<1x128xf32> to vector<2x128xf32>
    %15 = arith.addf %12, %14 : vector<2x128xf32>
    %16 = math.exp %15 : vector<2x128xf32>
    %c0_13 = arith.constant 0 : index
    %c0_14 = arith.constant 0 : index
    %17 = vector.load %arg5[%c0_13, %c0_14] : memref<2x128xf32, #tpu.memory_space<vmem>>, vector<2x128xf32>
    %18 = arith.mulf %16, %17 : vector<2x128xf32>
    %19 = vector.shape_cast %18 : vector<2x128xf32> to vector<1x2x128xf32>
    %cst_15 = arith.constant dense<0.000000e+00> : vector<1xf32>
    %20 = vector.multi_reduction <add>, %19, %cst_15 [1, 2] : vector<1x2x128xf32> to vector<1xf32>
    %21 = vector.shape_cast %20 : vector<1xf32> to vector<1x1x1xf32>
    %22 = vector.extract %21[0, 0, 0] : f32 from vector<1x1x1xf32>
    %23 = vector.broadcast %22 : f32 to vector<2x128xf32>
    %24 = arith.divf %18, %23 : vector<2x128xf32>
    %c0_16 = arith.constant 0 : index
    %c0_17 = arith.constant 0 : index
    %25 = vector.load %arg12[%c0_16, %c0_17] : memref<2x128xf32, #tpu.memory_space<vmem>>, vector<2x128xf32>
    tpu.vector_store %arg12[%c0_16, %c0_17], %24 {strides = array<i32>} : memref<2x128xf32, #tpu.memory_space<vmem>>, vector<2x128xf32>,
    %c0_18 = arith.constant 0 : index
    %c0_19 = arith.constant 0 : index
    %26 = vector.load %arg8[%c0_18, %c0_19] : memref<192x32xf32, #tpu.memory_space<vmem>>, vector<192x32xf32>
    %cst_20 = arith.constant dense<0.000000e+00> : vector<2x32xf32>
    %27 = tpu.matmul %10, %26, %cst_20 {dimension_numbers = #tpu.dot_dimension_numbers<[1], [0], [0], [1], [0, 0, 1, 1], [], []>} : vector<2x192xf32>, vector<192x32xf32>, vector<2x32xf32> -> vector<2x32xf32>
    %c0_21 = arith.constant 0 : index
    %c0_22 = arith.constant 0 : index
    %28 = vector.load %arg9[%c0_21, %c0_22] : memref<1x32xf32, #tpu.memory_space<vmem>>, vector<1x32xf32>
    %29 = vector.broadcast %28 : vector<1x32xf32> to vector<2x32xf32>
    %30 = arith.addf %27, %29 : vector<2x32xf32>
    %cst_23 = arith.constant 0.000000e+00 : f32
    %31 = vector.broadcast %cst_23 : f32 to vector<2x32xf32>
    %32 = arith.maximumf %30, %31 : vector<2x32xf32>
    %c0_24 = arith.constant 0 : index
    %c0_25 = arith.constant 0 : index
    %33 = vector.load %arg10[%c0_24, %c0_25] : memref<32x1xf32, #tpu.memory_space<vmem>>, vector<32x1xf32>
    %cst_26 = arith.constant dense<0.000000e+00> : vector<2x1xf32>
    %34 = tpu.matmul %32, %33, %cst_26 {dimension_numbers = #tpu.dot_dimension_numbers<[1], [0], [0], [1], [0, 0, 1, 1], [], []>} : vector<2x32xf32>, vector<32x1xf32>, vector<2x1xf32> -> vector<2x1xf32>
    %c0_27 = arith.constant 0 : index
    %c0_28 = arith.constant 0 : index
    %35 = vector.load %arg11[%c0_27, %c0_28] : memref<1x1xf32, #tpu.memory_space<vmem>>, vector<1x1xf32>
    %36 = vector.broadcast %35 : vector<1x1xf32> to vector<2x1xf32>
    %37 = arith.addf %34, %36 : vector<2x1xf32>
    %38 = math.tanh %37 : vector<2x1xf32>
    %c0_29 = arith.constant 0 : index
    %c0_30 = arith.constant 0 : index
    %39 = vector.load %arg13[%c0_29, %c0_30] : memref<2x1xf32, #tpu.memory_space<vmem>>, vector<2x1xf32>
    tpu.vector_store %arg13[%c0_29, %c0_30], %38 {strides = array<i32>} : memref<2x1xf32, #tpu.memory_space<vmem>>, vector<2x1xf32>,
    return
  }
  func.func @transform_0(%arg0: i32) -> (i32, i32) {
    %c0_i32 = arith.constant 0 : i32
    %c0_i32_0 = arith.constant 0 : i32
    %c0_i32_1 = arith.constant 0 : i32
    return %c0_i32, %c0_i32_0 : i32, i32
  }
  func.func @transform_1(%arg0: i32) -> (i32, i32) {
    %c0_i32 = arith.constant 0 : i32
    %c0_i32_0 = arith.constant 0 : i32
    %c0_i32_1 = arith.constant 0 : i32
    return %c0_i32, %c0_i32_0 : i32, i32
  }
  func.func @transform_2(%arg0: i32) -> (i32, i32) {
    %c0_i32 = arith.constant 0 : i32
    %c0_i32_0 = arith.constant 0 : i32
    %c0_i32_1 = arith.constant 0 : i32
    return %c0_i32, %c0_i32_0 : i32, i32
  }
  func.func @transform_3(%arg0: i32) -> (i32, i32) {
    %c0_i32 = arith.constant 0 : i32
    %c0_i32_0 = arith.constant 0 : i32
    %c0_i32_1 = arith.constant 0 : i32
    return %c0_i32, %c0_i32_0 : i32, i32
  }
  func.func @transform_4(%arg0: i32) -> (i32, i32) {
    %c0_i32 = arith.constant 0 : i32
    %c0_i32_0 = arith.constant 0 : i32
    %c0_i32_1 = arith.constant 0 : i32
    return %c0_i32, %c0_i32_0 : i32, i32
  }
  func.func @transform_5(%arg0: i32) -> (i32, i32) {
    %c0_i32 = arith.constant 0 : i32
    %c0_i32_0 = arith.constant 0 : i32
    %c0_i32_1 = arith.constant 0 : i32
    return %c0_i32, %c0_i32_0 : i32, i32
  }
  func.func @transform_6(%arg0: i32) -> (i32, i32) {
    %c0_i32 = arith.constant 0 : i32
    %c0_i32_0 = arith.constant 0 : i32
    %c0_i32_1 = arith.constant 0 : i32
    return %c0_i32, %c0_i32_0 : i32, i32
  }
  func.func @transform_7(%arg0: i32) -> (i32, i32) {
    %c0_i32 = arith.constant 0 : i32
    %c0_i32_0 = arith.constant 0 : i32
    %c0_i32_1 = arith.constant 0 : i32
    return %c0_i32, %c0_i32_0 : i32, i32
  }
  func.func @transform_8(%arg0: i32) -> (i32, i32) {
    %c0_i32 = arith.constant 0 : i32
    %c0_i32_0 = arith.constant 0 : i32
    %c0_i32_1 = arith.constant 0 : i32
    return %c0_i32, %c0_i32_0 : i32, i32
  }
  func.func @transform_9(%arg0: i32) -> (i32, i32) {
    %c0_i32 = arith.constant 0 : i32
    %c0_i32_0 = arith.constant 0 : i32
    %c0_i32_1 = arith.constant 0 : i32
    return %c0_i32, %c0_i32_0 : i32, i32
  }
  func.func @transform_10(%arg0: i32) -> (i32, i32) {
    %c0_i32 = arith.constant 0 : i32
    %c0_i32_0 = arith.constant 0 : i32
    %c0_i32_1 = arith.constant 0 : i32
    return %c0_i32, %c0_i32_0 : i32, i32
  }
  func.func @transform_11(%arg0: i32) -> (i32, i32) {
    %c0_i32 = arith.constant 0 : i32
    %c0_i32_0 = arith.constant 0 : i32
    %c0_i32_1 = arith.constant 0 : i32
    return %c0_i32, %c0_i32_0 : i32, i32
  }
  func.func @transform_12(%arg0: i32) -> (i32, i32) {
    %c0_i32 = arith.constant 0 : i32
    %c0_i32_0 = arith.constant 0 : i32
    %c0_i32_1 = arith.constant 0 : i32
    return %c0_i32, %c0_i32_0 : i32, i32
  }
}

</mosaic_0001>

<llo_original>
// kernel: squeeze.1
$region0: #{squeeze.1}
  %s0 = inlined_call_operand.vmem [shape: f32[2,1,8,8], index: 0, kind: input, shape index: {}]
  %s1 = inlined_call_operand.vmem [shape: f32[2,64], index: 1, kind: output, shape index: {}]
  $region1: #{squeeze.1} parent=0
    #allocation0 [shape = 'u8[4096]{0}', space=vmem, size = 0x1000, scoped, tag = 'scoped mem for output reshape']
    %s2 = smov 3
    %v3 = vld [vmem:[%s0] ss:$8 sm:%s2]
    %vm4 = vcmask 64512
    %5 = vst.msk [vmem:[#allocation0] sm:$0x3] %vm4, %v3
    %s6 = scalar_lea.vmem %s0, 7
    %s7 = smov 3
    %v8 = vld [vmem:[%s6] ss:$8 sm:%s7]
    %9 = vrot.lane.b32.xlu0 %v8, 56
    %v10 = vpop.permute.xlu0 %9
    %vm11 = vcmask 523712
    %12 = vst.msk [vmem:[#allocation0] sm:$0x3] %vm11, %v10
    %s13 = scalar_lea.vmem %s0, 6
    %s14 = smov 3
    %v15 = vld [vmem:[%s13] ss:$8 sm:%s14]
    %16 = vrot.lane.b32.xlu0 %v15, 48
    %v17 = vpop.permute.xlu0 %16
    %vm18 = vcmask 458112
    %19 = vst.msk [vmem:[#allocation0] sm:$0x3] %vm18, %v17
    %s20 = scalar_lea.vmem %s0, 5
    %s21 = smov 3
    %v22 = vld [vmem:[%s20] ss:$8 sm:%s21]
    %23 = vrot.lane.b32.xlu0 %v22, 40
    %v24 = vpop.permute.xlu0 %23
    %vm25 = vcmask 392512
    %26 = vst.msk [vmem:[#allocation0] sm:$0x3] %vm25, %v24
    %s27 = scalar_lea.vmem %s0, 4
    %s28 = smov 3
    %v29 = vld [vmem:[%s27] ss:$8 sm:%s28]
    %30 = vrot.lane.b32.xlu0 %v29, 32
    %v31 = vpop.permute.xlu0 %30
    %vm32 = vcmask 326912
    %33 = vst.msk [vmem:[#allocation0] sm:$0x3] %vm32, %v31
    %s34 = scalar_lea.vmem %s0, 3
    %s35 = smov 3
    %v36 = vld [vmem:[%s34] ss:$8 sm:%s35]
    %37 = vrot.lane.b32.xlu0 %v36, 24
    %v38 = vpop.permute.xlu0 %37
    %vm39 = vcmask 261312
    %40 = vst.msk [vmem:[#allocation0] sm:$0x3] %vm39, %v38
    %s41 = scalar_lea.vmem %s0, 2
    %s42 = smov 3
    %v43 = vld [vmem:[%s41] ss:$8 sm:%s42]
    %44 = vrot.lane.b32.xlu0 %v43, 16
    %v45 = vpop.permute.xlu0 %44
    %vm46 = vcmask 195712
    %47 = vst.msk [vmem:[#allocation0] sm:$0x3] %vm46, %v45
    %s48 = scalar_lea.vmem %s0, 1
    %s49 = smov 3
    %v50 = vld [vmem:[%s48] ss:$8 sm:%s49]
    %51 = vrot.lane.b32.xlu0 %v50, 8
    %v52 = vpop.permute.xlu0 %51
    %vm53 = vcmask 130112
    %54 = vst.msk [vmem:[#allocation0] sm:$0x3] %vm53, %v52
    %s56 = sshllo.u32 0, 2
    %v58 = vld [vmem:[#allocation0] sm:%s56]
    %s59 = sshllo.u32 0, 2
    %60 = vst [vmem:[%s1] sm:%s59] %v58

// kernel: _lambda_.2
$region0: #{_lambda_.2}
  #allocation0 [shape = 'u32[]', space=smem, size = 0x4, offset = 0x4, fixed_abs, tag = 'smem constant byte address 0x4 - core index']
  #allocation1 [shape = 'u32[144,128]{1,0:T(1,128)}', space=vmem, size = 0x12000, scoped, tag = 'internal scratch']
  #allocation2 [shape = 'f32[2,10,10,128]{3,2,1,0:T(8,128)}', space=vmem, size = 0x28000, scoped, tag = 'scratch operand']
  #allocation3 [shape = 'f32[2,10,10,128]{3,2,1,0:T(8,128)}', space=vmem, size = 0x28000, scoped, tag = 'scratch operand']
  %s0 = inlined_call_operand.vmem [shape: f32[2,8,8,128], index: 0, kind: input, shape index: {}]
  %s1 = inlined_call_operand.vmem [shape: bf16[5,1152,128], index: 1, kind: input, shape index: {}]
  %s2 = inlined_call_operand.vmem [shape: f32[5,1,128], index: 2, kind: input, shape index: {}]
  %s3 = inlined_call_operand.vmem [shape: f32[5,1,128], index: 3, kind: input, shape index: {}]
  %s4 = inlined_call_operand.vmem [shape: f32[128,128], index: 4, kind: output, shape index: {}]
  %s5 = sld [smem:[#allocation0]]
  $region65: #{_lambda_.2} parent=0
    _
  %s7 = ssub.s32 1, %s5
  %s8 = scalar_select 0, %s7, %s5
  loop: start=0, step=1, limit=7
  $region2: #{_lambda_.2} parent=0 // loop_pre_header
    _
  $region3: #{_lambda_.2} parent=0 // loop_header
    %s10 = sphi 0, %s14
    %p11 = scmp.ge.s32.totalorder %s10, 7
    %s18 = sphi 0, %s18
    %s20 = sphi 0, %s18
    %s21 = sphi 0, %s20
    %s35 = sphi 0, %s21
    %s41 = sphi 0, %s43
    %s44 = sphi 0, %s41
    %s45 = sphi 0, %s44
    %s61 = sphi 0, %s45
    %s67 = sphi 0, %s69
    %s70 = sphi 0, %s67
    %s71 = sphi 0, %s70
    %s87 = sphi 0, %s71
    %s93 = sphi 0, %s95
    %s96 = sphi 0, %s93
    %s97 = sphi 0, %s96
    %s113 = sphi 0, %s97
    %s117 = sphi 0, %s117
    %s119 = sphi 0, %s117
    %s120 = sphi 0, %s119
    %s134 = sphi 0, %s120
  $region4: #{_lambda_.2} parent=0 // loop_header_branch
    %13 = sbr.rel (%p11) target = $region8
  $region5: #{_lambda_.2} parent=0 // loop_body
    %s15 = ssub.s32 %s10, 1
    %s16 = ssub.s32 %s10, 2
    %s17 = sadd.s32 %s10, 1
    %s19 = sadd.s32 %s18, 1
    %p22 = scmp.eq.s32.totalorder %s10, 4
    %p23 = scmp.ne.s32.totalorder %s18, %s20
    %p24 = scmp.eq.s32.totalorder %s10, 0
    %p25 = por %p23, %p24
    %p26 = scmp.ne.s32.totalorder %s18, %s20
    %p27 = scmp.eq.s32.totalorder %s15, 4
    %p28 = por %p26, %p27
    %p29 = scmp.ne.s32.totalorder %s20, %s21
    %p30 = scmp.eq.s32.totalorder %s15, 0
    %p31 = por %p29, %p30
    %p32 = scmp.ne.s32.totalorder %s20, %s21
    %p33 = scmp.eq.s32.totalorder %s16, 4
    %p34 = por %p32, %p33
    %p36 = scmp.ne.s32.totalorder %s21, %s35
    %p37 = scmp.eq.s32.totalorder %s16, 0
    %p38 = por %p36, %p37
    %s39 = ssub.s32 %s10, %s17
    %p40 = scmp.eq.s32.totalorder %s39, 0
    %s42 = sadd.s32 %s41, 1
    %s43 = scalar_select %p40, %s41, %s42
    %p46 = pneg %p40
    %p47 = scmp.eq.s32.totalorder %s10, 4
    %p48 = por %p46, %p47
    %p49 = scmp.ne.s32.totalorder %s41, %s44
    %p50 = scmp.eq.s32.totalorder %s10, 0
    %p51 = por %p49, %p50
    %p52 = scmp.ne.s32.totalorder %s41, %s44
    %p53 = scmp.eq.s32.totalorder %s15, 4
    %p54 = por %p52, %p53
    %p55 = scmp.ne.s32.totalorder %s44, %s45
    %p56 = scmp.eq.s32.totalorder %s15, 0
    %p57 = por %p55, %p56
    %p58 = scmp.ne.s32.totalorder %s44, %s45
    %p59 = scmp.eq.s32.totalorder %s16, 4
    %p60 = por %p58, %p59
    %p62 = scmp.ne.s32.totalorder %s45, %s61
    %p63 = scmp.eq.s32.totalorder %s16, 0
    %p64 = por %p62, %p63
    %s65 = ssub.s32 %s10, %s17
    %p66 = scmp.eq.s32.totalorder %s65, 0
    %s68 = sadd.s32 %s67, 1
    %s69 = scalar_select %p66, %s67, %s68
    %p72 = pneg %p66
    %p73 = scmp.eq.s32.totalorder %s10, 4
    %p74 = por %p72, %p73
    %p75 = scmp.ne.s32.totalorder %s67, %s70
    %p76 = scmp.eq.s32.totalorder %s10, 0
    %p77 = por %p75, %p76
    %p78 = scmp.ne.s32.totalorder %s67, %s70
    %p79 = scmp.eq.s32.totalorder %s15, 4
    %p80 = por %p78, %p79
    %p81 = scmp.ne.s32.totalorder %s70, %s71
    %p82 = scmp.eq.s32.totalorder %s15, 0
    %p83 = por %p81, %p82
    %p84 = scmp.ne.s32.totalorder %s70, %s71
    %p85 = scmp.eq.s32.totalorder %s16, 4
    %p86 = por %p84, %p85
    %p88 = scmp.ne.s32.totalorder %s71, %s87
    %p89 = scmp.eq.s32.totalorder %s16, 0
    %p90 = por %p88, %p89
    %s91 = ssub.s32 %s10, %s17
    %p92 = scmp.eq.s32.totalorder %s91, 0
    %s94 = sadd.s32 %s93, 1
    %s95 = scalar_select %p92, %s93, %s94
    %p98 = pneg %p92
    %p99 = scmp.eq.s32.totalorder %s10, 4
    %p100 = por %p98, %p99
    %p101 = scmp.ne.s32.totalorder %s93, %s96
    %p102 = scmp.eq.s32.totalorder %s10, 0
    %p103 = por %p101, %p102
    %p104 = scmp.ne.s32.totalorder %s93, %s96
    %p105 = scmp.eq.s32.totalorder %s15, 4
    %p106 = por %p104, %p105
    %p107 = scmp.ne.s32.totalorder %s96, %s97
    %p108 = scmp.eq.s32.totalorder %s15, 0
    %p109 = por %p107, %p108
    %p110 = scmp.ne.s32.totalorder %s96, %s97
    %p111 = scmp.eq.s32.totalorder %s16, 4
    %p112 = por %p110, %p111
    %p114 = scmp.ne.s32.totalorder %s97, %s113
    %p115 = scmp.eq.s32.totalorder %s16, 0
    %p116 = por %p114, %p115
    %s118 = sadd.s32 %s117, 1
    %p121 = scmp.eq.s32.totalorder %s10, 4
    %p122 = scmp.ne.s32.totalorder %s117, %s119
    %p123 = scmp.eq.s32.totalorder %s10, 0
    %p124 = por %p122, %p123
    %p125 = scmp.ne.s32.totalorder %s117, %s119
    %p126 = scmp.eq.s32.totalorder %s15, 4
    %p127 = por %p125, %p126
    %p128 = scmp.ne.s32.totalorder %s119, %s120
    %p129 = scmp.eq.s32.totalorder %s15, 0
    %p130 = por %p128, %p129
    %p131 = scmp.ne.s32.totalorder %s119, %s120
    %p132 = scmp.eq.s32.totalorder %s16, 4
    %p133 = por %p131, %p132
    %p135 = scmp.ne.s32.totalorder %s120, %s134
    %p136 = scmp.eq.s32.totalorder %s16, 0
    %p137 = por %p135, %p136
    %p138 = scmp.le.s32.totalorder 1, %s10
    %p139 = scmp.lt.s32.totalorder %s10, 6
    %p140 = pnand %p138, %p139
    %p141 = pneg %p140
    // Predicated region
    $region9: #{_lambda_.2} parent=5 // pred_check
      _
    $region10: #{_lambda_.2} parent=5 // pred_check_branch
      %143 = sbr.rel (%p140) target = $region12
    $region11: #{_lambda_.2} parent=5 // pred_region
      %s144 = ssub.s32 %s10, 1
      // Predicated region
      $region13: #{_lambda_.2} parent=11 // pred_check
        %p145 = pneg %p31
      $region14: #{_lambda_.2} parent=11 // pred_check_branch
        %147 = sbr.rel (%p145) target = $region16
      $region15: #{_lambda_.2} parent=11 // pred_region
        _
      $region16: #{_lambda_.2} parent=11 // pred_fallthru
        _
    $region12: #{_lambda_.2} parent=5 // pred_fallthru
      _
    %p148 = scmp.lt.s32.totalorder %s10, 5
    // Predicated region
    $region17: #{_lambda_.2} parent=5 // pred_check
      %p149 = pneg %p148
    $region18: #{_lambda_.2} parent=5 // pred_check_branch
      %151 = sbr.rel (%p149) target = $region20
    $region19: #{_lambda_.2} parent=5 // pred_region
      // Predicated region
      $region21: #{_lambda_.2} parent=19 // pred_check
        %p152 = pneg %p51
      $region22: #{_lambda_.2} parent=19 // pred_check_branch
        %154 = sbr.rel (%p152) target = $region24
      $region23: #{_lambda_.2} parent=19 // pred_region
        %p155 = scmp.lt.s32.totalorder %s10, 4
        %s156 = scalar_select %p155, %s10, 4
        %s157 = smul.addr %s156, 144
        %s158 = smul.addr %s157, 4
        %s159 = scalar_lea.vmem %s1, %s158
      $region24: #{_lambda_.2} parent=19 // pred_fallthru
        _
      // Predicated region
      $region25: #{_lambda_.2} parent=19 // pred_check
        %p160 = pneg %p77
      $region26: #{_lambda_.2} parent=19 // pred_check_branch
        %162 = sbr.rel (%p160) target = $region28
      $region27: #{_lambda_.2} parent=19 // pred_region
        %p163 = scmp.lt.s32.totalorder %s10, 4
        %s164 = scalar_select %p163, %s10, 4
        %s165 = scalar_lea.vmem %s2, %s164
      $region28: #{_lambda_.2} parent=19 // pred_fallthru
        _
      // Predicated region
      $region29: #{_lambda_.2} parent=19 // pred_check
        %p166 = pneg %p103
      $region30: #{_lambda_.2} parent=19 // pred_check_branch
        %168 = sbr.rel (%p166) target = $region32
      $region31: #{_lambda_.2} parent=19 // pred_region
        %p169 = scmp.lt.s32.totalorder %s10, 4
        %s170 = scalar_select %p169, %s10, 4
        %s171 = scalar_lea.vmem %s3, %s170
      $region32: #{_lambda_.2} parent=19 // pred_fallthru
        _
    $region20: #{_lambda_.2} parent=5 // pred_fallthru
      _
    %p172 = scmp.le.s32.totalorder 1, %s10
    %p173 = scmp.lt.s32.totalorder %s10, 6
    %p174 = pnand %p172, %p173
    %p175 = pneg %p174
    // Predicated region
    $region33: #{_lambda_.2} parent=5 // pred_check
      _
    $region34: #{_lambda_.2} parent=5 // pred_check_branch
      %177 = sbr.rel (%p174) target = $region36
    $region35: #{_lambda_.2} parent=5 // pred_region
      %s178 = ssub.s32 %s10, 1
      %p179 = pneg %p31
      %p180 = pneg %p28
      %p181 = scmp.lt.s32.totalorder %s15, 4
      %s182 = scalar_select %p181, %s15, 4
      %s183 = smul.addr %s182, 144
      %s184 = smul.addr %s183, 4
      %s185 = scalar_lea.vmem %s1, %s184
      %p186 = pneg %p57
      %p187 = pneg %p54
      %p188 = scmp.lt.s32.totalorder %s15, 4
      %s189 = scalar_select %p188, %s15, 4
      %s190 = scalar_lea.vmem %s2, %s189
      %p191 = pneg %p83
      %p192 = pneg %p80
      %p193 = scmp.lt.s32.totalorder %s15, 4
      %s194 = scalar_select %p193, %s15, 4
      %s195 = scalar_lea.vmem %s3, %s194
      %p196 = pneg %p109
      %p197 = pneg %p106
      %p198 = pneg %p130
      %p199 = pneg %p127
      %p200 = scmp.lt.s32.totalorder %s15, 4
      %s201 = scalar_select %p200, %s15, 4
      %s202 = smul.addr %s201, 144
      %s203 = smul.addr %s202, 4
      %s204 = scalar_lea.vmem %s1, %s203
      %p205 = scmp.lt.s32.totalorder %s15, 4
      %s206 = scalar_select %p205, %s15, 4
      %s207 = scalar_lea.vmem %s2, %s206
      %p208 = scmp.lt.s32.totalorder %s15, 4
      %s209 = scalar_select %p208, %s15, 4
      %s210 = scalar_lea.vmem %s3, %s209
      %p212 = scmp.eq.s32.totalorder %s15, 0
      // Predicated region
      $region37: #{_lambda_.2} parent=35 // pred_check
        %p213 = pneg %p212
      $region38: #{_lambda_.2} parent=35 // pred_check_branch
        %215 = sbr.rel (%p213) target = $region40
      $region39: #{_lambda_.2} parent=35 // pred_region
        %216 = vst [vmem:[#allocation2] sm:$0xff] 0.0
        %217 = vst [vmem:[#allocation2 + $0x8] sm:$0x3] 0.0
        %218 = vst [vmem:[#allocation2 + $0x10] sm:$0xff] 0.0
        %219 = vst [vmem:[#allocation2 + $0x18] sm:$0x3] 0.0
        %220 = vst [vmem:[#allocation2 + $0x20] sm:$0xff] 0.0
        %221 = vst [vmem:[#allocation2 + $0x28] sm:$0x3] 0.0
        %222 = vst [vmem:[#allocation2 + $0x30] sm:$0xff] 0.0
        %223 = vst [vmem:[#allocation2 + $0x38] sm:$0x3] 0.0
        %224 = vst [vmem:[#allocation2 + $0x40] sm:$0xff] 0.0
        %225 = vst [vmem:[#allocation2 + $0x48] sm:$0x3] 0.0
        %226 = vst [vmem:[#allocation2 + $0x50] sm:$0xff] 0.0
        %227 = vst [vmem:[#allocation2 + $0x58] sm:$0x3] 0.0
        %228 = vst [vmem:[#allocation2 + $0x60] sm:$0xff] 0.0
        %229 = vst [vmem:[#allocation2 + $0x68] sm:$0x3] 0.0
        %230 = vst [vmem:[#allocation2 + $0x70] sm:$0xff] 0.0
        %231 = vst [vmem:[#allocation2 + $0x78] sm:$0x3] 0.0
        %232 = vst [vmem:[#allocation2 + $0x80] sm:$0xff] 0.0
        %233 = vst [vmem:[#allocation2 + $0x88] sm:$0x3] 0.0
        %234 = vst [vmem:[#allocation2 + $0x90] sm:$0xff] 0.0
        %235 = vst [vmem:[#allocation2 + $0x98] sm:$0x3] 0.0
        %236 = vst [vmem:[#allocation2 + $0xa0] sm:$0xff] 0.0
        %237 = vst [vmem:[#allocation2 + $0xa8] sm:$0x3] 0.0
        %238 = vst [vmem:[#allocation2 + $0xb0] sm:$0xff] 0.0
        %239 = vst [vmem:[#allocation2 + $0xb8] sm:$0x3] 0.0
        %240 = vst [vmem:[#allocation2 + $0xc0] sm:$0xff] 0.0
        %241 = vst [vmem:[#allocation2 + $0xc8] sm:$0x3] 0.0
        %242 = vst [vmem:[#allocation2 + $0xd0] sm:$0xff] 0.0
        %243 = vst [vmem:[#allocation2 + $0xd8] sm:$0x3] 0.0
        %244 = vst [vmem:[#allocation2 + $0xe0] sm:$0xff] 0.0
        %245 = vst [vmem:[#allocation2 + $0xe8] sm:$0x3] 0.0
        %246 = vst [vmem:[#allocation2 + $0xf0] sm:$0xff] 0.0
        %247 = vst [vmem:[#allocation2 + $0xf8] sm:$0x3] 0.0
        %248 = vst [vmem:[#allocation2 + $0x100] sm:$0xff] 0.0
        %249 = vst [vmem:[#allocation2 + $0x108] sm:$0x3] 0.0
        %250 = vst [vmem:[#allocation2 + $0x110] sm:$0xff] 0.0
        %251 = vst [vmem:[#allocation2 + $0x118] sm:$0x3] 0.0
        %252 = vst [vmem:[#allocation2 + $0x120] sm:$0xff] 0.0
        %253 = vst [vmem:[#allocation2 + $0x128] sm:$0x3] 0.0
        %254 = vst [vmem:[#allocation2 + $0x130] sm:$0xff] 0.0
        %255 = vst [vmem:[#allocation2 + $0x138] sm:$0x3] 0.0
        %256 = vst [vmem:[#allocation3] sm:$0xff] 0.0
        %257 = vst [vmem:[#allocation3 + $0x8] sm:$0x3] 0.0
        %258 = vst [vmem:[#allocation3 + $0x10] sm:$0xff] 0.0
        %259 = vst [vmem:[#allocation3 + $0x18] sm:$0x3] 0.0
        %260 = vst [vmem:[#allocation3 + $0x20] sm:$0xff] 0.0
        %261 = vst [vmem:[#allocation3 + $0x28] sm:$0x3] 0.0
        %262 = vst [vmem:[#allocation3 + $0x30] sm:$0xff] 0.0
        %263 = vst [vmem:[#allocation3 + $0x38] sm:$0x3] 0.0
        %264 = vst [vmem:[#allocation3 + $0x40] sm:$0xff] 0.0
        %265 = vst [vmem:[#allocation3 + $0x48] sm:$0x3] 0.0
        %266 = vst [vmem:[#allocation3 + $0x50] sm:$0xff] 0.0
        %267 = vst [vmem:[#allocation3 + $0x58] sm:$0x3] 0.0
        %268 = vst [vmem:[#allocation3 + $0x60] sm:$0xff] 0.0
        %269 = vst [vmem:[#allocation3 + $0x68] sm:$0x3] 0.0
        %270 = vst [vmem:[#allocation3 + $0x70] sm:$0xff] 0.0
        %271 = vst [vmem:[#allocation3 + $0x78] sm:$0x3] 0.0
        %272 = vst [vmem:[#allocation3 + $0x80] sm:$0xff] 0.0
        %273 = vst [vmem:[#allocation3 + $0x88] sm:$0x3] 0.0
        %274 = vst [vmem:[#allocation3 + $0x90] sm:$0xff] 0.0
        %275 = vst [vmem:[#allocation3 + $0x98] sm:$0x3] 0.0
        %276 = vst [vmem:[#allocation3 + $0xa0] sm:$0xff] 0.0
        %277 = vst [vmem:[#allocation3 + $0xa8] sm:$0x3] 0.0
        %278 = vst [vmem:[#allocation3 + $0xb0] sm:$0xff] 0.0
        %279 = vst [vmem:[#allocation3 + $0xb8] sm:$0x3] 0.0
        %280 = vst [vmem:[#allocation3 + $0xc0] sm:$0xff] 0.0
        %281 = vst [vmem:[#allocation3 + $0xc8] sm:$0x3] 0.0
        %282 = vst [vmem:[#allocation3 + $0xd0] sm:$0xff] 0.0
        %283 = vst [vmem:[#allocation3 + $0xd8] sm:$0x3] 0.0
        %284 = vst [vmem:[#allocation3 + $0xe0] sm:$0xff] 0.0
        %285 = vst [vmem:[#allocation3 + $0xe8] sm:$0x3] 0.0
        %286 = vst [vmem:[#allocation3 + $0xf0] sm:$0xff] 0.0
        %287 = vst [vmem:[#allocation3 + $0xf8] sm:$0x3] 0.0
        %288 = vst [vmem:[#allocation3 + $0x100] sm:$0xff] 0.0
        %289 = vst [vmem:[#allocation3 + $0x108] sm:$0x3] 0.0
        %290 = vst [vmem:[#allocation3 + $0x110] sm:$0xff] 0.0
        %291 = vst [vmem:[#allocation3 + $0x118] sm:$0x3] 0.0
        %292 = vst [vmem:[#allocation3 + $0x120] sm:$0xff] 0.0
        %293 = vst [vmem:[#allocation3 + $0x128] sm:$0x3] 0.0
        %294 = vst [vmem:[#allocation3 + $0x130] sm:$0xff] 0.0
        %295 = vst [vmem:[#allocation3 + $0x138] sm:$0x3] 0.0
        %v296 = vld [vmem:[%s0] sm:$0xff]
        %v297 = vld [vmem:[%s0 + $0x8] sm:$0xff]
        %v298 = vld [vmem:[%s0 + $0x10] sm:$0xff]
        %v299 = vld [vmem:[%s0 + $0x18] sm:$0xff]
        %v300 = vld [vmem:[%s0 + $0x20] sm:$0xff]
        %v301 = vld [vmem:[%s0 + $0x28] sm:$0xff]
        %v302 = vld [vmem:[%s0 + $0x30] sm:$0xff]
        %v303 = vld [vmem:[%s0 + $0x38] sm:$0xff]
        %v304 = vld [vmem:[%s0 + $0x40] sm:$0xff]
        %v305 = vld [vmem:[%s0 + $0x48] sm:$0xff]
        %v306 = vld [vmem:[%s0 + $0x50] sm:$0xff]
        %v307 = vld [vmem:[%s0 + $0x58] sm:$0xff]
        %v308 = vld [vmem:[%s0 + $0x60] sm:$0xff]
        %v309 = vld [vmem:[%s0 + $0x68] sm:$0xff]
        %v310 = vld [vmem:[%s0 + $0x70] sm:$0xff]
        %v311 = vld [vmem:[%s0 + $0x78] sm:$0xff]
        %s312 = scalar_lea.vmem [#allocation3], 16
        %313 = vst [vmem:[%s312 + $0x1] sm:$0xff] %v296
        %314 = vst [vmem:[%s312 + $0x11] sm:$0xff] %v297
        %315 = vst [vmem:[%s312 + $0x21] sm:$0xff] %v298
        %316 = vst [vmem:[%s312 + $0x31] sm:$0xff] %v299
        %317 = vst [vmem:[%s312 + $0x41] sm:$0xff] %v300
        %318 = vst [vmem:[%s312 + $0x51] sm:$0xff] %v301
        %319 = vst [vmem:[%s312 + $0x61] sm:$0xff] %v302
        %320 = vst [vmem:[%s312 + $0x71] sm:$0xff] %v303
        %321 = vst [vmem:[%s312 + $0xa1] sm:$0xff] %v304
        %322 = vst [vmem:[%s312 + $0xb1] sm:$0xff] %v305
        %323 = vst [vmem:[%s312 + $0xc1] sm:$0xff] %v306
        %324 = vst [vmem:[%s312 + $0xd1] sm:$0xff] %v307
        %325 = vst [vmem:[%s312 + $0xe1] sm:$0xff] %v308
        %326 = vst [vmem:[%s312 + $0xf1] sm:$0xff] %v309
        %327 = vst [vmem:[%s312 + $0x101] sm:$0xff] %v310
        %328 = vst [vmem:[%s312 + $0x111] sm:$0xff] %v311
      $region40: #{_lambda_.2} parent=35 // pred_fallthru
        _
      %v329 = vld [vmem:[%s204] sm:$0xf]
      %v330 = vld [vmem:[%s204 + $0x4] sm:$0xf]
      %v331 = vld [vmem:[%s204 + $0x8] sm:$0xf]
      %v332 = vld [vmem:[%s204 + $0xc] sm:$0xf]
      %v333 = vld [vmem:[%s204 + $0x10] sm:$0xf]
      %v334 = vld [vmem:[%s204 + $0x14] sm:$0xf]
      %v335 = vld [vmem:[%s204 + $0x18] sm:$0xf]
      %v336 = vld [vmem:[%s204 + $0x1c] sm:$0xf]
      %v337 = vld [vmem:[%s204 + $0x20] sm:$0xf]
      %v338 = vld [vmem:[%s204 + $0x24] sm:$0xf]
      %v339 = vld [vmem:[%s204 + $0x28] sm:$0xf]
      %v340 = vld [vmem:[%s204 + $0x2c] sm:$0xf]
      %v341 = vld [vmem:[%s204 + $0x30] sm:$0xf]
      %v342 = vld [vmem:[%s204 + $0x34] sm:$0xf]
      %v343 = vld [vmem:[%s204 + $0x38] sm:$0xf]
      %v344 = vld [vmem:[%s204 + $0x3c] sm:$0xf]
      %v345 = vld [vmem:[%s204 + $0x40] sm:$0xf]
      %v346 = vld [vmem:[%s204 + $0x44] sm:$0xf]
      %v347 = vld [vmem:[%s204 + $0x48] sm:$0xf]
      %v348 = vld [vmem:[%s204 + $0x4c] sm:$0xf]
      %v349 = vld [vmem:[%s204 + $0x50] sm:$0xf]
      %v350 = vld [vmem:[%s204 + $0x54] sm:$0xf]
      %v351 = vld [vmem:[%s204 + $0x58] sm:$0xf]
      %v352 = vld [vmem:[%s204 + $0x5c] sm:$0xf]
      %v353 = vld [vmem:[%s204 + $0x60] sm:$0xf]
      %v354 = vld [vmem:[%s204 + $0x64] sm:$0xf]
      %v355 = vld [vmem:[%s204 + $0x68] sm:$0xf]
      %v356 = vld [vmem:[%s204 + $0x6c] sm:$0xf]
      %v357 = vld [vmem:[%s204 + $0x70] sm:$0xf]
      %v358 = vld [vmem:[%s204 + $0x74] sm:$0xf]
      %v359 = vld [vmem:[%s204 + $0x78] sm:$0xf]
      %v360 = vld [vmem:[%s204 + $0x7c] sm:$0xf]
      %v361 = vld [vmem:[%s204 + $0x80] sm:$0xf]
      %v362 = vld [vmem:[%s204 + $0x84] sm:$0xf]
      %v363 = vld [vmem:[%s204 + $0x88] sm:$0xf]
      %v364 = vld [vmem:[%s204 + $0x8c] sm:$0xf]
      %v365 = vld [vmem:[%s204 + $0x90] sm:$0xf]
      %v366 = vld [vmem:[%s204 + $0x94] sm:$0xf]
      %v367 = vld [vmem:[%s204 + $0x98] sm:$0xf]
      %v368 = vld [vmem:[%s204 + $0x9c] sm:$0xf]
      %v369 = vld [vmem:[%s204 + $0xa0] sm:$0xf]
      %v370 = vld [vmem:[%s204 + $0xa4] sm:$0xf]
      %v371 = vld [vmem:[%s204 + $0xa8] sm:$0xf]
      %v372 = vld [vmem:[%s204 + $0xac] sm:$0xf]
      %v373 = vld [vmem:[%s204 + $0xb0] sm:$0xf]
      %v374 = vld [vmem:[%s204 + $0xb4] sm:$0xf]
      %v375 = vld [vmem:[%s204 + $0xb8] sm:$0xf]
      %v376 = vld [vmem:[%s204 + $0xbc] sm:$0xf]
      %v377 = vld [vmem:[%s204 + $0xc0] sm:$0xf]
      %v378 = vld [vmem:[%s204 + $0xc4] sm:$0xf]
      %v379 = vld [vmem:[%s204 + $0xc8] sm:$0xf]
      %v380 = vld [vmem:[%s204 + $0xcc] sm:$0xf]
      %v381 = vld [vmem:[%s204 + $0xd0] sm:$0xf]
      %v382 = vld [vmem:[%s204 + $0xd4] sm:$0xf]
      %v383 = vld [vmem:[%s204 + $0xd8] sm:$0xf]
      %v384 = vld [vmem:[%s204 + $0xdc] sm:$0xf]
      %v385 = vld [vmem:[%s204 + $0xe0] sm:$0xf]
      %v386 = vld [vmem:[%s204 + $0xe4] sm:$0xf]
      %v387 = vld [vmem:[%s204 + $0xe8] sm:$0xf]
      %v388 = vld [vmem:[%s204 + $0xec] sm:$0xf]
      %v389 = vld [vmem:[%s204 + $0xf0] sm:$0xf]
      %v390 = vld [vmem:[%s204 + $0xf4] sm:$0xf]
      %v391 = vld [vmem:[%s204 + $0xf8] sm:$0xf]
      %v392 = vld [vmem:[%s204 + $0xfc] sm:$0xf]
      %v393 = vld [vmem:[%s204 + $0x100] sm:$0xf]
      %v394 = vld [vmem:[%s204 + $0x104] sm:$0xf]
      %v395 = vld [vmem:[%s204 + $0x108] sm:$0xf]
      %v396 = vld [vmem:[%s204 + $0x10c] sm:$0xf]
      %v397 = vld [vmem:[%s204 + $0x110] sm:$0xf]
      %v398 = vld [vmem:[%s204 + $0x114] sm:$0xf]
      %v399 = vld [vmem:[%s204 + $0x118] sm:$0xf]
      %v400 = vld [vmem:[%s204 + $0x11c] sm:$0xf]
      %v401 = vld [vmem:[%s204 + $0x120] sm:$0xf]
      %v402 = vld [vmem:[%s204 + $0x124] sm:$0xf]
      %v403 = vld [vmem:[%s204 + $0x128] sm:$0xf]
      %v404 = vld [vmem:[%s204 + $0x12c] sm:$0xf]
      %v405 = vld [vmem:[%s204 + $0x130] sm:$0xf]
      %v406 = vld [vmem:[%s204 + $0x134] sm:$0xf]
      %v407 = vld [vmem:[%s204 + $0x138] sm:$0xf]
      %v408 = vld [vmem:[%s204 + $0x13c] sm:$0xf]
      %v409 = vld [vmem:[%s204 + $0x140] sm:$0xf]
      %v410 = vld [vmem:[%s204 + $0x144] sm:$0xf]
      %v411 = vld [vmem:[%s204 + $0x148] sm:$0xf]
      %v412 = vld [vmem:[%s204 + $0x14c] sm:$0xf]
      %v413 = vld [vmem:[%s204 + $0x150] sm:$0xf]
      %v414 = vld [vmem:[%s204 + $0x154] sm:$0xf]
      %v415 = vld [vmem:[%s204 + $0x158] sm:$0xf]
      %v416 = vld [vmem:[%s204 + $0x15c] sm:$0xf]
      %v417 = vld [vmem:[%s204 + $0x160] sm:$0xf]
      %v418 = vld [vmem:[%s204 + $0x164] sm:$0xf]
      %v419 = vld [vmem:[%s204 + $0x168] sm:$0xf]
      %v420 = vld [vmem:[%s204 + $0x16c] sm:$0xf]
      %v421 = vld [vmem:[%s204 + $0x170] sm:$0xf]
      %v422 = vld [vmem:[%s204 + $0x174] sm:$0xf]
      %v423 = vld [vmem:[%s204 + $0x178] sm:$0xf]
      %v424 = vld [vmem:[%s204 + $0x17c] sm:$0xf]
      %v425 = vld [vmem:[%s204 + $0x180] sm:$0xf]
      %v426 = vld [vmem:[%s204 + $0x184] sm:$0xf]
      %v427 = vld [vmem:[%s204 + $0x188] sm:$0xf]
      %v428 = vld [vmem:[%s204 + $0x18c] sm:$0xf]
      %v429 = vld [vmem:[%s204 + $0x190] sm:$0xf]
      %v430 = vld [vmem:[%s204 + $0x194] sm:$0xf]
      %v431 = vld [vmem:[%s204 + $0x198] sm:$0xf]
      %v432 = vld [vmem:[%s204 + $0x19c] sm:$0xf]
      %v433 = vld [vmem:[%s204 + $0x1a0] sm:$0xf]
      %v434 = vld [vmem:[%s204 + $0x1a4] sm:$0xf]
      %v435 = vld [vmem:[%s204 + $0x1a8] sm:$0xf]
      %v436 = vld [vmem:[%s204 + $0x1ac] sm:$0xf]
      %v437 = vld [vmem:[%s204 + $0x1b0] sm:$0xf]
      %v438 = vld [vmem:[%s204 + $0x1b4] sm:$0xf]
      %v439 = vld [vmem:[%s204 + $0x1b8] sm:$0xf]
      %v440 = vld [vmem:[%s204 + $0x1bc] sm:$0xf]
      %v441 = vld [vmem:[%s204 + $0x1c0] sm:$0xf]
      %v442 = vld [vmem:[%s204 + $0x1c4] sm:$0xf]
      %v443 = vld [vmem:[%s204 + $0x1c8] sm:$0xf]
      %v444 = vld [vmem:[%s204 + $0x1cc] sm:$0xf]
      %v445 = vld [vmem:[%s204 + $0x1d0] sm:$0xf]
      %v446 = vld [vmem:[%s204 + $0x1d4] sm:$0xf]
      %v447 = vld [vmem:[%s204 + $0x1d8] sm:$0xf]
      %v448 = vld [vmem:[%s204 + $0x1dc] sm:$0xf]
      %v449 = vld [vmem:[%s204 + $0x1e0] sm:$0xf]
      %v450 = vld [vmem:[%s204 + $0x1e4] sm:$0xf]
      %v451 = vld [vmem:[%s204 + $0x1e8] sm:$0xf]
      %v452 = vld [vmem:[%s204 + $0x1ec] sm:$0xf]
      %v453 = vld [vmem:[%s204 + $0x1f0] sm:$0xf]
      %v454 = vld [vmem:[%s204 + $0x1f4] sm:$0xf]
      %v455 = vld [vmem:[%s204 + $0x1f8] sm:$0xf]
      %v456 = vld [vmem:[%s204 + $0x1fc] sm:$0xf]
      %v457 = vld [vmem:[%s204 + $0x200] sm:$0xf]
      %v458 = vld [vmem:[%s204 + $0x204] sm:$0xf]
      %v459 = vld [vmem:[%s204 + $0x208] sm:$0xf]
      %v460 = vld [vmem:[%s204 + $0x20c] sm:$0xf]
      %v461 = vld [vmem:[%s204 + $0x210] sm:$0xf]
      %v462 = vld [vmem:[%s204 + $0x214] sm:$0xf]
      %v463 = vld [vmem:[%s204 + $0x218] sm:$0xf]
      %v464 = vld [vmem:[%s204 + $0x21c] sm:$0xf]
      %v465 = vld [vmem:[%s204 + $0x220] sm:$0xf]
      %v466 = vld [vmem:[%s204 + $0x224] sm:$0xf]
      %v467 = vld [vmem:[%s204 + $0x228] sm:$0xf]
      %v468 = vld [vmem:[%s204 + $0x22c] sm:$0xf]
      %v469 = vld [vmem:[%s204 + $0x230] sm:$0xf]
      %v470 = vld [vmem:[%s204 + $0x234] sm:$0xf]
      %v471 = vld [vmem:[%s204 + $0x238] sm:$0xf]
      %v472 = vld [vmem:[%s204 + $0x23c] sm:$0xf]
      %v473 = vld [vmem:[%s207] sm:$0x1]
      %v474 = vld [vmem:[%s210] sm:$0x1]
      %p475 = scmp.lt.s32.totalorder %s15, 0
      %s476 = ssub.s32 0, %s15
      %s477 = scalar_select %p475, %s476, %s15
      %s478 = sand.u32 %s477, 1
      %s479 = ssub.s32 0, %s478
      %s480 = scalar_select %p475, %s479, %s478
      %p481 = scmp.ne.s32.totalorder %s480, 0
      %p482 = scmp.lt.s32.totalorder %s480, 0
      %p483 = pnand %p482, %p481
      %p484 = pneg %p483
      %s485 = sadd.s32 %s480, 2
      %s486 = scalar_select %p484, %s485, %s480
      %p487 = scmp.eq.s32.totalorder %s486, 0
      // Predicated region
      $region41: #{_lambda_.2} parent=35 // pred_check
        %p488 = pneg %p487
      $region42: #{_lambda_.2} parent=35 // pred_check_branch
        %490 = sbr.rel (%p488) target = $region44
      $region43: #{_lambda_.2} parent=35 // pred_region
        %s491 = scalar_lea.vmem [#allocation2], 16
        %v492 = vld [vmem:[%s491 + $0x1] sm:$0xff]
        %v493 = vld [vmem:[%s491 + $0x11] sm:$0xff]
        %v494 = vld [vmem:[%s491 + $0x21] sm:$0xff]
        %v495 = vld [vmem:[%s491 + $0x31] sm:$0xff]
        %v496 = vld [vmem:[%s491 + $0x41] sm:$0xff]
        %v497 = vld [vmem:[%s491 + $0x51] sm:$0xff]
        %v498 = vld [vmem:[%s491 + $0x61] sm:$0xff]
        %v499 = vld [vmem:[%s491 + $0x71] sm:$0xff]
        %v500 = vld [vmem:[%s491 + $0xa1] sm:$0xff]
        %v501 = vld [vmem:[%s491 + $0xb1] sm:$0xff]
        %v502 = vld [vmem:[%s491 + $0xc1] sm:$0xff]
        %v503 = vld [vmem:[%s491 + $0xd1] sm:$0xff]
        %v504 = vld [vmem:[%s491 + $0xe1] sm:$0xff]
        %v505 = vld [vmem:[%s491 + $0xf1] sm:$0xff]
        %v506 = vld [vmem:[%s491 + $0x101] sm:$0xff]
        %v507 = vld [vmem:[%s491 + $0x111] sm:$0xff]
        %v508 = vld [vmem:[#allocation3] sm:$0xff]
        %v509 = vld [vmem:[#allocation3 + $0x10] sm:$0xff]
        %v510 = vld [vmem:[#allocation3 + $0x20] sm:$0xff]
        %v511 = vld [vmem:[#allocation3 + $0x30] sm:$0xff]
        %v512 = vld [vmem:[#allocation3 + $0x40] sm:$0xff]
        %v513 = vld [vmem:[#allocation3 + $0x50] sm:$0xff]
        %v514 = vld [vmem:[#allocation3 + $0x60] sm:$0xff]
        %v515 = vld [vmem:[#allocation3 + $0x70] sm:$0xff]
        %v516 = vld [vmem:[#allocation3 + $0xa0] sm:$0xff]
        %v517 = vld [vmem:[#allocation3 + $0xb0] sm:$0xff]
        %v518 = vld [vmem:[#allocation3 + $0xc0] sm:$0xff]
        %v519 = vld [vmem:[#allocation3 + $0xd0] sm:$0xff]
        %v520 = vld [vmem:[#allocation3 + $0xe0] sm:$0xff]
        %v521 = vld [vmem:[#allocation3 + $0xf0] sm:$0xff]
        %v522 = vld [vmem:[#allocation3 + $0x100] sm:$0xff]
        %v523 = vld [vmem:[#allocation3 + $0x110] sm:$0xff]
        %v524 = vpack.c.bf16 %v509, %v508
        %v525 = vpack.c.bf16 %v511, %v510
        %v526 = vpack.c.bf16 %v513, %v512
        %v527 = vpack.c.bf16 %v515, %v514
        %v528 = vpack.c.bf16 %v517, %v516
        %v529 = vpack.c.bf16 %v519, %v518
        %v530 = vpack.c.bf16 %v521, %v520
        %v531 = vpack.c.bf16 %v523, %v522
        %v532 = vld [vmem:[#allocation3 + $0x1] sm:$0xff]
        %v533 = vld [vmem:[#allocation3 + $0x11] sm:$0xff]
        %v534 = vld [vmem:[#allocation3 + $0x21] sm:$0xff]
        %v535 = vld [vmem:[#allocation3 + $0x31] sm:$0xff]
        %v536 = vld [vmem:[#allocation3 + $0x41] sm:$0xff]
        %v537 = vld [vmem:[#allocation3 + $0x51] sm:$0xff]
        %v538 = vld [vmem:[#allocation3 + $0x61] sm:$0xff]
        %v539 = vld [vmem:[#allocation3 + $0x71] sm:$0xff]
        %v540 = vld [vmem:[#allocation3 + $0xa1] sm:$0xff]
        %v541 = vld [vmem:[#allocation3 + $0xb1] sm:$0xff]
        %v542 = vld [vmem:[#allocation3 + $0xc1] sm:$0xff]
        %v543 = vld [vmem:[#allocation3 + $0xd1] sm:$0xff]
        %v544 = vld [vmem:[#allocation3 + $0xe1] sm:$0xff]
        %v545 = vld [vmem:[#allocation3 + $0xf1] sm:$0xff]
        %v546 = vld [vmem:[#allocation3 + $0x101] sm:$0xff]
        %v547 = vld [vmem:[#allocation3 + $0x111] sm:$0xff]
        %v548 = vpack.c.bf16 %v533, %v532
        %v549 = vpack.c.bf16 %v535, %v534
        %v550 = vpack.c.bf16 %v537, %v536
        %v551 = vpack.c.bf16 %v539, %v538
        %v552 = vpack.c.bf16 %v541, %v540
        %v553 = vpack.c.bf16 %v543, %v542
        %v554 = vpack.c.bf16 %v545, %v544
        %v555 = vpack.c.bf16 %v547, %v546
        %v556 = vld [vmem:[#allocation3 + $0x2] sm:$0xff]
        %v557 = vld [vmem:[#allocation3 + $0x12] sm:$0xff]
        %v558 = vld [vmem:[#allocation3 + $0x22] sm:$0xff]
        %v559 = vld [vmem:[#allocation3 + $0x32] sm:$0xff]
        %v560 = vld [vmem:[#allocation3 + $0x42] sm:$0xff]
        %v561 = vld [vmem:[#allocation3 + $0x52] sm:$0xff]
        %v562 = vld [vmem:[#allocation3 + $0x62] sm:$0xff]
        %v563 = vld [vmem:[#allocation3 + $0x72] sm:$0xff]
        %v564 = vld [vmem:[#allocation3 + $0xa2] sm:$0xff]
        %v565 = vld [vmem:[#allocation3 + $0xb2] sm:$0xff]
        %v566 = vld [vmem:[#allocation3 + $0xc2] sm:$0xff]
        %v567 = vld [vmem:[#allocation3 + $0xd2] sm:$0xff]
        %v568 = vld [vmem:[#allocation3 + $0xe2] sm:$0xff]
        %v569 = vld [vmem:[#allocation3 + $0xf2] sm:$0xff]
        %v570 = vld [vmem:[#allocation3 + $0x102] sm:$0xff]
        %v571 = vld [vmem:[#allocation3 + $0x112] sm:$0xff]
        %v572 = vpack.c.bf16 %v557, %v556
        %v573 = vpack.c.bf16 %v559, %v558
        %v574 = vpack.c.bf16 %v561, %v560
        %v575 = vpack.c.bf16 %v563, %v562
        %v576 = vpack.c.bf16 %v565, %v564
        %v577 = vpack.c.bf16 %v567, %v566
        %v578 = vpack.c.bf16 %v569, %v568
        %v579 = vpack.c.bf16 %v571, %v570
        %s580 = scalar_lea.vmem [#allocation3], 16
        %v581 = vld [vmem:[%s580] sm:$0xff]
        %v582 = vld [vmem:[%s580 + $0x10] sm:$0xff]
        %v583 = vld [vmem:[%s580 + $0x20] sm:$0xff]
        %v584 = vld [vmem:[%s580 + $0x30] sm:$0xff]
        %v585 = vld [vmem:[%s580 + $0x40] sm:$0xff]
        %v586 = vld [vmem:[%s580 + $0x50] sm:$0xff]
        %v587 = vld [vmem:[%s580 + $0x60] sm:$0xff]
        %v588 = vld [vmem:[%s580 + $0x70] sm:$0xff]
        %v589 = vld [vmem:[%s580 + $0xa0] sm:$0xff]
        %v590 = vld [vmem:[%s580 + $0xb0] sm:$0xff]
        %v591 = vld [vmem:[%s580 + $0xc0] sm:$0xff]
        %v592 = vld [vmem:[%s580 + $0xd0] sm:$0xff]
        %v593 = vld [vmem:[%s580 + $0xe0] sm:$0xff]
        %v594 = vld [vmem:[%s580 + $0xf0] sm:$0xff]
        %v595 = vld [vmem:[%s580 + $0x100] sm:$0xff]
        %v596 = vld [vmem:[%s580 + $0x110] sm:$0xff]
        %v597 = vpack.c.bf16 %v582, %v581
        %v598 = vpack.c.bf16 %v584, %v583
        %v599 = vpack.c.bf16 %v586, %v585
        %v600 = vpack.c.bf16 %v588, %v587
        %v601 = vpack.c.bf16 %v590, %v589
        %v602 = vpack.c.bf16 %v592, %v591
        %v603 = vpack.c.bf16 %v594, %v593
        %v604 = vpack.c.bf16 %v596, %v595
        %v605 = vld [vmem:[%s580 + $0x1] sm:$0xff]
        %v606 = vld [vmem:[%s580 + $0x11] sm:$0xff]
        %v607 = vld [vmem:[%s580 + $0x21] sm:$0xff]
        %v608 = vld [vmem:[%s580 + $0x31] sm:$0xff]
        %v609 = vld [vmem:[%s580 + $0x41] sm:$0xff]
        %v610 = vld [vmem:[%s580 + $0x51] sm:$0xff]
        %v611 = vld [vmem:[%s580 + $0x61] sm:$0xff]
        %v612 = vld [vmem:[%s580 + $0x71] sm:$0xff]
        %v613 = vld [vmem:[%s580 + $0xa1] sm:$0xff]
        %v614 = vld [vmem:[%s580 + $0xb1] sm:$0xff]
        %v615 = vld [vmem:[%s580 + $0xc1] sm:$0xff]
        %v616 = vld [vmem:[%s580 + $0xd1] sm:$0xff]
        %v617 = vld [vmem:[%s580 + $0xe1] sm:$0xff]
        %v618 = vld [vmem:[%s580 + $0xf1] sm:$0xff]
        %v619 = vld [vmem:[%s580 + $0x101] sm:$0xff]
        %v620 = vld [vmem:[%s580 + $0x111] sm:$0xff]
        %v621 = vpack.c.bf16 %v606, %v605
        %v622 = vpack.c.bf16 %v608, %v607
        %v623 = vpack.c.bf16 %v610, %v609
        %v624 = vpack.c.bf16 %v612, %v611
        %v625 = vpack.c.bf16 %v614, %v613
        %v626 = vpack.c.bf16 %v616, %v615
        %v627 = vpack.c.bf16 %v618, %v617
        %v628 = vpack.c.bf16 %v620, %v619
        %v629 = vld [vmem:[%s580 + $0x2] sm:$0xff]
        %v630 = vld [vmem:[%s580 + $0x12] sm:$0xff]
        %v631 = vld [vmem:[%s580 + $0x22] sm:$0xff]
        %v632 = vld [vmem:[%s580 + $0x32] sm:$0xff]
        %v633 = vld [vmem:[%s580 + $0x42] sm:$0xff]
        %v634 = vld [vmem:[%s580 + $0x52] sm:$0xff]
        %v635 = vld [vmem:[%s580 + $0x62] sm:$0xff]
        %v636 = vld [vmem:[%s580 + $0x72] sm:$0xff]
        %v637 = vld [vmem:[%s580 + $0xa2] sm:$0xff]
        %v638 = vld [vmem:[%s580 + $0xb2] sm:$0xff]
        %v639 = vld [vmem:[%s580 + $0xc2] sm:$0xff]
        %v640 = vld [vmem:[%s580 + $0xd2] sm:$0xff]
        %v641 = vld [vmem:[%s580 + $0xe2] sm:$0xff]
        %v642 = vld [vmem:[%s580 + $0xf2] sm:$0xff]
        %v643 = vld [vmem:[%s580 + $0x102] sm:$0xff]
        %v644 = vld [vmem:[%s580 + $0x112] sm:$0xff]
        %v645 = vpack.c.bf16 %v630, %v629
        %v646 = vpack.c.bf16 %v632, %v631
        %v647 = vpack.c.bf16 %v634, %v633
        %v648 = vpack.c.bf16 %v636, %v635
        %v649 = vpack.c.bf16 %v638, %v637
        %v650 = vpack.c.bf16 %v640, %v639
        %v651 = vpack.c.bf16 %v642, %v641
        %v652 = vpack.c.bf16 %v644, %v643
        %s653 = scalar_lea.vmem [#allocation3], 32
        %v654 = vld [vmem:[%s653] sm:$0xff]
        %v655 = vld [vmem:[%s653 + $0x10] sm:$0xff]
        %v656 = vld [vmem:[%s653 + $0x20] sm:$0xff]
        %v657 = vld [vmem:[%s653 + $0x30] sm:$0xff]
        %v658 = vld [vmem:[%s653 + $0x40] sm:$0xff]
        %v659 = vld [vmem:[%s653 + $0x50] sm:$0xff]
        %v660 = vld [vmem:[%s653 + $0x60] sm:$0xff]
        %v661 = vld [vmem:[%s653 + $0x70] sm:$0xff]
        %v662 = vld [vmem:[%s653 + $0xa0] sm:$0xff]
        %v663 = vld [vmem:[%s653 + $0xb0] sm:$0xff]
        %v664 = vld [vmem:[%s653 + $0xc0] sm:$0xff]
        %v665 = vld [vmem:[%s653 + $0xd0] sm:$0xff]
        %v666 = vld [vmem:[%s653 + $0xe0] sm:$0xff]
        %v667 = vld [vmem:[%s653 + $0xf0] sm:$0xff]
        %v668 = vld [vmem:[%s653 + $0x100] sm:$0xff]
        %v669 = vld [vmem:[%s653 + $0x110] sm:$0xff]
        %v670 = vpack.c.bf16 %v655, %v654
        %v671 = vpack.c.bf16 %v657, %v656
        %v672 = vpack.c.bf16 %v659, %v658
        %v673 = vpack.c.bf16 %v661, %v660
        %v674 = vpack.c.bf16 %v663, %v662
        %v675 = vpack.c.bf16 %v665, %v664
        %v676 = vpack.c.bf16 %v667, %v666
        %v677 = vpack.c.bf16 %v669, %v668
        %v678 = vld [vmem:[%s653 + $0x1] sm:$0xff]
        %v679 = vld [vmem:[%s653 + $0x11] sm:$0xff]
        %v680 = vld [vmem:[%s653 + $0x21] sm:$0xff]
        %v681 = vld [vmem:[%s653 + $0x31] sm:$0xff]
        %v682 = vld [vmem:[%s653 + $0x41] sm:$0xff]
        %v683 = vld [vmem:[%s653 + $0x51] sm:$0xff]
        %v684 = vld [vmem:[%s653 + $0x61] sm:$0xff]
        %v685 = vld [vmem:[%s653 + $0x71] sm:$0xff]
        %v686 = vld [vmem:[%s653 + $0xa1] sm:$0xff]
        %v687 = vld [vmem:[%s653 + $0xb1] sm:$0xff]
        %v688 = vld [vmem:[%s653 + $0xc1] sm:$0xff]
        %v689 = vld [vmem:[%s653 + $0xd1] sm:$0xff]
        %v690 = vld [vmem:[%s653 + $0xe1] sm:$0xff]
        %v691 = vld [vmem:[%s653 + $0xf1] sm:$0xff]
        %v692 = vld [vmem:[%s653 + $0x101] sm:$0xff]
        %v693 = vld [vmem:[%s653 + $0x111] sm:$0xff]
        %v694 = vpack.c.bf16 %v679, %v678
        %v695 = vpack.c.bf16 %v681, %v680
        %v696 = vpack.c.bf16 %v683, %v682
        %v697 = vpack.c.bf16 %v685, %v684
        %v698 = vpack.c.bf16 %v687, %v686
        %v699 = vpack.c.bf16 %v689, %v688
        %v700 = vpack.c.bf16 %v691, %v690
        %v701 = vpack.c.bf16 %v693, %v692
        %v702 = vld [vmem:[%s653 + $0x2] sm:$0xff]
        %v703 = vld [vmem:[%s653 + $0x12] sm:$0xff]
        %v704 = vld [vmem:[%s653 + $0x22] sm:$0xff]
        %v705 = vld [vmem:[%s653 + $0x32] sm:$0xff]
        %v706 = vld [vmem:[%s653 + $0x42] sm:$0xff]
        %v707 = vld [vmem:[%s653 + $0x52] sm:$0xff]
        %v708 = vld [vmem:[%s653 + $0x62] sm:$0xff]
        %v709 = vld [vmem:[%s653 + $0x72] sm:$0xff]
        %v710 = vld [vmem:[%s653 + $0xa2] sm:$0xff]
        %v711 = vld [vmem:[%s653 + $0xb2] sm:$0xff]
        %v712 = vld [vmem:[%s653 + $0xc2] sm:$0xff]
        %v713 = vld [vmem:[%s653 + $0xd2] sm:$0xff]
        %v714 = vld [vmem:[%s653 + $0xe2] sm:$0xff]
        %v715 = vld [vmem:[%s653 + $0xf2] sm:$0xff]
        %v716 = vld [vmem:[%s653 + $0x102] sm:$0xff]
        %v717 = vld [vmem:[%s653 + $0x112] sm:$0xff]
        %v718 = vpack.c.bf16 %v703, %v702
        %v719 = vpack.c.bf16 %v705, %v704
        %v720 = vpack.c.bf16 %v707, %v706
        %v721 = vpack.c.bf16 %v709, %v708
        %v722 = vpack.c.bf16 %v711, %v710
        %v723 = vpack.c.bf16 %v713, %v712
        %v724 = vpack.c.bf16 %v715, %v714
        %v725 = vpack.c.bf16 %v717, %v716
        %v870 = vunpack.c.l.b16 %v329
        %v871 = vunpack.c.l.b16 %v330
        %v872 = vunpack.c.l.b16 %v331
        %v873 = vunpack.c.l.b16 %v332
        %v874 = vunpack.c.l.b16 %v333
        %v875 = vunpack.c.l.b16 %v334
        %v876 = vunpack.c.l.b16 %v335
        %v877 = vunpack.c.l.b16 %v336
        %v878 = vunpack.c.l.b16 %v337
        %v879 = vunpack.c.l.b16 %v338
        %v880 = vunpack.c.l.b16 %v339
        %v881 = vunpack.c.l.b16 %v340
        %v882 = vunpack.c.l.b16 %v341
        %v883 = vunpack.c.l.b16 %v342
        %v884 = vunpack.c.l.b16 %v343
        %v885 = vunpack.c.l.b16 %v344
        %v886 = vunpack.c.l.b16 %v345
        %v887 = vunpack.c.l.b16 %v346
        %v888 = vunpack.c.l.b16 %v347
        %v889 = vunpack.c.l.b16 %v348
        %v890 = vunpack.c.l.b16 %v349
        %v891 = vunpack.c.l.b16 %v350
        %v892 = vunpack.c.l.b16 %v351
        %v893 = vunpack.c.l.b16 %v352
        %v894 = vunpack.c.l.b16 %v353
        %v895 = vunpack.c.l.b16 %v354
        %v896 = vunpack.c.l.b16 %v355
        %v897 = vunpack.c.l.b16 %v356
        %v898 = vunpack.c.l.b16 %v357
        %v899 = vunpack.c.l.b16 %v358
        %v900 = vunpack.c.l.b16 %v359
        %v901 = vunpack.c.l.b16 %v360
        %v902 = vunpack.c.l.b16 %v361
        %v903 = vunpack.c.l.b16 %v362
        %v904 = vunpack.c.l.b16 %v363
        %v905 = vunpack.c.l.b16 %v364
        %v906 = vunpack.c.l.b16 %v365
        %v907 = vunpack.c.l.b16 %v366
        %v908 = vunpack.c.l.b16 %v367
        %v909 = vunpack.c.l.b16 %v368
        %v910 = vunpack.c.l.b16 %v369
        %v911 = vunpack.c.l.b16 %v370
        %v912 = vunpack.c.l.b16 %v371
        %v913 = vunpack.c.l.b16 %v372
        %v914 = vunpack.c.l.b16 %v373
        %v915 = vunpack.c.l.b16 %v374
        %v916 = vunpack.c.l.b16 %v375
        %v917 = vunpack.c.l.b16 %v376
        %v918 = vunpack.c.l.b16 %v377
        %v919 = vunpack.c.l.b16 %v378
        %v920 = vunpack.c.l.b16 %v379
        %v921 = vunpack.c.l.b16 %v380
        %v922 = vunpack.c.l.b16 %v381
        %v923 = vunpack.c.l.b16 %v382
        %v924 = vunpack.c.l.b16 %v383
        %v925 = vunpack.c.l.b16 %v384
        %v926 = vunpack.c.l.b16 %v385
        %v927 = vunpack.c.l.b16 %v386
        %v928 = vunpack.c.l.b16 %v387
        %v929 = vunpack.c.l.b16 %v388
        %v930 = vunpack.c.l.b16 %v389
        %v931 = vunpack.c.l.b16 %v390
        %v932 = vunpack.c.l.b16 %v391
        %v933 = vunpack.c.l.b16 %v392
        %v934 = vunpack.c.l.b16 %v393
        %v935 = vunpack.c.l.b16 %v394
        %v936 = vunpack.c.l.b16 %v395
        %v937 = vunpack.c.l.b16 %v396
        %v938 = vunpack.c.l.b16 %v397
        %v939 = vunpack.c.l.b16 %v398
        %v940 = vunpack.c.l.b16 %v399
        %v941 = vunpack.c.l.b16 %v400
        %v942 = vunpack.c.l.b16 %v401
        %v943 = vunpack.c.l.b16 %v402
        %v944 = vunpack.c.l.b16 %v403
        %v945 = vunpack.c.l.b16 %v404
        %v946 = vunpack.c.l.b16 %v405
        %v947 = vunpack.c.l.b16 %v406
        %v948 = vunpack.c.l.b16 %v407
        %v949 = vunpack.c.l.b16 %v408
        %v950 = vunpack.c.l.b16 %v409
        %v951 = vunpack.c.l.b16 %v410
        %v952 = vunpack.c.l.b16 %v411
        %v953 = vunpack.c.l.b16 %v412
        %v954 = vunpack.c.l.b16 %v413
        %v955 = vunpack.c.l.b16 %v414
        %v956 = vunpack.c.l.b16 %v415
        %v957 = vunpack.c.l.b16 %v416
        %v958 = vunpack.c.l.b16 %v417
        %v959 = vunpack.c.l.b16 %v418
        %v960 = vunpack.c.l.b16 %v419
        %v961 = vunpack.c.l.b16 %v420
        %v962 = vunpack.c.l.b16 %v421
        %v963 = vunpack.c.l.b16 %v422
        %v964 = vunpack.c.l.b16 %v423
        %v965 = vunpack.c.l.b16 %v424
        %v966 = vunpack.c.l.b16 %v425
        %v967 = vunpack.c.l.b16 %v426
        %v968 = vunpack.c.l.b16 %v427
        %v969 = vunpack.c.l.b16 %v428
        %v970 = vunpack.c.l.b16 %v429
        %v971 = vunpack.c.l.b16 %v430
        %v972 = vunpack.c.l.b16 %v431
        %v973 = vunpack.c.l.b16 %v432
        %v974 = vunpack.c.l.b16 %v433
        %v975 = vunpack.c.l.b16 %v434
        %v976 = vunpack.c.l.b16 %v435
        %v977 = vunpack.c.l.b16 %v436
        %v978 = vunpack.c.l.b16 %v437
        %v979 = vunpack.c.l.b16 %v438
        %v980 = vunpack.c.l.b16 %v439
        %v981 = vunpack.c.l.b16 %v440
        %v982 = vunpack.c.l.b16 %v441
        %v983 = vunpack.c.l.b16 %v442
        %v984 = vunpack.c.l.b16 %v443
        %v985 = vunpack.c.l.b16 %v444
        %v986 = vunpack.c.l.b16 %v445
        %v987 = vunpack.c.l.b16 %v446
        %v988 = vunpack.c.l.b16 %v447
        %v989 = vunpack.c.l.b16 %v448
        %v990 = vunpack.c.l.b16 %v449
        %v991 = vunpack.c.l.b16 %v450
        %v992 = vunpack.c.l.b16 %v451
        %v993 = vunpack.c.l.b16 %v452
        %v994 = vunpack.c.l.b16 %v453
        %v995 = vunpack.c.l.b16 %v454
        %v996 = vunpack.c.l.b16 %v455
        %v997 = vunpack.c.l.b16 %v456
        %v998 = vunpack.c.l.b16 %v457
        %v999 = vunpack.c.l.b16 %v458
        %v1000 = vunpack.c.l.b16 %v459
        %v1001 = vunpack.c.l.b16 %v460
        %v1002 = vunpack.c.l.b16 %v461
        %v1003 = vunpack.c.l.b16 %v462
        %v1004 = vunpack.c.l.b16 %v463
        %v1005 = vunpack.c.l.b16 %v464
        %v1006 = vunpack.c.l.b16 %v465
        %v1007 = vunpack.c.l.b16 %v466
        %v1008 = vunpack.c.l.b16 %v467
        %v1009 = vunpack.c.l.b16 %v468
        %v1010 = vunpack.c.l.b16 %v469
        %v1011 = vunpack.c.l.b16 %v470
        %v1012 = vunpack.c.l.b16 %v471
        %v1013 = vunpack.c.l.b16 %v472
        %v1014 = vpack.c.b16 %v871, %v870
        %v1015 = vpack.c.b16 %v873, %v872
        %v1016 = vpack.c.b16 %v875, %v874
        %v1017 = vpack.c.b16 %v877, %v876
        %v1018 = vpack.c.b16 %v879, %v878
        %v1019 = vpack.c.b16 %v881, %v880
        %v1020 = vpack.c.b16 %v883, %v882
        %v1021 = vpack.c.b16 %v885, %v884
        %v1022 = vpack.c.b16 %v887, %v886
        %v1023 = vpack.c.b16 %v889, %v888
        %v1024 = vpack.c.b16 %v891, %v890
        %v1025 = vpack.c.b16 %v893, %v892
        %v1026 = vpack.c.b16 %v895, %v894
        %v1027 = vpack.c.b16 %v897, %v896
        %v1028 = vpack.c.b16 %v899, %v898
        %v1029 = vpack.c.b16 %v901, %v900
        %v1030 = vpack.c.b16 %v903, %v902
        %v1031 = vpack.c.b16 %v905, %v904
        %v1032 = vpack.c.b16 %v907, %v906
        %v1033 = vpack.c.b16 %v909, %v908
        %v1034 = vpack.c.b16 %v911, %v910
        %v1035 = vpack.c.b16 %v913, %v912
        %v1036 = vpack.c.b16 %v915, %v914
        %v1037 = vpack.c.b16 %v917, %v916
        %v1038 = vpack.c.b16 %v919, %v918
        %v1039 = vpack.c.b16 %v921, %v920
        %v1040 = vpack.c.b16 %v923, %v922
        %v1041 = vpack.c.b16 %v925, %v924
        %v1042 = vpack.c.b16 %v927, %v926
        %v1043 = vpack.c.b16 %v929, %v928
        %v1044 = vpack.c.b16 %v931, %v930
        %v1045 = vpack.c.b16 %v933, %v932
        %v1046 = vpack.c.b16 %v935, %v934
        %v1047 = vpack.c.b16 %v937, %v936
        %v1048 = vpack.c.b16 %v939, %v938
        %v1049 = vpack.c.b16 %v941, %v940
        %v1050 = vpack.c.b16 %v943, %v942
        %v1051 = vpack.c.b16 %v945, %v944
        %v1052 = vpack.c.b16 %v947, %v946
        %v1053 = vpack.c.b16 %v949, %v948
        %v1054 = vpack.c.b16 %v951, %v950
        %v1055 = vpack.c.b16 %v953, %v952
        %v1056 = vpack.c.b16 %v955, %v954
        %v1057 = vpack.c.b16 %v957, %v956
        %v1058 = vpack.c.b16 %v959, %v958
        %v1059 = vpack.c.b16 %v961, %v960
        %v1060 = vpack.c.b16 %v963, %v962
        %v1061 = vpack.c.b16 %v965, %v964
        %v1062 = vpack.c.b16 %v967, %v966
        %v1063 = vpack.c.b16 %v969, %v968
        %v1064 = vpack.c.b16 %v971, %v970
        %v1065 = vpack.c.b16 %v973, %v972
        %v1066 = vpack.c.b16 %v975, %v974
        %v1067 = vpack.c.b16 %v977, %v976
        %v1068 = vpack.c.b16 %v979, %v978
        %v1069 = vpack.c.b16 %v981, %v980
        %v1070 = vpack.c.b16 %v983, %v982
        %v1071 = vpack.c.b16 %v985, %v984
        %v1072 = vpack.c.b16 %v987, %v986
        %v1073 = vpack.c.b16 %v989, %v988
        %v1074 = vpack.c.b16 %v991, %v990
        %v1075 = vpack.c.b16 %v993, %v992
        %v1076 = vpack.c.b16 %v995, %v994
        %v1077 = vpack.c.b16 %v997, %v996
        %v1078 = vpack.c.b16 %v999, %v998
        %v1079 = vpack.c.b16 %v1001, %v1000
        %v1080 = vpack.c.b16 %v1003, %v1002
        %v1081 = vpack.c.b16 %v1005, %v1004
        %v1082 = vpack.c.b16 %v1007, %v1006
        %v1083 = vpack.c.b16 %v1009, %v1008
        %v1084 = vpack.c.b16 %v1011, %v1010
        %v1085 = vpack.c.b16 %v1013, %v1012
        %1158 = vmatprep.subr.bf16.mxu0 0
        %1159 = vmatpush1.bf16.msra.mxu0 %v1014
        %1160 = vmatprep.subr.bf16.mxu0 0
        %1161 = vmatpush1.bf16.msra.mxu0 %v1015
        %1162 = vmatprep.subr.bf16.mxu0 0
        %1163 = vmatpush1.bf16.msra.mxu0 %v1016
        %1164 = vmatprep.subr.bf16.mxu0 0
        %1165 = vmatpush1.bf16.msra.mxu0 %v1017
        %1166 = vmatprep.subr.bf16.mxu0 0
        %1167 = vmatpush1.bf16.msra.mxu0 %v1018
        %1168 = vmatprep.subr.bf16.mxu0 0
        %1169 = vmatpush1.bf16.msra.mxu0 %v1019
        %1170 = vmatprep.subr.bf16.mxu0 0
        %1171 = vmatpush1.bf16.msra.mxu0 %v1020
        %1172 = vmatprep.subr.bf16.mxu0 0
        %1173 = vmatpush1.bf16.msra.mxu0 %v1021
        %1174 = vmatprep.subr.bf16.mxu0 0
        %1175 = vmatpush1.bf16.msra.mxu0 %v1022
        %1176 = vmatprep.subr.bf16.mxu0 0
        %1177 = vmatpush1.bf16.msra.mxu0 %v1023
        %1178 = vmatprep.subr.bf16.mxu0 0
        %1179 = vmatpush1.bf16.msra.mxu0 %v1024
        %1180 = vmatprep.subr.bf16.mxu0 0
        %1181 = vmatpush1.bf16.msra.mxu0 %v1025
        %1182 = vmatprep.subr.bf16.mxu0 0
        %1183 = vmatpush1.bf16.msra.mxu0 %v1026
        %1184 = vmatprep.subr.bf16.mxu0 0
        %1185 = vmatpush1.bf16.msra.mxu0 %v1027
        %1186 = vmatprep.subr.bf16.mxu0 0
        %1187 = vmatpush1.bf16.msra.mxu0 %v1028
        %1188 = vmatprep.subr.bf16.mxu0 0
        %1189 = vmatpush1.bf16.msra.mxu0 %v1029
        %1190 = vmatprep.mubr.bf16.mxu0 %v548
        %1191 = vmatmul.mubr.bf16.gmra.mrb[0].mxu0 %v524
        %v1192 = vpop.f32.mrb[0].mxu0
        %v1193 = vadd.f32 0.0, %v1192
        %v1194 = vpop.f32.mrb[0].mxu0
        %v1195 = vpop.f32.mrb[0].mxu0
        %v1196 = vadd.f32 0.0, %v1195
        %v1197 = vpop.f32.mrb[0].mxu0
        %1198 = vmatprep.mubr.bf16.mxu0 %v549
        %1199 = vmatmul.mubr.bf16.gmra.mrb[0].mxu0 %v525
        %v1200 = vpop.f32.mrb[0].mxu0
        %v1201 = vadd.f32 0.0, %v1200
        %v1202 = vpop.f32.mrb[0].mxu0
        %v1203 = vpop.f32.mrb[0].mxu0
        %v1204 = vadd.f32 0.0, %v1203
        %v1205 = vpop.f32.mrb[0].mxu0
        %1206 = vmatprep.mubr.bf16.mxu0 %v550
        %1207 = vmatmul.mubr.bf16.gmra.mrb[0].mxu0 %v526
        %v1208 = vpop.f32.mrb[0].mxu0
        %v1209 = vadd.f32 0.0, %v1208
        %v1210 = vpop.f32.mrb[0].mxu0
        %v1211 = vpop.f32.mrb[0].mxu0
        %v1212 = vadd.f32 0.0, %v1211
        %v1213 = vpop.f32.mrb[0].mxu0
        %1214 = vmatprep.mubr.bf16.mxu0 %v551
        %1215 = vmatmul.mubr.bf16.gmra.mrb[0].mxu0 %v527
        %v1216 = vpop.f32.mrb[0].mxu0
        %v1217 = vadd.f32 0.0, %v1216
        %v1218 = vpop.f32.mrb[0].mxu0
        %v1219 = vpop.f32.mrb[0].mxu0
        %v1220 = vadd.f32 0.0, %v1219
        %v1221 = vpop.f32.mrb[0].mxu0
        %1222 = vmatprep.mubr.bf16.mxu0 %v552
        %1223 = vmatmul.mubr.bf16.gmra.mrb[0].mxu0 %v528
        %v1224 = vpop.f32.mrb[0].mxu0
        %v1225 = vadd.f32 0.0, %v1224
        %v1226 = vpop.f32.mrb[0].mxu0
        %v1227 = vpop.f32.mrb[0].mxu0
        %v1228 = vadd.f32 0.0, %v1227
        %v1229 = vpop.f32.mrb[0].mxu0
        %1230 = vmatprep.mubr.bf16.mxu0 %v553
        %1231 = vmatmul.mubr.bf16.gmra.mrb[0].mxu0 %v529
        %v1232 = vpop.f32.mrb[0].mxu0
        %v1233 = vadd.f32 0.0, %v1232
        %v1234 = vpop.f32.mrb[0].mxu0
        %v1235 = vpop.f32.mrb[0].mxu0
        %v1236 = vadd.f32 0.0, %v1235
        %v1237 = vpop.f32.mrb[0].mxu0
        %1238 = vmatprep.mubr.bf16.mxu0 %v554
        %1239 = vmatmul.mubr.bf16.gmra.mrb[0].mxu0 %v530
        %v1240 = vpop.f32.mrb[0].mxu0
        %v1241 = vadd.f32 0.0, %v1240
        %v1242 = vpop.f32.mrb[0].mxu0
        %v1243 = vpop.f32.mrb[0].mxu0
        %v1244 = vadd.f32 0.0, %v1243
        %v1245 = vpop.f32.mrb[0].mxu0
        %1246 = vmatprep.mubr.bf16.mxu0 %v555
        %1247 = vmatmul.mubr.bf16.gmra.mrb[0].mxu0 %v531
        %v1248 = vpop.f32.mrb[0].mxu0
        %v1249 = vadd.f32 0.0, %v1248
        %v1250 = vpop.f32.mrb[0].mxu0
        %v1251 = vpop.f32.mrb[0].mxu0
        %v1252 = vadd.f32 0.0, %v1251
        %v1253 = vpop.f32.mrb[0].mxu0
        %1254 = vdwg.mxu0
        %1255 = vmatprep.subr.bf16.mxu0 0
        %1256 = vmatpush1.bf16.msra.mxu0 %v1030
        %1257 = vmatprep.subr.bf16.mxu0 0
        %1258 = vmatpush1.bf16.msra.mxu0 %v1031
        %1259 = vmatprep.subr.bf16.mxu0 0
        %1260 = vmatpush1.bf16.msra.mxu0 %v1032
        %1261 = vmatprep.subr.bf16.mxu0 0
        %1262 = vmatpush1.bf16.msra.mxu0 %v1033
        %1263 = vmatprep.subr.bf16.mxu0 0
        %1264 = vmatpush1.bf16.msra.mxu0 %v1034
        %1265 = vmatprep.subr.bf16.mxu0 0
        %1266 = vmatpush1.bf16.msra.mxu0 %v1035
        %1267 = vmatprep.subr.bf16.mxu0 0
        %1268 = vmatpush1.bf16.msra.mxu0 %v1036
        %1269 = vmatprep.subr.bf16.mxu0 0
        %1270 = vmatpush1.bf16.msra.mxu0 %v1037
        %1271 = vmatprep.subr.bf16.mxu0 0
        %1272 = vmatpush1.bf16.msra.mxu0 %v1038
        %1273 = vmatprep.subr.bf16.mxu0 0
        %1274 = vmatpush1.bf16.msra.mxu0 %v1039
        %1275 = vmatprep.subr.bf16.mxu0 0
        %1276 = vmatpush1.bf16.msra.mxu0 %v1040
        %1277 = vmatprep.subr.bf16.mxu0 0
        %1278 = vmatpush1.bf16.msra.mxu0 %v1041
        %1279 = vmatprep.subr.bf16.mxu0 0
        %1280 = vmatpush1.bf16.msra.mxu0 %v1042
        %1281 = vmatprep.subr.bf16.mxu0 0
        %1282 = vmatpush1.bf16.msra.mxu0 %v1043
        %1283 = vmatprep.subr.bf16.mxu0 0
        %1284 = vmatpush1.bf16.msra.mxu0 %v1044
        %1285 = vmatprep.subr.bf16.mxu0 0
        %1286 = vmatpush1.bf16.msra.mxu0 %v1045
        %1287 = vmatprep.mubr.bf16.mxu0 %v597
        %1288 = vmatmul.mubr.bf16.gmra.mrb[0].mxu0 %v572
        %v1289 = vpop.f32.mrb[0].mxu0
        %v1290 = vadd.f32 %v1193, %v1289
        %v1291 = vpop.f32.mrb[0].mxu0
        %v1292 = vpop.f32.mrb[0].mxu0
        %v1293 = vadd.f32 %v1196, %v1292
        %v1294 = vpop.f32.mrb[0].mxu0
        %1295 = vmatprep.mubr.bf16.mxu0 %v598
        %1296 = vmatmul.mubr.bf16.gmra.mrb[0].mxu0 %v573
        %v1297 = vpop.f32.mrb[0].mxu0
        %v1298 = vadd.f32 %v1201, %v1297
        %v1299 = vpop.f32.mrb[0].mxu0
        %v1300 = vpop.f32.mrb[0].mxu0
        %v1301 = vadd.f32 %v1204, %v1300
        %v1302 = vpop.f32.mrb[0].mxu0
        %1303 = vmatprep.mubr.bf16.mxu0 %v599
        %1304 = vmatmul.mubr.bf16.gmra.mrb[0].mxu0 %v574
        %v1305 = vpop.f32.mrb[0].mxu0
        %v1306 = vadd.f32 %v1209, %v1305
        %v1307 = vpop.f32.mrb[0].mxu0
        %v1308 = vpop.f32.mrb[0].mxu0
        %v1309 = vadd.f32 %v1212, %v1308
        %v1310 = vpop.f32.mrb[0].mxu0
        %1311 = vmatprep.mubr.bf16.mxu0 %v600
        %1312 = vmatmul.mubr.bf16.gmra.mrb[0].mxu0 %v575
        %v1313 = vpop.f32.mrb[0].mxu0
        %v1314 = vadd.f32 %v1217, %v1313
        %v1315 = vpop.f32.mrb[0].mxu0
        %v1316 = vpop.f32.mrb[0].mxu0
        %v1317 = vadd.f32 %v1220, %v1316
        %v1318 = vpop.f32.mrb[0].mxu0
        %1319 = vmatprep.mubr.bf16.mxu0 %v601
        %1320 = vmatmul.mubr.bf16.gmra.mrb[0].mxu0 %v576
        %v1321 = vpop.f32.mrb[0].mxu0
        %v1322 = vadd.f32 %v1225, %v1321
        %v1323 = vpop.f32.mrb[0].mxu0
        %v1324 = vpop.f32.mrb[0].mxu0
        %v1325 = vadd.f32 %v1228, %v1324
        %v1326 = vpop.f32.mrb[0].mxu0
        %1327 = vmatprep.mubr.bf16.mxu0 %v602
        %1328 = vmatmul.mubr.bf16.gmra.mrb[0].mxu0 %v577
        %v1329 = vpop.f32.mrb[0].mxu0
        %v1330 = vadd.f32 %v1233, %v1329
        %v1331 = vpop.f32.mrb[0].mxu0
        %v1332 = vpop.f32.mrb[0].mxu0
        %v1333 = vadd.f32 %v1236, %v1332
        %v1334 = vpop.f32.mrb[0].mxu0
        %1335 = vmatprep.mubr.bf16.mxu0 %v603
        %1336 = vmatmul.mubr.bf16.gmra.mrb[0].mxu0 %v578
        %v1337 = vpop.f32.mrb[0].mxu0
        %v1338 = vadd.f32 %v1241, %v1337
        %v1339 = vpop.f32.mrb[0].mxu0
        %v1340 = vpop.f32.mrb[0].mxu0
        %v1341 = vadd.f32 %v1244, %v1340
        %v1342 = vpop.f32.mrb[0].mxu0
        %1343 = vmatprep.mubr.bf16.mxu0 %v604
        %1344 = vmatmul.mubr.bf16.gmra.mrb[0].mxu0 %v579
        %v1345 = vpop.f32.mrb[0].mxu0
        %v1346 = vadd.f32 %v1249, %v1345
        %v1347 = vpop.f32.mrb[0].mxu0
        %v1348 = vpop.f32.mrb[0].mxu0
        %v1349 = vadd.f32 %v1252, %v1348
        %v1350 = vpop.f32.mrb[0].mxu0
        %1351 = vdwg.mxu0
        %1352 = vmatprep.subr.bf16.mxu0 0
        %1353 = vmatpush1.bf16.msra.mxu0 %v1046
        %1354 = vmatprep.subr.bf16.mxu0 0
        %1355 = vmatpush1.bf16.msra.mxu0 %v1047
        %1356 = vmatprep.subr.bf16.mxu0 0
        %1357 = vmatpush1.bf16.msra.mxu0 %v1048
        %1358 = vmatprep.subr.bf16.mxu0 0
        %1359 = vmatpush1.bf16.msra.mxu0 %v1049
        %1360 = vmatprep.subr.bf16.mxu0 0
        %1361 = vmatpush1.bf16.msra.mxu0 %v1050
        %1362 = vmatprep.subr.bf16.mxu0 0
        %1363 = vmatpush1.bf16.msra.mxu0 %v1051
        %1364 = vmatprep.subr.bf16.mxu0 0
        %1365 = vmatpush1.bf16.msra.mxu0 %v1052
        %1366 = vmatprep.subr.bf16.mxu0 0
        %1367 = vmatpush1.bf16.msra.mxu0 %v1053
        %1368 = vmatprep.subr.bf16.mxu0 0
        %1369 = vmatpush1.bf16.msra.mxu0 %v1054
        %1370 = vmatprep.subr.bf16.mxu0 0
        %1371 = vmatpush1.bf16.msra.mxu0 %v1055
        %1372 = vmatprep.subr.bf16.mxu0 0
        %1373 = vmatpush1.bf16.msra.mxu0 %v1056
        %1374 = vmatprep.subr.bf16.mxu0 0
        %1375 = vmatpush1.bf16.msra.mxu0 %v1057
        %1376 = vmatprep.subr.bf16.mxu0 0
        %1377 = vmatpush1.bf16.msra.mxu0 %v1058
        %1378 = vmatprep.subr.bf16.mxu0 0
        %1379 = vmatpush1.bf16.msra.mxu0 %v1059
        %1380 = vmatprep.subr.bf16.mxu0 0
        %1381 = vmatpush1.bf16.msra.mxu0 %v1060
        %1382 = vmatprep.subr.bf16.mxu0 0
        %1383 = vmatpush1.bf16.msra.mxu0 %v1061
        %1384 = vmatprep.mubr.bf16.mxu0 %v645
        %1385 = vmatmul.mubr.bf16.gmra.mrb[0].mxu0 %v621
        %v1386 = vpop.f32.mrb[0].mxu0
        %v1387 = vadd.f32 %v1290, %v1386
        %v1388 = vpop.f32.mrb[0].mxu0
        %v1389 = vpop.f32.mrb[0].mxu0
        %v1390 = vadd.f32 %v1293, %v1389
        %v1391 = vpop.f32.mrb[0].mxu0
        %1392 = vmatprep.mubr.bf16.mxu0 %v646
        %1393 = vmatmul.mubr.bf16.gmra.mrb[0].mxu0 %v622
        %v1394 = vpop.f32.mrb[0].mxu0
        %v1395 = vadd.f32 %v1298, %v1394
        %v1396 = vpop.f32.mrb[0].mxu0
        %v1397 = vpop.f32.mrb[0].mxu0
        %v1398 = vadd.f32 %v1301, %v1397
        %v1399 = vpop.f32.mrb[0].mxu0
        %1400 = vmatprep.mubr.bf16.mxu0 %v647
        %1401 = vmatmul.mubr.bf16.gmra.mrb[0].mxu0 %v623
        %v1402 = vpop.f32.mrb[0].mxu0
        %v1403 = vadd.f32 %v1306, %v1402
        %v1404 = vpop.f32.mrb[0].mxu0
        %v1405 = vpop.f32.mrb[0].mxu0
        %v1406 = vadd.f32 %v1309, %v1405
        %v1407 = vpop.f32.mrb[0].mxu0
        %1408 = vmatprep.mubr.bf16.mxu0 %v648
        %1409 = vmatmul.mubr.bf16.gmra.mrb[0].mxu0 %v624
        %v1410 = vpop.f32.mrb[0].mxu0
        %v1411 = vadd.f32 %v1314, %v1410
        %v1412 = vpop.f32.mrb[0].mxu0
        %v1413 = vpop.f32.mrb[0].mxu0
        %v1414 = vadd.f32 %v1317, %v1413
        %v1415 = vpop.f32.mrb[0].mxu0
        %1416 = vmatprep.mubr.bf16.mxu0 %v649
        %1417 = vmatmul.mubr.bf16.gmra.mrb[0].mxu0 %v625
        %v1418 = vpop.f32.mrb[0].mxu0
        %v1419 = vadd.f32 %v1322, %v1418
        %v1420 = vpop.f32.mrb[0].mxu0
        %v1421 = vpop.f32.mrb[0].mxu0
        %v1422 = vadd.f32 %v1325, %v1421
        %v1423 = vpop.f32.mrb[0].mxu0
        %1424 = vmatprep.mubr.bf16.mxu0 %v650
        %1425 = vmatmul.mubr.bf16.gmra.mrb[0].mxu0 %v626
        %v1426 = vpop.f32.mrb[0].mxu0
        %v1427 = vadd.f32 %v1330, %v1426
        %v1428 = vpop.f32.mrb[0].mxu0
        %v1429 = vpop.f32.mrb[0].mxu0
        %v1430 = vadd.f32 %v1333, %v1429
        %v1431 = vpop.f32.mrb[0].mxu0
        %1432 = vmatprep.mubr.bf16.mxu0 %v651
        %1433 = vmatmul.mubr.bf16.gmra.mrb[0].mxu0 %v627
        %v1434 = vpop.f32.mrb[0].mxu0
        %v1435 = vadd.f32 %v1338, %v1434
        %v1436 = vpop.f32.mrb[0].mxu0
        %v1437 = vpop.f32.mrb[0].mxu0
        %v1438 = vadd.f32 %v1341, %v1437
        %v1439 = vpop.f32.mrb[0].mxu0
        %1440 = vmatprep.mubr.bf16.mxu0 %v652
        %1441 = vmatmul.mubr.bf16.gmra.mrb[0].mxu0 %v628
        %v1442 = vpop.f32.mrb[0].mxu0
        %v1443 = vadd.f32 %v1346, %v1442
        %v1444 = vpop.f32.mrb[0].mxu0
        %v1445 = vpop.f32.mrb[0].mxu0
        %v1446 = vadd.f32 %v1349, %v1445
        %v1447 = vpop.f32.mrb[0].mxu0
        %1448 = vdwg.mxu0
        %1449 = vmatprep.subr.bf16.mxu0 0
        %1450 = vmatpush1.bf16.msra.mxu0 %v1062
        %1451 = vmatprep.subr.bf16.mxu0 0
        %1452 = vmatpush1.bf16.msra.mxu0 %v1063
        %1453 = vmatprep.subr.bf16.mxu0 0
        %1454 = vmatpush1.bf16.msra.mxu0 %v1064
        %1455 = vmatprep.subr.bf16.mxu0 0
        %1456 = vmatpush1.bf16.msra.mxu0 %v1065
        %1457 = vmatprep.subr.bf16.mxu0 0
        %1458 = vmatpush1.bf16.msra.mxu0 %v1066
        %1459 = vmatprep.subr.bf16.mxu0 0
        %1460 = vmatpush1.bf16.msra.mxu0 %v1067
        %1461 = vmatprep.subr.bf16.mxu0 0
        %1462 = vmatpush1.bf16.msra.mxu0 %v1068
        %1463 = vmatprep.subr.bf16.mxu0 0
        %1464 = vmatpush1.bf16.msra.mxu0 %v1069
        %1465 = vmatprep.subr.bf16.mxu0 0
        %1466 = vmatpush1.bf16.msra.mxu0 %v1070
        %1467 = vmatprep.subr.bf16.mxu0 0
        %1468 = vmatpush1.bf16.msra.mxu0 %v1071
        %1469 = vmatprep.subr.bf16.mxu0 0
        %1470 = vmatpush1.bf16.msra.mxu0 %v1072
        %1471 = vmatprep.subr.bf16.mxu0 0
        %1472 = vmatpush1.bf16.msra.mxu0 %v1073
        %1473 = vmatprep.subr.bf16.mxu0 0
        %1474 = vmatpush1.bf16.msra.mxu0 %v1074
        %1475 = vmatprep.subr.bf16.mxu0 0
        %1476 = vmatpush1.bf16.msra.mxu0 %v1075
        %1477 = vmatprep.subr.bf16.mxu0 0
        %1478 = vmatpush1.bf16.msra.mxu0 %v1076
        %1479 = vmatprep.subr.bf16.mxu0 0
        %1480 = vmatpush1.bf16.msra.mxu0 %v1077
        %1481 = vmatprep.mubr.bf16.mxu0 %v694
        %1482 = vmatmul.mubr.bf16.gmra.mrb[0].mxu0 %v670
        %v1483 = vpop.f32.mrb[0].mxu0
        %v1484 = vadd.f32 %v1387, %v1483
        %v1485 = vpop.f32.mrb[0].mxu0
        %v1486 = vpop.f32.mrb[0].mxu0
        %v1487 = vadd.f32 %v1390, %v1486
        %v1488 = vpop.f32.mrb[0].mxu0
        %1489 = vmatprep.mubr.bf16.mxu0 %v695
        %1490 = vmatmul.mubr.bf16.gmra.mrb[0].mxu0 %v671
        %v1491 = vpop.f32.mrb[0].mxu0
        %v1492 = vadd.f32 %v1395, %v1491
        %v1493 = vpop.f32.mrb[0].mxu0
        %v1494 = vpop.f32.mrb[0].mxu0
        %v1495 = vadd.f32 %v1398, %v1494
        %v1496 = vpop.f32.mrb[0].mxu0
        %1497 = vmatprep.mubr.bf16.mxu0 %v696
        %1498 = vmatmul.mubr.bf16.gmra.mrb[0].mxu0 %v672
        %v1499 = vpop.f32.mrb[0].mxu0
        %v1500 = vadd.f32 %v1403, %v1499
        %v1501 = vpop.f32.mrb[0].mxu0
        %v1502 = vpop.f32.mrb[0].mxu0
        %v1503 = vadd.f32 %v1406, %v1502
        %v1504 = vpop.f32.mrb[0].mxu0
        %1505 = vmatprep.mubr.bf16.mxu0 %v697
        %1506 = vmatmul.mubr.bf16.gmra.mrb[0].mxu0 %v673
        %v1507 = vpop.f32.mrb[0].mxu0
        %v1508 = vadd.f32 %v1411, %v1507
        %v1509 = vpop.f32.mrb[0].mxu0
        %v1510 = vpop.f32.mrb[0].mxu0
        %v1511 = vadd.f32 %v1414, %v1510
        %v1512 = vpop.f32.mrb[0].mxu0
        %1513 = vmatprep.mubr.bf16.mxu0 %v698
        %1514 = vmatmul.mubr.bf16.gmra.mrb[0].mxu0 %v674
        %v1515 = vpop.f32.mrb[0].mxu0
        %v1516 = vadd.f32 %v1419, %v1515
        %v1517 = vpop.f32.mrb[0].mxu0
        %v1518 = vpop.f32.mrb[0].mxu0
        %v1519 = vadd.f32 %v1422, %v1518
        %v1520 = vpop.f32.mrb[0].mxu0
        %1521 = vmatprep.mubr.bf16.mxu0 %v699
        %1522 = vmatmul.mubr.bf16.gmra.mrb[0].mxu0 %v675
        %v1523 = vpop.f32.mrb[0].mxu0
        %v1524 = vadd.f32 %v1427, %v1523
        %v1525 = vpop.f32.mrb[0].mxu0
        %v1526 = vpop.f32.mrb[0].mxu0
        %v1527 = vadd.f32 %v1430, %v1526
        %v1528 = vpop.f32.mrb[0].mxu0
        %1529 = vmatprep.mubr.bf16.mxu0 %v700
        %1530 = vmatmul.mubr.bf16.gmra.mrb[0].mxu0 %v676
        %v1531 = vpop.f32.mrb[0].mxu0
        %v1532 = vadd.f32 %v1435, %v1531
        %v1533 = vpop.f32.mrb[0].mxu0
        %v1534 = vpop.f32.mrb[0].mxu0
        %v1535 = vadd.f32 %v1438, %v1534
        %v1536 = vpop.f32.mrb[0].mxu0
        %1537 = vmatprep.mubr.bf16.mxu0 %v701
        %1538 = vmatmul.mubr.bf16.gmra.mrb[0].mxu0 %v677
        %v1539 = vpop.f32.mrb[0].mxu0
        %v1540 = vadd.f32 %v1443, %v1539
        %v1541 = vpop.f32.mrb[0].mxu0
        %v1542 = vpop.f32.mrb[0].mxu0
        %v1543 = vadd.f32 %v1446, %v1542
        %v1544 = vpop.f32.mrb[0].mxu0
        %1545 = vdwg.mxu0
        %1546 = vmatprep.subr.bf16.mxu0 0
        %1547 = vmatpush1.bf16.msra.mxu0 %v1078
        %1548 = vmatprep.subr.bf16.mxu0 0
        %1549 = vmatpush1.bf16.msra.mxu0 %v1079
        %1550 = vmatprep.subr.bf16.mxu0 0
        %1551 = vmatpush1.bf16.msra.mxu0 %v1080
        %1552 = vmatprep.subr.bf16.mxu0 0
        %1553 = vmatpush1.bf16.msra.mxu0 %v1081
        %1554 = vmatprep.subr.bf16.mxu0 0
        %1555 = vmatpush1.bf16.msra.mxu0 %v1082
        %1556 = vmatprep.subr.bf16.mxu0 0
        %1557 = vmatpush1.bf16.msra.mxu0 %v1083
        %1558 = vmatprep.subr.bf16.mxu0 0
        %1559 = vmatpush1.bf16.msra.mxu0 %v1084
        %1560 = vmatprep.subr.bf16.mxu0 0
        %1561 = vmatpush1.bf16.msra.mxu0 %v1085
        %1562 = vmatprep.subr.bf16.mxu0 0
        %1563 = vmatpush1.bf16.msra.mxu0 0
        %1564 = vmatprep.subr.bf16.mxu0 0
        %1565 = vmatpush1.bf16.msra.mxu0 0
        %1566 = vmatprep.subr.bf16.mxu0 0
        %1567 = vmatpush1.bf16.msra.mxu0 0
        %1568 = vmatprep.subr.bf16.mxu0 0
        %1569 = vmatpush1.bf16.msra.mxu0 0
        %1570 = vmatprep.subr.bf16.mxu0 0
        %1571 = vmatpush1.bf16.msra.mxu0 0
        %1572 = vmatprep.subr.bf16.mxu0 0
        %1573 = vmatpush1.bf16.msra.mxu0 0
        %1574 = vmatprep.subr.bf16.mxu0 0
        %1575 = vmatpush1.bf16.msra.mxu0 0
        %1576 = vmatprep.subr.bf16.mxu0 0
        %1577 = vmatpush1.bf16.msra.mxu0 0
        %1578 = vmatprep.mubr.bf16.mxu0 0
        %1579 = vmatmul.mubr.bf16.gmra.mrb[0].mxu0 %v718
        %v1580 = vpop.f32.mrb[0].mxu0
        %v1581 = vadd.f32 %v1484, %v1580
        %v1582 = vpop.f32.mrb[0].mxu0
        %v1583 = vpop.f32.mrb[0].mxu0
        %v1584 = vadd.f32 %v1487, %v1583
        %v1585 = vpop.f32.mrb[0].mxu0
        %1586 = vmatprep.mubr.bf16.mxu0 0
        %1587 = vmatmul.mubr.bf16.gmra.mrb[0].mxu0 %v719
        %v1588 = vpop.f32.mrb[0].mxu0
        %v1589 = vadd.f32 %v1492, %v1588
        %v1590 = vpop.f32.mrb[0].mxu0
        %v1591 = vpop.f32.mrb[0].mxu0
        %v1592 = vadd.f32 %v1495, %v1591
        %v1593 = vpop.f32.mrb[0].mxu0
        %1594 = vmatprep.mubr.bf16.mxu0 0
        %1595 = vmatmul.mubr.bf16.gmra.mrb[0].mxu0 %v720
        %v1596 = vpop.f32.mrb[0].mxu0
        %v1597 = vadd.f32 %v1500, %v1596
        %v1598 = vpop.f32.mrb[0].mxu0
        %v1599 = vpop.f32.mrb[0].mxu0
        %v1600 = vadd.f32 %v1503, %v1599
        %v1601 = vpop.f32.mrb[0].mxu0
        %1602 = vmatprep.mubr.bf16.mxu0 0
        %1603 = vmatmul.mubr.bf16.gmra.mrb[0].mxu0 %v721
        %v1604 = vpop.f32.mrb[0].mxu0
        %v1605 = vadd.f32 %v1508, %v1604
        %v1606 = vpop.f32.mrb[0].mxu0
        %v1607 = vpop.f32.mrb[0].mxu0
        %v1608 = vadd.f32 %v1511, %v1607
        %v1609 = vpop.f32.mrb[0].mxu0
        %1610 = vmatprep.mubr.bf16.mxu0 0
        %1611 = vmatmul.mubr.bf16.gmra.mrb[0].mxu0 %v722
        %v1612 = vpop.f32.mrb[0].mxu0
        %v1613 = vadd.f32 %v1516, %v1612
        %v1614 = vpop.f32.mrb[0].mxu0
        %v1615 = vpop.f32.mrb[0].mxu0
        %v1616 = vadd.f32 %v1519, %v1615
        %v1617 = vpop.f32.mrb[0].mxu0
        %1618 = vmatprep.mubr.bf16.mxu0 0
        %1619 = vmatmul.mubr.bf16.gmra.mrb[0].mxu0 %v723
        %v1620 = vpop.f32.mrb[0].mxu0
        %v1621 = vadd.f32 %v1524, %v1620
        %v1622 = vpop.f32.mrb[0].mxu0
        %v1623 = vpop.f32.mrb[0].mxu0
        %v1624 = vadd.f32 %v1527, %v1623
        %v1625 = vpop.f32.mrb[0].mxu0
        %1626 = vmatprep.mubr.bf16.mxu0 0
        %1627 = vmatmul.mubr.bf16.gmra.mrb[0].mxu0 %v724
        %v1628 = vpop.f32.mrb[0].mxu0
        %v1629 = vadd.f32 %v1532, %v1628
        %v1630 = vpop.f32.mrb[0].mxu0
        %v1631 = vpop.f32.mrb[0].mxu0
        %v1632 = vadd.f32 %v1535, %v1631
        %v1633 = vpop.f32.mrb[0].mxu0
        %1634 = vmatprep.mubr.bf16.mxu0 0
        %1635 = vmatmul.mubr.bf16.gmra.mrb[0].mxu0 %v725
        %v1636 = vpop.f32.mrb[0].mxu0
        %v1637 = vadd.f32 %v1540, %v1636
        %v1638 = vpop.f32.mrb[0].mxu0
        %v1639 = vpop.f32.mrb[0].mxu0
        %v1640 = vadd.f32 %v1543, %v1639
        %v1641 = vpop.f32.mrb[0].mxu0
        %1642 = vdwg.mxu0
        %v1644 = vlaneseq
        %v1645 = vshrl.u32 %v1644, 7
        %v1646 = vsub.s32 0, %v1645
        %v1647 = vrot.slane %v473, %v1646
        %v1649 = vmul.f32 %v1581, %v1647
        %v1650 = vmul.f32 %v1584, %v1647
        %v1651 = vmul.f32 %v1589, %v1647
        %v1652 = vmul.f32 %v1592, %v1647
        %v1653 = vmul.f32 %v1597, %v1647
        %v1654 = vmul.f32 %v1600, %v1647
        %v1655 = vmul.f32 %v1605, %v1647
        %v1656 = vmul.f32 %v1608, %v1647
        %v1657 = vmul.f32 %v1613, %v1647
        %v1658 = vmul.f32 %v1616, %v1647
        %v1659 = vmul.f32 %v1621, %v1647
        %v1660 = vmul.f32 %v1624, %v1647
        %v1661 = vmul.f32 %v1629, %v1647
        %v1662 = vmul.f32 %v1632, %v1647
        %v1663 = vmul.f32 %v1637, %v1647
        %v1664 = vmul.f32 %v1640, %v1647
        %v1666 = vlaneseq
        %v1667 = vshrl.u32 %v1666, 7
        %v1668 = vsub.s32 0, %v1667
        %v1669 = vrot.slane %v474, %v1668
        %v1671 = vadd.f32 %v1649, %v1669
        %v1672 = vadd.f32 %v1650, %v1669
        %v1673 = vadd.f32 %v1651, %v1669
        %v1674 = vadd.f32 %v1652, %v1669
        %v1675 = vadd.f32 %v1653, %v1669
        %v1676 = vadd.f32 %v1654, %v1669
        %v1677 = vadd.f32 %v1655, %v1669
        %v1678 = vadd.f32 %v1656, %v1669
        %v1679 = vadd.f32 %v1657, %v1669
        %v1680 = vadd.f32 %v1658, %v1669
        %v1681 = vadd.f32 %v1659, %v1669
        %v1682 = vadd.f32 %v1660, %v1669
        %v1683 = vadd.f32 %v1661, %v1669
        %v1684 = vadd.f32 %v1662, %v1669
        %v1685 = vadd.f32 %v1663, %v1669
        %v1686 = vadd.f32 %v1664, %v1669
        %v1687 = vadd.f32 %v1671, %v492
        %v1688 = vadd.f32 %v1672, %v493
        %v1689 = vadd.f32 %v1673, %v494
        %v1690 = vadd.f32 %v1674, %v495
        %v1691 = vadd.f32 %v1675, %v496
        %v1692 = vadd.f32 %v1676, %v497
        %v1693 = vadd.f32 %v1677, %v498
        %v1694 = vadd.f32 %v1678, %v499
        %v1695 = vadd.f32 %v1679, %v500
        %v1696 = vadd.f32 %v1680, %v501
        %v1697 = vadd.f32 %v1681, %v502
        %v1698 = vadd.f32 %v1682, %v503
        %v1699 = vadd.f32 %v1683, %v504
        %v1700 = vadd.f32 %v1684, %v505
        %v1701 = vadd.f32 %v1685, %v506
        %v1702 = vadd.f32 %v1686, %v507
        %v1703 = vmax.f32 %v1687, 0.0
        %v1704 = vmax.f32 %v1688, 0.0
        %v1705 = vmax.f32 %v1689, 0.0
        %v1706 = vmax.f32 %v1690, 0.0
        %v1707 = vmax.f32 %v1691, 0.0
        %v1708 = vmax.f32 %v1692, 0.0
        %v1709 = vmax.f32 %v1693, 0.0
        %v1710 = vmax.f32 %v1694, 0.0
        %v1711 = vmax.f32 %v1695, 0.0
        %v1712 = vmax.f32 %v1696, 0.0
        %v1713 = vmax.f32 %v1697, 0.0
        %v1714 = vmax.f32 %v1698, 0.0
        %v1715 = vmax.f32 %v1699, 0.0
        %v1716 = vmax.f32 %v1700, 0.0
        %v1717 = vmax.f32 %v1701, 0.0
        %v1718 = vmax.f32 %v1702, 0.0
        %1719 = vst [vmem:[%s491 + $0x1] sm:$0xff] %v1703
        %1720 = vst [vmem:[%s491 + $0x11] sm:$0xff] %v1704
        %1721 = vst [vmem:[%s491 + $0x21] sm:$0xff] %v1705
        %1722 = vst [vmem:[%s491 + $0x31] sm:$0xff] %v1706
        %1723 = vst [vmem:[%s491 + $0x41] sm:$0xff] %v1707
        %1724 = vst [vmem:[%s491 + $0x51] sm:$0xff] %v1708
        %1725 = vst [vmem:[%s491 + $0x61] sm:$0xff] %v1709
        %1726 = vst [vmem:[%s491 + $0x71] sm:$0xff] %v1710
        %1727 = vst [vmem:[%s491 + $0xa1] sm:$0xff] %v1711
        %1728 = vst [vmem:[%s491 + $0xb1] sm:$0xff] %v1712
        %1729 = vst [vmem:[%s491 + $0xc1] sm:$0xff] %v1713
        %1730 = vst [vmem:[%s491 + $0xd1] sm:$0xff] %v1714
        %1731 = vst [vmem:[%s491 + $0xe1] sm:$0xff] %v1715
        %1732 = vst [vmem:[%s491 + $0xf1] sm:$0xff] %v1716
        %1733 = vst [vmem:[%s491 + $0x101] sm:$0xff] %v1717
        %1734 = vst [vmem:[%s491 + $0x111] sm:$0xff] %v1718
      $region44: #{_lambda_.2} parent=35 // pred_fallthru
        _
      %p1735 = scmp.ne.s32.totalorder %s486, 0
      // Predicated region
      $region45: #{_lambda_.2} parent=35 // pred_check
        %p1736 = pneg %p1735
      $region46: #{_lambda_.2} parent=35 // pred_check_branch
        %1738 = sbr.rel (%p1736) target = $region48
      $region47: #{_lambda_.2} parent=35 // pred_region
        %v1739 = vld [vmem:[#allocation2] sm:$0xff]
        %v1740 = vld [vmem:[#allocation2 + $0x10] sm:$0xff]
        %v1741 = vld [vmem:[#allocation2 + $0x20] sm:$0xff]
        %v1742 = vld [vmem:[#allocation2 + $0x30] sm:$0xff]
        %v1743 = vld [vmem:[#allocation2 + $0x40] sm:$0xff]
        %v1744 = vld [vmem:[#allocation2 + $0x50] sm:$0xff]
        %v1745 = vld [vmem:[#allocation2 + $0x60] sm:$0xff]
        %v1746 = vld [vmem:[#allocation2 + $0x70] sm:$0xff]
        %v1747 = vld [vmem:[#allocation2 + $0xa0] sm:$0xff]
        %v1748 = vld [vmem:[#allocation2 + $0xb0] sm:$0xff]
        %v1749 = vld [vmem:[#allocation2 + $0xc0] sm:$0xff]
        %v1750 = vld [vmem:[#allocation2 + $0xd0] sm:$0xff]
        %v1751 = vld [vmem:[#allocation2 + $0xe0] sm:$0xff]
        %v1752 = vld [vmem:[#allocation2 + $0xf0] sm:$0xff]
        %v1753 = vld [vmem:[#allocation2 + $0x100] sm:$0xff]
        %v1754 = vld [vmem:[#allocation2 + $0x110] sm:$0xff]
        %v1755 = vpack.c.bf16 %v1740, %v1739
        %v1756 = vpack.c.bf16 %v1742, %v1741
        %v1757 = vpack.c.bf16 %v1744, %v1743
        %v1758 = vpack.c.bf16 %v1746, %v1745
        %v1759 = vpack.c.bf16 %v1748, %v1747
        %v1760 = vpack.c.bf16 %v1750, %v1749
        %v1761 = vpack.c.bf16 %v1752, %v1751
        %v1762 = vpack.c.bf16 %v1754, %v1753
        %v1763 = vld [vmem:[#allocation2 + $0x1] sm:$0xff]
        %v1764 = vld [vmem:[#allocation2 + $0x11] sm:$0xff]
        %v1765 = vld [vmem:[#allocation2 + $0x21] sm:$0xff]
        %v1766 = vld [vmem:[#allocation2 + $0x31] sm:$0xff]
        %v1767 = vld [vmem:[#allocation2 + $0x41] sm:$0xff]
        %v1768 = vld [vmem:[#allocation2 + $0x51] sm:$0xff]
        %v1769 = vld [vmem:[#allocation2 + $0x61] sm:$0xff]
        %v1770 = vld [vmem:[#allocation2 + $0x71] sm:$0xff]
        %v1771 = vld [vmem:[#allocation2 + $0xa1] sm:$0xff]
        %v1772 = vld [vmem:[#allocation2 + $0xb1] sm:$0xff]
        %v1773 = vld [vmem:[#allocation2 + $0xc1] sm:$0xff]
        %v1774 = vld [vmem:[#allocation2 + $0xd1] sm:$0xff]
        %v1775 = vld [vmem:[#allocation2 + $0xe1] sm:$0xff]
        %v1776 = vld [vmem:[#allocation2 + $0xf1] sm:$0xff]
        %v1777 = vld [vmem:[#allocation2 + $0x101] sm:$0xff]
        %v1778 = vld [vmem:[#allocation2 + $0x111] sm:$0xff]
        %v1779 = vpack.c.bf16 %v1764, %v1763
        %v1780 = vpack.c.bf16 %v1766, %v1765
        %v1781 = vpack.c.bf16 %v1768, %v1767
        %v1782 = vpack.c.bf16 %v1770, %v1769
        %v1783 = vpack.c.bf16 %v1772, %v1771
        %v1784 = vpack.c.bf16 %v1774, %v1773
        %v1785 = vpack.c.bf16 %v1776, %v1775
        %v1786 = vpack.c.bf16 %v1778, %v1777
        %v1787 = vld [vmem:[#allocation2 + $0x2] sm:$0xff]
        %v1788 = vld [vmem:[#allocation2 + $0x12] sm:$0xff]
        %v1789 = vld [vmem:[#allocation2 + $0x22] sm:$0xff]
        %v1790 = vld [vmem:[#allocation2 + $0x32] sm:$0xff]
        %v1791 = vld [vmem:[#allocation2 + $0x42] sm:$0xff]
        %v1792 = vld [vmem:[#allocation2 + $0x52] sm:$0xff]
        %v1793 = vld [vmem:[#allocation2 + $0x62] sm:$0xff]
        %v1794 = vld [vmem:[#allocation2 + $0x72] sm:$0xff]
        %v1795 = vld [vmem:[#allocation2 + $0xa2] sm:$0xff]
        %v1796 = vld [vmem:[#allocation2 + $0xb2] sm:$0xff]
        %v1797 = vld [vmem:[#allocation2 + $0xc2] sm:$0xff]
        %v1798 = vld [vmem:[#allocation2 + $0xd2] sm:$0xff]
        %v1799 = vld [vmem:[#allocation2 + $0xe2] sm:$0xff]
        %v1800 = vld [vmem:[#allocation2 + $0xf2] sm:$0xff]
        %v1801 = vld [vmem:[#allocation2 + $0x102] sm:$0xff]
        %v1802 = vld [vmem:[#allocation2 + $0x112] sm:$0xff]
        %v1803 = vpack.c.bf16 %v1788, %v1787
        %v1804 = vpack.c.bf16 %v1790, %v1789
        %v1805 = vpack.c.bf16 %v1792, %v1791
        %v1806 = vpack.c.bf16 %v1794, %v1793
        %v1807 = vpack.c.bf16 %v1796, %v1795
        %v1808 = vpack.c.bf16 %v1798, %v1797
        %v1809 = vpack.c.bf16 %v1800, %v1799
        %v1810 = vpack.c.bf16 %v1802, %v1801
        %s1811 = scalar_lea.vmem [#allocation2], 16
        %v1812 = vld [vmem:[%s1811] sm:$0xff]
        %v1813 = vld [vmem:[%s1811 + $0x10] sm:$0xff]
        %v1814 = vld [vmem:[%s1811 + $0x20] sm:$0xff]
        %v1815 = vld [vmem:[%s1811 + $0x30] sm:$0xff]
        %v1816 = vld [vmem:[%s1811 + $0x40] sm:$0xff]
        %v1817 = vld [vmem:[%s1811 + $0x50] sm:$0xff]
        %v1818 = vld [vmem:[%s1811 + $0x60] sm:$0xff]
        %v1819 = vld [vmem:[%s1811 + $0x70] sm:$0xff]
        %v1820 = vld [vmem:[%s1811 + $0xa0] sm:$0xff]
        %v1821 = vld [vmem:[%s1811 + $0xb0] sm:$0xff]
        %v1822 = vld [vmem:[%s1811 + $0xc0] sm:$0xff]
        %v1823 = vld [vmem:[%s1811 + $0xd0] sm:$0xff]
        %v1824 = vld [vmem:[%s1811 + $0xe0] sm:$0xff]
        %v1825 = vld [vmem:[%s1811 + $0xf0] sm:$0xff]
        %v1826 = vld [vmem:[%s1811 + $0x100] sm:$0xff]
        %v1827 = vld [vmem:[%s1811 + $0x110] sm:$0xff]
        %v1828 = vpack.c.bf16 %v1813, %v1812
        %v1829 = vpack.c.bf16 %v1815, %v1814
        %v1830 = vpack.c.bf16 %v1817, %v1816
        %v1831 = vpack.c.bf16 %v1819, %v1818
        %v1832 = vpack.c.bf16 %v1821, %v1820
        %v1833 = vpack.c.bf16 %v1823, %v1822
        %v1834 = vpack.c.bf16 %v1825, %v1824
        %v1835 = vpack.c.bf16 %v1827, %v1826
        %v1836 = vld [vmem:[%s1811 + $0x1] sm:$0xff]
        %v1837 = vld [vmem:[%s1811 + $0x11] sm:$0xff]
        %v1838 = vld [vmem:[%s1811 + $0x21] sm:$0xff]
        %v1839 = vld [vmem:[%s1811 + $0x31] sm:$0xff]
        %v1840 = vld [vmem:[%s1811 + $0x41] sm:$0xff]
        %v1841 = vld [vmem:[%s1811 + $0x51] sm:$0xff]
        %v1842 = vld [vmem:[%s1811 + $0x61] sm:$0xff]
        %v1843 = vld [vmem:[%s1811 + $0x71] sm:$0xff]
        %v1844 = vld [vmem:[%s1811 + $0xa1] sm:$0xff]
        %v1845 = vld [vmem:[%s1811 + $0xb1] sm:$0xff]
        %v1846 = vld [vmem:[%s1811 + $0xc1] sm:$0xff]
        %v1847 = vld [vmem:[%s1811 + $0xd1] sm:$0xff]
        %v1848 = vld [vmem:[%s1811 + $0xe1] sm:$0xff]
        %v1849 = vld [vmem:[%s1811 + $0xf1] sm:$0xff]
        %v1850 = vld [vmem:[%s1811 + $0x101] sm:$0xff]
        %v1851 = vld [vmem:[%s1811 + $0x111] sm:$0xff]
        %v1852 = vpack.c.bf16 %v1837, %v1836
        %v1853 = vpack.c.bf16 %v1839, %v1838
        %v1854 = vpack.c.bf16 %v1841, %v1840
        %v1855 = vpack.c.bf16 %v1843, %v1842
        %v1856 = vpack.c.bf16 %v1845, %v1844
        %v1857 = vpack.c.bf16 %v1847, %v1846
        %v1858 = vpack.c.bf16 %v1849, %v1848
        %v1859 = vpack.c.bf16 %v1851, %v1850
        %v1860 = vld [vmem:[%s1811 + $0x2] sm:$0xff]
        %v1861 = vld [vmem:[%s1811 + $0x12] sm:$0xff]
        %v1862 = vld [vmem:[%s1811 + $0x22] sm:$0xff]
        %v1863 = vld [vmem:[%s1811 + $0x32] sm:$0xff]
        %v1864 = vld [vmem:[%s1811 + $0x42] sm:$0xff]
        %v1865 = vld [vmem:[%s1811 + $0x52] sm:$0xff]
        %v1866 = vld [vmem:[%s1811 + $0x62] sm:$0xff]
        %v1867 = vld [vmem:[%s1811 + $0x72] sm:$0xff]
        %v1868 = vld [vmem:[%s1811 + $0xa2] sm:$0xff]
        %v1869 = vld [vmem:[%s1811 + $0xb2] sm:$0xff]
        %v1870 = vld [vmem:[%s1811 + $0xc2] sm:$0xff]
        %v1871 = vld [vmem:[%s1811 + $0xd2] sm:$0xff]
        %v1872 = vld [vmem:[%s1811 + $0xe2] sm:$0xff]
        %v1873 = vld [vmem:[%s1811 + $0xf2] sm:$0xff]
        %v1874 = vld [vmem:[%s1811 + $0x102] sm:$0xff]
        %v1875 = vld [vmem:[%s1811 + $0x112] sm:$0xff]
        %v1876 = vpack.c.bf16 %v1861, %v1860
        %v1877 = vpack.c.bf16 %v1863, %v1862
        %v1878 = vpack.c.bf16 %v1865, %v1864
        %v1879 = vpack.c.bf16 %v1867, %v1866
        %v1880 = vpack.c.bf16 %v1869, %v1868
        %v1881 = vpack.c.bf16 %v1871, %v1870
        %v1882 = vpack.c.bf16 %v1873, %v1872
        %v1883 = vpack.c.bf16 %v1875, %v1874
        %s1884 = scalar_lea.vmem [#allocation2], 32
        %v1885 = vld [vmem:[%s1884] sm:$0xff]
        %v1886 = vld [vmem:[%s1884 + $0x10] sm:$0xff]
        %v1887 = vld [vmem:[%s1884 + $0x20] sm:$0xff]
        %v1888 = vld [vmem:[%s1884 + $0x30] sm:$0xff]
        %v1889 = vld [vmem:[%s1884 + $0x40] sm:$0xff]
        %v1890 = vld [vmem:[%s1884 + $0x50] sm:$0xff]
        %v1891 = vld [vmem:[%s1884 + $0x60] sm:$0xff]
        %v1892 = vld [vmem:[%s1884 + $0x70] sm:$0xff]
        %v1893 = vld [vmem:[%s1884 + $0xa0] sm:$0xff]
        %v1894 = vld [vmem:[%s1884 + $0xb0] sm:$0xff]
        %v1895 = vld [vmem:[%s1884 + $0xc0] sm:$0xff]
        %v1896 = vld [vmem:[%s1884 + $0xd0] sm:$0xff]
        %v1897 = vld [vmem:[%s1884 + $0xe0] sm:$0xff]
        %v1898 = vld [vmem:[%s1884 + $0xf0] sm:$0xff]
        %v1899 = vld [vmem:[%s1884 + $0x100] sm:$0xff]
        %v1900 = vld [vmem:[%s1884 + $0x110] sm:$0xff]
        %v1901 = vpack.c.bf16 %v1886, %v1885
        %v1902 = vpack.c.bf16 %v1888, %v1887
        %v1903 = vpack.c.bf16 %v1890, %v1889
        %v1904 = vpack.c.bf16 %v1892, %v1891
        %v1905 = vpack.c.bf16 %v1894, %v1893
        %v1906 = vpack.c.bf16 %v1896, %v1895
        %v1907 = vpack.c.bf16 %v1898, %v1897
        %v1908 = vpack.c.bf16 %v1900, %v1899
        %v1909 = vld [vmem:[%s1884 + $0x1] sm:$0xff]
        %v1910 = vld [vmem:[%s1884 + $0x11] sm:$0xff]
        %v1911 = vld [vmem:[%s1884 + $0x21] sm:$0xff]
        %v1912 = vld [vmem:[%s1884 + $0x31] sm:$0xff]
        %v1913 = vld [vmem:[%s1884 + $0x41] sm:$0xff]
        %v1914 = vld [vmem:[%s1884 + $0x51] sm:$0xff]
        %v1915 = vld [vmem:[%s1884 + $0x61] sm:$0xff]
        %v1916 = vld [vmem:[%s1884 + $0x71] sm:$0xff]
        %v1917 = vld [vmem:[%s1884 + $0xa1] sm:$0xff]
        %v1918 = vld [vmem:[%s1884 + $0xb1] sm:$0xff]
        %v1919 = vld [vmem:[%s1884 + $0xc1] sm:$0xff]
        %v1920 = vld [vmem:[%s1884 + $0xd1] sm:$0xff]
        %v1921 = vld [vmem:[%s1884 + $0xe1] sm:$0xff]
        %v1922 = vld [vmem:[%s1884 + $0xf1] sm:$0xff]
        %v1923 = vld [vmem:[%s1884 + $0x101] sm:$0xff]
        %v1924 = vld [vmem:[%s1884 + $0x111] sm:$0xff]
        %v1925 = vpack.c.bf16 %v1910, %v1909
        %v1926 = vpack.c.bf16 %v1912, %v1911
        %v1927 = vpack.c.bf16 %v1914, %v1913
        %v1928 = vpack.c.bf16 %v1916, %v1915
        %v1929 = vpack.c.bf16 %v1918, %v1917
        %v1930 = vpack.c.bf16 %v1920, %v1919
        %v1931 = vpack.c.bf16 %v1922, %v1921
        %v1932 = vpack.c.bf16 %v1924, %v1923
        %v1933 = vld [vmem:[%s1884 + $0x2] sm:$0xff]
        %v1934 = vld [vmem:[%s1884 + $0x12] sm:$0xff]
        %v1935 = vld [vmem:[%s1884 + $0x22] sm:$0xff]
        %v1936 = vld [vmem:[%s1884 + $0x32] sm:$0xff]
        %v1937 = vld [vmem:[%s1884 + $0x42] sm:$0xff]
        %v1938 = vld [vmem:[%s1884 + $0x52] sm:$0xff]
        %v1939 = vld [vmem:[%s1884 + $0x62] sm:$0xff]
        %v1940 = vld [vmem:[%s1884 + $0x72] sm:$0xff]
        %v1941 = vld [vmem:[%s1884 + $0xa2] sm:$0xff]
        %v1942 = vld [vmem:[%s1884 + $0xb2] sm:$0xff]
        %v1943 = vld [vmem:[%s1884 + $0xc2] sm:$0xff]
        %v1944 = vld [vmem:[%s1884 + $0xd2] sm:$0xff]
        %v1945 = vld [vmem:[%s1884 + $0xe2] sm:$0xff]
        %v1946 = vld [vmem:[%s1884 + $0xf2] sm:$0xff]
        %v1947 = vld [vmem:[%s1884 + $0x102] sm:$0xff]
        %v1948 = vld [vmem:[%s1884 + $0x112] sm:$0xff]
        %v1949 = vpack.c.bf16 %v1934, %v1933
        %v1950 = vpack.c.bf16 %v1936, %v1935
        %v1951 = vpack.c.bf16 %v1938, %v1937
        %v1952 = vpack.c.bf16 %v1940, %v1939
        %v1953 = vpack.c.bf16 %v1942, %v1941
        %v1954 = vpack.c.bf16 %v1944, %v1943
        %v1955 = vpack.c.bf16 %v1946, %v1945
        %v1956 = vpack.c.bf16 %v1948, %v1947
        %v2101 = vunpack.c.l.b16 %v329
        %v2102 = vunpack.c.l.b16 %v330
        %v2103 = vunpack.c.l.b16 %v331
        %v2104 = vunpack.c.l.b16 %v332
        %v2105 = vunpack.c.l.b16 %v333
        %v2106 = vunpack.c.l.b16 %v334
        %v2107 = vunpack.c.l.b16 %v335
        %v2108 = vunpack.c.l.b16 %v336
        %v2109 = vunpack.c.l.b16 %v337
        %v2110 = vunpack.c.l.b16 %v338
        %v2111 = vunpack.c.l.b16 %v339
        %v2112 = vunpack.c.l.b16 %v340
        %v2113 = vunpack.c.l.b16 %v341
        %v2114 = vunpack.c.l.b16 %v342
        %v2115 = vunpack.c.l.b16 %v343
        %v2116 = vunpack.c.l.b16 %v344
        %v2117 = vunpack.c.l.b16 %v345
        %v2118 = vunpack.c.l.b16 %v346
        %v2119 = vunpack.c.l.b16 %v347
        %v2120 = vunpack.c.l.b16 %v348
        %v2121 = vunpack.c.l.b16 %v349
        %v2122 = vunpack.c.l.b16 %v350
        %v2123 = vunpack.c.l.b16 %v351
        %v2124 = vunpack.c.l.b16 %v352
        %v2125 = vunpack.c.l.b16 %v353
        %v2126 = vunpack.c.l.b16 %v354
        %v2127 = vunpack.c.l.b16 %v355
        %v2128 = vunpack.c.l.b16 %v356
        %v2129 = vunpack.c.l.b16 %v357
        %v2130 = vunpack.c.l.b16 %v358
        %v2131 = vunpack.c.l.b16 %v359
        %v2132 = vunpack.c.l.b16 %v360
        %v2133 = vunpack.c.l.b16 %v361
        %v2134 = vunpack.c.l.b16 %v362
        %v2135 = vunpack.c.l.b16 %v363
        %v2136 = vunpack.c.l.b16 %v364
        %v2137 = vunpack.c.l.b16 %v365
        %v2138 = vunpack.c.l.b16 %v366
        %v2139 = vunpack.c.l.b16 %v367
        %v2140 = vunpack.c.l.b16 %v368
        %v2141 = vunpack.c.l.b16 %v369
        %v2142 = vunpack.c.l.b16 %v370
        %v2143 = vunpack.c.l.b16 %v371
        %v2144 = vunpack.c.l.b16 %v372
        %v2145 = vunpack.c.l.b16 %v373
        %v2146 = vunpack.c.l.b16 %v374
        %v2147 = vunpack.c.l.b16 %v375
        %v2148 = vunpack.c.l.b16 %v376
        %v2149 = vunpack.c.l.b16 %v377
        %v2150 = vunpack.c.l.b16 %v378
        %v2151 = vunpack.c.l.b16 %v379
        %v2152 = vunpack.c.l.b16 %v380
        %v2153 = vunpack.c.l.b16 %v381
        %v2154 = vunpack.c.l.b16 %v382
        %v2155 = vunpack.c.l.b16 %v383
        %v2156 = vunpack.c.l.b16 %v384
        %v2157 = vunpack.c.l.b16 %v385
        %v2158 = vunpack.c.l.b16 %v386
        %v2159 = vunpack.c.l.b16 %v387
        %v2160 = vunpack.c.l.b16 %v388
        %v2161 = vunpack.c.l.b16 %v389
        %v2162 = vunpack.c.l.b16 %v390
        %v2163 = vunpack.c.l.b16 %v391
        %v2164 = vunpack.c.l.b16 %v392
        %v2165 = vunpack.c.l.b16 %v393
        %v2166 = vunpack.c.l.b16 %v394
        %v2167 = vunpack.c.l.b16 %v395
        %v2168 = vunpack.c.l.b16 %v396
        %v2169 = vunpack.c.l.b16 %v397
        %v2170 = vunpack.c.l.b16 %v398
        %v2171 = vunpack.c.l.b16 %v399
        %v2172 = vunpack.c.l.b16 %v400
        %v2173 = vunpack.c.l.b16 %v401
        %v2174 = vunpack.c.l.b16 %v402
        %v2175 = vunpack.c.l.b16 %v403
        %v2176 = vunpack.c.l.b16 %v404
        %v2177 = vunpack.c.l.b16 %v405
        %v2178 = vunpack.c.l.b16 %v406
        %v2179 = vunpack.c.l.b16 %v407
        %v2180 = vunpack.c.l.b16 %v408
        %v2181 = vunpack.c.l.b16 %v409
        %v2182 = vunpack.c.l.b16 %v410
        %v2183 = vunpack.c.l.b16 %v411
        %v2184 = vunpack.c.l.b16 %v412
        %v2185 = vunpack.c.l.b16 %v413
        %v2186 = vunpack.c.l.b16 %v414
        %v2187 = vunpack.c.l.b16 %v415
        %v2188 = vunpack.c.l.b16 %v416
        %v2189 = vunpack.c.l.b16 %v417
        %v2190 = vunpack.c.l.b16 %v418
        %v2191 = vunpack.c.l.b16 %v419
        %v2192 = vunpack.c.l.b16 %v420
        %v2193 = vunpack.c.l.b16 %v421
        %v2194 = vunpack.c.l.b16 %v422
        %v2195 = vunpack.c.l.b16 %v423
        %v2196 = vunpack.c.l.b16 %v424
        %v2197 = vunpack.c.l.b16 %v425
        %v2198 = vunpack.c.l.b16 %v426
        %v2199 = vunpack.c.l.b16 %v427
        %v2200 = vunpack.c.l.b16 %v428
        %v2201 = vunpack.c.l.b16 %v429
        %v2202 = vunpack.c.l.b16 %v430
        %v2203 = vunpack.c.l.b16 %v431
        %v2204 = vunpack.c.l.b16 %v432
        %v2205 = vunpack.c.l.b16 %v433
        %v2206 = vunpack.c.l.b16 %v434
        %v2207 = vunpack.c.l.b16 %v435
        %v2208 = vunpack.c.l.b16 %v436
        %v2209 = vunpack.c.l.b16 %v437
        %v2210 = vunpack.c.l.b16 %v438
        %v2211 = vunpack.c.l.b16 %v439
        %v2212 = vunpack.c.l.b16 %v440
        %v2213 = vunpack.c.l.b16 %v441
        %v2214 = vunpack.c.l.b16 %v442
        %v2215 = vunpack.c.l.b16 %v443
        %v2216 = vunpack.c.l.b16 %v444
        %v2217 = vunpack.c.l.b16 %v445
        %v2218 = vunpack.c.l.b16 %v446
        %v2219 = vunpack.c.l.b16 %v447
        %v2220 = vunpack.c.l.b16 %v448
        %v2221 = vunpack.c.l.b16 %v449
        %v2222 = vunpack.c.l.b16 %v450
        %v2223 = vunpack.c.l.b16 %v451
        %v2224 = vunpack.c.l.b16 %v452
        %v2225 = vunpack.c.l.b16 %v453
        %v2226 = vunpack.c.l.b16 %v454
        %v2227 = vunpack.c.l.b16 %v455
        %v2228 = vunpack.c.l.b16 %v456
        %v2229 = vunpack.c.l.b16 %v457
        %v2230 = vunpack.c.l.b16 %v458
        %v2231 = vunpack.c.l.b16 %v459
        %v2232 = vunpack.c.l.b16 %v460
        %v2233 = vunpack.c.l.b16 %v461
        %v2234 = vunpack.c.l.b16 %v462
        %v2235 = vunpack.c.l.b16 %v463
        %v2236 = vunpack.c.l.b16 %v464
        %v2237 = vunpack.c.l.b16 %v465
        %v2238 = vunpack.c.l.b16 %v466
        %v2239 = vunpack.c.l.b16 %v467
        %v2240 = vunpack.c.l.b16 %v468
        %v2241 = vunpack.c.l.b16 %v469
        %v2242 = vunpack.c.l.b16 %v470
        %v2243 = vunpack.c.l.b16 %v471
        %v2244 = vunpack.c.l.b16 %v472
        %v2245 = vpack.c.b16 %v2102, %v2101
        %v2246 = vpack.c.b16 %v2104, %v2103
        %v2247 = vpack.c.b16 %v2106, %v2105
        %v2248 = vpack.c.b16 %v2108, %v2107
        %v2249 = vpack.c.b16 %v2110, %v2109
        %v2250 = vpack.c.b16 %v2112, %v2111
        %v2251 = vpack.c.b16 %v2114, %v2113
        %v2252 = vpack.c.b16 %v2116, %v2115
        %v2253 = vpack.c.b16 %v2118, %v2117
        %v2254 = vpack.c.b16 %v2120, %v2119
        %v2255 = vpack.c.b16 %v2122, %v2121
        %v2256 = vpack.c.b16 %v2124, %v2123
        %v2257 = vpack.c.b16 %v2126, %v2125
        %v2258 = vpack.c.b16 %v2128, %v2127
        %v2259 = vpack.c.b16 %v2130, %v2129
        %v2260 = vpack.c.b16 %v2132, %v2131
        %v2261 = vpack.c.b16 %v2134, %v2133
        %v2262 = vpack.c.b16 %v2136, %v2135
        %v2263 = vpack.c.b16 %v2138, %v2137
        %v2264 = vpack.c.b16 %v2140, %v2139
        %v2265 = vpack.c.b16 %v2142, %v2141
        %v2266 = vpack.c.b16 %v2144, %v2143
        %v2267 = vpack.c.b16 %v2146, %v2145
        %v2268 = vpack.c.b16 %v2148, %v2147
        %v2269 = vpack.c.b16 %v2150, %v2149
        %v2270 = vpack.c.b16 %v2152, %v2151
        %v2271 = vpack.c.b16 %v2154, %v2153
        %v2272 = vpack.c.b16 %v2156, %v2155
        %v2273 = vpack.c.b16 %v2158, %v2157
        %v2274 = vpack.c.b16 %v2160, %v2159
        %v2275 = vpack.c.b16 %v2162, %v2161
        %v2276 = vpack.c.b16 %v2164, %v2163
        %v2277 = vpack.c.b16 %v2166, %v2165
        %v2278 = vpack.c.b16 %v2168, %v2167
        %v2279 = vpack.c.b16 %v2170, %v2169
        %v2280 = vpack.c.b16 %v2172, %v2171
        %v2281 = vpack.c.b16 %v2174, %v2173
        %v2282 = vpack.c.b16 %v2176, %v2175
        %v2283 = vpack.c.b16 %v2178, %v2177
        %v2284 = vpack.c.b16 %v2180, %v2179
        %v2285 = vpack.c.b16 %v2182, %v2181
        %v2286 = vpack.c.b16 %v2184, %v2183
        %v2287 = vpack.c.b16 %v2186, %v2185
        %v2288 = vpack.c.b16 %v2188, %v2187
        %v2289 = vpack.c.b16 %v2190, %v2189
        %v2290 = vpack.c.b16 %v2192, %v2191
        %v2291 = vpack.c.b16 %v2194, %v2193
        %v2292 = vpack.c.b16 %v2196, %v2195
        %v2293 = vpack.c.b16 %v2198, %v2197
        %v2294 = vpack.c.b16 %v2200, %v2199
        %v2295 = vpack.c.b16 %v2202, %v2201
        %v2296 = vpack.c.b16 %v2204, %v2203
        %v2297 = vpack.c.b16 %v2206, %v2205
        %v2298 = vpack.c.b16 %v2208, %v2207
        %v2299 = vpack.c.b16 %v2210, %v2209
        %v2300 = vpack.c.b16 %v2212, %v2211
        %v2301 = vpack.c.b16 %v2214, %v2213
        %v2302 = vpack.c.b16 %v2216, %v2215
        %v2303 = vpack.c.b16 %v2218, %v2217
        %v2304 = vpack.c.b16 %v2220, %v2219
        %v2305 = vpack.c.b16 %v2222, %v2221
        %v2306 = vpack.c.b16 %v2224, %v2223
        %v2307 = vpack.c.b16 %v2226, %v2225
        %v2308 = vpack.c.b16 %v2228, %v2227
        %v2309 = vpack.c.b16 %v2230, %v2229
        %v2310 = vpack.c.b16 %v2232, %v2231
        %v2311 = vpack.c.b16 %v2234, %v2233
        %v2312 = vpack.c.b16 %v2236, %v2235
        %v2313 = vpack.c.b16 %v2238, %v2237
        %v2314 = vpack.c.b16 %v2240, %v2239
        %v2315 = vpack.c.b16 %v2242, %v2241
        %v2316 = vpack.c.b16 %v2244, %v2243
        %2389 = vmatprep.subr.bf16.mxu0 0
        %2390 = vmatpush1.bf16.msra.mxu0 %v2245
        %2391 = vmatprep.subr.bf16.mxu0 0
        %2392 = vmatpush1.bf16.msra.mxu0 %v2246
        %2393 = vmatprep.subr.bf16.mxu0 0
        %2394 = vmatpush1.bf16.msra.mxu0 %v2247
        %2395 = vmatprep.subr.bf16.mxu0 0
        %2396 = vmatpush1.bf16.msra.mxu0 %v2248
        %2397 = vmatprep.subr.bf16.mxu0 0
        %2398 = vmatpush1.bf16.msra.mxu0 %v2249
        %2399 = vmatprep.subr.bf16.mxu0 0
        %2400 = vmatpush1.bf16.msra.mxu0 %v2250
        %2401 = vmatprep.subr.bf16.mxu0 0
        %2402 = vmatpush1.bf16.msra.mxu0 %v2251
        %2403 = vmatprep.subr.bf16.mxu0 0
        %2404 = vmatpush1.bf16.msra.mxu0 %v2252
        %2405 = vmatprep.subr.bf16.mxu0 0
        %2406 = vmatpush1.bf16.msra.mxu0 %v2253
        %2407 = vmatprep.subr.bf16.mxu0 0
        %2408 = vmatpush1.bf16.msra.mxu0 %v2254
        %2409 = vmatprep.subr.bf16.mxu0 0
        %2410 = vmatpush1.bf16.msra.mxu0 %v2255
        %2411 = vmatprep.subr.bf16.mxu0 0
        %2412 = vmatpush1.bf16.msra.mxu0 %v2256
        %2413 = vmatprep.subr.bf16.mxu0 0
        %2414 = vmatpush1.bf16.msra.mxu0 %v2257
        %2415 = vmatprep.subr.bf16.mxu0 0
        %2416 = vmatpush1.bf16.msra.mxu0 %v2258
        %2417 = vmatprep.subr.bf16.mxu0 0
        %2418 = vmatpush1.bf16.msra.mxu0 %v2259
        %2419 = vmatprep.subr.bf16.mxu0 0
        %2420 = vmatpush1.bf16.msra.mxu0 %v2260
        %2421 = vmatprep.mubr.bf16.mxu0 %v1779
        %2422 = vmatmul.mubr.bf16.gmra.mrb[0].mxu0 %v1755
        %v2423 = vpop.f32.mrb[0].mxu0
        %v2424 = vadd.f32 0.0, %v2423
        %v2425 = vpop.f32.mrb[0].mxu0
        %v2426 = vpop.f32.mrb[0].mxu0
        %v2427 = vadd.f32 0.0, %v2426
        %v2428 = vpop.f32.mrb[0].mxu0
        %2429 = vmatprep.mubr.bf16.mxu0 %v1780
        %2430 = vmatmul.mubr.bf16.gmra.mrb[0].mxu0 %v1756
        %v2431 = vpop.f32.mrb[0].mxu0
        %v2432 = vadd.f32 0.0, %v2431
        %v2433 = vpop.f32.mrb[0].mxu0
        %v2434 = vpop.f32.mrb[0].mxu0
        %v2435 = vadd.f32 0.0, %v2434
        %v2436 = vpop.f32.mrb[0].mxu0
        %2437 = vmatprep.mubr.bf16.mxu0 %v1781
        %2438 = vmatmul.mubr.bf16.gmra.mrb[0].mxu0 %v1757
        %v2439 = vpop.f32.mrb[0].mxu0
        %v2440 = vadd.f32 0.0, %v2439
        %v2441 = vpop.f32.mrb[0].mxu0
        %v2442 = vpop.f32.mrb[0].mxu0
        %v2443 = vadd.f32 0.0, %v2442
        %v2444 = vpop.f32.mrb[0].mxu0
        %2445 = vmatprep.mubr.bf16.mxu0 %v1782
        %2446 = vmatmul.mubr.bf16.gmra.mrb[0].mxu0 %v1758
        %v2447 = vpop.f32.mrb[0].mxu0
        %v2448 = vadd.f32 0.0, %v2447
        %v2449 = vpop.f32.mrb[0].mxu0
        %v2450 = vpop.f32.mrb[0].mxu0
        %v2451 = vadd.f32 0.0, %v2450
        %v2452 = vpop.f32.mrb[0].mxu0
        %2453 = vmatprep.mubr.bf16.mxu0 %v1783
        %2454 = vmatmul.mubr.bf16.gmra.mrb[0].mxu0 %v1759
        %v2455 = vpop.f32.mrb[0].mxu0
        %v2456 = vadd.f32 0.0, %v2455
        %v2457 = vpop.f32.mrb[0].mxu0
        %v2458 = vpop.f32.mrb[0].mxu0
        %v2459 = vadd.f32 0.0, %v2458
        %v2460 = vpop.f32.mrb[0].mxu0
        %2461 = vmatprep.mubr.bf16.mxu0 %v1784
        %2462 = vmatmul.mubr.bf16.gmra.mrb[0].mxu0 %v1760
        %v2463 = vpop.f32.mrb[0].mxu0
        %v2464 = vadd.f32 0.0, %v2463
        %v2465 = vpop.f32.mrb[0].mxu0
        %v2466 = vpop.f32.mrb[0].mxu0
        %v2467 = vadd.f32 0.0, %v2466
        %v2468 = vpop.f32.mrb[0].mxu0
        %2469 = vmatprep.mubr.bf16.mxu0 %v1785
        %2470 = vmatmul.mubr.bf16.gmra.mrb[0].mxu0 %v1761
        %v2471 = vpop.f32.mrb[0].mxu0
        %v2472 = vadd.f32 0.0, %v2471
        %v2473 = vpop.f32.mrb[0].mxu0
        %v2474 = vpop.f32.mrb[0].mxu0
        %v2475 = vadd.f32 0.0, %v2474
        %v2476 = vpop.f32.mrb[0].mxu0
        %2477 = vmatprep.mubr.bf16.mxu0 %v1786
        %2478 = vmatmul.mubr.bf16.gmra.mrb[0].mxu0 %v1762
        %v2479 = vpop.f32.mrb[0].mxu0
        %v2480 = vadd.f32 0.0, %v2479
        %v2481 = vpop.f32.mrb[0].mxu0
        %v2482 = vpop.f32.mrb[0].mxu0
        %v2483 = vadd.f32 0.0, %v2482
        %v2484 = vpop.f32.mrb[0].mxu0
        %2485 = vdwg.mxu0
        %2486 = vmatprep.subr.bf16.mxu0 0
        %2487 = vmatpush1.bf16.msra.mxu0 %v2261
        %2488 = vmatprep.subr.bf16.mxu0 0
        %2489 = vmatpush1.bf16.msra.mxu0 %v2262
        %2490 = vmatprep.subr.bf16.mxu0 0
        %2491 = vmatpush1.bf16.msra.mxu0 %v2263
        %2492 = vmatprep.subr.bf16.mxu0 0
        %2493 = vmatpush1.bf16.msra.mxu0 %v2264
        %2494 = vmatprep.subr.bf16.mxu0 0
        %2495 = vmatpush1.bf16.msra.mxu0 %v2265
        %2496 = vmatprep.subr.bf16.mxu0 0
        %2497 = vmatpush1.bf16.msra.mxu0 %v2266
        %2498 = vmatprep.subr.bf16.mxu0 0
        %2499 = vmatpush1.bf16.msra.mxu0 %v2267
        %2500 = vmatprep.subr.bf16.mxu0 0
        %2501 = vmatpush1.bf16.msra.mxu0 %v2268
        %2502 = vmatprep.subr.bf16.mxu0 0
        %2503 = vmatpush1.bf16.msra.mxu0 %v2269
        %2504 = vmatprep.subr.bf16.mxu0 0
        %2505 = vmatpush1.bf16.msra.mxu0 %v2270
        %2506 = vmatprep.subr.bf16.mxu0 0
        %2507 = vmatpush1.bf16.msra.mxu0 %v2271
        %2508 = vmatprep.subr.bf16.mxu0 0
        %2509 = vmatpush1.bf16.msra.mxu0 %v2272
        %2510 = vmatprep.subr.bf16.mxu0 0
        %2511 = vmatpush1.bf16.msra.mxu0 %v2273
        %2512 = vmatprep.subr.bf16.mxu0 0
        %2513 = vmatpush1.bf16.msra.mxu0 %v2274
        %2514 = vmatprep.subr.bf16.mxu0 0
        %2515 = vmatpush1.bf16.msra.mxu0 %v2275
        %2516 = vmatprep.subr.bf16.mxu0 0
        %2517 = vmatpush1.bf16.msra.mxu0 %v2276
        %2518 = vmatprep.mubr.bf16.mxu0 %v1828
        %2519 = vmatmul.mubr.bf16.gmra.mrb[0].mxu0 %v1803
        %v2520 = vpop.f32.mrb[0].mxu0
        %v2521 = vadd.f32 %v2424, %v2520
        %v2522 = vpop.f32.mrb[0].mxu0
        %v2523 = vpop.f32.mrb[0].mxu0
        %v2524 = vadd.f32 %v2427, %v2523
        %v2525 = vpop.f32.mrb[0].mxu0
        %2526 = vmatprep.mubr.bf16.mxu0 %v1829
        %2527 = vmatmul.mubr.bf16.gmra.mrb[0].mxu0 %v1804
        %v2528 = vpop.f32.mrb[0].mxu0
        %v2529 = vadd.f32 %v2432, %v2528
        %v2530 = vpop.f32.mrb[0].mxu0
        %v2531 = vpop.f32.mrb[0].mxu0
        %v2532 = vadd.f32 %v2435, %v2531
        %v2533 = vpop.f32.mrb[0].mxu0
        %2534 = vmatprep.mubr.bf16.mxu0 %v1830
        %2535 = vmatmul.mubr.bf16.gmra.mrb[0].mxu0 %v1805
        %v2536 = vpop.f32.mrb[0].mxu0
        %v2537 = vadd.f32 %v2440, %v2536
        %v2538 = vpop.f32.mrb[0].mxu0
        %v2539 = vpop.f32.mrb[0].mxu0
        %v2540 = vadd.f32 %v2443, %v2539
        %v2541 = vpop.f32.mrb[0].mxu0
        %2542 = vmatprep.mubr.bf16.mxu0 %v1831
        %2543 = vmatmul.mubr.bf16.gmra.mrb[0].mxu0 %v1806
        %v2544 = vpop.f32.mrb[0].mxu0
        %v2545 = vadd.f32 %v2448, %v2544
        %v2546 = vpop.f32.mrb[0].mxu0
        %v2547 = vpop.f32.mrb[0].mxu0
        %v2548 = vadd.f32 %v2451, %v2547
        %v2549 = vpop.f32.mrb[0].mxu0
        %2550 = vmatprep.mubr.bf16.mxu0 %v1832
        %2551 = vmatmul.mubr.bf16.gmra.mrb[0].mxu0 %v1807
        %v2552 = vpop.f32.mrb[0].mxu0
        %v2553 = vadd.f32 %v2456, %v2552
        %v2554 = vpop.f32.mrb[0].mxu0
        %v2555 = vpop.f32.mrb[0].mxu0
        %v2556 = vadd.f32 %v2459, %v2555
        %v2557 = vpop.f32.mrb[0].mxu0
        %2558 = vmatprep.mubr.bf16.mxu0 %v1833
        %2559 = vmatmul.mubr.bf16.gmra.mrb[0].mxu0 %v1808
        %v2560 = vpop.f32.mrb[0].mxu0
        %v2561 = vadd.f32 %v2464, %v2560
        %v2562 = vpop.f32.mrb[0].mxu0
        %v2563 = vpop.f32.mrb[0].mxu0
        %v2564 = vadd.f32 %v2467, %v2563
        %v2565 = vpop.f32.mrb[0].mxu0
        %2566 = vmatprep.mubr.bf16.mxu0 %v1834
        %2567 = vmatmul.mubr.bf16.gmra.mrb[0].mxu0 %v1809
        %v2568 = vpop.f32.mrb[0].mxu0
        %v2569 = vadd.f32 %v2472, %v2568
        %v2570 = vpop.f32.mrb[0].mxu0
        %v2571 = vpop.f32.mrb[0].mxu0
        %v2572 = vadd.f32 %v2475, %v2571
        %v2573 = vpop.f32.mrb[0].mxu0
        %2574 = vmatprep.mubr.bf16.mxu0 %v1835
        %2575 = vmatmul.mubr.bf16.gmra.mrb[0].mxu0 %v1810
        %v2576 = vpop.f32.mrb[0].mxu0
        %v2577 = vadd.f32 %v2480, %v2576
        %v2578 = vpop.f32.mrb[0].mxu0
        %v2579 = vpop.f32.mrb[0].mxu0
        %v2580 = vadd.f32 %v2483, %v2579
        %v2581 = vpop.f32.mrb[0].mxu0
        %2582 = vdwg.mxu0
        %2583 = vmatprep.subr.bf16.mxu0 0
        %2584 = vmatpush1.bf16.msra.mxu0 %v2277
        %2585 = vmatprep.subr.bf16.mxu0 0
        %2586 = vmatpush1.bf16.msra.mxu0 %v2278
        %2587 = vmatprep.subr.bf16.mxu0 0
        %2588 = vmatpush1.bf16.msra.mxu0 %v2279
        %2589 = vmatprep.subr.bf16.mxu0 0
        %2590 = vmatpush1.bf16.msra.mxu0 %v2280
        %2591 = vmatprep.subr.bf16.mxu0 0
        %2592 = vmatpush1.bf16.msra.mxu0 %v2281
        %2593 = vmatprep.subr.bf16.mxu0 0
        %2594 = vmatpush1.bf16.msra.mxu0 %v2282
        %2595 = vmatprep.subr.bf16.mxu0 0
        %2596 = vmatpush1.bf16.msra.mxu0 %v2283
        %2597 = vmatprep.subr.bf16.mxu0 0
        %2598 = vmatpush1.bf16.msra.mxu0 %v2284
        %2599 = vmatprep.subr.bf16.mxu0 0
        %2600 = vmatpush1.bf16.msra.mxu0 %v2285
        %2601 = vmatprep.subr.bf16.mxu0 0
        %2602 = vmatpush1.bf16.msra.mxu0 %v2286
        %2603 = vmatprep.subr.bf16.mxu0 0
        %2604 = vmatpush1.bf16.msra.mxu0 %v2287
        %2605 = vmatprep.subr.bf16.mxu0 0
        %2606 = vmatpush1.bf16.msra.mxu0 %v2288
        %2607 = vmatprep.subr.bf16.mxu0 0
        %2608 = vmatpush1.bf16.msra.mxu0 %v2289
        %2609 = vmatprep.subr.bf16.mxu0 0
        %2610 = vmatpush1.bf16.msra.mxu0 %v2290
        %2611 = vmatprep.subr.bf16.mxu0 0
        %2612 = vmatpush1.bf16.msra.mxu0 %v2291
        %2613 = vmatprep.subr.bf16.mxu0 0
        %2614 = vmatpush1.bf16.msra.mxu0 %v2292
        %2615 = vmatprep.mubr.bf16.mxu0 %v1876
        %2616 = vmatmul.mubr.bf16.gmra.mrb[0].mxu0 %v1852
        %v2617 = vpop.f32.mrb[0].mxu0
        %v2618 = vadd.f32 %v2521, %v2617
        %v2619 = vpop.f32.mrb[0].mxu0
        %v2620 = vpop.f32.mrb[0].mxu0
        %v2621 = vadd.f32 %v2524, %v2620
        %v2622 = vpop.f32.mrb[0].mxu0
        %2623 = vmatprep.mubr.bf16.mxu0 %v1877
        %2624 = vmatmul.mubr.bf16.gmra.mrb[0].mxu0 %v1853
        %v2625 = vpop.f32.mrb[0].mxu0
        %v2626 = vadd.f32 %v2529, %v2625
        %v2627 = vpop.f32.mrb[0].mxu0
        %v2628 = vpop.f32.mrb[0].mxu0
        %v2629 = vadd.f32 %v2532, %v2628
        %v2630 = vpop.f32.mrb[0].mxu0
        %2631 = vmatprep.mubr.bf16.mxu0 %v1878
        %2632 = vmatmul.mubr.bf16.gmra.mrb[0].mxu0 %v1854
        %v2633 = vpop.f32.mrb[0].mxu0
        %v2634 = vadd.f32 %v2537, %v2633
        %v2635 = vpop.f32.mrb[0].mxu0
        %v2636 = vpop.f32.mrb[0].mxu0
        %v2637 = vadd.f32 %v2540, %v2636
        %v2638 = vpop.f32.mrb[0].mxu0
        %2639 = vmatprep.mubr.bf16.mxu0 %v1879
        %2640 = vmatmul.mubr.bf16.gmra.mrb[0].mxu0 %v1855
        %v2641 = vpop.f32.mrb[0].mxu0
        %v2642 = vadd.f32 %v2545, %v2641
        %v2643 = vpop.f32.mrb[0].mxu0
        %v2644 = vpop.f32.mrb[0].mxu0
        %v2645 = vadd.f32 %v2548, %v2644
        %v2646 = vpop.f32.mrb[0].mxu0
        %2647 = vmatprep.mubr.bf16.mxu0 %v1880
        %2648 = vmatmul.mubr.bf16.gmra.mrb[0].mxu0 %v1856
        %v2649 = vpop.f32.mrb[0].mxu0
        %v2650 = vadd.f32 %v2553, %v2649
        %v2651 = vpop.f32.mrb[0].mxu0
        %v2652 = vpop.f32.mrb[0].mxu0
        %v2653 = vadd.f32 %v2556, %v2652
        %v2654 = vpop.f32.mrb[0].mxu0
        %2655 = vmatprep.mubr.bf16.mxu0 %v1881
        %2656 = vmatmul.mubr.bf16.gmra.mrb[0].mxu0 %v1857
        %v2657 = vpop.f32.mrb[0].mxu0
        %v2658 = vadd.f32 %v2561, %v2657
        %v2659 = vpop.f32.mrb[0].mxu0
        %v2660 = vpop.f32.mrb[0].mxu0
        %v2661 = vadd.f32 %v2564, %v2660
        %v2662 = vpop.f32.mrb[0].mxu0
        %2663 = vmatprep.mubr.bf16.mxu0 %v1882
        %2664 = vmatmul.mubr.bf16.gmra.mrb[0].mxu0 %v1858
        %v2665 = vpop.f32.mrb[0].mxu0
        %v2666 = vadd.f32 %v2569, %v2665
        %v2667 = vpop.f32.mrb[0].mxu0
        %v2668 = vpop.f32.mrb[0].mxu0
        %v2669 = vadd.f32 %v2572, %v2668
        %v2670 = vpop.f32.mrb[0].mxu0
        %2671 = vmatprep.mubr.bf16.mxu0 %v1883
        %2672 = vmatmul.mubr.bf16.gmra.mrb[0].mxu0 %v1859
        %v2673 = vpop.f32.mrb[0].mxu0
        %v2674 = vadd.f32 %v2577, %v2673
        %v2675 = vpop.f32.mrb[0].mxu0
        %v2676 = vpop.f32.mrb[0].mxu0
        %v2677 = vadd.f32 %v2580, %v2676
        %v2678 = vpop.f32.mrb[0].mxu0
        %2679 = vdwg.mxu0
        %2680 = vmatprep.subr.bf16.mxu0 0
        %2681 = vmatpush1.bf16.msra.mxu0 %v2293
        %2682 = vmatprep.subr.bf16.mxu0 0
        %2683 = vmatpush1.bf16.msra.mxu0 %v2294
        %2684 = vmatprep.subr.bf16.mxu0 0
        %2685 = vmatpush1.bf16.msra.mxu0 %v2295
        %2686 = vmatprep.subr.bf16.mxu0 0
        %2687 = vmatpush1.bf16.msra.mxu0 %v2296
        %2688 = vmatprep.subr.bf16.mxu0 0
        %2689 = vmatpush1.bf16.msra.mxu0 %v2297
        %2690 = vmatprep.subr.bf16.mxu0 0
        %2691 = vmatpush1.bf16.msra.mxu0 %v2298
        %2692 = vmatprep.subr.bf16.mxu0 0
        %2693 = vmatpush1.bf16.msra.mxu0 %v2299
        %2694 = vmatprep.subr.bf16.mxu0 0
        %2695 = vmatpush1.bf16.msra.mxu0 %v2300
        %2696 = vmatprep.subr.bf16.mxu0 0
        %2697 = vmatpush1.bf16.msra.mxu0 %v2301
        %2698 = vmatprep.subr.bf16.mxu0 0
        %2699 = vmatpush1.bf16.msra.mxu0 %v2302
        %2700 = vmatprep.subr.bf16.mxu0 0
        %2701 = vmatpush1.bf16.msra.mxu0 %v2303
        %2702 = vmatprep.subr.bf16.mxu0 0
        %2703 = vmatpush1.bf16.msra.mxu0 %v2304
        %2704 = vmatprep.subr.bf16.mxu0 0
        %2705 = vmatpush1.bf16.msra.mxu0 %v2305
        %2706 = vmatprep.subr.bf16.mxu0 0
        %2707 = vmatpush1.bf16.msra.mxu0 %v2306
        %2708 = vmatprep.subr.bf16.mxu0 0
        %2709 = vmatpush1.bf16.msra.mxu0 %v2307
        %2710 = vmatprep.subr.bf16.mxu0 0
        %2711 = vmatpush1.bf16.msra.mxu0 %v2308
        %2712 = vmatprep.mubr.bf16.mxu0 %v1925
        %2713 = vmatmul.mubr.bf16.gmra.mrb[0].mxu0 %v1901
        %v2714 = vpop.f32.mrb[0].mxu0
        %v2715 = vadd.f32 %v2618, %v2714
        %v2716 = vpop.f32.mrb[0].mxu0
        %v2717 = vpop.f32.mrb[0].mxu0
        %v2718 = vadd.f32 %v2621, %v2717
        %v2719 = vpop.f32.mrb[0].mxu0
        %2720 = vmatprep.mubr.bf16.mxu0 %v1926
        %2721 = vmatmul.mubr.bf16.gmra.mrb[0].mxu0 %v1902
        %v2722 = vpop.f32.mrb[0].mxu0
        %v2723 = vadd.f32 %v2626, %v2722
        %v2724 = vpop.f32.mrb[0].mxu0
        %v2725 = vpop.f32.mrb[0].mxu0
        %v2726 = vadd.f32 %v2629, %v2725
        %v2727 = vpop.f32.mrb[0].mxu0
        %2728 = vmatprep.mubr.bf16.mxu0 %v1927
        %2729 = vmatmul.mubr.bf16.gmra.mrb[0].mxu0 %v1903
        %v2730 = vpop.f32.mrb[0].mxu0
        %v2731 = vadd.f32 %v2634, %v2730
        %v2732 = vpop.f32.mrb[0].mxu0
        %v2733 = vpop.f32.mrb[0].mxu0
        %v2734 = vadd.f32 %v2637, %v2733
        %v2735 = vpop.f32.mrb[0].mxu0
        %2736 = vmatprep.mubr.bf16.mxu0 %v1928
        %2737 = vmatmul.mubr.bf16.gmra.mrb[0].mxu0 %v1904
        %v2738 = vpop.f32.mrb[0].mxu0
        %v2739 = vadd.f32 %v2642, %v2738
        %v2740 = vpop.f32.mrb[0].mxu0
        %v2741 = vpop.f32.mrb[0].mxu0
        %v2742 = vadd.f32 %v2645, %v2741
        %v2743 = vpop.f32.mrb[0].mxu0
        %2744 = vmatprep.mubr.bf16.mxu0 %v1929
        %2745 = vmatmul.mubr.bf16.gmra.mrb[0].mxu0 %v1905
        %v2746 = vpop.f32.mrb[0].mxu0
        %v2747 = vadd.f32 %v2650, %v2746
        %v2748 = vpop.f32.mrb[0].mxu0
        %v2749 = vpop.f32.mrb[0].mxu0
        %v2750 = vadd.f32 %v2653, %v2749
        %v2751 = vpop.f32.mrb[0].mxu0
        %2752 = vmatprep.mubr.bf16.mxu0 %v1930
        %2753 = vmatmul.mubr.bf16.gmra.mrb[0].mxu0 %v1906
        %v2754 = vpop.f32.mrb[0].mxu0
        %v2755 = vadd.f32 %v2658, %v2754
        %v2756 = vpop.f32.mrb[0].mxu0
        %v2757 = vpop.f32.mrb[0].mxu0
        %v2758 = vadd.f32 %v2661, %v2757
        %v2759 = vpop.f32.mrb[0].mxu0
        %2760 = vmatprep.mubr.bf16.mxu0 %v1931
        %2761 = vmatmul.mubr.bf16.gmra.mrb[0].mxu0 %v1907
        %v2762 = vpop.f32.mrb[0].mxu0
        %v2763 = vadd.f32 %v2666, %v2762
        %v2764 = vpop.f32.mrb[0].mxu0
        %v2765 = vpop.f32.mrb[0].mxu0
        %v2766 = vadd.f32 %v2669, %v2765
        %v2767 = vpop.f32.mrb[0].mxu0
        %2768 = vmatprep.mubr.bf16.mxu0 %v1932
        %2769 = vmatmul.mubr.bf16.gmra.mrb[0].mxu0 %v1908
        %v2770 = vpop.f32.mrb[0].mxu0
        %v2771 = vadd.f32 %v2674, %v2770
        %v2772 = vpop.f32.mrb[0].mxu0
        %v2773 = vpop.f32.mrb[0].mxu0
        %v2774 = vadd.f32 %v2677, %v2773
        %v2775 = vpop.f32.mrb[0].mxu0
        %2776 = vdwg.mxu0
        %2777 = vmatprep.subr.bf16.mxu0 0
        %2778 = vmatpush1.bf16.msra.mxu0 %v2309
        %2779 = vmatprep.subr.bf16.mxu0 0
        %2780 = vmatpush1.bf16.msra.mxu0 %v2310
        %2781 = vmatprep.subr.bf16.mxu0 0
        %2782 = vmatpush1.bf16.msra.mxu0 %v2311
        %2783 = vmatprep.subr.bf16.mxu0 0
        %2784 = vmatpush1.bf16.msra.mxu0 %v2312
        %2785 = vmatprep.subr.bf16.mxu0 0
        %2786 = vmatpush1.bf16.msra.mxu0 %v2313
        %2787 = vmatprep.subr.bf16.mxu0 0
        %2788 = vmatpush1.bf16.msra.mxu0 %v2314
        %2789 = vmatprep.subr.bf16.mxu0 0
        %2790 = vmatpush1.bf16.msra.mxu0 %v2315
        %2791 = vmatprep.subr.bf16.mxu0 0
        %2792 = vmatpush1.bf16.msra.mxu0 %v2316
        %2793 = vmatprep.subr.bf16.mxu0 0
        %2794 = vmatpush1.bf16.msra.mxu0 0
        %2795 = vmatprep.subr.bf16.mxu0 0
        %2796 = vmatpush1.bf16.msra.mxu0 0
        %2797 = vmatprep.subr.bf16.mxu0 0
        %2798 = vmatpush1.bf16.msra.mxu0 0
        %2799 = vmatprep.subr.bf16.mxu0 0
        %2800 = vmatpush1.bf16.msra.mxu0 0
        %2801 = vmatprep.subr.bf16.mxu0 0
        %2802 = vmatpush1.bf16.msra.mxu0 0
        %2803 = vmatprep.subr.bf16.mxu0 0
        %2804 = vmatpush1.bf16.msra.mxu0 0
        %2805 = vmatprep.subr.bf16.mxu0 0
        %2806 = vmatpush1.bf16.msra.mxu0 0
        %2807 = vmatprep.subr.bf16.mxu0 0
        %2808 = vmatpush1.bf16.msra.mxu0 0
        %2809 = vmatprep.mubr.bf16.mxu0 0
        %2810 = vmatmul.mubr.bf16.gmra.mrb[0].mxu0 %v1949
        %v2811 = vpop.f32.mrb[0].mxu0
        %v2812 = vadd.f32 %v2715, %v2811
        %v2813 = vpop.f32.mrb[0].mxu0
        %v2814 = vpop.f32.mrb[0].mxu0
        %v2815 = vadd.f32 %v2718, %v2814
        %v2816 = vpop.f32.mrb[0].mxu0
        %2817 = vmatprep.mubr.bf16.mxu0 0
        %2818 = vmatmul.mubr.bf16.gmra.mrb[0].mxu0 %v1950
        %v2819 = vpop.f32.mrb[0].mxu0
        %v2820 = vadd.f32 %v2723, %v2819
        %v2821 = vpop.f32.mrb[0].mxu0
        %v2822 = vpop.f32.mrb[0].mxu0
        %v2823 = vadd.f32 %v2726, %v2822
        %v2824 = vpop.f32.mrb[0].mxu0
        %2825 = vmatprep.mubr.bf16.mxu0 0
        %2826 = vmatmul.mubr.bf16.gmra.mrb[0].mxu0 %v1951
        %v2827 = vpop.f32.mrb[0].mxu0
        %v2828 = vadd.f32 %v2731, %v2827
        %v2829 = vpop.f32.mrb[0].mxu0
        %v2830 = vpop.f32.mrb[0].mxu0
        %v2831 = vadd.f32 %v2734, %v2830
        %v2832 = vpop.f32.mrb[0].mxu0
        %2833 = vmatprep.mubr.bf16.mxu0 0
        %2834 = vmatmul.mubr.bf16.gmra.mrb[0].mxu0 %v1952
        %v2835 = vpop.f32.mrb[0].mxu0
        %v2836 = vadd.f32 %v2739, %v2835
        %v2837 = vpop.f32.mrb[0].mxu0
        %v2838 = vpop.f32.mrb[0].mxu0
        %v2839 = vadd.f32 %v2742, %v2838
        %v2840 = vpop.f32.mrb[0].mxu0
        %2841 = vmatprep.mubr.bf16.mxu0 0
        %2842 = vmatmul.mubr.bf16.gmra.mrb[0].mxu0 %v1953
        %v2843 = vpop.f32.mrb[0].mxu0
        %v2844 = vadd.f32 %v2747, %v2843
        %v2845 = vpop.f32.mrb[0].mxu0
        %v2846 = vpop.f32.mrb[0].mxu0
        %v2847 = vadd.f32 %v2750, %v2846
        %v2848 = vpop.f32.mrb[0].mxu0
        %2849 = vmatprep.mubr.bf16.mxu0 0
        %2850 = vmatmul.mubr.bf16.gmra.mrb[0].mxu0 %v1954
        %v2851 = vpop.f32.mrb[0].mxu0
        %v2852 = vadd.f32 %v2755, %v2851
        %v2853 = vpop.f32.mrb[0].mxu0
        %v2854 = vpop.f32.mrb[0].mxu0
        %v2855 = vadd.f32 %v2758, %v2854
        %v2856 = vpop.f32.mrb[0].mxu0
        %2857 = vmatprep.mubr.bf16.mxu0 0
        %2858 = vmatmul.mubr.bf16.gmra.mrb[0].mxu0 %v1955
        %v2859 = vpop.f32.mrb[0].mxu0
        %v2860 = vadd.f32 %v2763, %v2859
        %v2861 = vpop.f32.mrb[0].mxu0
        %v2862 = vpop.f32.mrb[0].mxu0
        %v2863 = vadd.f32 %v2766, %v2862
        %v2864 = vpop.f32.mrb[0].mxu0
        %2865 = vmatprep.mubr.bf16.mxu0 0
        %2866 = vmatmul.mubr.bf16.gmra.mrb[0].mxu0 %v1956
        %v2867 = vpop.f32.mrb[0].mxu0
        %v2868 = vadd.f32 %v2771, %v2867
        %v2869 = vpop.f32.mrb[0].mxu0
        %v2870 = vpop.f32.mrb[0].mxu0
        %v2871 = vadd.f32 %v2774, %v2870
        %v2872 = vpop.f32.mrb[0].mxu0
        %2873 = vdwg.mxu0
        %v2875 = vlaneseq
        %v2876 = vshrl.u32 %v2875, 7
        %v2877 = vsub.s32 0, %v2876
        %v2878 = vrot.slane %v473, %v2877
        %v2880 = vmul.f32 %v2812, %v2878
        %v2881 = vmul.f32 %v2815, %v2878
        %v2882 = vmul.f32 %v2820, %v2878
        %v2883 = vmul.f32 %v2823, %v2878
        %v2884 = vmul.f32 %v2828, %v2878
        %v2885 = vmul.f32 %v2831, %v2878
        %v2886 = vmul.f32 %v2836, %v2878
        %v2887 = vmul.f32 %v2839, %v2878
        %v2888 = vmul.f32 %v2844, %v2878
        %v2889 = vmul.f32 %v2847, %v2878
        %v2890 = vmul.f32 %v2852, %v2878
        %v2891 = vmul.f32 %v2855, %v2878
        %v2892 = vmul.f32 %v2860, %v2878
        %v2893 = vmul.f32 %v2863, %v2878
        %v2894 = vmul.f32 %v2868, %v2878
        %v2895 = vmul.f32 %v2871, %v2878
        %v2897 = vlaneseq
        %v2898 = vshrl.u32 %v2897, 7
        %v2899 = vsub.s32 0, %v2898
        %v2900 = vrot.slane %v474, %v2899
        %v2902 = vadd.f32 %v2880, %v2900
        %v2903 = vadd.f32 %v2881, %v2900
        %v2904 = vadd.f32 %v2882, %v2900
        %v2905 = vadd.f32 %v2883, %v2900
        %v2906 = vadd.f32 %v2884, %v2900
        %v2907 = vadd.f32 %v2885, %v2900
        %v2908 = vadd.f32 %v2886, %v2900
        %v2909 = vadd.f32 %v2887, %v2900
        %v2910 = vadd.f32 %v2888, %v2900
        %v2911 = vadd.f32 %v2889, %v2900
        %v2912 = vadd.f32 %v2890, %v2900
        %v2913 = vadd.f32 %v2891, %v2900
        %v2914 = vadd.f32 %v2892, %v2900
        %v2915 = vadd.f32 %v2893, %v2900
        %v2916 = vadd.f32 %v2894, %v2900
        %v2917 = vadd.f32 %v2895, %v2900
        %v2918 = vmax.f32 %v2902, 0.0
        %v2919 = vmax.f32 %v2903, 0.0
        %v2920 = vmax.f32 %v2904, 0.0
        %v2921 = vmax.f32 %v2905, 0.0
        %v2922 = vmax.f32 %v2906, 0.0
        %v2923 = vmax.f32 %v2907, 0.0
        %v2924 = vmax.f32 %v2908, 0.0
        %v2925 = vmax.f32 %v2909, 0.0
        %v2926 = vmax.f32 %v2910, 0.0
        %v2927 = vmax.f32 %v2911, 0.0
        %v2928 = vmax.f32 %v2912, 0.0
        %v2929 = vmax.f32 %v2913, 0.0
        %v2930 = vmax.f32 %v2914, 0.0
        %v2931 = vmax.f32 %v2915, 0.0
        %v2932 = vmax.f32 %v2916, 0.0
        %v2933 = vmax.f32 %v2917, 0.0
        %s2934 = scalar_lea.vmem [#allocation3], 16
        %2935 = vst [vmem:[%s2934 + $0x1] sm:$0xff] %v2918
        %2936 = vst [vmem:[%s2934 + $0x11] sm:$0xff] %v2919
        %2937 = vst [vmem:[%s2934 + $0x21] sm:$0xff] %v2920
        %2938 = vst [vmem:[%s2934 + $0x31] sm:$0xff] %v2921
        %2939 = vst [vmem:[%s2934 + $0x41] sm:$0xff] %v2922
        %2940 = vst [vmem:[%s2934 + $0x51] sm:$0xff] %v2923
        %2941 = vst [vmem:[%s2934 + $0x61] sm:$0xff] %v2924
        %2942 = vst [vmem:[%s2934 + $0x71] sm:$0xff] %v2925
        %2943 = vst [vmem:[%s2934 + $0xa1] sm:$0xff] %v2926
        %2944 = vst [vmem:[%s2934 + $0xb1] sm:$0xff] %v2927
        %2945 = vst [vmem:[%s2934 + $0xc1] sm:$0xff] %v2928
        %2946 = vst [vmem:[%s2934 + $0xd1] sm:$0xff] %v2929
        %2947 = vst [vmem:[%s2934 + $0xe1] sm:$0xff] %v2930
        %2948 = vst [vmem:[%s2934 + $0xf1] sm:$0xff] %v2931
        %2949 = vst [vmem:[%s2934 + $0x101] sm:$0xff] %v2932
        %2950 = vst [vmem:[%s2934 + $0x111] sm:$0xff] %v2933
      $region48: #{_lambda_.2} parent=35 // pred_fallthru
        _
      %p2951 = scmp.eq.s32.totalorder %s15, 4
      // Predicated region
      $region49: #{_lambda_.2} parent=35 // pred_check
        %p2952 = pneg %p2951
      $region50: #{_lambda_.2} parent=35 // pred_check_branch
        %2954 = sbr.rel (%p2952) target = $region52
      $region51: #{_lambda_.2} parent=35 // pred_region
        %s2955 = scalar_lea.vmem [#allocation2], 16
        %v2956 = vld [vmem:[%s2955 + $0x1] sm:$0xff]
        %v2957 = vld [vmem:[%s2955 + $0x11] sm:$0xff]
        %v2958 = vld [vmem:[%s2955 + $0x21] sm:$0xff]
        %v2959 = vld [vmem:[%s2955 + $0x31] sm:$0xff]
        %v2960 = vld [vmem:[%s2955 + $0x41] sm:$0xff]
        %v2961 = vld [vmem:[%s2955 + $0x51] sm:$0xff]
        %v2962 = vld [vmem:[%s2955 + $0x61] sm:$0xff]
        %v2963 = vld [vmem:[%s2955 + $0x71] sm:$0xff]
        %v2964 = vld [vmem:[%s2955 + $0xa1] sm:$0xff]
        %v2965 = vld [vmem:[%s2955 + $0xb1] sm:$0xff]
        %v2966 = vld [vmem:[%s2955 + $0xc1] sm:$0xff]
        %v2967 = vld [vmem:[%s2955 + $0xd1] sm:$0xff]
        %v2968 = vld [vmem:[%s2955 + $0xe1] sm:$0xff]
        %v2969 = vld [vmem:[%s2955 + $0xf1] sm:$0xff]
        %v2970 = vld [vmem:[%s2955 + $0x101] sm:$0xff]
        %v2971 = vld [vmem:[%s2955 + $0x111] sm:$0xff]
        %2972 = vst [vmem:[%s4] sm:$0xff] %v2956
        %2973 = vst [vmem:[%s4 + $0x8] sm:$0xff] %v2957
        %2974 = vst [vmem:[%s4 + $0x10] sm:$0xff] %v2958
        %2975 = vst [vmem:[%s4 + $0x18] sm:$0xff] %v2959
        %2976 = vst [vmem:[%s4 + $0x20] sm:$0xff] %v2960
        %2977 = vst [vmem:[%s4 + $0x28] sm:$0xff] %v2961
        %2978 = vst [vmem:[%s4 + $0x30] sm:$0xff] %v2962
        %2979 = vst [vmem:[%s4 + $0x38] sm:$0xff] %v2963
        %2980 = vst [vmem:[%s4 + $0x40] sm:$0xff] %v2964
        %2981 = vst [vmem:[%s4 + $0x48] sm:$0xff] %v2965
        %2982 = vst [vmem:[%s4 + $0x50] sm:$0xff] %v2966
        %2983 = vst [vmem:[%s4 + $0x58] sm:$0xff] %v2967
        %2984 = vst [vmem:[%s4 + $0x60] sm:$0xff] %v2968
        %2985 = vst [vmem:[%s4 + $0x68] sm:$0xff] %v2969
        %2986 = vst [vmem:[%s4 + $0x70] sm:$0xff] %v2970
        %2987 = vst [vmem:[%s4 + $0x78] sm:$0xff] %v2971
      $region52: #{_lambda_.2} parent=35 // pred_fallthru
        _
      // Predicated region
      $region53: #{_lambda_.2} parent=35 // pred_check
        %p2988 = pneg %p127
      $region54: #{_lambda_.2} parent=35 // pred_check_branch
        %2990 = sbr.rel (%p2988) target = $region56
      $region55: #{_lambda_.2} parent=35 // pred_region
        _
      $region56: #{_lambda_.2} parent=35 // pred_fallthru
        _
      // Predicated region
      $region57: #{_lambda_.2} parent=35 // pred_check
        %p2991 = pneg %p127
      $region58: #{_lambda_.2} parent=35 // pred_check_branch
        %2993 = sbr.rel (%p2991) target = $region60
      $region59: #{_lambda_.2} parent=35 // pred_region
        _
      $region60: #{_lambda_.2} parent=35 // pred_fallthru
        _
    $region36: #{_lambda_.2} parent=5 // pred_fallthru
      _
    %p2994 = scmp.le.s32.totalorder 2, %s10
    // Predicated region
    $region61: #{_lambda_.2} parent=5 // pred_check
      %p2995 = pneg %p2994
    $region62: #{_lambda_.2} parent=5 // pred_check_branch
      %2997 = sbr.rel (%p2995) target = $region64
    $region63: #{_lambda_.2} parent=5 // pred_region
      %s2998 = ssub.s32 %s10, 2
    $region64: #{_lambda_.2} parent=5 // pred_fallthru
      _
  $region6: #{_lambda_.2} parent=0 // loop_footer
    %s14 = sadd.s32 1, %s10
  $region7: #{_lambda_.2} parent=0 // loop_footer_branch
    %9 = sbr.rel target = $region3
  $region8: #{_lambda_.2} parent=0 // loop_exit
    _

// kernel: _lambda_.3
$region0: #{_lambda_.3}
  #allocation0 [shape = 'u32[]', space=smem, size = 0x4, offset = 0x4, fixed_abs, tag = 'smem constant byte address 0x4 - core index']
  #allocation1 [shape = 'u32[144,128]{1,0:T(1,128)}', space=vmem, size = 0x12000, scoped, tag = 'internal scratch']
  #allocation2 [shape = 'f32[1,1]{1,0:T(1,128)S(1)}', space=vmem, size = 0x200, scoped, tag = 'scoped memory for _lambda_.3']
  %s0 = inlined_call_operand.vmem [shape: f32[2,8192], index: 0, kind: input, shape index: {}]
  %s1 = inlined_call_operand.vmem [shape: f32[8192,192], index: 1, kind: input, shape index: {}]
  %s2 = inlined_call_operand.vmem [shape: f32[1,192], index: 2, kind: input, shape index: {}]
  %s3 = inlined_call_operand.vmem [shape: f32[1,192], index: 3, kind: input, shape index: {}]
  %s4 = inlined_call_operand.vmem [shape: f32[2,128], index: 4, kind: input, shape index: {}]
  %s5 = inlined_call_operand.vmem [shape: f32[192,128], index: 5, kind: input, shape index: {}]
  %s6 = inlined_call_operand.vmem [shape: f32[1,128], index: 6, kind: input, shape index: {}]
  %s7 = inlined_call_operand.vmem [shape: f32[192,32], index: 7, kind: input, shape index: {}]
  %s8 = inlined_call_operand.vmem [shape: f32[1,32], index: 8, kind: input, shape index: {}]
  %s9 = inlined_call_operand.vmem [shape: f32[32,1], index: 9, kind: input, shape index: {}]
  %s10 = inlined_call_operand.<no memory space> [shape: f32[1,1], index: 10, kind: input, shape index: {}]
  %s11 = inlined_call_operand.vmem [shape: f32[2,128], index: 11, kind: output, shape index: {0}]
  %s12 = inlined_call_operand.vmem [shape: f32[2,1], index: 12, kind: output, shape index: {1}]
  %13 = xla_tuple %s11, %s12
  %s14 = sld [smem:[#allocation0]]
  $region62: #{_lambda_.3} parent=0
    _
  %s16 = ssub.s32 1, %s14
  %s17 = scalar_select 0, %s16, %s14
  %v18 = vstv %s10
  %19 = vst [vmem:[#allocation2] sm:$0x1] %v18
  // Predicated region
  $region2: #{_lambda_.3} parent=0 // pred_check
    _
  $region3: #{_lambda_.3} parent=0 // pred_check_branch
    %21 = sbr.rel (0) target = $region5
  $region4: #{_lambda_.3} parent=0 // pred_region
    _
  $region5: #{_lambda_.3} parent=0 // pred_fallthru
    _
  // Predicated region
  $region6: #{_lambda_.3} parent=0 // pred_check
    _
  $region7: #{_lambda_.3} parent=0 // pred_check_branch
    %23 = sbr.rel (0) target = $region9
  $region8: #{_lambda_.3} parent=0 // pred_region
    _
  $region9: #{_lambda_.3} parent=0 // pred_fallthru
    _
  // Predicated region
  $region10: #{_lambda_.3} parent=0 // pred_check
    _
  $region11: #{_lambda_.3} parent=0 // pred_check_branch
    %25 = sbr.rel (0) target = $region13
  $region12: #{_lambda_.3} parent=0 // pred_region
    _
  $region13: #{_lambda_.3} parent=0 // pred_fallthru
    _
  // Predicated region
  $region14: #{_lambda_.3} parent=0 // pred_check
    _
  $region15: #{_lambda_.3} parent=0 // pred_check_branch
    %27 = sbr.rel (0) target = $region17
  $region16: #{_lambda_.3} parent=0 // pred_region
    _
  $region17: #{_lambda_.3} parent=0 // pred_fallthru
    _
  // Predicated region
  $region18: #{_lambda_.3} parent=0 // pred_check
    _
  $region19: #{_lambda_.3} parent=0 // pred_check_branch
    %29 = sbr.rel (0) target = $region21
  $region20: #{_lambda_.3} parent=0 // pred_region
    _
  $region21: #{_lambda_.3} parent=0 // pred_fallthru
    _
  // Predicated region
  $region22: #{_lambda_.3} parent=0 // pred_check
    _
  $region23: #{_lambda_.3} parent=0 // pred_check_branch
    %31 = sbr.rel (0) target = $region25
  $region24: #{_lambda_.3} parent=0 // pred_region
    _
  $region25: #{_lambda_.3} parent=0 // pred_fallthru
    _
  // Predicated region
  $region26: #{_lambda_.3} parent=0 // pred_check
    _
  $region27: #{_lambda_.3} parent=0 // pred_check_branch
    %33 = sbr.rel (0) target = $region29
  $region28: #{_lambda_.3} parent=0 // pred_region
    _
  $region29: #{_lambda_.3} parent=0 // pred_fallthru
    _
  // Predicated region
  $region30: #{_lambda_.3} parent=0 // pred_check
    _
  $region31: #{_lambda_.3} parent=0 // pred_check_branch
    %35 = sbr.rel (0) target = $region33
  $region32: #{_lambda_.3} parent=0 // pred_region
    _
  $region33: #{_lambda_.3} parent=0 // pred_fallthru
    _
  // Predicated region
  $region34: #{_lambda_.3} parent=0 // pred_check
    _
  $region35: #{_lambda_.3} parent=0 // pred_check_branch
    %37 = sbr.rel (0) target = $region37
  $region36: #{_lambda_.3} parent=0 // pred_region
    _
  $region37: #{_lambda_.3} parent=0 // pred_fallthru
    _
  // Predicated region
  $region38: #{_lambda_.3} parent=0 // pred_check
    _
  $region39: #{_lambda_.3} parent=0 // pred_check_branch
    %39 = sbr.rel (0) target = $region41
  $region40: #{_lambda_.3} parent=0 // pred_region
    _
  $region41: #{_lambda_.3} parent=0 // pred_fallthru
    _
  // Predicated region
  $region42: #{_lambda_.3} parent=0 // pred_check
    _
  $region43: #{_lambda_.3} parent=0 // pred_check_branch
    %41 = sbr.rel (0) target = $region45
  $region44: #{_lambda_.3} parent=0 // pred_region
    _
  $region45: #{_lambda_.3} parent=0 // pred_fallthru
    _
  %v42 = vld [vmem:[%s0] sm:$0xff]
  %v43 = vld [vmem:[%s0 + $0x8] sm:$0xff]
  %v44 = vld [vmem:[%s0 + $0x10] sm:$0xff]
  %v45 = vld [vmem:[%s0 + $0x18] sm:$0xff]
  %v46 = vld [vmem:[%s0 + $0x20] sm:$0xff]
  %v47 = vld [vmem:[%s0 + $0x28] sm:$0xff]
  %v48 = vld [vmem:[%s0 + $0x30] sm:$0xff]
  %v49 = vld [vmem:[%s0 + $0x38] sm:$0xff]
  %v50 = vld [vmem:[%s0 + $0x40] sm:$0xff]
  %v51 = vld [vmem:[%s0 + $0x48] sm:$0xff]
  %v52 = vld [vmem:[%s0 + $0x50] sm:$0xff]
  %v53 = vld [vmem:[%s0 + $0x58] sm:$0xff]
  %v54 = vld [vmem:[%s0 + $0x60] sm:$0xff]
  %v55 = vld [vmem:[%s0 + $0x68] sm:$0xff]
  %v56 = vld [vmem:[%s0 + $0x70] sm:$0xff]
  %v57 = vld [vmem:[%s0 + $0x78] sm:$0xff]
  %v58 = vld [vmem:[%s1] sm:$0xff]
  %v59 = vld [vmem:[%s1 + $0x8] sm:$0xff]
  %v60 = vld [vmem:[%s1 + $0x10] sm:$0xff]
  %v61 = vld [vmem:[%s1 + $0x18] sm:$0xff]
  %v62 = vld [vmem:[%s1 + $0x20] sm:$0xff]
  %v63 = vld [vmem:[%s1 + $0x28] sm:$0xff]
  %v64 = vld [vmem:[%s1 + $0x30] sm:$0xff]
  %v65 = vld [vmem:[%s1 + $0x38] sm:$0xff]
  %v66 = vld [vmem:[%s1 + $0x40] sm:$0xff]
  %v67 = vld [vmem:[%s1 + $0x48] sm:$0xff]
  %v68 = vld [vmem:[%s1 + $0x50] sm:$0xff]
  %v69 = vld [vmem:[%s1 + $0x58] sm:$0xff]
  %v70 = vld [vmem:[%s1 + $0x60] sm:$0xff]
  %v71 = vld [vmem:[%s1 + $0x68] sm:$0xff]
  %v72 = vld [vmem:[%s1 + $0x70] sm:$0xff]
  %v73 = vld [vmem:[%s1 + $0x78] sm:$0xff]
  %v74 = vld [vmem:[%s1 + $0x80] sm:$0xff]
  %v75 = vld [vmem:[%s1 + $0x88] sm:$0xff]
  %v76 = vld [vmem:[%s1 + $0x90] sm:$0xff]
  %v77 = vld [vmem:[%s1 + $0x98] sm:$0xff]
  %v78 = vld [vmem:[%s1 + $0xa0] sm:$0xff]
  %v79 = vld [vmem:[%s1 + $0xa8] sm:$0xff]
  %v80 = vld [vmem:[%s1 + $0xb0] sm:$0xff]
  %v81 = vld [vmem:[%s1 + $0xb8] sm:$0xff]
  %v82 = vld [vmem:[%s1 + $0xc0] sm:$0xff]
  %v83 = vld [vmem:[%s1 + $0xc8] sm:$0xff]
  %v84 = vld [vmem:[%s1 + $0xd0] sm:$0xff]
  %v85 = vld [vmem:[%s1 + $0xd8] sm:$0xff]
  %v86 = vld [vmem:[%s1 + $0xe0] sm:$0xff]
  %v87 = vld [vmem:[%s1 + $0xe8] sm:$0xff]
  %v88 = vld [vmem:[%s1 + $0xf0] sm:$0xff]
  %v89 = vld [vmem:[%s1 + $0xf8] sm:$0xff]
  %v90 = vld [vmem:[%s1 + $0x100] sm:$0xff]
  %v91 = vld [vmem:[%s1 + $0x108] sm:$0xff]
  %v92 = vld [vmem:[%s1 + $0x110] sm:$0xff]
  %v93 = vld [vmem:[%s1 + $0x118] sm:$0xff]
  %v94 = vld [vmem:[%s1 + $0x120] sm:$0xff]
  %v95 = vld [vmem:[%s1 + $0x128] sm:$0xff]
  %v96 = vld [vmem:[%s1 + $0x130] sm:$0xff]
  %v97 = vld [vmem:[%s1 + $0x138] sm:$0xff]
  %v98 = vld [vmem:[%s1 + $0x140] sm:$0xff]
  %v99 = vld [vmem:[%s1 + $0x148] sm:$0xff]
  %v100 = vld [vmem:[%s1 + $0x150] sm:$0xff]
  %v101 = vld [vmem:[%s1 + $0x158] sm:$0xff]
  %v102 = vld [vmem:[%s1 + $0x160] sm:$0xff]
  %v103 = vld [vmem:[%s1 + $0x168] sm:$0xff]
  %v104 = vld [vmem:[%s1 + $0x170] sm:$0xff]
  %v105 = vld [vmem:[%s1 + $0x178] sm:$0xff]
  %v106 = vld [vmem:[%s1 + $0x180] sm:$0xff]
  %v107 = vld [vmem:[%s1 + $0x188] sm:$0xff]
  %v108 = vld [vmem:[%s1 + $0x190] sm:$0xff]
  %v109 = vld [vmem:[%s1 + $0x198] sm:$0xff]
  %v110 = vld [vmem:[%s1 + $0x1a0] sm:$0xff]
  %v111 = vld [vmem:[%s1 + $0x1a8] sm:$0xff]
  %v112 = vld [vmem:[%s1 + $0x1b0] sm:$0xff]
  %v113 = vld [vmem:[%s1 + $0x1b8] sm:$0xff]
  %v114 = vld [vmem:[%s1 + $0x1c0] sm:$0xff]
  %v115 = vld [vmem:[%s1 + $0x1c8] sm:$0xff]
  %v116 = vld [vmem:[%s1 + $0x1d0] sm:$0xff]
  %v117 = vld [vmem:[%s1 + $0x1d8] sm:$0xff]
  %v118 = vld [vmem:[%s1 + $0x1e0] sm:$0xff]
  %v119 = vld [vmem:[%s1 + $0x1e8] sm:$0xff]
  %v120 = vld [vmem:[%s1 + $0x1f0] sm:$0xff]
  %v121 = vld [vmem:[%s1 + $0x1f8] sm:$0xff]
  %v122 = vld [vmem:[%s1 + $0x200] sm:$0xff]
  %v123 = vld [vmem:[%s1 + $0x208] sm:$0xff]
  %v124 = vld [vmem:[%s1 + $0x210] sm:$0xff]
  %v125 = vld [vmem:[%s1 + $0x218] sm:$0xff]
  %v126 = vld [vmem:[%s1 + $0x220] sm:$0xff]
  %v127 = vld [vmem:[%s1 + $0x228] sm:$0xff]
  %v128 = vld [vmem:[%s1 + $0x230] sm:$0xff]
  %v129 = vld [vmem:[%s1 + $0x238] sm:$0xff]
  %v130 = vld [vmem:[%s1 + $0x240] sm:$0xff]
  %v131 = vld [vmem:[%s1 + $0x248] sm:$0xff]
  %v132 = vld [vmem:[%s1 + $0x250] sm:$0xff]
  %v133 = vld [vmem:[%s1 + $0x258] sm:$0xff]
  %v134 = vld [vmem:[%s1 + $0x260] sm:$0xff]
  %v135 = vld [vmem:[%s1 + $0x268] sm:$0xff]
  %v136 = vld [vmem:[%s1 + $0x270] sm:$0xff]
  %v137 = vld [vmem:[%s1 + $0x278] sm:$0xff]
  %v138 = vld [vmem:[%s1 + $0x280] sm:$0xff]
  %v139 = vld [vmem:[%s1 + $0x288] sm:$0xff]
  %v140 = vld [vmem:[%s1 + $0x290] sm:$0xff]
  %v141 = vld [vmem:[%s1 + $0x298] sm:$0xff]
  %v142 = vld [vmem:[%s1 + $0x2a0] sm:$0xff]
  %v143 = vld [vmem:[%s1 + $0x2a8] sm:$0xff]
  %v144 = vld [vmem:[%s1 + $0x2b0] sm:$0xff]
  %v145 = vld [vmem:[%s1 + $0x2b8] sm:$0xff]
  %v146 = vld [vmem:[%s1 + $0x2c0] sm:$0xff]
  %v147 = vld [vmem:[%s1 + $0x2c8] sm:$0xff]
  %v148 = vld [vmem:[%s1 + $0x2d0] sm:$0xff]
  %v149 = vld [vmem:[%s1 + $0x2d8] sm:$0xff]
  %v150 = vld [vmem:[%s1 + $0x2e0] sm:$0xff]
  %v151 = vld [vmem:[%s1 + $0x2e8] sm:$0xff]
  %v152 = vld [vmem:[%s1 + $0x2f0] sm:$0xff]
  %v153 = vld [vmem:[%s1 + $0x2f8] sm:$0xff]
  %v154 = vld [vmem:[%s1 + $0x300] sm:$0xff]
  %v155 = vld [vmem:[%s1 + $0x308] sm:$0xff]
  %v156 = vld [vmem:[%s1 + $0x310] sm:$0xff]
  %v157 = vld [vmem:[%s1 + $0x318] sm:$0xff]
  %v158 = vld [vmem:[%s1 + $0x320] sm:$0xff]
  %v159 = vld [vmem:[%s1 + $0x328] sm:$0xff]
  %v160 = vld [vmem:[%s1 + $0x330] sm:$0xff]
  %v161 = vld [vmem:[%s1 + $0x338] sm:$0xff]
  %v162 = vld [vmem:[%s1 + $0x340] sm:$0xff]
  %v163 = vld [vmem:[%s1 + $0x348] sm:$0xff]
  %v164 = vld [vmem:[%s1 + $0x350] sm:$0xff]
  %v165 = vld [vmem:[%s1 + $0x358] sm:$0xff]
  %v166 = vld [vmem:[%s1 + $0x360] sm:$0xff]
  %v167 = vld [vmem:[%s1 + $0x368] sm:$0xff]
  %v168 = vld [vmem:[%s1 + $0x370] sm:$0xff]
  %v169 = vld [vmem:[%s1 + $0x378] sm:$0xff]
  %v170 = vld [vmem:[%s1 + $0x380] sm:$0xff]
  %v171 = vld [vmem:[%s1 + $0x388] sm:$0xff]
  %v172 = vld [vmem:[%s1 + $0x390] sm:$0xff]
  %v173 = vld [vmem:[%s1 + $0x398] sm:$0xff]
  %v174 = vld [vmem:[%s1 + $0x3a0] sm:$0xff]
  %v175 = vld [vmem:[%s1 + $0x3a8] sm:$0xff]
  %v176 = vld [vmem:[%s1 + $0x3b0] sm:$0xff]
  %v177 = vld [vmem:[%s1 + $0x3b8] sm:$0xff]
  %v178 = vld [vmem:[%s1 + $0x3c0] sm:$0xff]
  %v179 = vld [vmem:[%s1 + $0x3c8] sm:$0xff]
  %v180 = vld [vmem:[%s1 + $0x3d0] sm:$0xff]
  %v181 = vld [vmem:[%s1 + $0x3d8] sm:$0xff]
  %v182 = vld [vmem:[%s1 + $0x3e0] sm:$0xff]
  %v183 = vld [vmem:[%s1 + $0x3e8] sm:$0xff]
  %v184 = vld [vmem:[%s1 + $0x3f0] sm:$0xff]
  %v185 = vld [vmem:[%s1 + $0x3f8] sm:$0xff]
  %v186 = vld [vmem:[%s1 + $0x400] sm:$0xff]
  %v187 = vld [vmem:[%s1 + $0x408] sm:$0xff]
  %v188 = vld [vmem:[%s1 + $0x410] sm:$0xff]
  %v189 = vld [vmem:[%s1 + $0x418] sm:$0xff]
  %v190 = vld [vmem:[%s1 + $0x420] sm:$0xff]
  %v191 = vld [vmem:[%s1 + $0x428] sm:$0xff]
  %v192 = vld [vmem:[%s1 + $0x430] sm:$0xff]
  %v193 = vld [vmem:[%s1 + $0x438] sm:$0xff]
  %v194 = vld [vmem:[%s1 + $0x440] sm:$0xff]
  %v195 = vld [vmem:[%s1 + $0x448] sm:$0xff]
  %v196 = vld [vmem:[%s1 + $0x450] sm:$0xff]
  %v197 = vld [vmem:[%s1 + $0x458] sm:$0xff]
  %v198 = vld [vmem:[%s1 + $0x460] sm:$0xff]
  %v199 = vld [vmem:[%s1 + $0x468] sm:$0xff]
  %v200 = vld [vmem:[%s1 + $0x470] sm:$0xff]
  %v201 = vld [vmem:[%s1 + $0x478] sm:$0xff]
  %v202 = vld [vmem:[%s1 + $0x480] sm:$0xff]
  %v203 = vld [vmem:[%s1 + $0x488] sm:$0xff]
  %v204 = vld [vmem:[%s1 + $0x490] sm:$0xff]
  %v205 = vld [vmem:[%s1 + $0x498] sm:$0xff]
  %v206 = vld [vmem:[%s1 + $0x4a0] sm:$0xff]
  %v207 = vld [vmem:[%s1 + $0x4a8] sm:$0xff]
  %v208 = vld [vmem:[%s1 + $0x4b0] sm:$0xff]
  %v209 = vld [vmem:[%s1 + $0x4b8] sm:$0xff]
  %v210 = vld [vmem:[%s1 + $0x4c0] sm:$0xff]
  %v211 = vld [vmem:[%s1 + $0x4c8] sm:$0xff]
  %v212 = vld [vmem:[%s1 + $0x4d0] sm:$0xff]
  %v213 = vld [vmem:[%s1 + $0x4d8] sm:$0xff]
  %v214 = vld [vmem:[%s1 + $0x4e0] sm:$0xff]
  %v215 = vld [vmem:[%s1 + $0x4e8] sm:$0xff]
  %v216 = vld [vmem:[%s1 + $0x4f0] sm:$0xff]
  %v217 = vld [vmem:[%s1 + $0x4f8] sm:$0xff]
  %v218 = vld [vmem:[%s1 + $0x500] sm:$0xff]
  %v219 = vld [vmem:[%s1 + $0x508] sm:$0xff]
  %v220 = vld [vmem:[%s1 + $0x510] sm:$0xff]
  %v221 = vld [vmem:[%s1 + $0x518] sm:$0xff]
  %v222 = vld [vmem:[%s1 + $0x520] sm:$0xff]
  %v223 = vld [vmem:[%s1 + $0x528] sm:$0xff]
  %v224 = vld [vmem:[%s1 + $0x530] sm:$0xff]
  %v225 = vld [vmem:[%s1 + $0x538] sm:$0xff]
  %v226 = vld [vmem:[%s1 + $0x540] sm:$0xff]
  %v227 = vld [vmem:[%s1 + $0x548] sm:$0xff]
  %v228 = vld [vmem:[%s1 + $0x550] sm:$0xff]
  %v229 = vld [vmem:[%s1 + $0x558] sm:$0xff]
  %v230 = vld [vmem:[%s1 + $0x560] sm:$0xff]
  %v231 = vld [vmem:[%s1 + $0x568] sm:$0xff]
  %v232 = vld [vmem:[%s1 + $0x570] sm:$0xff]
  %v233 = vld [vmem:[%s1 + $0x578] sm:$0xff]
  %v234 = vld [vmem:[%s1 + $0x580] sm:$0xff]
  %v235 = vld [vmem:[%s1 + $0x588] sm:$0xff]
  %v236 = vld [vmem:[%s1 + $0x590] sm:$0xff]
  %v237 = vld [vmem:[%s1 + $0x598] sm:$0xff]
  %v238 = vld [vmem:[%s1 + $0x5a0] sm:$0xff]
  %v239 = vld [vmem:[%s1 + $0x5a8] sm:$0xff]
  %v240 = vld [vmem:[%s1 + $0x5b0] sm:$0xff]
  %v241 = vld [vmem:[%s1 + $0x5b8] sm:$0xff]
  %v242 = vld [vmem:[%s1 + $0x5c0] sm:$0xff]
  %v243 = vld [vmem:[%s1 + $0x5c8] sm:$0xff]
  %v244 = vld [vmem:[%s1 + $0x5d0] sm:$0xff]
  %v245 = vld [vmem:[%s1 + $0x5d8] sm:$0xff]
  %v246 = vld [vmem:[%s1 + $0x5e0] sm:$0xff]
  %v247 = vld [vmem:[%s1 + $0x5e8] sm:$0xff]
  %v248 = vld [vmem:[%s1 + $0x5f0] sm:$0xff]
  %v249 = vld [vmem:[%s1 + $0x5f8] sm:$0xff]
  %v250 = vld [vmem:[%s1 + $0x600] sm:$0xff]
  %v251 = vld [vmem:[%s1 + $0x608] sm:$0xff]
  %v252 = vld [vmem:[%s1 + $0x610] sm:$0xff]
  %v253 = vld [vmem:[%s1 + $0x618] sm:$0xff]
  %v254 = vld [vmem:[%s1 + $0x620] sm:$0xff]
  %v255 = vld [vmem:[%s1 + $0x628] sm:$0xff]
  %v256 = vld [vmem:[%s1 + $0x630] sm:$0xff]
  %v257 = vld [vmem:[%s1 + $0x638] sm:$0xff]
  %v258 = vld [vmem:[%s1 + $0x640] sm:$0xff]
  %v259 = vld [vmem:[%s1 + $0x648] sm:$0xff]
  %v260 = vld [vmem:[%s1 + $0x650] sm:$0xff]
  %v261 = vld [vmem:[%s1 + $0x658] sm:$0xff]
  %v262 = vld [vmem:[%s1 + $0x660] sm:$0xff]
  %v263 = vld [vmem:[%s1 + $0x668] sm:$0xff]
  %v264 = vld [vmem:[%s1 + $0x670] sm:$0xff]
  %v265 = vld [vmem:[%s1 + $0x678] sm:$0xff]
  %v266 = vld [vmem:[%s1 + $0x680] sm:$0xff]
  %v267 = vld [vmem:[%s1 + $0x688] sm:$0xff]
  %v268 = vld [vmem:[%s1 + $0x690] sm:$0xff]
  %v269 = vld [vmem:[%s1 + $0x698] sm:$0xff]
  %v270 = vld [vmem:[%s1 + $0x6a0] sm:$0xff]
  %v271 = vld [vmem:[%s1 + $0x6a8] sm:$0xff]
  %v272 = vld [vmem:[%s1 + $0x6b0] sm:$0xff]
  %v273 = vld [vmem:[%s1 + $0x6b8] sm:$0xff]
  %v274 = vld [vmem:[%s1 + $0x6c0] sm:$0xff]
  %v275 = vld [vmem:[%s1 + $0x6c8] sm:$0xff]
  %v276 = vld [vmem:[%s1 + $0x6d0] sm:$0xff]
  %v277 = vld [vmem:[%s1 + $0x6d8] sm:$0xff]
  %v278 = vld [vmem:[%s1 + $0x6e0] sm:$0xff]
  %v279 = vld [vmem:[%s1 + $0x6e8] sm:$0xff]
  %v280 = vld [vmem:[%s1 + $0x6f0] sm:$0xff]
  %v281 = vld [vmem:[%s1 + $0x6f8] sm:$0xff]
  %v282 = vld [vmem:[%s1 + $0x700] sm:$0xff]
  %v283 = vld [vmem:[%s1 + $0x708] sm:$0xff]
  %v284 = vld [vmem:[%s1 + $0x710] sm:$0xff]
  %v285 = vld [vmem:[%s1 + $0x718] sm:$0xff]
  %v286 = vld [vmem:[%s1 + $0x720] sm:$0xff]
  %v287 = vld [vmem:[%s1 + $0x728] sm:$0xff]
  %v288 = vld [vmem:[%s1 + $0x730] sm:$0xff]
  %v289 = vld [vmem:[%s1 + $0x738] sm:$0xff]
  %v290 = vld [vmem:[%s1 + $0x740] sm:$0xff]
  %v291 = vld [vmem:[%s1 + $0x748] sm:$0xff]
  %v292 = vld [vmem:[%s1 + $0x750] sm:$0xff]
  %v293 = vld [vmem:[%s1 + $0x758] sm:$0xff]
  %v294 = vld [vmem:[%s1 + $0x760] sm:$0xff]
  %v295 = vld [vmem:[%s1 + $0x768] sm:$0xff]
  %v296 = vld [vmem:[%s1 + $0x770] sm:$0xff]
  %v297 = vld [vmem:[%s1 + $0x778] sm:$0xff]
  %v298 = vld [vmem:[%s1 + $0x780] sm:$0xff]
  %v299 = vld [vmem:[%s1 + $0x788] sm:$0xff]
  %v300 = vld [vmem:[%s1 + $0x790] sm:$0xff]
  %v301 = vld [vmem:[%s1 + $0x798] sm:$0xff]
  %v302 = vld [vmem:[%s1 + $0x7a0] sm:$0xff]
  %v303 = vld [vmem:[%s1 + $0x7a8] sm:$0xff]
  %v304 = vld [vmem:[%s1 + $0x7b0] sm:$0xff]
  %v305 = vld [vmem:[%s1 + $0x7b8] sm:$0xff]
  %v306 = vld [vmem:[%s1 + $0x7c0] sm:$0xff]
  %v307 = vld [vmem:[%s1 + $0x7c8] sm:$0xff]
  %v308 = vld [vmem:[%s1 + $0x7d0] sm:$0xff]
  %v309 = vld [vmem:[%s1 + $0x7d8] sm:$0xff]
  %v310 = vld [vmem:[%s1 + $0x7e0] sm:$0xff]
  %v311 = vld [vmem:[%s1 + $0x7e8] sm:$0xff]
  %v312 = vld [vmem:[%s1 + $0x7f0] sm:$0xff]
  %v313 = vld [vmem:[%s1 + $0x7f8] sm:$0xff]
  %v314 = vld [vmem:[%s1 + $0x800] sm:$0xff]
  %v315 = vld [vmem:[%s1 + $0x808] sm:$0xff]
  %v316 = vld [vmem:[%s1 + $0x810] sm:$0xff]
  %v317 = vld [vmem:[%s1 + $0x818] sm:$0xff]
  %v318 = vld [vmem:[%s1 + $0x820] sm:$0xff]
  %v319 = vld [vmem:[%s1 + $0x828] sm:$0xff]
  %v320 = vld [vmem:[%s1 + $0x830] sm:$0xff]
  %v321 = vld [vmem:[%s1 + $0x838] sm:$0xff]
  %v322 = vld [vmem:[%s1 + $0x840] sm:$0xff]
  %v323 = vld [vmem:[%s1 + $0x848] sm:$0xff]
  %v324 = vld [vmem:[%s1 + $0x850] sm:$0xff]
  %v325 = vld [vmem:[%s1 + $0x858] sm:$0xff]
  %v326 = vld [vmem:[%s1 + $0x860] sm:$0xff]
  %v327 = vld [vmem:[%s1 + $0x868] sm:$0xff]
  %v328 = vld [vmem:[%s1 + $0x870] sm:$0xff]
  %v329 = vld [vmem:[%s1 + $0x878] sm:$0xff]
  %v330 = vld [vmem:[%s1 + $0x880] sm:$0xff]
  %v331 = vld [vmem:[%s1 + $0x888] sm:$0xff]
  %v332 = vld [vmem:[%s1 + $0x890] sm:$0xff]
  %v333 = vld [vmem:[%s1 + $0x898] sm:$0xff]
  %v334 = vld [vmem:[%s1 + $0x8a0] sm:$0xff]
  %v335 = vld [vmem:[%s1 + $0x8a8] sm:$0xff]
  %v336 = vld [vmem:[%s1 + $0x8b0] sm:$0xff]
  %v337 = vld [vmem:[%s1 + $0x8b8] sm:$0xff]
  %v338 = vld [vmem:[%s1 + $0x8c0] sm:$0xff]
  %v339 = vld [vmem:[%s1 + $0x8c8] sm:$0xff]
  %v340 = vld [vmem:[%s1 + $0x8d0] sm:$0xff]
  %v341 = vld [vmem:[%s1 + $0x8d8] sm:$0xff]
  %v342 = vld [vmem:[%s1 + $0x8e0] sm:$0xff]
  %v343 = vld [vmem:[%s1 + $0x8e8] sm:$0xff]
  %v344 = vld [vmem:[%s1 + $0x8f0] sm:$0xff]
  %v345 = vld [vmem:[%s1 + $0x8f8] sm:$0xff]
  %v346 = vld [vmem:[%s1 + $0x900] sm:$0xff]
  %v347 = vld [vmem:[%s1 + $0x908] sm:$0xff]
  %v348 = vld [vmem:[%s1 + $0x910] sm:$0xff]
  %v349 = vld [vmem:[%s1 + $0x918] sm:$0xff]
  %v350 = vld [vmem:[%s1 + $0x920] sm:$0xff]
  %v351 = vld [vmem:[%s1 + $0x928] sm:$0xff]
  %v352 = vld [vmem:[%s1 + $0x930] sm:$0xff]
  %v353 = vld [vmem:[%s1 + $0x938] sm:$0xff]
  %v354 = vld [vmem:[%s1 + $0x940] sm:$0xff]
  %v355 = vld [vmem:[%s1 + $0x948] sm:$0xff]
  %v356 = vld [vmem:[%s1 + $0x950] sm:$0xff]
  %v357 = vld [vmem:[%s1 + $0x958] sm:$0xff]
  %v358 = vld [vmem:[%s1 + $0x960] sm:$0xff]
  %v359 = vld [vmem:[%s1 + $0x968] sm:$0xff]
  %v360 = vld [vmem:[%s1 + $0x970] sm:$0xff]
  %v361 = vld [vmem:[%s1 + $0x978] sm:$0xff]
  %v362 = vld [vmem:[%s1 + $0x980] sm:$0xff]
  %v363 = vld [vmem:[%s1 + $0x988] sm:$0xff]
  %v364 = vld [vmem:[%s1 + $0x990] sm:$0xff]
  %v365 = vld [vmem:[%s1 + $0x998] sm:$0xff]
  %v366 = vld [vmem:[%s1 + $0x9a0] sm:$0xff]
  %v367 = vld [vmem:[%s1 + $0x9a8] sm:$0xff]
  %v368 = vld [vmem:[%s1 + $0x9b0] sm:$0xff]
  %v369 = vld [vmem:[%s1 + $0x9b8] sm:$0xff]
  %v370 = vld [vmem:[%s1 + $0x9c0] sm:$0xff]
  %v371 = vld [vmem:[%s1 + $0x9c8] sm:$0xff]
  %v372 = vld [vmem:[%s1 + $0x9d0] sm:$0xff]
  %v373 = vld [vmem:[%s1 + $0x9d8] sm:$0xff]
  %v374 = vld [vmem:[%s1 + $0x9e0] sm:$0xff]
  %v375 = vld [vmem:[%s1 + $0x9e8] sm:$0xff]
  %v376 = vld [vmem:[%s1 + $0x9f0] sm:$0xff]
  %v377 = vld [vmem:[%s1 + $0x9f8] sm:$0xff]
  %v378 = vld [vmem:[%s1 + $0xa00] sm:$0xff]
  %v379 = vld [vmem:[%s1 + $0xa08] sm:$0xff]
  %v380 = vld [vmem:[%s1 + $0xa10] sm:$0xff]
  %v381 = vld [vmem:[%s1 + $0xa18] sm:$0xff]
  %v382 = vld [vmem:[%s1 + $0xa20] sm:$0xff]
  %v383 = vld [vmem:[%s1 + $0xa28] sm:$0xff]
  %v384 = vld [vmem:[%s1 + $0xa30] sm:$0xff]
  %v385 = vld [vmem:[%s1 + $0xa38] sm:$0xff]
  %v386 = vld [vmem:[%s1 + $0xa40] sm:$0xff]
  %v387 = vld [vmem:[%s1 + $0xa48] sm:$0xff]
  %v388 = vld [vmem:[%s1 + $0xa50] sm:$0xff]
  %v389 = vld [vmem:[%s1 + $0xa58] sm:$0xff]
  %v390 = vld [vmem:[%s1 + $0xa60] sm:$0xff]
  %v391 = vld [vmem:[%s1 + $0xa68] sm:$0xff]
  %v392 = vld [vmem:[%s1 + $0xa70] sm:$0xff]
  %v393 = vld [vmem:[%s1 + $0xa78] sm:$0xff]
  %v394 = vld [vmem:[%s1 + $0xa80] sm:$0xff]
  %v395 = vld [vmem:[%s1 + $0xa88] sm:$0xff]
  %v396 = vld [vmem:[%s1 + $0xa90] sm:$0xff]
  %v397 = vld [vmem:[%s1 + $0xa98] sm:$0xff]
  %v398 = vld [vmem:[%s1 + $0xaa0] sm:$0xff]
  %v399 = vld [vmem:[%s1 + $0xaa8] sm:$0xff]
  %v400 = vld [vmem:[%s1 + $0xab0] sm:$0xff]
  %v401 = vld [vmem:[%s1 + $0xab8] sm:$0xff]
  %v402 = vld [vmem:[%s1 + $0xac0] sm:$0xff]
  %v403 = vld [vmem:[%s1 + $0xac8] sm:$0xff]
  %v404 = vld [vmem:[%s1 + $0xad0] sm:$0xff]
  %v405 = vld [vmem:[%s1 + $0xad8] sm:$0xff]
  %v406 = vld [vmem:[%s1 + $0xae0] sm:$0xff]
  %v407 = vld [vmem:[%s1 + $0xae8] sm:$0xff]
  %v408 = vld [vmem:[%s1 + $0xaf0] sm:$0xff]
  %v409 = vld [vmem:[%s1 + $0xaf8] sm:$0xff]
  %v410 = vld [vmem:[%s1 + $0xb00] sm:$0xff]
  %v411 = vld [vmem:[%s1 + $0xb08] sm:$0xff]
  %v412 = vld [vmem:[%s1 + $0xb10] sm:$0xff]
  %v413 = vld [vmem:[%s1 + $0xb18] sm:$0xff]
  %v414 = vld [vmem:[%s1 + $0xb20] sm:$0xff]
  %v415 = vld [vmem:[%s1 + $0xb28] sm:$0xff]
  %v416 = vld [vmem:[%s1 + $0xb30] sm:$0xff]
  %v417 = vld [vmem:[%s1 + $0xb38] sm:$0xff]
  %v418 = vld [vmem:[%s1 + $0xb40] sm:$0xff]
  %v419 = vld [vmem:[%s1 + $0xb48] sm:$0xff]
  %v420 = vld [vmem:[%s1 + $0xb50] sm:$0xff]
  %v421 = vld [vmem:[%s1 + $0xb58] sm:$0xff]
  %v422 = vld [vmem:[%s1 + $0xb60] sm:$0xff]
  %v423 = vld [vmem:[%s1 + $0xb68] sm:$0xff]
  %v424 = vld [vmem:[%s1 + $0xb70] sm:$0xff]
  %v425 = vld [vmem:[%s1 + $0xb78] sm:$0xff]
  %v426 = vld [vmem:[%s1 + $0xb80] sm:$0xff]
  %v427 = vld [vmem:[%s1 + $0xb88] sm:$0xff]
  %v428 = vld [vmem:[%s1 + $0xb90] sm:$0xff]
  %v429 = vld [vmem:[%s1 + $0xb98] sm:$0xff]
  %v430 = vld [vmem:[%s1 + $0xba0] sm:$0xff]
  %v431 = vld [vmem:[%s1 + $0xba8] sm:$0xff]
  %v432 = vld [vmem:[%s1 + $0xbb0] sm:$0xff]
  %v433 = vld [vmem:[%s1 + $0xbb8] sm:$0xff]
  %v434 = vld [vmem:[%s1 + $0xbc0] sm:$0xff]
  %v435 = vld [vmem:[%s1 + $0xbc8] sm:$0xff]
  %v436 = vld [vmem:[%s1 + $0xbd0] sm:$0xff]
  %v437 = vld [vmem:[%s1 + $0xbd8] sm:$0xff]
  %v438 = vld [vmem:[%s1 + $0xbe0] sm:$0xff]
  %v439 = vld [vmem:[%s1 + $0xbe8] sm:$0xff]
  %v440 = vld [vmem:[%s1 + $0xbf0] sm:$0xff]
  %v441 = vld [vmem:[%s1 + $0xbf8] sm:$0xff]
  %v442 = vld [vmem:[%s1 + $0xc00] sm:$0xff]
  %v443 = vld [vmem:[%s1 + $0xc08] sm:$0xff]
  %v444 = vld [vmem:[%s1 + $0xc10] sm:$0xff]
  %v445 = vld [vmem:[%s1 + $0xc18] sm:$0xff]
  %v446 = vld [vmem:[%s1 + $0xc20] sm:$0xff]
  %v447 = vld [vmem:[%s1 + $0xc28] sm:$0xff]
  %v448 = vld [vmem:[%s1 + $0xc30] sm:$0xff]
  %v449 = vld [vmem:[%s1 + $0xc38] sm:$0xff]
  %v450 = vld [vmem:[%s1 + $0xc40] sm:$0xff]
  %v451 = vld [vmem:[%s1 + $0xc48] sm:$0xff]
  %v452 = vld [vmem:[%s1 + $0xc50] sm:$0xff]
  %v453 = vld [vmem:[%s1 + $0xc58] sm:$0xff]
  %v454 = vld [vmem:[%s1 + $0xc60] sm:$0xff]
  %v455 = vld [vmem:[%s1 + $0xc68] sm:$0xff]
  %v456 = vld [vmem:[%s1 + $0xc70] sm:$0xff]
  %v457 = vld [vmem:[%s1 + $0xc78] sm:$0xff]
  %v458 = vld [vmem:[%s1 + $0xc80] sm:$0xff]
  %v459 = vld [vmem:[%s1 + $0xc88] sm:$0xff]
  %v460 = vld [vmem:[%s1 + $0xc90] sm:$0xff]
  %v461 = vld [vmem:[%s1 + $0xc98] sm:$0xff]
  %v462 = vld [vmem:[%s1 + $0xca0] sm:$0xff]
  %v463 = vld [vmem:[%s1 + $0xca8] sm:$0xff]
  %v464 = vld [vmem:[%s1 + $0xcb0] sm:$0xff]
  %v465 = vld [vmem:[%s1 + $0xcb8] sm:$0xff]
  %v466 = vld [vmem:[%s1 + $0xcc0] sm:$0xff]
  %v467 = vld [vmem:[%s1 + $0xcc8] sm:$0xff]
  %v468 = vld [vmem:[%s1 + $0xcd0] sm:$0xff]
  %v469 = vld [vmem:[%s1 + $0xcd8] sm:$0xff]
  %v470 = vld [vmem:[%s1 + $0xce0] sm:$0xff]
  %v471 = vld [vmem:[%s1 + $0xce8] sm:$0xff]
  %v472 = vld [vmem:[%s1 + $0xcf0] sm:$0xff]
  %v473 = vld [vmem:[%s1 + $0xcf8] sm:$0xff]
  %v474 = vld [vmem:[%s1 + $0xd00] sm:$0xff]
  %v475 = vld [vmem:[%s1 + $0xd08] sm:$0xff]
  %v476 = vld [vmem:[%s1 + $0xd10] sm:$0xff]
  %v477 = vld [vmem:[%s1 + $0xd18] sm:$0xff]
  %v478 = vld [vmem:[%s1 + $0xd20] sm:$0xff]
  %v479 = vld [vmem:[%s1 + $0xd28] sm:$0xff]
  %v480 = vld [vmem:[%s1 + $0xd30] sm:$0xff]
  %v481 = vld [vmem:[%s1 + $0xd38] sm:$0xff]
  %v482 = vld [vmem:[%s1 + $0xd40] sm:$0xff]
  %v483 = vld [vmem:[%s1 + $0xd48] sm:$0xff]
  %v484 = vld [vmem:[%s1 + $0xd50] sm:$0xff]
  %v485 = vld [vmem:[%s1 + $0xd58] sm:$0xff]
  %v486 = vld [vmem:[%s1 + $0xd60] sm:$0xff]
  %v487 = vld [vmem:[%s1 + $0xd68] sm:$0xff]
  %v488 = vld [vmem:[%s1 + $0xd70] sm:$0xff]
  %v489 = vld [vmem:[%s1 + $0xd78] sm:$0xff]
  %v490 = vld [vmem:[%s1 + $0xd80] sm:$0xff]
  %v491 = vld [vmem:[%s1 + $0xd88] sm:$0xff]
  %v492 = vld [vmem:[%s1 + $0xd90] sm:$0xff]
  %v493 = vld [vmem:[%s1 + $0xd98] sm:$0xff]
  %v494 = vld [vmem:[%s1 + $0xda0] sm:$0xff]
  %v495 = vld [vmem:[%s1 + $0xda8] sm:$0xff]
  %v496 = vld [vmem:[%s1 + $0xdb0] sm:$0xff]
  %v497 = vld [vmem:[%s1 + $0xdb8] sm:$0xff]
  %v498 = vld [vmem:[%s1 + $0xdc0] sm:$0xff]
  %v499 = vld [vmem:[%s1 + $0xdc8] sm:$0xff]
  %v500 = vld [vmem:[%s1 + $0xdd0] sm:$0xff]
  %v501 = vld [vmem:[%s1 + $0xdd8] sm:$0xff]
  %v502 = vld [vmem:[%s1 + $0xde0] sm:$0xff]
  %v503 = vld [vmem:[%s1 + $0xde8] sm:$0xff]
  %v504 = vld [vmem:[%s1 + $0xdf0] sm:$0xff]
  %v505 = vld [vmem:[%s1 + $0xdf8] sm:$0xff]
  %v506 = vld [vmem:[%s1 + $0xe00] sm:$0xff]
  %v507 = vld [vmem:[%s1 + $0xe08] sm:$0xff]
  %v508 = vld [vmem:[%s1 + $0xe10] sm:$0xff]
  %v509 = vld [vmem:[%s1 + $0xe18] sm:$0xff]
  %v510 = vld [vmem:[%s1 + $0xe20] sm:$0xff]
  %v511 = vld [vmem:[%s1 + $0xe28] sm:$0xff]
  %v512 = vld [vmem:[%s1 + $0xe30] sm:$0xff]
  %v513 = vld [vmem:[%s1 + $0xe38] sm:$0xff]
  %v514 = vld [vmem:[%s1 + $0xe40] sm:$0xff]
  %v515 = vld [vmem:[%s1 + $0xe48] sm:$0xff]
  %v516 = vld [vmem:[%s1 + $0xe50] sm:$0xff]
  %v517 = vld [vmem:[%s1 + $0xe58] sm:$0xff]
  %v518 = vld [vmem:[%s1 + $0xe60] sm:$0xff]
  %v519 = vld [vmem:[%s1 + $0xe68] sm:$0xff]
  %v520 = vld [vmem:[%s1 + $0xe70] sm:$0xff]
  %v521 = vld [vmem:[%s1 + $0xe78] sm:$0xff]
  %v522 = vld [vmem:[%s1 + $0xe80] sm:$0xff]
  %v523 = vld [vmem:[%s1 + $0xe88] sm:$0xff]
  %v524 = vld [vmem:[%s1 + $0xe90] sm:$0xff]
  %v525 = vld [vmem:[%s1 + $0xe98] sm:$0xff]
  %v526 = vld [vmem:[%s1 + $0xea0] sm:$0xff]
  %v527 = vld [vmem:[%s1 + $0xea8] sm:$0xff]
  %v528 = vld [vmem:[%s1 + $0xeb0] sm:$0xff]
  %v529 = vld [vmem:[%s1 + $0xeb8] sm:$0xff]
  %v530 = vld [vmem:[%s1 + $0xec0] sm:$0xff]
  %v531 = vld [vmem:[%s1 + $0xec8] sm:$0xff]
  %v532 = vld [vmem:[%s1 + $0xed0] sm:$0xff]
  %v533 = vld [vmem:[%s1 + $0xed8] sm:$0xff]
  %v534 = vld [vmem:[%s1 + $0xee0] sm:$0xff]
  %v535 = vld [vmem:[%s1 + $0xee8] sm:$0xff]
  %v536 = vld [vmem:[%s1 + $0xef0] sm:$0xff]
  %v537 = vld [vmem:[%s1 + $0xef8] sm:$0xff]
  %v538 = vld [vmem:[%s1 + $0xf00] sm:$0xff]
  %v539 = vld [vmem:[%s1 + $0xf08] sm:$0xff]
  %v540 = vld [vmem:[%s1 + $0xf10] sm:$0xff]
  %v541 = vld [vmem:[%s1 + $0xf18] sm:$0xff]
  %v542 = vld [vmem:[%s1 + $0xf20] sm:$0xff]
  %v543 = vld [vmem:[%s1 + $0xf28] sm:$0xff]
  %v544 = vld [vmem:[%s1 + $0xf30] sm:$0xff]
  %v545 = vld [vmem:[%s1 + $0xf38] sm:$0xff]
  %v546 = vld [vmem:[%s1 + $0xf40] sm:$0xff]
  %v547 = vld [vmem:[%s1 + $0xf48] sm:$0xff]
  %v548 = vld [vmem:[%s1 + $0xf50] sm:$0xff]
  %v549 = vld [vmem:[%s1 + $0xf58] sm:$0xff]
  %v550 = vld [vmem:[%s1 + $0xf60] sm:$0xff]
  %v551 = vld [vmem:[%s1 + $0xf68] sm:$0xff]
  %v552 = vld [vmem:[%s1 + $0xf70] sm:$0xff]
  %v553 = vld [vmem:[%s1 + $0xf78] sm:$0xff]
  %v554 = vld [vmem:[%s1 + $0xf80] sm:$0xff]
  %v555 = vld [vmem:[%s1 + $0xf88] sm:$0xff]
  %v556 = vld [vmem:[%s1 + $0xf90] sm:$0xff]
  %v557 = vld [vmem:[%s1 + $0xf98] sm:$0xff]
  %v558 = vld [vmem:[%s1 + $0xfa0] sm:$0xff]
  %v559 = vld [vmem:[%s1 + $0xfa8] sm:$0xff]
  %v560 = vld [vmem:[%s1 + $0xfb0] sm:$0xff]
  %v561 = vld [vmem:[%s1 + $0xfb8] sm:$0xff]
  %v562 = vld [vmem:[%s1 + $0xfc0] sm:$0xff]
  %v563 = vld [vmem:[%s1 + $0xfc8] sm:$0xff]
  %v564 = vld [vmem:[%s1 + $0xfd0] sm:$0xff]
  %v565 = vld [vmem:[%s1 + $0xfd8] sm:$0xff]
  %v566 = vld [vmem:[%s1 + $0xfe0] sm:$0xff]
  %v567 = vld [vmem:[%s1 + $0xfe8] sm:$0xff]
  %v568 = vld [vmem:[%s1 + $0xff0] sm:$0xff]
  %v569 = vld [vmem:[%s1 + $0xff8] sm:$0xff]
  %v570 = vld [vmem:[%s1 + $0x1000] sm:$0xff]
  %v571 = vld [vmem:[%s1 + $0x1008] sm:$0xff]
  %v572 = vld [vmem:[%s1 + $0x1010] sm:$0xff]
  %v573 = vld [vmem:[%s1 + $0x1018] sm:$0xff]
  %v574 = vld [vmem:[%s1 + $0x1020] sm:$0xff]
  %v575 = vld [vmem:[%s1 + $0x1028] sm:$0xff]
  %v576 = vld [vmem:[%s1 + $0x1030] sm:$0xff]
  %v577 = vld [vmem:[%s1 + $0x1038] sm:$0xff]
  %v578 = vld [vmem:[%s1 + $0x1040] sm:$0xff]
  %v579 = vld [vmem:[%s1 + $0x1048] sm:$0xff]
  %v580 = vld [vmem:[%s1 + $0x1050] sm:$0xff]
  %v581 = vld [vmem:[%s1 + $0x1058] sm:$0xff]
  %v582 = vld [vmem:[%s1 + $0x1060] sm:$0xff]
  %v583 = vld [vmem:[%s1 + $0x1068] sm:$0xff]
  %v584 = vld [vmem:[%s1 + $0x1070] sm:$0xff]
  %v585 = vld [vmem:[%s1 + $0x1078] sm:$0xff]
  %v586 = vld [vmem:[%s1 + $0x1080] sm:$0xff]
  %v587 = vld [vmem:[%s1 + $0x1088] sm:$0xff]
  %v588 = vld [vmem:[%s1 + $0x1090] sm:$0xff]
  %v589 = vld [vmem:[%s1 + $0x1098] sm:$0xff]
  %v590 = vld [vmem:[%s1 + $0x10a0] sm:$0xff]
  %v591 = vld [vmem:[%s1 + $0x10a8] sm:$0xff]
  %v592 = vld [vmem:[%s1 + $0x10b0] sm:$0xff]
  %v593 = vld [vmem:[%s1 + $0x10b8] sm:$0xff]
  %v594 = vld [vmem:[%s1 + $0x10c0] sm:$0xff]
  %v595 = vld [vmem:[%s1 + $0x10c8] sm:$0xff]
  %v596 = vld [vmem:[%s1 + $0x10d0] sm:$0xff]
  %v597 = vld [vmem:[%s1 + $0x10d8] sm:$0xff]
  %v598 = vld [vmem:[%s1 + $0x10e0] sm:$0xff]
  %v599 = vld [vmem:[%s1 + $0x10e8] sm:$0xff]
  %v600 = vld [vmem:[%s1 + $0x10f0] sm:$0xff]
  %v601 = vld [vmem:[%s1 + $0x10f8] sm:$0xff]
  %v602 = vld [vmem:[%s1 + $0x1100] sm:$0xff]
  %v603 = vld [vmem:[%s1 + $0x1108] sm:$0xff]
  %v604 = vld [vmem:[%s1 + $0x1110] sm:$0xff]
  %v605 = vld [vmem:[%s1 + $0x1118] sm:$0xff]
  %v606 = vld [vmem:[%s1 + $0x1120] sm:$0xff]
  %v607 = vld [vmem:[%s1 + $0x1128] sm:$0xff]
  %v608 = vld [vmem:[%s1 + $0x1130] sm:$0xff]
  %v609 = vld [vmem:[%s1 + $0x1138] sm:$0xff]
  %v610 = vld [vmem:[%s1 + $0x1140] sm:$0xff]
  %v611 = vld [vmem:[%s1 + $0x1148] sm:$0xff]
  %v612 = vld [vmem:[%s1 + $0x1150] sm:$0xff]
  %v613 = vld [vmem:[%s1 + $0x1158] sm:$0xff]
  %v614 = vld [vmem:[%s1 + $0x1160] sm:$0xff]
  %v615 = vld [vmem:[%s1 + $0x1168] sm:$0xff]
  %v616 = vld [vmem:[%s1 + $0x1170] sm:$0xff]
  %v617 = vld [vmem:[%s1 + $0x1178] sm:$0xff]
  %v618 = vld [vmem:[%s1 + $0x1180] sm:$0xff]
  %v619 = vld [vmem:[%s1 + $0x1188] sm:$0xff]
  %v620 = vld [vmem:[%s1 + $0x1190] sm:$0xff]
  %v621 = vld [vmem:[%s1 + $0x1198] sm:$0xff]
  %v622 = vld [vmem:[%s1 + $0x11a0] sm:$0xff]
  %v623 = vld [vmem:[%s1 + $0x11a8] sm:$0xff]
  %v624 = vld [vmem:[%s1 + $0x11b0] sm:$0xff]
  %v625 = vld [vmem:[%s1 + $0x11b8] sm:$0xff]
  %v626 = vld [vmem:[%s1 + $0x11c0] sm:$0xff]
  %v627 = vld [vmem:[%s1 + $0x11c8] sm:$0xff]
  %v628 = vld [vmem:[%s1 + $0x11d0] sm:$0xff]
  %v629 = vld [vmem:[%s1 + $0x11d8] sm:$0xff]
  %v630 = vld [vmem:[%s1 + $0x11e0] sm:$0xff]
  %v631 = vld [vmem:[%s1 + $0x11e8] sm:$0xff]
  %v632 = vld [vmem:[%s1 + $0x11f0] sm:$0xff]
  %v633 = vld [vmem:[%s1 + $0x11f8] sm:$0xff]
  %v634 = vld [vmem:[%s1 + $0x1200] sm:$0xff]
  %v635 = vld [vmem:[%s1 + $0x1208] sm:$0xff]
  %v636 = vld [vmem:[%s1 + $0x1210] sm:$0xff]
  %v637 = vld [vmem:[%s1 + $0x1218] sm:$0xff]
  %v638 = vld [vmem:[%s1 + $0x1220] sm:$0xff]
  %v639 = vld [vmem:[%s1 + $0x1228] sm:$0xff]
  %v640 = vld [vmem:[%s1 + $0x1230] sm:$0xff]
  %v641 = vld [vmem:[%s1 + $0x1238] sm:$0xff]
  %v642 = vld [vmem:[%s1 + $0x1240] sm:$0xff]
  %v643 = vld [vmem:[%s1 + $0x1248] sm:$0xff]
  %v644 = vld [vmem:[%s1 + $0x1250] sm:$0xff]
  %v645 = vld [vmem:[%s1 + $0x1258] sm:$0xff]
  %v646 = vld [vmem:[%s1 + $0x1260] sm:$0xff]
  %v647 = vld [vmem:[%s1 + $0x1268] sm:$0xff]
  %v648 = vld [vmem:[%s1 + $0x1270] sm:$0xff]
  %v649 = vld [vmem:[%s1 + $0x1278] sm:$0xff]
  %v650 = vld [vmem:[%s1 + $0x1280] sm:$0xff]
  %v651 = vld [vmem:[%s1 + $0x1288] sm:$0xff]
  %v652 = vld [vmem:[%s1 + $0x1290] sm:$0xff]
  %v653 = vld [vmem:[%s1 + $0x1298] sm:$0xff]
  %v654 = vld [vmem:[%s1 + $0x12a0] sm:$0xff]
  %v655 = vld [vmem:[%s1 + $0x12a8] sm:$0xff]
  %v656 = vld [vmem:[%s1 + $0x12b0] sm:$0xff]
  %v657 = vld [vmem:[%s1 + $0x12b8] sm:$0xff]
  %v658 = vld [vmem:[%s1 + $0x12c0] sm:$0xff]
  %v659 = vld [vmem:[%s1 + $0x12c8] sm:$0xff]
  %v660 = vld [vmem:[%s1 + $0x12d0] sm:$0xff]
  %v661 = vld [vmem:[%s1 + $0x12d8] sm:$0xff]
  %v662 = vld [vmem:[%s1 + $0x12e0] sm:$0xff]
  %v663 = vld [vmem:[%s1 + $0x12e8] sm:$0xff]
  %v664 = vld [vmem:[%s1 + $0x12f0] sm:$0xff]
  %v665 = vld [vmem:[%s1 + $0x12f8] sm:$0xff]
  %v666 = vld [vmem:[%s1 + $0x1300] sm:$0xff]
  %v667 = vld [vmem:[%s1 + $0x1308] sm:$0xff]
  %v668 = vld [vmem:[%s1 + $0x1310] sm:$0xff]
  %v669 = vld [vmem:[%s1 + $0x1318] sm:$0xff]
  %v670 = vld [vmem:[%s1 + $0x1320] sm:$0xff]
  %v671 = vld [vmem:[%s1 + $0x1328] sm:$0xff]
  %v672 = vld [vmem:[%s1 + $0x1330] sm:$0xff]
  %v673 = vld [vmem:[%s1 + $0x1338] sm:$0xff]
  %v674 = vld [vmem:[%s1 + $0x1340] sm:$0xff]
  %v675 = vld [vmem:[%s1 + $0x1348] sm:$0xff]
  %v676 = vld [vmem:[%s1 + $0x1350] sm:$0xff]
  %v677 = vld [vmem:[%s1 + $0x1358] sm:$0xff]
  %v678 = vld [vmem:[%s1 + $0x1360] sm:$0xff]
  %v679 = vld [vmem:[%s1 + $0x1368] sm:$0xff]
  %v680 = vld [vmem:[%s1 + $0x1370] sm:$0xff]
  %v681 = vld [vmem:[%s1 + $0x1378] sm:$0xff]
  %v682 = vld [vmem:[%s1 + $0x1380] sm:$0xff]
  %v683 = vld [vmem:[%s1 + $0x1388] sm:$0xff]
  %v684 = vld [vmem:[%s1 + $0x1390] sm:$0xff]
  %v685 = vld [vmem:[%s1 + $0x1398] sm:$0xff]
  %v686 = vld [vmem:[%s1 + $0x13a0] sm:$0xff]
  %v687 = vld [vmem:[%s1 + $0x13a8] sm:$0xff]
  %v688 = vld [vmem:[%s1 + $0x13b0] sm:$0xff]
  %v689 = vld [vmem:[%s1 + $0x13b8] sm:$0xff]
  %v690 = vld [vmem:[%s1 + $0x13c0] sm:$0xff]
  %v691 = vld [vmem:[%s1 + $0x13c8] sm:$0xff]
  %v692 = vld [vmem:[%s1 + $0x13d0] sm:$0xff]
  %v693 = vld [vmem:[%s1 + $0x13d8] sm:$0xff]
  %v694 = vld [vmem:[%s1 + $0x13e0] sm:$0xff]
  %v695 = vld [vmem:[%s1 + $0x13e8] sm:$0xff]
  %v696 = vld [vmem:[%s1 + $0x13f0] sm:$0xff]
  %v697 = vld [vmem:[%s1 + $0x13f8] sm:$0xff]
  %v698 = vld [vmem:[%s1 + $0x1400] sm:$0xff]
  %v699 = vld [vmem:[%s1 + $0x1408] sm:$0xff]
  %v700 = vld [vmem:[%s1 + $0x1410] sm:$0xff]
  %v701 = vld [vmem:[%s1 + $0x1418] sm:$0xff]
  %v702 = vld [vmem:[%s1 + $0x1420] sm:$0xff]
  %v703 = vld [vmem:[%s1 + $0x1428] sm:$0xff]
  %v704 = vld [vmem:[%s1 + $0x1430] sm:$0xff]
  %v705 = vld [vmem:[%s1 + $0x1438] sm:$0xff]
  %v706 = vld [vmem:[%s1 + $0x1440] sm:$0xff]
  %v707 = vld [vmem:[%s1 + $0x1448] sm:$0xff]
  %v708 = vld [vmem:[%s1 + $0x1450] sm:$0xff]
  %v709 = vld [vmem:[%s1 + $0x1458] sm:$0xff]
  %v710 = vld [vmem:[%s1 + $0x1460] sm:$0xff]
  %v711 = vld [vmem:[%s1 + $0x1468] sm:$0xff]
  %v712 = vld [vmem:[%s1 + $0x1470] sm:$0xff]
  %v713 = vld [vmem:[%s1 + $0x1478] sm:$0xff]
  %v714 = vld [vmem:[%s1 + $0x1480] sm:$0xff]
  %v715 = vld [vmem:[%s1 + $0x1488] sm:$0xff]
  %v716 = vld [vmem:[%s1 + $0x1490] sm:$0xff]
  %v717 = vld [vmem:[%s1 + $0x1498] sm:$0xff]
  %v718 = vld [vmem:[%s1 + $0x14a0] sm:$0xff]
  %v719 = vld [vmem:[%s1 + $0x14a8] sm:$0xff]
  %v720 = vld [vmem:[%s1 + $0x14b0] sm:$0xff]
  %v721 = vld [vmem:[%s1 + $0x14b8] sm:$0xff]
  %v722 = vld [vmem:[%s1 + $0x14c0] sm:$0xff]
  %v723 = vld [vmem:[%s1 + $0x14c8] sm:$0xff]
  %v724 = vld [vmem:[%s1 + $0x14d0] sm:$0xff]
  %v725 = vld [vmem:[%s1 + $0x14d8] sm:$0xff]
  %v726 = vld [vmem:[%s1 + $0x14e0] sm:$0xff]
  %v727 = vld [vmem:[%s1 + $0x14e8] sm:$0xff]
  %v728 = vld [vmem:[%s1 + $0x14f0] sm:$0xff]
  %v729 = vld [vmem:[%s1 + $0x14f8] sm:$0xff]
  %v730 = vld [vmem:[%s1 + $0x1500] sm:$0xff]
  %v731 = vld [vmem:[%s1 + $0x1508] sm:$0xff]
  %v732 = vld [vmem:[%s1 + $0x1510] sm:$0xff]
  %v733 = vld [vmem:[%s1 + $0x1518] sm:$0xff]
  %v734 = vld [vmem:[%s1 + $0x1520] sm:$0xff]
  %v735 = vld [vmem:[%s1 + $0x1528] sm:$0xff]
  %v736 = vld [vmem:[%s1 + $0x1530] sm:$0xff]
  %v737 = vld [vmem:[%s1 + $0x1538] sm:$0xff]
  %v738 = vld [vmem:[%s1 + $0x1540] sm:$0xff]
  %v739 = vld [vmem:[%s1 + $0x1548] sm:$0xff]
  %v740 = vld [vmem:[%s1 + $0x1550] sm:$0xff]
  %v741 = vld [vmem:[%s1 + $0x1558] sm:$0xff]
  %v742 = vld [vmem:[%s1 + $0x1560] sm:$0xff]
  %v743 = vld [vmem:[%s1 + $0x1568] sm:$0xff]
  %v744 = vld [vmem:[%s1 + $0x1570] sm:$0xff]
  %v745 = vld [vmem:[%s1 + $0x1578] sm:$0xff]
  %v746 = vld [vmem:[%s1 + $0x1580] sm:$0xff]
  %v747 = vld [vmem:[%s1 + $0x1588] sm:$0xff]
  %v748 = vld [vmem:[%s1 + $0x1590] sm:$0xff]
  %v749 = vld [vmem:[%s1 + $0x1598] sm:$0xff]
  %v750 = vld [vmem:[%s1 + $0x15a0] sm:$0xff]
  %v751 = vld [vmem:[%s1 + $0x15a8] sm:$0xff]
  %v752 = vld [vmem:[%s1 + $0x15b0] sm:$0xff]
  %v753 = vld [vmem:[%s1 + $0x15b8] sm:$0xff]
  %v754 = vld [vmem:[%s1 + $0x15c0] sm:$0xff]
  %v755 = vld [vmem:[%s1 + $0x15c8] sm:$0xff]
  %v756 = vld [vmem:[%s1 + $0x15d0] sm:$0xff]
  %v757 = vld [vmem:[%s1 + $0x15d8] sm:$0xff]
  %v758 = vld [vmem:[%s1 + $0x15e0] sm:$0xff]
  %v759 = vld [vmem:[%s1 + $0x15e8] sm:$0xff]
  %v760 = vld [vmem:[%s1 + $0x15f0] sm:$0xff]
  %v761 = vld [vmem:[%s1 + $0x15f8] sm:$0xff]
  %v762 = vld [vmem:[%s1 + $0x1600] sm:$0xff]
  %v763 = vld [vmem:[%s1 + $0x1608] sm:$0xff]
  %v764 = vld [vmem:[%s1 + $0x1610] sm:$0xff]
  %v765 = vld [vmem:[%s1 + $0x1618] sm:$0xff]
  %v766 = vld [vmem:[%s1 + $0x1620] sm:$0xff]
  %v767 = vld [vmem:[%s1 + $0x1628] sm:$0xff]
  %v768 = vld [vmem:[%s1 + $0x1630] sm:$0xff]
  %v769 = vld [vmem:[%s1 + $0x1638] sm:$0xff]
  %v770 = vld [vmem:[%s1 + $0x1640] sm:$0xff]
  %v771 = vld [vmem:[%s1 + $0x1648] sm:$0xff]
  %v772 = vld [vmem:[%s1 + $0x1650] sm:$0xff]
  %v773 = vld [vmem:[%s1 + $0x1658] sm:$0xff]
  %v774 = vld [vmem:[%s1 + $0x1660] sm:$0xff]
  %v775 = vld [vmem:[%s1 + $0x1668] sm:$0xff]
  %v776 = vld [vmem:[%s1 + $0x1670] sm:$0xff]
  %v777 = vld [vmem:[%s1 + $0x1678] sm:$0xff]
  %v778 = vld [vmem:[%s1 + $0x1680] sm:$0xff]
  %v779 = vld [vmem:[%s1 + $0x1688] sm:$0xff]
  %v780 = vld [vmem:[%s1 + $0x1690] sm:$0xff]
  %v781 = vld [vmem:[%s1 + $0x1698] sm:$0xff]
  %v782 = vld [vmem:[%s1 + $0x16a0] sm:$0xff]
  %v783 = vld [vmem:[%s1 + $0x16a8] sm:$0xff]
  %v784 = vld [vmem:[%s1 + $0x16b0] sm:$0xff]
  %v785 = vld [vmem:[%s1 + $0x16b8] sm:$0xff]
  %v786 = vld [vmem:[%s1 + $0x16c0] sm:$0xff]
  %v787 = vld [vmem:[%s1 + $0x16c8] sm:$0xff]
  %v788 = vld [vmem:[%s1 + $0x16d0] sm:$0xff]
  %v789 = vld [vmem:[%s1 + $0x16d8] sm:$0xff]
  %v790 = vld [vmem:[%s1 + $0x16e0] sm:$0xff]
  %v791 = vld [vmem:[%s1 + $0x16e8] sm:$0xff]
  %v792 = vld [vmem:[%s1 + $0x16f0] sm:$0xff]
  %v793 = vld [vmem:[%s1 + $0x16f8] sm:$0xff]
  %v794 = vld [vmem:[%s1 + $0x1700] sm:$0xff]
  %v795 = vld [vmem:[%s1 + $0x1708] sm:$0xff]
  %v796 = vld [vmem:[%s1 + $0x1710] sm:$0xff]
  %v797 = vld [vmem:[%s1 + $0x1718] sm:$0xff]
  %v798 = vld [vmem:[%s1 + $0x1720] sm:$0xff]
  %v799 = vld [vmem:[%s1 + $0x1728] sm:$0xff]
  %v800 = vld [vmem:[%s1 + $0x1730] sm:$0xff]
  %v801 = vld [vmem:[%s1 + $0x1738] sm:$0xff]
  %v802 = vld [vmem:[%s1 + $0x1740] sm:$0xff]
  %v803 = vld [vmem:[%s1 + $0x1748] sm:$0xff]
  %v804 = vld [vmem:[%s1 + $0x1750] sm:$0xff]
  %v805 = vld [vmem:[%s1 + $0x1758] sm:$0xff]
  %v806 = vld [vmem:[%s1 + $0x1760] sm:$0xff]
  %v807 = vld [vmem:[%s1 + $0x1768] sm:$0xff]
  %v808 = vld [vmem:[%s1 + $0x1770] sm:$0xff]
  %v809 = vld [vmem:[%s1 + $0x1778] sm:$0xff]
  %v810 = vld [vmem:[%s1 + $0x1780] sm:$0xff]
  %v811 = vld [vmem:[%s1 + $0x1788] sm:$0xff]
  %v812 = vld [vmem:[%s1 + $0x1790] sm:$0xff]
  %v813 = vld [vmem:[%s1 + $0x1798] sm:$0xff]
  %v814 = vld [vmem:[%s1 + $0x17a0] sm:$0xff]
  %v815 = vld [vmem:[%s1 + $0x17a8] sm:$0xff]
  %v816 = vld [vmem:[%s1 + $0x17b0] sm:$0xff]
  %v817 = vld [vmem:[%s1 + $0x17b8] sm:$0xff]
  %v818 = vld [vmem:[%s1 + $0x17c0] sm:$0xff]
  %v819 = vld [vmem:[%s1 + $0x17c8] sm:$0xff]
  %v820 = vld [vmem:[%s1 + $0x17d0] sm:$0xff]
  %v821 = vld [vmem:[%s1 + $0x17d8] sm:$0xff]
  %v822 = vld [vmem:[%s1 + $0x17e0] sm:$0xff]
  %v823 = vld [vmem:[%s1 + $0x17e8] sm:$0xff]
  %v824 = vld [vmem:[%s1 + $0x17f0] sm:$0xff]
  %v825 = vld [vmem:[%s1 + $0x17f8] sm:$0xff]
  %v826 = vld [vmem:[%s1 + $0x1800] sm:$0xff]
  %v827 = vld [vmem:[%s1 + $0x1808] sm:$0xff]
  %v828 = vld [vmem:[%s1 + $0x1810] sm:$0xff]
  %v829 = vld [vmem:[%s1 + $0x1818] sm:$0xff]
  %v830 = vld [vmem:[%s1 + $0x1820] sm:$0xff]
  %v831 = vld [vmem:[%s1 + $0x1828] sm:$0xff]
  %v832 = vld [vmem:[%s1 + $0x1830] sm:$0xff]
  %v833 = vld [vmem:[%s1 + $0x1838] sm:$0xff]
  %v834 = vld [vmem:[%s1 + $0x1840] sm:$0xff]
  %v835 = vld [vmem:[%s1 + $0x1848] sm:$0xff]
  %v836 = vld [vmem:[%s1 + $0x1850] sm:$0xff]
  %v837 = vld [vmem:[%s1 + $0x1858] sm:$0xff]
  %v838 = vld [vmem:[%s1 + $0x1860] sm:$0xff]
  %v839 = vld [vmem:[%s1 + $0x1868] sm:$0xff]
  %v840 = vld [vmem:[%s1 + $0x1870] sm:$0xff]
  %v841 = vld [vmem:[%s1 + $0x1878] sm:$0xff]
  %v842 = vld [vmem:[%s1 + $0x1880] sm:$0xff]
  %v843 = vld [vmem:[%s1 + $0x1888] sm:$0xff]
  %v844 = vld [vmem:[%s1 + $0x1890] sm:$0xff]
  %v845 = vld [vmem:[%s1 + $0x1898] sm:$0xff]
  %v846 = vld [vmem:[%s1 + $0x18a0] sm:$0xff]
  %v847 = vld [vmem:[%s1 + $0x18a8] sm:$0xff]
  %v848 = vld [vmem:[%s1 + $0x18b0] sm:$0xff]
  %v849 = vld [vmem:[%s1 + $0x18b8] sm:$0xff]
  %v850 = vld [vmem:[%s1 + $0x18c0] sm:$0xff]
  %v851 = vld [vmem:[%s1 + $0x18c8] sm:$0xff]
  %v852 = vld [vmem:[%s1 + $0x18d0] sm:$0xff]
  %v853 = vld [vmem:[%s1 + $0x18d8] sm:$0xff]
  %v854 = vld [vmem:[%s1 + $0x18e0] sm:$0xff]
  %v855 = vld [vmem:[%s1 + $0x18e8] sm:$0xff]
  %v856 = vld [vmem:[%s1 + $0x18f0] sm:$0xff]
  %v857 = vld [vmem:[%s1 + $0x18f8] sm:$0xff]
  %v858 = vld [vmem:[%s1 + $0x1900] sm:$0xff]
  %v859 = vld [vmem:[%s1 + $0x1908] sm:$0xff]
  %v860 = vld [vmem:[%s1 + $0x1910] sm:$0xff]
  %v861 = vld [vmem:[%s1 + $0x1918] sm:$0xff]
  %v862 = vld [vmem:[%s1 + $0x1920] sm:$0xff]
  %v863 = vld [vmem:[%s1 + $0x1928] sm:$0xff]
  %v864 = vld [vmem:[%s1 + $0x1930] sm:$0xff]
  %v865 = vld [vmem:[%s1 + $0x1938] sm:$0xff]
  %v866 = vld [vmem:[%s1 + $0x1940] sm:$0xff]
  %v867 = vld [vmem:[%s1 + $0x1948] sm:$0xff]
  %v868 = vld [vmem:[%s1 + $0x1950] sm:$0xff]
  %v869 = vld [vmem:[%s1 + $0x1958] sm:$0xff]
  %v870 = vld [vmem:[%s1 + $0x1960] sm:$0xff]
  %v871 = vld [vmem:[%s1 + $0x1968] sm:$0xff]
  %v872 = vld [vmem:[%s1 + $0x1970] sm:$0xff]
  %v873 = vld [vmem:[%s1 + $0x1978] sm:$0xff]
  %v874 = vld [vmem:[%s1 + $0x1980] sm:$0xff]
  %v875 = vld [vmem:[%s1 + $0x1988] sm:$0xff]
  %v876 = vld [vmem:[%s1 + $0x1990] sm:$0xff]
  %v877 = vld [vmem:[%s1 + $0x1998] sm:$0xff]
  %v878 = vld [vmem:[%s1 + $0x19a0] sm:$0xff]
  %v879 = vld [vmem:[%s1 + $0x19a8] sm:$0xff]
  %v880 = vld [vmem:[%s1 + $0x19b0] sm:$0xff]
  %v881 = vld [vmem:[%s1 + $0x19b8] sm:$0xff]
  %v882 = vld [vmem:[%s1 + $0x19c0] sm:$0xff]
  %v883 = vld [vmem:[%s1 + $0x19c8] sm:$0xff]
  %v884 = vld [vmem:[%s1 + $0x19d0] sm:$0xff]
  %v885 = vld [vmem:[%s1 + $0x19d8] sm:$0xff]
  %v886 = vld [vmem:[%s1 + $0x19e0] sm:$0xff]
  %v887 = vld [vmem:[%s1 + $0x19e8] sm:$0xff]
  %v888 = vld [vmem:[%s1 + $0x19f0] sm:$0xff]
  %v889 = vld [vmem:[%s1 + $0x19f8] sm:$0xff]
  %v890 = vld [vmem:[%s1 + $0x1a00] sm:$0xff]
  %v891 = vld [vmem:[%s1 + $0x1a08] sm:$0xff]
  %v892 = vld [vmem:[%s1 + $0x1a10] sm:$0xff]
  %v893 = vld [vmem:[%s1 + $0x1a18] sm:$0xff]
  %v894 = vld [vmem:[%s1 + $0x1a20] sm:$0xff]
  %v895 = vld [vmem:[%s1 + $0x1a28] sm:$0xff]
  %v896 = vld [vmem:[%s1 + $0x1a30] sm:$0xff]
  %v897 = vld [vmem:[%s1 + $0x1a38] sm:$0xff]
  %v898 = vld [vmem:[%s1 + $0x1a40] sm:$0xff]
  %v899 = vld [vmem:[%s1 + $0x1a48] sm:$0xff]
  %v900 = vld [vmem:[%s1 + $0x1a50] sm:$0xff]
  %v901 = vld [vmem:[%s1 + $0x1a58] sm:$0xff]
  %v902 = vld [vmem:[%s1 + $0x1a60] sm:$0xff]
  %v903 = vld [vmem:[%s1 + $0x1a68] sm:$0xff]
  %v904 = vld [vmem:[%s1 + $0x1a70] sm:$0xff]
  %v905 = vld [vmem:[%s1 + $0x1a78] sm:$0xff]
  %v906 = vld [vmem:[%s1 + $0x1a80] sm:$0xff]
  %v907 = vld [vmem:[%s1 + $0x1a88] sm:$0xff]
  %v908 = vld [vmem:[%s1 + $0x1a90] sm:$0xff]
  %v909 = vld [vmem:[%s1 + $0x1a98] sm:$0xff]
  %v910 = vld [vmem:[%s1 + $0x1aa0] sm:$0xff]
  %v911 = vld [vmem:[%s1 + $0x1aa8] sm:$0xff]
  %v912 = vld [vmem:[%s1 + $0x1ab0] sm:$0xff]
  %v913 = vld [vmem:[%s1 + $0x1ab8] sm:$0xff]
  %v914 = vld [vmem:[%s1 + $0x1ac0] sm:$0xff]
  %v915 = vld [vmem:[%s1 + $0x1ac8] sm:$0xff]
  %v916 = vld [vmem:[%s1 + $0x1ad0] sm:$0xff]
  %v917 = vld [vmem:[%s1 + $0x1ad8] sm:$0xff]
  %v918 = vld [vmem:[%s1 + $0x1ae0] sm:$0xff]
  %v919 = vld [vmem:[%s1 + $0x1ae8] sm:$0xff]
  %v920 = vld [vmem:[%s1 + $0x1af0] sm:$0xff]
  %v921 = vld [vmem:[%s1 + $0x1af8] sm:$0xff]
  %v922 = vld [vmem:[%s1 + $0x1b00] sm:$0xff]
  %v923 = vld [vmem:[%s1 + $0x1b08] sm:$0xff]
  %v924 = vld [vmem:[%s1 + $0x1b10] sm:$0xff]
  %v925 = vld [vmem:[%s1 + $0x1b18] sm:$0xff]
  %v926 = vld [vmem:[%s1 + $0x1b20] sm:$0xff]
  %v927 = vld [vmem:[%s1 + $0x1b28] sm:$0xff]
  %v928 = vld [vmem:[%s1 + $0x1b30] sm:$0xff]
  %v929 = vld [vmem:[%s1 + $0x1b38] sm:$0xff]
  %v930 = vld [vmem:[%s1 + $0x1b40] sm:$0xff]
  %v931 = vld [vmem:[%s1 + $0x1b48] sm:$0xff]
  %v932 = vld [vmem:[%s1 + $0x1b50] sm:$0xff]
  %v933 = vld [vmem:[%s1 + $0x1b58] sm:$0xff]
  %v934 = vld [vmem:[%s1 + $0x1b60] sm:$0xff]
  %v935 = vld [vmem:[%s1 + $0x1b68] sm:$0xff]
  %v936 = vld [vmem:[%s1 + $0x1b70] sm:$0xff]
  %v937 = vld [vmem:[%s1 + $0x1b78] sm:$0xff]
  %v938 = vld [vmem:[%s1 + $0x1b80] sm:$0xff]
  %v939 = vld [vmem:[%s1 + $0x1b88] sm:$0xff]
  %v940 = vld [vmem:[%s1 + $0x1b90] sm:$0xff]
  %v941 = vld [vmem:[%s1 + $0x1b98] sm:$0xff]
  %v942 = vld [vmem:[%s1 + $0x1ba0] sm:$0xff]
  %v943 = vld [vmem:[%s1 + $0x1ba8] sm:$0xff]
  %v944 = vld [vmem:[%s1 + $0x1bb0] sm:$0xff]
  %v945 = vld [vmem:[%s1 + $0x1bb8] sm:$0xff]
  %v946 = vld [vmem:[%s1 + $0x1bc0] sm:$0xff]
  %v947 = vld [vmem:[%s1 + $0x1bc8] sm:$0xff]
  %v948 = vld [vmem:[%s1 + $0x1bd0] sm:$0xff]
  %v949 = vld [vmem:[%s1 + $0x1bd8] sm:$0xff]
  %v950 = vld [vmem:[%s1 + $0x1be0] sm:$0xff]
  %v951 = vld [vmem:[%s1 + $0x1be8] sm:$0xff]
  %v952 = vld [vmem:[%s1 + $0x1bf0] sm:$0xff]
  %v953 = vld [vmem:[%s1 + $0x1bf8] sm:$0xff]
  %v954 = vld [vmem:[%s1 + $0x1c00] sm:$0xff]
  %v955 = vld [vmem:[%s1 + $0x1c08] sm:$0xff]
  %v956 = vld [vmem:[%s1 + $0x1c10] sm:$0xff]
  %v957 = vld [vmem:[%s1 + $0x1c18] sm:$0xff]
  %v958 = vld [vmem:[%s1 + $0x1c20] sm:$0xff]
  %v959 = vld [vmem:[%s1 + $0x1c28] sm:$0xff]
  %v960 = vld [vmem:[%s1 + $0x1c30] sm:$0xff]
  %v961 = vld [vmem:[%s1 + $0x1c38] sm:$0xff]
  %v962 = vld [vmem:[%s1 + $0x1c40] sm:$0xff]
  %v963 = vld [vmem:[%s1 + $0x1c48] sm:$0xff]
  %v964 = vld [vmem:[%s1 + $0x1c50] sm:$0xff]
  %v965 = vld [vmem:[%s1 + $0x1c58] sm:$0xff]
  %v966 = vld [vmem:[%s1 + $0x1c60] sm:$0xff]
  %v967 = vld [vmem:[%s1 + $0x1c68] sm:$0xff]
  %v968 = vld [vmem:[%s1 + $0x1c70] sm:$0xff]
  %v969 = vld [vmem:[%s1 + $0x1c78] sm:$0xff]
  %v970 = vld [vmem:[%s1 + $0x1c80] sm:$0xff]
  %v971 = vld [vmem:[%s1 + $0x1c88] sm:$0xff]
  %v972 = vld [vmem:[%s1 + $0x1c90] sm:$0xff]
  %v973 = vld [vmem:[%s1 + $0x1c98] sm:$0xff]
  %v974 = vld [vmem:[%s1 + $0x1ca0] sm:$0xff]
  %v975 = vld [vmem:[%s1 + $0x1ca8] sm:$0xff]
  %v976 = vld [vmem:[%s1 + $0x1cb0] sm:$0xff]
  %v977 = vld [vmem:[%s1 + $0x1cb8] sm:$0xff]
  %v978 = vld [vmem:[%s1 + $0x1cc0] sm:$0xff]
  %v979 = vld [vmem:[%s1 + $0x1cc8] sm:$0xff]
  %v980 = vld [vmem:[%s1 + $0x1cd0] sm:$0xff]
  %v981 = vld [vmem:[%s1 + $0x1cd8] sm:$0xff]
  %v982 = vld [vmem:[%s1 + $0x1ce0] sm:$0xff]
  %v983 = vld [vmem:[%s1 + $0x1ce8] sm:$0xff]
  %v984 = vld [vmem:[%s1 + $0x1cf0] sm:$0xff]
  %v985 = vld [vmem:[%s1 + $0x1cf8] sm:$0xff]
  %v986 = vld [vmem:[%s1 + $0x1d00] sm:$0xff]
  %v987 = vld [vmem:[%s1 + $0x1d08] sm:$0xff]
  %v988 = vld [vmem:[%s1 + $0x1d10] sm:$0xff]
  %v989 = vld [vmem:[%s1 + $0x1d18] sm:$0xff]
  %v990 = vld [vmem:[%s1 + $0x1d20] sm:$0xff]
  %v991 = vld [vmem:[%s1 + $0x1d28] sm:$0xff]
  %v992 = vld [vmem:[%s1 + $0x1d30] sm:$0xff]
  %v993 = vld [vmem:[%s1 + $0x1d38] sm:$0xff]
  %v994 = vld [vmem:[%s1 + $0x1d40] sm:$0xff]
  %v995 = vld [vmem:[%s1 + $0x1d48] sm:$0xff]
  %v996 = vld [vmem:[%s1 + $0x1d50] sm:$0xff]
  %v997 = vld [vmem:[%s1 + $0x1d58] sm:$0xff]
  %v998 = vld [vmem:[%s1 + $0x1d60] sm:$0xff]
  %v999 = vld [vmem:[%s1 + $0x1d68] sm:$0xff]
  %v1000 = vld [vmem:[%s1 + $0x1d70] sm:$0xff]
  %v1001 = vld [vmem:[%s1 + $0x1d78] sm:$0xff]
  %v1002 = vld [vmem:[%s1 + $0x1d80] sm:$0xff]
  %v1003 = vld [vmem:[%s1 + $0x1d88] sm:$0xff]
  %v1004 = vld [vmem:[%s1 + $0x1d90] sm:$0xff]
  %v1005 = vld [vmem:[%s1 + $0x1d98] sm:$0xff]
  %v1006 = vld [vmem:[%s1 + $0x1da0] sm:$0xff]
  %v1007 = vld [vmem:[%s1 + $0x1da8] sm:$0xff]
  %v1008 = vld [vmem:[%s1 + $0x1db0] sm:$0xff]
  %v1009 = vld [vmem:[%s1 + $0x1db8] sm:$0xff]
  %v1010 = vld [vmem:[%s1 + $0x1dc0] sm:$0xff]
  %v1011 = vld [vmem:[%s1 + $0x1dc8] sm:$0xff]
  %v1012 = vld [vmem:[%s1 + $0x1dd0] sm:$0xff]
  %v1013 = vld [vmem:[%s1 + $0x1dd8] sm:$0xff]
  %v1014 = vld [vmem:[%s1 + $0x1de0] sm:$0xff]
  %v1015 = vld [vmem:[%s1 + $0x1de8] sm:$0xff]
  %v1016 = vld [vmem:[%s1 + $0x1df0] sm:$0xff]
  %v1017 = vld [vmem:[%s1 + $0x1df8] sm:$0xff]
  %v1018 = vld [vmem:[%s1 + $0x1e00] sm:$0xff]
  %v1019 = vld [vmem:[%s1 + $0x1e08] sm:$0xff]
  %v1020 = vld [vmem:[%s1 + $0x1e10] sm:$0xff]
  %v1021 = vld [vmem:[%s1 + $0x1e18] sm:$0xff]
  %v1022 = vld [vmem:[%s1 + $0x1e20] sm:$0xff]
  %v1023 = vld [vmem:[%s1 + $0x1e28] sm:$0xff]
  %v1024 = vld [vmem:[%s1 + $0x1e30] sm:$0xff]
  %v1025 = vld [vmem:[%s1 + $0x1e38] sm:$0xff]
  %v1026 = vld [vmem:[%s1 + $0x1e40] sm:$0xff]
  %v1027 = vld [vmem:[%s1 + $0x1e48] sm:$0xff]
  %v1028 = vld [vmem:[%s1 + $0x1e50] sm:$0xff]
  %v1029 = vld [vmem:[%s1 + $0x1e58] sm:$0xff]
  %v1030 = vld [vmem:[%s1 + $0x1e60] sm:$0xff]
  %v1031 = vld [vmem:[%s1 + $0x1e68] sm:$0xff]
  %v1032 = vld [vmem:[%s1 + $0x1e70] sm:$0xff]
  %v1033 = vld [vmem:[%s1 + $0x1e78] sm:$0xff]
  %v1034 = vld [vmem:[%s1 + $0x1e80] sm:$0xff]
  %v1035 = vld [vmem:[%s1 + $0x1e88] sm:$0xff]
  %v1036 = vld [vmem:[%s1 + $0x1e90] sm:$0xff]
  %v1037 = vld [vmem:[%s1 + $0x1e98] sm:$0xff]
  %v1038 = vld [vmem:[%s1 + $0x1ea0] sm:$0xff]
  %v1039 = vld [vmem:[%s1 + $0x1ea8] sm:$0xff]
  %v1040 = vld [vmem:[%s1 + $0x1eb0] sm:$0xff]
  %v1041 = vld [vmem:[%s1 + $0x1eb8] sm:$0xff]
  %v1042 = vld [vmem:[%s1 + $0x1ec0] sm:$0xff]
  %v1043 = vld [vmem:[%s1 + $0x1ec8] sm:$0xff]
  %v1044 = vld [vmem:[%s1 + $0x1ed0] sm:$0xff]
  %v1045 = vld [vmem:[%s1 + $0x1ed8] sm:$0xff]
  %v1046 = vld [vmem:[%s1 + $0x1ee0] sm:$0xff]
  %v1047 = vld [vmem:[%s1 + $0x1ee8] sm:$0xff]
  %v1048 = vld [vmem:[%s1 + $0x1ef0] sm:$0xff]
  %v1049 = vld [vmem:[%s1 + $0x1ef8] sm:$0xff]
  %v1050 = vld [vmem:[%s1 + $0x1f00] sm:$0xff]
  %v1051 = vld [vmem:[%s1 + $0x1f08] sm:$0xff]
  %v1052 = vld [vmem:[%s1 + $0x1f10] sm:$0xff]
  %v1053 = vld [vmem:[%s1 + $0x1f18] sm:$0xff]
  %v1054 = vld [vmem:[%s1 + $0x1f20] sm:$0xff]
  %v1055 = vld [vmem:[%s1 + $0x1f28] sm:$0xff]
  %v1056 = vld [vmem:[%s1 + $0x1f30] sm:$0xff]
  %v1057 = vld [vmem:[%s1 + $0x1f38] sm:$0xff]
  %v1058 = vld [vmem:[%s1 + $0x1f40] sm:$0xff]
  %v1059 = vld [vmem:[%s1 + $0x1f48] sm:$0xff]
  %v1060 = vld [vmem:[%s1 + $0x1f50] sm:$0xff]
  %v1061 = vld [vmem:[%s1 + $0x1f58] sm:$0xff]
  %v1062 = vld [vmem:[%s1 + $0x1f60] sm:$0xff]
  %v1063 = vld [vmem:[%s1 + $0x1f68] sm:$0xff]
  %v1064 = vld [vmem:[%s1 + $0x1f70] sm:$0xff]
  %v1065 = vld [vmem:[%s1 + $0x1f78] sm:$0xff]
  %v1066 = vld [vmem:[%s1 + $0x1f80] sm:$0xff]
  %v1067 = vld [vmem:[%s1 + $0x1f88] sm:$0xff]
  %v1068 = vld [vmem:[%s1 + $0x1f90] sm:$0xff]
  %v1069 = vld [vmem:[%s1 + $0x1f98] sm:$0xff]
  %v1070 = vld [vmem:[%s1 + $0x1fa0] sm:$0xff]
  %v1071 = vld [vmem:[%s1 + $0x1fa8] sm:$0xff]
  %v1072 = vld [vmem:[%s1 + $0x1fb0] sm:$0xff]
  %v1073 = vld [vmem:[%s1 + $0x1fb8] sm:$0xff]
  %v1074 = vld [vmem:[%s1 + $0x1fc0] sm:$0xff]
  %v1075 = vld [vmem:[%s1 + $0x1fc8] sm:$0xff]
  %v1076 = vld [vmem:[%s1 + $0x1fd0] sm:$0xff]
  %v1077 = vld [vmem:[%s1 + $0x1fd8] sm:$0xff]
  %v1078 = vld [vmem:[%s1 + $0x1fe0] sm:$0xff]
  %v1079 = vld [vmem:[%s1 + $0x1fe8] sm:$0xff]
  %v1080 = vld [vmem:[%s1 + $0x1ff0] sm:$0xff]
  %v1081 = vld [vmem:[%s1 + $0x1ff8] sm:$0xff]
  %v1082 = vld [vmem:[%s1 + $0x2000] sm:$0xff]
  %v1083 = vld [vmem:[%s1 + $0x2008] sm:$0xff]
  %v1084 = vld [vmem:[%s1 + $0x2010] sm:$0xff]
  %v1085 = vld [vmem:[%s1 + $0x2018] sm:$0xff]
  %v1086 = vld [vmem:[%s1 + $0x2020] sm:$0xff]
  %v1087 = vld [vmem:[%s1 + $0x2028] sm:$0xff]
  %v1088 = vld [vmem:[%s1 + $0x2030] sm:$0xff]
  %v1089 = vld [vmem:[%s1 + $0x2038] sm:$0xff]
  %v1090 = vld [vmem:[%s1 + $0x2040] sm:$0xff]
  %v1091 = vld [vmem:[%s1 + $0x2048] sm:$0xff]
  %v1092 = vld [vmem:[%s1 + $0x2050] sm:$0xff]
  %v1093 = vld [vmem:[%s1 + $0x2058] sm:$0xff]
  %v1094 = vld [vmem:[%s1 + $0x2060] sm:$0xff]
  %v1095 = vld [vmem:[%s1 + $0x2068] sm:$0xff]
  %v1096 = vld [vmem:[%s1 + $0x2070] sm:$0xff]
  %v1097 = vld [vmem:[%s1 + $0x2078] sm:$0xff]
  %v1098 = vld [vmem:[%s1 + $0x2080] sm:$0xff]
  %v1099 = vld [vmem:[%s1 + $0x2088] sm:$0xff]
  %v1100 = vld [vmem:[%s1 + $0x2090] sm:$0xff]
  %v1101 = vld [vmem:[%s1 + $0x2098] sm:$0xff]
  %v1102 = vld [vmem:[%s1 + $0x20a0] sm:$0xff]
  %v1103 = vld [vmem:[%s1 + $0x20a8] sm:$0xff]
  %v1104 = vld [vmem:[%s1 + $0x20b0] sm:$0xff]
  %v1105 = vld [vmem:[%s1 + $0x20b8] sm:$0xff]
  %v1106 = vld [vmem:[%s1 + $0x20c0] sm:$0xff]
  %v1107 = vld [vmem:[%s1 + $0x20c8] sm:$0xff]
  %v1108 = vld [vmem:[%s1 + $0x20d0] sm:$0xff]
  %v1109 = vld [vmem:[%s1 + $0x20d8] sm:$0xff]
  %v1110 = vld [vmem:[%s1 + $0x20e0] sm:$0xff]
  %v1111 = vld [vmem:[%s1 + $0x20e8] sm:$0xff]
  %v1112 = vld [vmem:[%s1 + $0x20f0] sm:$0xff]
  %v1113 = vld [vmem:[%s1 + $0x20f8] sm:$0xff]
  %v1114 = vld [vmem:[%s1 + $0x2100] sm:$0xff]
  %v1115 = vld [vmem:[%s1 + $0x2108] sm:$0xff]
  %v1116 = vld [vmem:[%s1 + $0x2110] sm:$0xff]
  %v1117 = vld [vmem:[%s1 + $0x2118] sm:$0xff]
  %v1118 = vld [vmem:[%s1 + $0x2120] sm:$0xff]
  %v1119 = vld [vmem:[%s1 + $0x2128] sm:$0xff]
  %v1120 = vld [vmem:[%s1 + $0x2130] sm:$0xff]
  %v1121 = vld [vmem:[%s1 + $0x2138] sm:$0xff]
  %v1122 = vld [vmem:[%s1 + $0x2140] sm:$0xff]
  %v1123 = vld [vmem:[%s1 + $0x2148] sm:$0xff]
  %v1124 = vld [vmem:[%s1 + $0x2150] sm:$0xff]
  %v1125 = vld [vmem:[%s1 + $0x2158] sm:$0xff]
  %v1126 = vld [vmem:[%s1 + $0x2160] sm:$0xff]
  %v1127 = vld [vmem:[%s1 + $0x2168] sm:$0xff]
  %v1128 = vld [vmem:[%s1 + $0x2170] sm:$0xff]
  %v1129 = vld [vmem:[%s1 + $0x2178] sm:$0xff]
  %v1130 = vld [vmem:[%s1 + $0x2180] sm:$0xff]
  %v1131 = vld [vmem:[%s1 + $0x2188] sm:$0xff]
  %v1132 = vld [vmem:[%s1 + $0x2190] sm:$0xff]
  %v1133 = vld [vmem:[%s1 + $0x2198] sm:$0xff]
  %v1134 = vld [vmem:[%s1 + $0x21a0] sm:$0xff]
  %v1135 = vld [vmem:[%s1 + $0x21a8] sm:$0xff]
  %v1136 = vld [vmem:[%s1 + $0x21b0] sm:$0xff]
  %v1137 = vld [vmem:[%s1 + $0x21b8] sm:$0xff]
  %v1138 = vld [vmem:[%s1 + $0x21c0] sm:$0xff]
  %v1139 = vld [vmem:[%s1 + $0x21c8] sm:$0xff]
  %v1140 = vld [vmem:[%s1 + $0x21d0] sm:$0xff]
  %v1141 = vld [vmem:[%s1 + $0x21d8] sm:$0xff]
  %v1142 = vld [vmem:[%s1 + $0x21e0] sm:$0xff]
  %v1143 = vld [vmem:[%s1 + $0x21e8] sm:$0xff]
  %v1144 = vld [vmem:[%s1 + $0x21f0] sm:$0xff]
  %v1145 = vld [vmem:[%s1 + $0x21f8] sm:$0xff]
  %v1146 = vld [vmem:[%s1 + $0x2200] sm:$0xff]
  %v1147 = vld [vmem:[%s1 + $0x2208] sm:$0xff]
  %v1148 = vld [vmem:[%s1 + $0x2210] sm:$0xff]
  %v1149 = vld [vmem:[%s1 + $0x2218] sm:$0xff]
  %v1150 = vld [vmem:[%s1 + $0x2220] sm:$0xff]
  %v1151 = vld [vmem:[%s1 + $0x2228] sm:$0xff]
  %v1152 = vld [vmem:[%s1 + $0x2230] sm:$0xff]
  %v1153 = vld [vmem:[%s1 + $0x2238] sm:$0xff]
  %v1154 = vld [vmem:[%s1 + $0x2240] sm:$0xff]
  %v1155 = vld [vmem:[%s1 + $0x2248] sm:$0xff]
  %v1156 = vld [vmem:[%s1 + $0x2250] sm:$0xff]
  %v1157 = vld [vmem:[%s1 + $0x2258] sm:$0xff]
  %v1158 = vld [vmem:[%s1 + $0x2260] sm:$0xff]
  %v1159 = vld [vmem:[%s1 + $0x2268] sm:$0xff]
  %v1160 = vld [vmem:[%s1 + $0x2270] sm:$0xff]
  %v1161 = vld [vmem:[%s1 + $0x2278] sm:$0xff]
  %v1162 = vld [vmem:[%s1 + $0x2280] sm:$0xff]
  %v1163 = vld [vmem:[%s1 + $0x2288] sm:$0xff]
  %v1164 = vld [vmem:[%s1 + $0x2290] sm:$0xff]
  %v1165 = vld [vmem:[%s1 + $0x2298] sm:$0xff]
  %v1166 = vld [vmem:[%s1 + $0x22a0] sm:$0xff]
  %v1167 = vld [vmem:[%s1 + $0x22a8] sm:$0xff]
  %v1168 = vld [vmem:[%s1 + $0x22b0] sm:$0xff]
  %v1169 = vld [vmem:[%s1 + $0x22b8] sm:$0xff]
  %v1170 = vld [vmem:[%s1 + $0x22c0] sm:$0xff]
  %v1171 = vld [vmem:[%s1 + $0x22c8] sm:$0xff]
  %v1172 = vld [vmem:[%s1 + $0x22d0] sm:$0xff]
  %v1173 = vld [vmem:[%s1 + $0x22d8] sm:$0xff]
  %v1174 = vld [vmem:[%s1 + $0x22e0] sm:$0xff]
  %v1175 = vld [vmem:[%s1 + $0x22e8] sm:$0xff]
  %v1176 = vld [vmem:[%s1 + $0x22f0] sm:$0xff]
  %v1177 = vld [vmem:[%s1 + $0x22f8] sm:$0xff]
  %v1178 = vld [vmem:[%s1 + $0x2300] sm:$0xff]
  %v1179 = vld [vmem:[%s1 + $0x2308] sm:$0xff]
  %v1180 = vld [vmem:[%s1 + $0x2310] sm:$0xff]
  %v1181 = vld [vmem:[%s1 + $0x2318] sm:$0xff]
  %v1182 = vld [vmem:[%s1 + $0x2320] sm:$0xff]
  %v1183 = vld [vmem:[%s1 + $0x2328] sm:$0xff]
  %v1184 = vld [vmem:[%s1 + $0x2330] sm:$0xff]
  %v1185 = vld [vmem:[%s1 + $0x2338] sm:$0xff]
  %v1186 = vld [vmem:[%s1 + $0x2340] sm:$0xff]
  %v1187 = vld [vmem:[%s1 + $0x2348] sm:$0xff]
  %v1188 = vld [vmem:[%s1 + $0x2350] sm:$0xff]
  %v1189 = vld [vmem:[%s1 + $0x2358] sm:$0xff]
  %v1190 = vld [vmem:[%s1 + $0x2360] sm:$0xff]
  %v1191 = vld [vmem:[%s1 + $0x2368] sm:$0xff]
  %v1192 = vld [vmem:[%s1 + $0x2370] sm:$0xff]
  %v1193 = vld [vmem:[%s1 + $0x2378] sm:$0xff]
  %v1194 = vld [vmem:[%s1 + $0x2380] sm:$0xff]
  %v1195 = vld [vmem:[%s1 + $0x2388] sm:$0xff]
  %v1196 = vld [vmem:[%s1 + $0x2390] sm:$0xff]
  %v1197 = vld [vmem:[%s1 + $0x2398] sm:$0xff]
  %v1198 = vld [vmem:[%s1 + $0x23a0] sm:$0xff]
  %v1199 = vld [vmem:[%s1 + $0x23a8] sm:$0xff]
  %v1200 = vld [vmem:[%s1 + $0x23b0] sm:$0xff]
  %v1201 = vld [vmem:[%s1 + $0x23b8] sm:$0xff]
  %v1202 = vld [vmem:[%s1 + $0x23c0] sm:$0xff]
  %v1203 = vld [vmem:[%s1 + $0x23c8] sm:$0xff]
  %v1204 = vld [vmem:[%s1 + $0x23d0] sm:$0xff]
  %v1205 = vld [vmem:[%s1 + $0x23d8] sm:$0xff]
  %v1206 = vld [vmem:[%s1 + $0x23e0] sm:$0xff]
  %v1207 = vld [vmem:[%s1 + $0x23e8] sm:$0xff]
  %v1208 = vld [vmem:[%s1 + $0x23f0] sm:$0xff]
  %v1209 = vld [vmem:[%s1 + $0x23f8] sm:$0xff]
  %v1210 = vld [vmem:[%s1 + $0x2400] sm:$0xff]
  %v1211 = vld [vmem:[%s1 + $0x2408] sm:$0xff]
  %v1212 = vld [vmem:[%s1 + $0x2410] sm:$0xff]
  %v1213 = vld [vmem:[%s1 + $0x2418] sm:$0xff]
  %v1214 = vld [vmem:[%s1 + $0x2420] sm:$0xff]
  %v1215 = vld [vmem:[%s1 + $0x2428] sm:$0xff]
  %v1216 = vld [vmem:[%s1 + $0x2430] sm:$0xff]
  %v1217 = vld [vmem:[%s1 + $0x2438] sm:$0xff]
  %v1218 = vld [vmem:[%s1 + $0x2440] sm:$0xff]
  %v1219 = vld [vmem:[%s1 + $0x2448] sm:$0xff]
  %v1220 = vld [vmem:[%s1 + $0x2450] sm:$0xff]
  %v1221 = vld [vmem:[%s1 + $0x2458] sm:$0xff]
  %v1222 = vld [vmem:[%s1 + $0x2460] sm:$0xff]
  %v1223 = vld [vmem:[%s1 + $0x2468] sm:$0xff]
  %v1224 = vld [vmem:[%s1 + $0x2470] sm:$0xff]
  %v1225 = vld [vmem:[%s1 + $0x2478] sm:$0xff]
  %v1226 = vld [vmem:[%s1 + $0x2480] sm:$0xff]
  %v1227 = vld [vmem:[%s1 + $0x2488] sm:$0xff]
  %v1228 = vld [vmem:[%s1 + $0x2490] sm:$0xff]
  %v1229 = vld [vmem:[%s1 + $0x2498] sm:$0xff]
  %v1230 = vld [vmem:[%s1 + $0x24a0] sm:$0xff]
  %v1231 = vld [vmem:[%s1 + $0x24a8] sm:$0xff]
  %v1232 = vld [vmem:[%s1 + $0x24b0] sm:$0xff]
  %v1233 = vld [vmem:[%s1 + $0x24b8] sm:$0xff]
  %v1234 = vld [vmem:[%s1 + $0x24c0] sm:$0xff]
  %v1235 = vld [vmem:[%s1 + $0x24c8] sm:$0xff]
  %v1236 = vld [vmem:[%s1 + $0x24d0] sm:$0xff]
  %v1237 = vld [vmem:[%s1 + $0x24d8] sm:$0xff]
  %v1238 = vld [vmem:[%s1 + $0x24e0] sm:$0xff]
  %v1239 = vld [vmem:[%s1 + $0x24e8] sm:$0xff]
  %v1240 = vld [vmem:[%s1 + $0x24f0] sm:$0xff]
  %v1241 = vld [vmem:[%s1 + $0x24f8] sm:$0xff]
  %v1242 = vld [vmem:[%s1 + $0x2500] sm:$0xff]
  %v1243 = vld [vmem:[%s1 + $0x2508] sm:$0xff]
  %v1244 = vld [vmem:[%s1 + $0x2510] sm:$0xff]
  %v1245 = vld [vmem:[%s1 + $0x2518] sm:$0xff]
  %v1246 = vld [vmem:[%s1 + $0x2520] sm:$0xff]
  %v1247 = vld [vmem:[%s1 + $0x2528] sm:$0xff]
  %v1248 = vld [vmem:[%s1 + $0x2530] sm:$0xff]
  %v1249 = vld [vmem:[%s1 + $0x2538] sm:$0xff]
  %v1250 = vld [vmem:[%s1 + $0x2540] sm:$0xff]
  %v1251 = vld [vmem:[%s1 + $0x2548] sm:$0xff]
  %v1252 = vld [vmem:[%s1 + $0x2550] sm:$0xff]
  %v1253 = vld [vmem:[%s1 + $0x2558] sm:$0xff]
  %v1254 = vld [vmem:[%s1 + $0x2560] sm:$0xff]
  %v1255 = vld [vmem:[%s1 + $0x2568] sm:$0xff]
  %v1256 = vld [vmem:[%s1 + $0x2570] sm:$0xff]
  %v1257 = vld [vmem:[%s1 + $0x2578] sm:$0xff]
  %v1258 = vld [vmem:[%s1 + $0x2580] sm:$0xff]
  %v1259 = vld [vmem:[%s1 + $0x2588] sm:$0xff]
  %v1260 = vld [vmem:[%s1 + $0x2590] sm:$0xff]
  %v1261 = vld [vmem:[%s1 + $0x2598] sm:$0xff]
  %v1262 = vld [vmem:[%s1 + $0x25a0] sm:$0xff]
  %v1263 = vld [vmem:[%s1 + $0x25a8] sm:$0xff]
  %v1264 = vld [vmem:[%s1 + $0x25b0] sm:$0xff]
  %v1265 = vld [vmem:[%s1 + $0x25b8] sm:$0xff]
  %v1266 = vld [vmem:[%s1 + $0x25c0] sm:$0xff]
  %v1267 = vld [vmem:[%s1 + $0x25c8] sm:$0xff]
  %v1268 = vld [vmem:[%s1 + $0x25d0] sm:$0xff]
  %v1269 = vld [vmem:[%s1 + $0x25d8] sm:$0xff]
  %v1270 = vld [vmem:[%s1 + $0x25e0] sm:$0xff]
  %v1271 = vld [vmem:[%s1 + $0x25e8] sm:$0xff]
  %v1272 = vld [vmem:[%s1 + $0x25f0] sm:$0xff]
  %v1273 = vld [vmem:[%s1 + $0x25f8] sm:$0xff]
  %v1274 = vld [vmem:[%s1 + $0x2600] sm:$0xff]
  %v1275 = vld [vmem:[%s1 + $0x2608] sm:$0xff]
  %v1276 = vld [vmem:[%s1 + $0x2610] sm:$0xff]
  %v1277 = vld [vmem:[%s1 + $0x2618] sm:$0xff]
  %v1278 = vld [vmem:[%s1 + $0x2620] sm:$0xff]
  %v1279 = vld [vmem:[%s1 + $0x2628] sm:$0xff]
  %v1280 = vld [vmem:[%s1 + $0x2630] sm:$0xff]
  %v1281 = vld [vmem:[%s1 + $0x2638] sm:$0xff]
  %v1282 = vld [vmem:[%s1 + $0x2640] sm:$0xff]
  %v1283 = vld [vmem:[%s1 + $0x2648] sm:$0xff]
  %v1284 = vld [vmem:[%s1 + $0x2650] sm:$0xff]
  %v1285 = vld [vmem:[%s1 + $0x2658] sm:$0xff]
  %v1286 = vld [vmem:[%s1 + $0x2660] sm:$0xff]
  %v1287 = vld [vmem:[%s1 + $0x2668] sm:$0xff]
  %v1288 = vld [vmem:[%s1 + $0x2670] sm:$0xff]
  %v1289 = vld [vmem:[%s1 + $0x2678] sm:$0xff]
  %v1290 = vld [vmem:[%s1 + $0x2680] sm:$0xff]
  %v1291 = vld [vmem:[%s1 + $0x2688] sm:$0xff]
  %v1292 = vld [vmem:[%s1 + $0x2690] sm:$0xff]
  %v1293 = vld [vmem:[%s1 + $0x2698] sm:$0xff]
  %v1294 = vld [vmem:[%s1 + $0x26a0] sm:$0xff]
  %v1295 = vld [vmem:[%s1 + $0x26a8] sm:$0xff]
  %v1296 = vld [vmem:[%s1 + $0x26b0] sm:$0xff]
  %v1297 = vld [vmem:[%s1 + $0x26b8] sm:$0xff]
  %v1298 = vld [vmem:[%s1 + $0x26c0] sm:$0xff]
  %v1299 = vld [vmem:[%s1 + $0x26c8] sm:$0xff]
  %v1300 = vld [vmem:[%s1 + $0x26d0] sm:$0xff]
  %v1301 = vld [vmem:[%s1 + $0x26d8] sm:$0xff]
  %v1302 = vld [vmem:[%s1 + $0x26e0] sm:$0xff]
  %v1303 = vld [vmem:[%s1 + $0x26e8] sm:$0xff]
  %v1304 = vld [vmem:[%s1 + $0x26f0] sm:$0xff]
  %v1305 = vld [vmem:[%s1 + $0x26f8] sm:$0xff]
  %v1306 = vld [vmem:[%s1 + $0x2700] sm:$0xff]
  %v1307 = vld [vmem:[%s1 + $0x2708] sm:$0xff]
  %v1308 = vld [vmem:[%s1 + $0x2710] sm:$0xff]
  %v1309 = vld [vmem:[%s1 + $0x2718] sm:$0xff]
  %v1310 = vld [vmem:[%s1 + $0x2720] sm:$0xff]
  %v1311 = vld [vmem:[%s1 + $0x2728] sm:$0xff]
  %v1312 = vld [vmem:[%s1 + $0x2730] sm:$0xff]
  %v1313 = vld [vmem:[%s1 + $0x2738] sm:$0xff]
  %v1314 = vld [vmem:[%s1 + $0x2740] sm:$0xff]
  %v1315 = vld [vmem:[%s1 + $0x2748] sm:$0xff]
  %v1316 = vld [vmem:[%s1 + $0x2750] sm:$0xff]
  %v1317 = vld [vmem:[%s1 + $0x2758] sm:$0xff]
  %v1318 = vld [vmem:[%s1 + $0x2760] sm:$0xff]
  %v1319 = vld [vmem:[%s1 + $0x2768] sm:$0xff]
  %v1320 = vld [vmem:[%s1 + $0x2770] sm:$0xff]
  %v1321 = vld [vmem:[%s1 + $0x2778] sm:$0xff]
  %v1322 = vld [vmem:[%s1 + $0x2780] sm:$0xff]
  %v1323 = vld [vmem:[%s1 + $0x2788] sm:$0xff]
  %v1324 = vld [vmem:[%s1 + $0x2790] sm:$0xff]
  %v1325 = vld [vmem:[%s1 + $0x2798] sm:$0xff]
  %v1326 = vld [vmem:[%s1 + $0x27a0] sm:$0xff]
  %v1327 = vld [vmem:[%s1 + $0x27a8] sm:$0xff]
  %v1328 = vld [vmem:[%s1 + $0x27b0] sm:$0xff]
  %v1329 = vld [vmem:[%s1 + $0x27b8] sm:$0xff]
  %v1330 = vld [vmem:[%s1 + $0x27c0] sm:$0xff]
  %v1331 = vld [vmem:[%s1 + $0x27c8] sm:$0xff]
  %v1332 = vld [vmem:[%s1 + $0x27d0] sm:$0xff]
  %v1333 = vld [vmem:[%s1 + $0x27d8] sm:$0xff]
  %v1334 = vld [vmem:[%s1 + $0x27e0] sm:$0xff]
  %v1335 = vld [vmem:[%s1 + $0x27e8] sm:$0xff]
  %v1336 = vld [vmem:[%s1 + $0x27f0] sm:$0xff]
  %v1337 = vld [vmem:[%s1 + $0x27f8] sm:$0xff]
  %v1338 = vld [vmem:[%s1 + $0x2800] sm:$0xff]
  %v1339 = vld [vmem:[%s1 + $0x2808] sm:$0xff]
  %v1340 = vld [vmem:[%s1 + $0x2810] sm:$0xff]
  %v1341 = vld [vmem:[%s1 + $0x2818] sm:$0xff]
  %v1342 = vld [vmem:[%s1 + $0x2820] sm:$0xff]
  %v1343 = vld [vmem:[%s1 + $0x2828] sm:$0xff]
  %v1344 = vld [vmem:[%s1 + $0x2830] sm:$0xff]
  %v1345 = vld [vmem:[%s1 + $0x2838] sm:$0xff]
  %v1346 = vld [vmem:[%s1 + $0x2840] sm:$0xff]
  %v1347 = vld [vmem:[%s1 + $0x2848] sm:$0xff]
  %v1348 = vld [vmem:[%s1 + $0x2850] sm:$0xff]
  %v1349 = vld [vmem:[%s1 + $0x2858] sm:$0xff]
  %v1350 = vld [vmem:[%s1 + $0x2860] sm:$0xff]
  %v1351 = vld [vmem:[%s1 + $0x2868] sm:$0xff]
  %v1352 = vld [vmem:[%s1 + $0x2870] sm:$0xff]
  %v1353 = vld [vmem:[%s1 + $0x2878] sm:$0xff]
  %v1354 = vld [vmem:[%s1 + $0x2880] sm:$0xff]
  %v1355 = vld [vmem:[%s1 + $0x2888] sm:$0xff]
  %v1356 = vld [vmem:[%s1 + $0x2890] sm:$0xff]
  %v1357 = vld [vmem:[%s1 + $0x2898] sm:$0xff]
  %v1358 = vld [vmem:[%s1 + $0x28a0] sm:$0xff]
  %v1359 = vld [vmem:[%s1 + $0x28a8] sm:$0xff]
  %v1360 = vld [vmem:[%s1 + $0x28b0] sm:$0xff]
  %v1361 = vld [vmem:[%s1 + $0x28b8] sm:$0xff]
  %v1362 = vld [vmem:[%s1 + $0x28c0] sm:$0xff]
  %v1363 = vld [vmem:[%s1 + $0x28c8] sm:$0xff]
  %v1364 = vld [vmem:[%s1 + $0x28d0] sm:$0xff]
  %v1365 = vld [vmem:[%s1 + $0x28d8] sm:$0xff]
  %v1366 = vld [vmem:[%s1 + $0x28e0] sm:$0xff]
  %v1367 = vld [vmem:[%s1 + $0x28e8] sm:$0xff]
  %v1368 = vld [vmem:[%s1 + $0x28f0] sm:$0xff]
  %v1369 = vld [vmem:[%s1 + $0x28f8] sm:$0xff]
  %v1370 = vld [vmem:[%s1 + $0x2900] sm:$0xff]
  %v1371 = vld [vmem:[%s1 + $0x2908] sm:$0xff]
  %v1372 = vld [vmem:[%s1 + $0x2910] sm:$0xff]
  %v1373 = vld [vmem:[%s1 + $0x2918] sm:$0xff]
  %v1374 = vld [vmem:[%s1 + $0x2920] sm:$0xff]
  %v1375 = vld [vmem:[%s1 + $0x2928] sm:$0xff]
  %v1376 = vld [vmem:[%s1 + $0x2930] sm:$0xff]
  %v1377 = vld [vmem:[%s1 + $0x2938] sm:$0xff]
  %v1378 = vld [vmem:[%s1 + $0x2940] sm:$0xff]
  %v1379 = vld [vmem:[%s1 + $0x2948] sm:$0xff]
  %v1380 = vld [vmem:[%s1 + $0x2950] sm:$0xff]
  %v1381 = vld [vmem:[%s1 + $0x2958] sm:$0xff]
  %v1382 = vld [vmem:[%s1 + $0x2960] sm:$0xff]
  %v1383 = vld [vmem:[%s1 + $0x2968] sm:$0xff]
  %v1384 = vld [vmem:[%s1 + $0x2970] sm:$0xff]
  %v1385 = vld [vmem:[%s1 + $0x2978] sm:$0xff]
  %v1386 = vld [vmem:[%s1 + $0x2980] sm:$0xff]
  %v1387 = vld [vmem:[%s1 + $0x2988] sm:$0xff]
  %v1388 = vld [vmem:[%s1 + $0x2990] sm:$0xff]
  %v1389 = vld [vmem:[%s1 + $0x2998] sm:$0xff]
  %v1390 = vld [vmem:[%s1 + $0x29a0] sm:$0xff]
  %v1391 = vld [vmem:[%s1 + $0x29a8] sm:$0xff]
  %v1392 = vld [vmem:[%s1 + $0x29b0] sm:$0xff]
  %v1393 = vld [vmem:[%s1 + $0x29b8] sm:$0xff]
  %v1394 = vld [vmem:[%s1 + $0x29c0] sm:$0xff]
  %v1395 = vld [vmem:[%s1 + $0x29c8] sm:$0xff]
  %v1396 = vld [vmem:[%s1 + $0x29d0] sm:$0xff]
  %v1397 = vld [vmem:[%s1 + $0x29d8] sm:$0xff]
  %v1398 = vld [vmem:[%s1 + $0x29e0] sm:$0xff]
  %v1399 = vld [vmem:[%s1 + $0x29e8] sm:$0xff]
  %v1400 = vld [vmem:[%s1 + $0x29f0] sm:$0xff]
  %v1401 = vld [vmem:[%s1 + $0x29f8] sm:$0xff]
  %v1402 = vld [vmem:[%s1 + $0x2a00] sm:$0xff]
  %v1403 = vld [vmem:[%s1 + $0x2a08] sm:$0xff]
  %v1404 = vld [vmem:[%s1 + $0x2a10] sm:$0xff]
  %v1405 = vld [vmem:[%s1 + $0x2a18] sm:$0xff]
  %v1406 = vld [vmem:[%s1 + $0x2a20] sm:$0xff]
  %v1407 = vld [vmem:[%s1 + $0x2a28] sm:$0xff]
  %v1408 = vld [vmem:[%s1 + $0x2a30] sm:$0xff]
  %v1409 = vld [vmem:[%s1 + $0x2a38] sm:$0xff]
  %v1410 = vld [vmem:[%s1 + $0x2a40] sm:$0xff]
  %v1411 = vld [vmem:[%s1 + $0x2a48] sm:$0xff]
  %v1412 = vld [vmem:[%s1 + $0x2a50] sm:$0xff]
  %v1413 = vld [vmem:[%s1 + $0x2a58] sm:$0xff]
  %v1414 = vld [vmem:[%s1 + $0x2a60] sm:$0xff]
  %v1415 = vld [vmem:[%s1 + $0x2a68] sm:$0xff]
  %v1416 = vld [vmem:[%s1 + $0x2a70] sm:$0xff]
  %v1417 = vld [vmem:[%s1 + $0x2a78] sm:$0xff]
  %v1418 = vld [vmem:[%s1 + $0x2a80] sm:$0xff]
  %v1419 = vld [vmem:[%s1 + $0x2a88] sm:$0xff]
  %v1420 = vld [vmem:[%s1 + $0x2a90] sm:$0xff]
  %v1421 = vld [vmem:[%s1 + $0x2a98] sm:$0xff]
  %v1422 = vld [vmem:[%s1 + $0x2aa0] sm:$0xff]
  %v1423 = vld [vmem:[%s1 + $0x2aa8] sm:$0xff]
  %v1424 = vld [vmem:[%s1 + $0x2ab0] sm:$0xff]
  %v1425 = vld [vmem:[%s1 + $0x2ab8] sm:$0xff]
  %v1426 = vld [vmem:[%s1 + $0x2ac0] sm:$0xff]
  %v1427 = vld [vmem:[%s1 + $0x2ac8] sm:$0xff]
  %v1428 = vld [vmem:[%s1 + $0x2ad0] sm:$0xff]
  %v1429 = vld [vmem:[%s1 + $0x2ad8] sm:$0xff]
  %v1430 = vld [vmem:[%s1 + $0x2ae0] sm:$0xff]
  %v1431 = vld [vmem:[%s1 + $0x2ae8] sm:$0xff]
  %v1432 = vld [vmem:[%s1 + $0x2af0] sm:$0xff]
  %v1433 = vld [vmem:[%s1 + $0x2af8] sm:$0xff]
  %v1434 = vld [vmem:[%s1 + $0x2b00] sm:$0xff]
  %v1435 = vld [vmem:[%s1 + $0x2b08] sm:$0xff]
  %v1436 = vld [vmem:[%s1 + $0x2b10] sm:$0xff]
  %v1437 = vld [vmem:[%s1 + $0x2b18] sm:$0xff]
  %v1438 = vld [vmem:[%s1 + $0x2b20] sm:$0xff]
  %v1439 = vld [vmem:[%s1 + $0x2b28] sm:$0xff]
  %v1440 = vld [vmem:[%s1 + $0x2b30] sm:$0xff]
  %v1441 = vld [vmem:[%s1 + $0x2b38] sm:$0xff]
  %v1442 = vld [vmem:[%s1 + $0x2b40] sm:$0xff]
  %v1443 = vld [vmem:[%s1 + $0x2b48] sm:$0xff]
  %v1444 = vld [vmem:[%s1 + $0x2b50] sm:$0xff]
  %v1445 = vld [vmem:[%s1 + $0x2b58] sm:$0xff]
  %v1446 = vld [vmem:[%s1 + $0x2b60] sm:$0xff]
  %v1447 = vld [vmem:[%s1 + $0x2b68] sm:$0xff]
  %v1448 = vld [vmem:[%s1 + $0x2b70] sm:$0xff]
  %v1449 = vld [vmem:[%s1 + $0x2b78] sm:$0xff]
  %v1450 = vld [vmem:[%s1 + $0x2b80] sm:$0xff]
  %v1451 = vld [vmem:[%s1 + $0x2b88] sm:$0xff]
  %v1452 = vld [vmem:[%s1 + $0x2b90] sm:$0xff]
  %v1453 = vld [vmem:[%s1 + $0x2b98] sm:$0xff]
  %v1454 = vld [vmem:[%s1 + $0x2ba0] sm:$0xff]
  %v1455 = vld [vmem:[%s1 + $0x2ba8] sm:$0xff]
  %v1456 = vld [vmem:[%s1 + $0x2bb0] sm:$0xff]
  %v1457 = vld [vmem:[%s1 + $0x2bb8] sm:$0xff]
  %v1458 = vld [vmem:[%s1 + $0x2bc0] sm:$0xff]
  %v1459 = vld [vmem:[%s1 + $0x2bc8] sm:$0xff]
  %v1460 = vld [vmem:[%s1 + $0x2bd0] sm:$0xff]
  %v1461 = vld [vmem:[%s1 + $0x2bd8] sm:$0xff]
  %v1462 = vld [vmem:[%s1 + $0x2be0] sm:$0xff]
  %v1463 = vld [vmem:[%s1 + $0x2be8] sm:$0xff]
  %v1464 = vld [vmem:[%s1 + $0x2bf0] sm:$0xff]
  %v1465 = vld [vmem:[%s1 + $0x2bf8] sm:$0xff]
  %v1466 = vld [vmem:[%s1 + $0x2c00] sm:$0xff]
  %v1467 = vld [vmem:[%s1 + $0x2c08] sm:$0xff]
  %v1468 = vld [vmem:[%s1 + $0x2c10] sm:$0xff]
  %v1469 = vld [vmem:[%s1 + $0x2c18] sm:$0xff]
  %v1470 = vld [vmem:[%s1 + $0x2c20] sm:$0xff]
  %v1471 = vld [vmem:[%s1 + $0x2c28] sm:$0xff]
  %v1472 = vld [vmem:[%s1 + $0x2c30] sm:$0xff]
  %v1473 = vld [vmem:[%s1 + $0x2c38] sm:$0xff]
  %v1474 = vld [vmem:[%s1 + $0x2c40] sm:$0xff]
  %v1475 = vld [vmem:[%s1 + $0x2c48] sm:$0xff]
  %v1476 = vld [vmem:[%s1 + $0x2c50] sm:$0xff]
  %v1477 = vld [vmem:[%s1 + $0x2c58] sm:$0xff]
  %v1478 = vld [vmem:[%s1 + $0x2c60] sm:$0xff]
  %v1479 = vld [vmem:[%s1 + $0x2c68] sm:$0xff]
  %v1480 = vld [vmem:[%s1 + $0x2c70] sm:$0xff]
  %v1481 = vld [vmem:[%s1 + $0x2c78] sm:$0xff]
  %v1482 = vld [vmem:[%s1 + $0x2c80] sm:$0xff]
  %v1483 = vld [vmem:[%s1 + $0x2c88] sm:$0xff]
  %v1484 = vld [vmem:[%s1 + $0x2c90] sm:$0xff]
  %v1485 = vld [vmem:[%s1 + $0x2c98] sm:$0xff]
  %v1486 = vld [vmem:[%s1 + $0x2ca0] sm:$0xff]
  %v1487 = vld [vmem:[%s1 + $0x2ca8] sm:$0xff]
  %v1488 = vld [vmem:[%s1 + $0x2cb0] sm:$0xff]
  %v1489 = vld [vmem:[%s1 + $0x2cb8] sm:$0xff]
  %v1490 = vld [vmem:[%s1 + $0x2cc0] sm:$0xff]
  %v1491 = vld [vmem:[%s1 + $0x2cc8] sm:$0xff]
  %v1492 = vld [vmem:[%s1 + $0x2cd0] sm:$0xff]
  %v1493 = vld [vmem:[%s1 + $0x2cd8] sm:$0xff]
  %v1494 = vld [vmem:[%s1 + $0x2ce0] sm:$0xff]
  %v1495 = vld [vmem:[%s1 + $0x2ce8] sm:$0xff]
  %v1496 = vld [vmem:[%s1 + $0x2cf0] sm:$0xff]
  %v1497 = vld [vmem:[%s1 + $0x2cf8] sm:$0xff]
  %v1498 = vld [vmem:[%s1 + $0x2d00] sm:$0xff]
  %v1499 = vld [vmem:[%s1 + $0x2d08] sm:$0xff]
  %v1500 = vld [vmem:[%s1 + $0x2d10] sm:$0xff]
  %v1501 = vld [vmem:[%s1 + $0x2d18] sm:$0xff]
  %v1502 = vld [vmem:[%s1 + $0x2d20] sm:$0xff]
  %v1503 = vld [vmem:[%s1 + $0x2d28] sm:$0xff]
  %v1504 = vld [vmem:[%s1 + $0x2d30] sm:$0xff]
  %v1505 = vld [vmem:[%s1 + $0x2d38] sm:$0xff]
  %v1506 = vld [vmem:[%s1 + $0x2d40] sm:$0xff]
  %v1507 = vld [vmem:[%s1 + $0x2d48] sm:$0xff]
  %v1508 = vld [vmem:[%s1 + $0x2d50] sm:$0xff]
  %v1509 = vld [vmem:[%s1 + $0x2d58] sm:$0xff]
  %v1510 = vld [vmem:[%s1 + $0x2d60] sm:$0xff]
  %v1511 = vld [vmem:[%s1 + $0x2d68] sm:$0xff]
  %v1512 = vld [vmem:[%s1 + $0x2d70] sm:$0xff]
  %v1513 = vld [vmem:[%s1 + $0x2d78] sm:$0xff]
  %v1514 = vld [vmem:[%s1 + $0x2d80] sm:$0xff]
  %v1515 = vld [vmem:[%s1 + $0x2d88] sm:$0xff]
  %v1516 = vld [vmem:[%s1 + $0x2d90] sm:$0xff]
  %v1517 = vld [vmem:[%s1 + $0x2d98] sm:$0xff]
  %v1518 = vld [vmem:[%s1 + $0x2da0] sm:$0xff]
  %v1519 = vld [vmem:[%s1 + $0x2da8] sm:$0xff]
  %v1520 = vld [vmem:[%s1 + $0x2db0] sm:$0xff]
  %v1521 = vld [vmem:[%s1 + $0x2db8] sm:$0xff]
  %v1522 = vld [vmem:[%s1 + $0x2dc0] sm:$0xff]
  %v1523 = vld [vmem:[%s1 + $0x2dc8] sm:$0xff]
  %v1524 = vld [vmem:[%s1 + $0x2dd0] sm:$0xff]
  %v1525 = vld [vmem:[%s1 + $0x2dd8] sm:$0xff]
  %v1526 = vld [vmem:[%s1 + $0x2de0] sm:$0xff]
  %v1527 = vld [vmem:[%s1 + $0x2de8] sm:$0xff]
  %v1528 = vld [vmem:[%s1 + $0x2df0] sm:$0xff]
  %v1529 = vld [vmem:[%s1 + $0x2df8] sm:$0xff]
  %v1530 = vld [vmem:[%s1 + $0x2e00] sm:$0xff]
  %v1531 = vld [vmem:[%s1 + $0x2e08] sm:$0xff]
  %v1532 = vld [vmem:[%s1 + $0x2e10] sm:$0xff]
  %v1533 = vld [vmem:[%s1 + $0x2e18] sm:$0xff]
  %v1534 = vld [vmem:[%s1 + $0x2e20] sm:$0xff]
  %v1535 = vld [vmem:[%s1 + $0x2e28] sm:$0xff]
  %v1536 = vld [vmem:[%s1 + $0x2e30] sm:$0xff]
  %v1537 = vld [vmem:[%s1 + $0x2e38] sm:$0xff]
  %v1538 = vld [vmem:[%s1 + $0x2e40] sm:$0xff]
  %v1539 = vld [vmem:[%s1 + $0x2e48] sm:$0xff]
  %v1540 = vld [vmem:[%s1 + $0x2e50] sm:$0xff]
  %v1541 = vld [vmem:[%s1 + $0x2e58] sm:$0xff]
  %v1542 = vld [vmem:[%s1 + $0x2e60] sm:$0xff]
  %v1543 = vld [vmem:[%s1 + $0x2e68] sm:$0xff]
  %v1544 = vld [vmem:[%s1 + $0x2e70] sm:$0xff]
  %v1545 = vld [vmem:[%s1 + $0x2e78] sm:$0xff]
  %v1546 = vld [vmem:[%s1 + $0x2e80] sm:$0xff]
  %v1547 = vld [vmem:[%s1 + $0x2e88] sm:$0xff]
  %v1548 = vld [vmem:[%s1 + $0x2e90] sm:$0xff]
  %v1549 = vld [vmem:[%s1 + $0x2e98] sm:$0xff]
  %v1550 = vld [vmem:[%s1 + $0x2ea0] sm:$0xff]
  %v1551 = vld [vmem:[%s1 + $0x2ea8] sm:$0xff]
  %v1552 = vld [vmem:[%s1 + $0x2eb0] sm:$0xff]
  %v1553 = vld [vmem:[%s1 + $0x2eb8] sm:$0xff]
  %v1554 = vld [vmem:[%s1 + $0x2ec0] sm:$0xff]
  %v1555 = vld [vmem:[%s1 + $0x2ec8] sm:$0xff]
  %v1556 = vld [vmem:[%s1 + $0x2ed0] sm:$0xff]
  %v1557 = vld [vmem:[%s1 + $0x2ed8] sm:$0xff]
  %v1558 = vld [vmem:[%s1 + $0x2ee0] sm:$0xff]
  %v1559 = vld [vmem:[%s1 + $0x2ee8] sm:$0xff]
  %v1560 = vld [vmem:[%s1 + $0x2ef0] sm:$0xff]
  %v1561 = vld [vmem:[%s1 + $0x2ef8] sm:$0xff]
  %v1562 = vld [vmem:[%s1 + $0x2f00] sm:$0xff]
  %v1563 = vld [vmem:[%s1 + $0x2f08] sm:$0xff]
  %v1564 = vld [vmem:[%s1 + $0x2f10] sm:$0xff]
  %v1565 = vld [vmem:[%s1 + $0x2f18] sm:$0xff]
  %v1566 = vld [vmem:[%s1 + $0x2f20] sm:$0xff]
  %v1567 = vld [vmem:[%s1 + $0x2f28] sm:$0xff]
  %v1568 = vld [vmem:[%s1 + $0x2f30] sm:$0xff]
  %v1569 = vld [vmem:[%s1 + $0x2f38] sm:$0xff]
  %v1570 = vld [vmem:[%s1 + $0x2f40] sm:$0xff]
  %v1571 = vld [vmem:[%s1 + $0x2f48] sm:$0xff]
  %v1572 = vld [vmem:[%s1 + $0x2f50] sm:$0xff]
  %v1573 = vld [vmem:[%s1 + $0x2f58] sm:$0xff]
  %v1574 = vld [vmem:[%s1 + $0x2f60] sm:$0xff]
  %v1575 = vld [vmem:[%s1 + $0x2f68] sm:$0xff]
  %v1576 = vld [vmem:[%s1 + $0x2f70] sm:$0xff]
  %v1577 = vld [vmem:[%s1 + $0x2f78] sm:$0xff]
  %v1578 = vld [vmem:[%s1 + $0x2f80] sm:$0xff]
  %v1579 = vld [vmem:[%s1 + $0x2f88] sm:$0xff]
  %v1580 = vld [vmem:[%s1 + $0x2f90] sm:$0xff]
  %v1581 = vld [vmem:[%s1 + $0x2f98] sm:$0xff]
  %v1582 = vld [vmem:[%s1 + $0x2fa0] sm:$0xff]
  %v1583 = vld [vmem:[%s1 + $0x2fa8] sm:$0xff]
  %v1584 = vld [vmem:[%s1 + $0x2fb0] sm:$0xff]
  %v1585 = vld [vmem:[%s1 + $0x2fb8] sm:$0xff]
  %v1586 = vld [vmem:[%s1 + $0x2fc0] sm:$0xff]
  %v1587 = vld [vmem:[%s1 + $0x2fc8] sm:$0xff]
  %v1588 = vld [vmem:[%s1 + $0x2fd0] sm:$0xff]
  %v1589 = vld [vmem:[%s1 + $0x2fd8] sm:$0xff]
  %v1590 = vld [vmem:[%s1 + $0x2fe0] sm:$0xff]
  %v1591 = vld [vmem:[%s1 + $0x2fe8] sm:$0xff]
  %v1592 = vld [vmem:[%s1 + $0x2ff0] sm:$0xff]
  %v1593 = vld [vmem:[%s1 + $0x2ff8] sm:$0xff]
  %v1594 = vld [vmem:[%s1 + $0x3000] sm:$0xff]
  %v1595 = vld [vmem:[%s1 + $0x3008] sm:$0xff]
  %v1596 = vld [vmem:[%s1 + $0x3010] sm:$0xff]
  %v1597 = vld [vmem:[%s1 + $0x3018] sm:$0xff]
  %v1598 = vld [vmem:[%s1 + $0x3020] sm:$0xff]
  %v1599 = vld [vmem:[%s1 + $0x3028] sm:$0xff]
  %v1600 = vld [vmem:[%s1 + $0x3030] sm:$0xff]
  %v1601 = vld [vmem:[%s1 + $0x3038] sm:$0xff]
  %v1602 = vld [vmem:[%s1 + $0x3040] sm:$0xff]
  %v1603 = vld [vmem:[%s1 + $0x3048] sm:$0xff]
  %v1604 = vld [vmem:[%s1 + $0x3050] sm:$0xff]
  %v1605 = vld [vmem:[%s1 + $0x3058] sm:$0xff]
  %v1606 = vld [vmem:[%s1 + $0x3060] sm:$0xff]
  %v1607 = vld [vmem:[%s1 + $0x3068] sm:$0xff]
  %v1608 = vld [vmem:[%s1 + $0x3070] sm:$0xff]
  %v1609 = vld [vmem:[%s1 + $0x3078] sm:$0xff]
  %v1610 = vld [vmem:[%s1 + $0x3080] sm:$0xff]
  %v1611 = vld [vmem:[%s1 + $0x3088] sm:$0xff]
  %v1612 = vld [vmem:[%s1 + $0x3090] sm:$0xff]
  %v1613 = vld [vmem:[%s1 + $0x3098] sm:$0xff]
  %v1614 = vld [vmem:[%s1 + $0x30a0] sm:$0xff]
  %v1615 = vld [vmem:[%s1 + $0x30a8] sm:$0xff]
  %v1616 = vld [vmem:[%s1 + $0x30b0] sm:$0xff]
  %v1617 = vld [vmem:[%s1 + $0x30b8] sm:$0xff]
  %v1618 = vld [vmem:[%s1 + $0x30c0] sm:$0xff]
  %v1619 = vld [vmem:[%s1 + $0x30c8] sm:$0xff]
  %v1620 = vld [vmem:[%s1 + $0x30d0] sm:$0xff]
  %v1621 = vld [vmem:[%s1 + $0x30d8] sm:$0xff]
  %v1622 = vld [vmem:[%s1 + $0x30e0] sm:$0xff]
  %v1623 = vld [vmem:[%s1 + $0x30e8] sm:$0xff]
  %v1624 = vld [vmem:[%s1 + $0x30f0] sm:$0xff]
  %v1625 = vld [vmem:[%s1 + $0x30f8] sm:$0xff]
  %v1626 = vld [vmem:[%s1 + $0x3100] sm:$0xff]
  %v1627 = vld [vmem:[%s1 + $0x3108] sm:$0xff]
  %v1628 = vld [vmem:[%s1 + $0x3110] sm:$0xff]
  %v1629 = vld [vmem:[%s1 + $0x3118] sm:$0xff]
  %v1630 = vld [vmem:[%s1 + $0x3120] sm:$0xff]
  %v1631 = vld [vmem:[%s1 + $0x3128] sm:$0xff]
  %v1632 = vld [vmem:[%s1 + $0x3130] sm:$0xff]
  %v1633 = vld [vmem:[%s1 + $0x3138] sm:$0xff]
  %v1634 = vld [vmem:[%s1 + $0x3140] sm:$0xff]
  %v1635 = vld [vmem:[%s1 + $0x3148] sm:$0xff]
  %v1636 = vld [vmem:[%s1 + $0x3150] sm:$0xff]
  %v1637 = vld [vmem:[%s1 + $0x3158] sm:$0xff]
  %v1638 = vld [vmem:[%s1 + $0x3160] sm:$0xff]
  %v1639 = vld [vmem:[%s1 + $0x3168] sm:$0xff]
  %v1640 = vld [vmem:[%s1 + $0x3170] sm:$0xff]
  %v1641 = vld [vmem:[%s1 + $0x3178] sm:$0xff]
  %v1642 = vld [vmem:[%s1 + $0x3180] sm:$0xff]
  %v1643 = vld [vmem:[%s1 + $0x3188] sm:$0xff]
  %v1644 = vld [vmem:[%s1 + $0x3190] sm:$0xff]
  %v1645 = vld [vmem:[%s1 + $0x3198] sm:$0xff]
  %v1646 = vld [vmem:[%s1 + $0x31a0] sm:$0xff]
  %v1647 = vld [vmem:[%s1 + $0x31a8] sm:$0xff]
  %v1648 = vld [vmem:[%s1 + $0x31b0] sm:$0xff]
  %v1649 = vld [vmem:[%s1 + $0x31b8] sm:$0xff]
  %v1650 = vld [vmem:[%s1 + $0x31c0] sm:$0xff]
  %v1651 = vld [vmem:[%s1 + $0x31c8] sm:$0xff]
  %v1652 = vld [vmem:[%s1 + $0x31d0] sm:$0xff]
  %v1653 = vld [vmem:[%s1 + $0x31d8] sm:$0xff]
  %v1654 = vld [vmem:[%s1 + $0x31e0] sm:$0xff]
  %v1655 = vld [vmem:[%s1 + $0x31e8] sm:$0xff]
  %v1656 = vld [vmem:[%s1 + $0x31f0] sm:$0xff]
  %v1657 = vld [vmem:[%s1 + $0x31f8] sm:$0xff]
  %v1658 = vld [vmem:[%s1 + $0x3200] sm:$0xff]
  %v1659 = vld [vmem:[%s1 + $0x3208] sm:$0xff]
  %v1660 = vld [vmem:[%s1 + $0x3210] sm:$0xff]
  %v1661 = vld [vmem:[%s1 + $0x3218] sm:$0xff]
  %v1662 = vld [vmem:[%s1 + $0x3220] sm:$0xff]
  %v1663 = vld [vmem:[%s1 + $0x3228] sm:$0xff]
  %v1664 = vld [vmem:[%s1 + $0x3230] sm:$0xff]
  %v1665 = vld [vmem:[%s1 + $0x3238] sm:$0xff]
  %v1666 = vld [vmem:[%s1 + $0x3240] sm:$0xff]
  %v1667 = vld [vmem:[%s1 + $0x3248] sm:$0xff]
  %v1668 = vld [vmem:[%s1 + $0x3250] sm:$0xff]
  %v1669 = vld [vmem:[%s1 + $0x3258] sm:$0xff]
  %v1670 = vld [vmem:[%s1 + $0x3260] sm:$0xff]
  %v1671 = vld [vmem:[%s1 + $0x3268] sm:$0xff]
  %v1672 = vld [vmem:[%s1 + $0x3270] sm:$0xff]
  %v1673 = vld [vmem:[%s1 + $0x3278] sm:$0xff]
  %v1674 = vld [vmem:[%s1 + $0x3280] sm:$0xff]
  %v1675 = vld [vmem:[%s1 + $0x3288] sm:$0xff]
  %v1676 = vld [vmem:[%s1 + $0x3290] sm:$0xff]
  %v1677 = vld [vmem:[%s1 + $0x3298] sm:$0xff]
  %v1678 = vld [vmem:[%s1 + $0x32a0] sm:$0xff]
  %v1679 = vld [vmem:[%s1 + $0x32a8] sm:$0xff]
  %v1680 = vld [vmem:[%s1 + $0x32b0] sm:$0xff]
  %v1681 = vld [vmem:[%s1 + $0x32b8] sm:$0xff]
  %v1682 = vld [vmem:[%s1 + $0x32c0] sm:$0xff]
  %v1683 = vld [vmem:[%s1 + $0x32c8] sm:$0xff]
  %v1684 = vld [vmem:[%s1 + $0x32d0] sm:$0xff]
  %v1685 = vld [vmem:[%s1 + $0x32d8] sm:$0xff]
  %v1686 = vld [vmem:[%s1 + $0x32e0] sm:$0xff]
  %v1687 = vld [vmem:[%s1 + $0x32e8] sm:$0xff]
  %v1688 = vld [vmem:[%s1 + $0x32f0] sm:$0xff]
  %v1689 = vld [vmem:[%s1 + $0x32f8] sm:$0xff]
  %v1690 = vld [vmem:[%s1 + $0x3300] sm:$0xff]
  %v1691 = vld [vmem:[%s1 + $0x3308] sm:$0xff]
  %v1692 = vld [vmem:[%s1 + $0x3310] sm:$0xff]
  %v1693 = vld [vmem:[%s1 + $0x3318] sm:$0xff]
  %v1694 = vld [vmem:[%s1 + $0x3320] sm:$0xff]
  %v1695 = vld [vmem:[%s1 + $0x3328] sm:$0xff]
  %v1696 = vld [vmem:[%s1 + $0x3330] sm:$0xff]
  %v1697 = vld [vmem:[%s1 + $0x3338] sm:$0xff]
  %v1698 = vld [vmem:[%s1 + $0x3340] sm:$0xff]
  %v1699 = vld [vmem:[%s1 + $0x3348] sm:$0xff]
  %v1700 = vld [vmem:[%s1 + $0x3350] sm:$0xff]
  %v1701 = vld [vmem:[%s1 + $0x3358] sm:$0xff]
  %v1702 = vld [vmem:[%s1 + $0x3360] sm:$0xff]
  %v1703 = vld [vmem:[%s1 + $0x3368] sm:$0xff]
  %v1704 = vld [vmem:[%s1 + $0x3370] sm:$0xff]
  %v1705 = vld [vmem:[%s1 + $0x3378] sm:$0xff]
  %v1706 = vld [vmem:[%s1 + $0x3380] sm:$0xff]
  %v1707 = vld [vmem:[%s1 + $0x3388] sm:$0xff]
  %v1708 = vld [vmem:[%s1 + $0x3390] sm:$0xff]
  %v1709 = vld [vmem:[%s1 + $0x3398] sm:$0xff]
  %v1710 = vld [vmem:[%s1 + $0x33a0] sm:$0xff]
  %v1711 = vld [vmem:[%s1 + $0x33a8] sm:$0xff]
  %v1712 = vld [vmem:[%s1 + $0x33b0] sm:$0xff]
  %v1713 = vld [vmem:[%s1 + $0x33b8] sm:$0xff]
  %v1714 = vld [vmem:[%s1 + $0x33c0] sm:$0xff]
  %v1715 = vld [vmem:[%s1 + $0x33c8] sm:$0xff]
  %v1716 = vld [vmem:[%s1 + $0x33d0] sm:$0xff]
  %v1717 = vld [vmem:[%s1 + $0x33d8] sm:$0xff]
  %v1718 = vld [vmem:[%s1 + $0x33e0] sm:$0xff]
  %v1719 = vld [vmem:[%s1 + $0x33e8] sm:$0xff]
  %v1720 = vld [vmem:[%s1 + $0x33f0] sm:$0xff]
  %v1721 = vld [vmem:[%s1 + $0x33f8] sm:$0xff]
  %v1722 = vld [vmem:[%s1 + $0x3400] sm:$0xff]
  %v1723 = vld [vmem:[%s1 + $0x3408] sm:$0xff]
  %v1724 = vld [vmem:[%s1 + $0x3410] sm:$0xff]
  %v1725 = vld [vmem:[%s1 + $0x3418] sm:$0xff]
  %v1726 = vld [vmem:[%s1 + $0x3420] sm:$0xff]
  %v1727 = vld [vmem:[%s1 + $0x3428] sm:$0xff]
  %v1728 = vld [vmem:[%s1 + $0x3430] sm:$0xff]
  %v1729 = vld [vmem:[%s1 + $0x3438] sm:$0xff]
  %v1730 = vld [vmem:[%s1 + $0x3440] sm:$0xff]
  %v1731 = vld [vmem:[%s1 + $0x3448] sm:$0xff]
  %v1732 = vld [vmem:[%s1 + $0x3450] sm:$0xff]
  %v1733 = vld [vmem:[%s1 + $0x3458] sm:$0xff]
  %v1734 = vld [vmem:[%s1 + $0x3460] sm:$0xff]
  %v1735 = vld [vmem:[%s1 + $0x3468] sm:$0xff]
  %v1736 = vld [vmem:[%s1 + $0x3470] sm:$0xff]
  %v1737 = vld [vmem:[%s1 + $0x3478] sm:$0xff]
  %v1738 = vld [vmem:[%s1 + $0x3480] sm:$0xff]
  %v1739 = vld [vmem:[%s1 + $0x3488] sm:$0xff]
  %v1740 = vld [vmem:[%s1 + $0x3490] sm:$0xff]
  %v1741 = vld [vmem:[%s1 + $0x3498] sm:$0xff]
  %v1742 = vld [vmem:[%s1 + $0x34a0] sm:$0xff]
  %v1743 = vld [vmem:[%s1 + $0x34a8] sm:$0xff]
  %v1744 = vld [vmem:[%s1 + $0x34b0] sm:$0xff]
  %v1745 = vld [vmem:[%s1 + $0x34b8] sm:$0xff]
  %v1746 = vld [vmem:[%s1 + $0x34c0] sm:$0xff]
  %v1747 = vld [vmem:[%s1 + $0x34c8] sm:$0xff]
  %v1748 = vld [vmem:[%s1 + $0x34d0] sm:$0xff]
  %v1749 = vld [vmem:[%s1 + $0x34d8] sm:$0xff]
  %v1750 = vld [vmem:[%s1 + $0x34e0] sm:$0xff]
  %v1751 = vld [vmem:[%s1 + $0x34e8] sm:$0xff]
  %v1752 = vld [vmem:[%s1 + $0x34f0] sm:$0xff]
  %v1753 = vld [vmem:[%s1 + $0x34f8] sm:$0xff]
  %v1754 = vld [vmem:[%s1 + $0x3500] sm:$0xff]
  %v1755 = vld [vmem:[%s1 + $0x3508] sm:$0xff]
  %v1756 = vld [vmem:[%s1 + $0x3510] sm:$0xff]
  %v1757 = vld [vmem:[%s1 + $0x3518] sm:$0xff]
  %v1758 = vld [vmem:[%s1 + $0x3520] sm:$0xff]
  %v1759 = vld [vmem:[%s1 + $0x3528] sm:$0xff]
  %v1760 = vld [vmem:[%s1 + $0x3530] sm:$0xff]
  %v1761 = vld [vmem:[%s1 + $0x3538] sm:$0xff]
  %v1762 = vld [vmem:[%s1 + $0x3540] sm:$0xff]
  %v1763 = vld [vmem:[%s1 + $0x3548] sm:$0xff]
  %v1764 = vld [vmem:[%s1 + $0x3550] sm:$0xff]
  %v1765 = vld [vmem:[%s1 + $0x3558] sm:$0xff]
  %v1766 = vld [vmem:[%s1 + $0x3560] sm:$0xff]
  %v1767 = vld [vmem:[%s1 + $0x3568] sm:$0xff]
  %v1768 = vld [vmem:[%s1 + $0x3570] sm:$0xff]
  %v1769 = vld [vmem:[%s1 + $0x3578] sm:$0xff]
  %v1770 = vld [vmem:[%s1 + $0x3580] sm:$0xff]
  %v1771 = vld [vmem:[%s1 + $0x3588] sm:$0xff]
  %v1772 = vld [vmem:[%s1 + $0x3590] sm:$0xff]
  %v1773 = vld [vmem:[%s1 + $0x3598] sm:$0xff]
  %v1774 = vld [vmem:[%s1 + $0x35a0] sm:$0xff]
  %v1775 = vld [vmem:[%s1 + $0x35a8] sm:$0xff]
  %v1776 = vld [vmem:[%s1 + $0x35b0] sm:$0xff]
  %v1777 = vld [vmem:[%s1 + $0x35b8] sm:$0xff]
  %v1778 = vld [vmem:[%s1 + $0x35c0] sm:$0xff]
  %v1779 = vld [vmem:[%s1 + $0x35c8] sm:$0xff]
  %v1780 = vld [vmem:[%s1 + $0x35d0] sm:$0xff]
  %v1781 = vld [vmem:[%s1 + $0x35d8] sm:$0xff]
  %v1782 = vld [vmem:[%s1 + $0x35e0] sm:$0xff]
  %v1783 = vld [vmem:[%s1 + $0x35e8] sm:$0xff]
  %v1784 = vld [vmem:[%s1 + $0x35f0] sm:$0xff]
  %v1785 = vld [vmem:[%s1 + $0x35f8] sm:$0xff]
  %v1786 = vld [vmem:[%s1 + $0x3600] sm:$0xff]
  %v1787 = vld [vmem:[%s1 + $0x3608] sm:$0xff]
  %v1788 = vld [vmem:[%s1 + $0x3610] sm:$0xff]
  %v1789 = vld [vmem:[%s1 + $0x3618] sm:$0xff]
  %v1790 = vld [vmem:[%s1 + $0x3620] sm:$0xff]
  %v1791 = vld [vmem:[%s1 + $0x3628] sm:$0xff]
  %v1792 = vld [vmem:[%s1 + $0x3630] sm:$0xff]
  %v1793 = vld [vmem:[%s1 + $0x3638] sm:$0xff]
  %v1794 = vld [vmem:[%s1 + $0x3640] sm:$0xff]
  %v1795 = vld [vmem:[%s1 + $0x3648] sm:$0xff]
  %v1796 = vld [vmem:[%s1 + $0x3650] sm:$0xff]
  %v1797 = vld [vmem:[%s1 + $0x3658] sm:$0xff]
  %v1798 = vld [vmem:[%s1 + $0x3660] sm:$0xff]
  %v1799 = vld [vmem:[%s1 + $0x3668] sm:$0xff]
  %v1800 = vld [vmem:[%s1 + $0x3670] sm:$0xff]
  %v1801 = vld [vmem:[%s1 + $0x3678] sm:$0xff]
  %v1802 = vld [vmem:[%s1 + $0x3680] sm:$0xff]
  %v1803 = vld [vmem:[%s1 + $0x3688] sm:$0xff]
  %v1804 = vld [vmem:[%s1 + $0x3690] sm:$0xff]
  %v1805 = vld [vmem:[%s1 + $0x3698] sm:$0xff]
  %v1806 = vld [vmem:[%s1 + $0x36a0] sm:$0xff]
  %v1807 = vld [vmem:[%s1 + $0x36a8] sm:$0xff]
  %v1808 = vld [vmem:[%s1 + $0x36b0] sm:$0xff]
  %v1809 = vld [vmem:[%s1 + $0x36b8] sm:$0xff]
  %v1810 = vld [vmem:[%s1 + $0x36c0] sm:$0xff]
  %v1811 = vld [vmem:[%s1 + $0x36c8] sm:$0xff]
  %v1812 = vld [vmem:[%s1 + $0x36d0] sm:$0xff]
  %v1813 = vld [vmem:[%s1 + $0x36d8] sm:$0xff]
  %v1814 = vld [vmem:[%s1 + $0x36e0] sm:$0xff]
  %v1815 = vld [vmem:[%s1 + $0x36e8] sm:$0xff]
  %v1816 = vld [vmem:[%s1 + $0x36f0] sm:$0xff]
  %v1817 = vld [vmem:[%s1 + $0x36f8] sm:$0xff]
  %v1818 = vld [vmem:[%s1 + $0x3700] sm:$0xff]
  %v1819 = vld [vmem:[%s1 + $0x3708] sm:$0xff]
  %v1820 = vld [vmem:[%s1 + $0x3710] sm:$0xff]
  %v1821 = vld [vmem:[%s1 + $0x3718] sm:$0xff]
  %v1822 = vld [vmem:[%s1 + $0x3720] sm:$0xff]
  %v1823 = vld [vmem:[%s1 + $0x3728] sm:$0xff]
  %v1824 = vld [vmem:[%s1 + $0x3730] sm:$0xff]
  %v1825 = vld [vmem:[%s1 + $0x3738] sm:$0xff]
  %v1826 = vld [vmem:[%s1 + $0x3740] sm:$0xff]
  %v1827 = vld [vmem:[%s1 + $0x3748] sm:$0xff]
  %v1828 = vld [vmem:[%s1 + $0x3750] sm:$0xff]
  %v1829 = vld [vmem:[%s1 + $0x3758] sm:$0xff]
  %v1830 = vld [vmem:[%s1 + $0x3760] sm:$0xff]
  %v1831 = vld [vmem:[%s1 + $0x3768] sm:$0xff]
  %v1832 = vld [vmem:[%s1 + $0x3770] sm:$0xff]
  %v1833 = vld [vmem:[%s1 + $0x3778] sm:$0xff]
  %v1834 = vld [vmem:[%s1 + $0x3780] sm:$0xff]
  %v1835 = vld [vmem:[%s1 + $0x3788] sm:$0xff]
  %v1836 = vld [vmem:[%s1 + $0x3790] sm:$0xff]
  %v1837 = vld [vmem:[%s1 + $0x3798] sm:$0xff]
  %v1838 = vld [vmem:[%s1 + $0x37a0] sm:$0xff]
  %v1839 = vld [vmem:[%s1 + $0x37a8] sm:$0xff]
  %v1840 = vld [vmem:[%s1 + $0x37b0] sm:$0xff]
  %v1841 = vld [vmem:[%s1 + $0x37b8] sm:$0xff]
  %v1842 = vld [vmem:[%s1 + $0x37c0] sm:$0xff]
  %v1843 = vld [vmem:[%s1 + $0x37c8] sm:$0xff]
  %v1844 = vld [vmem:[%s1 + $0x37d0] sm:$0xff]
  %v1845 = vld [vmem:[%s1 + $0x37d8] sm:$0xff]
  %v1846 = vld [vmem:[%s1 + $0x37e0] sm:$0xff]
  %v1847 = vld [vmem:[%s1 + $0x37e8] sm:$0xff]
  %v1848 = vld [vmem:[%s1 + $0x37f0] sm:$0xff]
  %v1849 = vld [vmem:[%s1 + $0x37f8] sm:$0xff]
  %v1850 = vld [vmem:[%s1 + $0x3800] sm:$0xff]
  %v1851 = vld [vmem:[%s1 + $0x3808] sm:$0xff]
  %v1852 = vld [vmem:[%s1 + $0x3810] sm:$0xff]
  %v1853 = vld [vmem:[%s1 + $0x3818] sm:$0xff]
  %v1854 = vld [vmem:[%s1 + $0x3820] sm:$0xff]
  %v1855 = vld [vmem:[%s1 + $0x3828] sm:$0xff]
  %v1856 = vld [vmem:[%s1 + $0x3830] sm:$0xff]
  %v1857 = vld [vmem:[%s1 + $0x3838] sm:$0xff]
  %v1858 = vld [vmem:[%s1 + $0x3840] sm:$0xff]
  %v1859 = vld [vmem:[%s1 + $0x3848] sm:$0xff]
  %v1860 = vld [vmem:[%s1 + $0x3850] sm:$0xff]
  %v1861 = vld [vmem:[%s1 + $0x3858] sm:$0xff]
  %v1862 = vld [vmem:[%s1 + $0x3860] sm:$0xff]
  %v1863 = vld [vmem:[%s1 + $0x3868] sm:$0xff]
  %v1864 = vld [vmem:[%s1 + $0x3870] sm:$0xff]
  %v1865 = vld [vmem:[%s1 + $0x3878] sm:$0xff]
  %v1866 = vld [vmem:[%s1 + $0x3880] sm:$0xff]
  %v1867 = vld [vmem:[%s1 + $0x3888] sm:$0xff]
  %v1868 = vld [vmem:[%s1 + $0x3890] sm:$0xff]
  %v1869 = vld [vmem:[%s1 + $0x3898] sm:$0xff]
  %v1870 = vld [vmem:[%s1 + $0x38a0] sm:$0xff]
  %v1871 = vld [vmem:[%s1 + $0x38a8] sm:$0xff]
  %v1872 = vld [vmem:[%s1 + $0x38b0] sm:$0xff]
  %v1873 = vld [vmem:[%s1 + $0x38b8] sm:$0xff]
  %v1874 = vld [vmem:[%s1 + $0x38c0] sm:$0xff]
  %v1875 = vld [vmem:[%s1 + $0x38c8] sm:$0xff]
  %v1876 = vld [vmem:[%s1 + $0x38d0] sm:$0xff]
  %v1877 = vld [vmem:[%s1 + $0x38d8] sm:$0xff]
  %v1878 = vld [vmem:[%s1 + $0x38e0] sm:$0xff]
  %v1879 = vld [vmem:[%s1 + $0x38e8] sm:$0xff]
  %v1880 = vld [vmem:[%s1 + $0x38f0] sm:$0xff]
  %v1881 = vld [vmem:[%s1 + $0x38f8] sm:$0xff]
  %v1882 = vld [vmem:[%s1 + $0x3900] sm:$0xff]
  %v1883 = vld [vmem:[%s1 + $0x3908] sm:$0xff]
  %v1884 = vld [vmem:[%s1 + $0x3910] sm:$0xff]
  %v1885 = vld [vmem:[%s1 + $0x3918] sm:$0xff]
  %v1886 = vld [vmem:[%s1 + $0x3920] sm:$0xff]
  %v1887 = vld [vmem:[%s1 + $0x3928] sm:$0xff]
  %v1888 = vld [vmem:[%s1 + $0x3930] sm:$0xff]
  %v1889 = vld [vmem:[%s1 + $0x3938] sm:$0xff]
  %v1890 = vld [vmem:[%s1 + $0x3940] sm:$0xff]
  %v1891 = vld [vmem:[%s1 + $0x3948] sm:$0xff]
  %v1892 = vld [vmem:[%s1 + $0x3950] sm:$0xff]
  %v1893 = vld [vmem:[%s1 + $0x3958] sm:$0xff]
  %v1894 = vld [vmem:[%s1 + $0x3960] sm:$0xff]
  %v1895 = vld [vmem:[%s1 + $0x3968] sm:$0xff]
  %v1896 = vld [vmem:[%s1 + $0x3970] sm:$0xff]
  %v1897 = vld [vmem:[%s1 + $0x3978] sm:$0xff]
  %v1898 = vld [vmem:[%s1 + $0x3980] sm:$0xff]
  %v1899 = vld [vmem:[%s1 + $0x3988] sm:$0xff]
  %v1900 = vld [vmem:[%s1 + $0x3990] sm:$0xff]
  %v1901 = vld [vmem:[%s1 + $0x3998] sm:$0xff]
  %v1902 = vld [vmem:[%s1 + $0x39a0] sm:$0xff]
  %v1903 = vld [vmem:[%s1 + $0x39a8] sm:$0xff]
  %v1904 = vld [vmem:[%s1 + $0x39b0] sm:$0xff]
  %v1905 = vld [vmem:[%s1 + $0x39b8] sm:$0xff]
  %v1906 = vld [vmem:[%s1 + $0x39c0] sm:$0xff]
  %v1907 = vld [vmem:[%s1 + $0x39c8] sm:$0xff]
  %v1908 = vld [vmem:[%s1 + $0x39d0] sm:$0xff]
  %v1909 = vld [vmem:[%s1 + $0x39d8] sm:$0xff]
  %v1910 = vld [vmem:[%s1 + $0x39e0] sm:$0xff]
  %v1911 = vld [vmem:[%s1 + $0x39e8] sm:$0xff]
  %v1912 = vld [vmem:[%s1 + $0x39f0] sm:$0xff]
  %v1913 = vld [vmem:[%s1 + $0x39f8] sm:$0xff]
  %v1914 = vld [vmem:[%s1 + $0x3a00] sm:$0xff]
  %v1915 = vld [vmem:[%s1 + $0x3a08] sm:$0xff]
  %v1916 = vld [vmem:[%s1 + $0x3a10] sm:$0xff]
  %v1917 = vld [vmem:[%s1 + $0x3a18] sm:$0xff]
  %v1918 = vld [vmem:[%s1 + $0x3a20] sm:$0xff]
  %v1919 = vld [vmem:[%s1 + $0x3a28] sm:$0xff]
  %v1920 = vld [vmem:[%s1 + $0x3a30] sm:$0xff]
  %v1921 = vld [vmem:[%s1 + $0x3a38] sm:$0xff]
  %v1922 = vld [vmem:[%s1 + $0x3a40] sm:$0xff]
  %v1923 = vld [vmem:[%s1 + $0x3a48] sm:$0xff]
  %v1924 = vld [vmem:[%s1 + $0x3a50] sm:$0xff]
  %v1925 = vld [vmem:[%s1 + $0x3a58] sm:$0xff]
  %v1926 = vld [vmem:[%s1 + $0x3a60] sm:$0xff]
  %v1927 = vld [vmem:[%s1 + $0x3a68] sm:$0xff]
  %v1928 = vld [vmem:[%s1 + $0x3a70] sm:$0xff]
  %v1929 = vld [vmem:[%s1 + $0x3a78] sm:$0xff]
  %v1930 = vld [vmem:[%s1 + $0x3a80] sm:$0xff]
  %v1931 = vld [vmem:[%s1 + $0x3a88] sm:$0xff]
  %v1932 = vld [vmem:[%s1 + $0x3a90] sm:$0xff]
  %v1933 = vld [vmem:[%s1 + $0x3a98] sm:$0xff]
  %v1934 = vld [vmem:[%s1 + $0x3aa0] sm:$0xff]
  %v1935 = vld [vmem:[%s1 + $0x3aa8] sm:$0xff]
  %v1936 = vld [vmem:[%s1 + $0x3ab0] sm:$0xff]
  %v1937 = vld [vmem:[%s1 + $0x3ab8] sm:$0xff]
  %v1938 = vld [vmem:[%s1 + $0x3ac0] sm:$0xff]
  %v1939 = vld [vmem:[%s1 + $0x3ac8] sm:$0xff]
  %v1940 = vld [vmem:[%s1 + $0x3ad0] sm:$0xff]
  %v1941 = vld [vmem:[%s1 + $0x3ad8] sm:$0xff]
  %v1942 = vld [vmem:[%s1 + $0x3ae0] sm:$0xff]
  %v1943 = vld [vmem:[%s1 + $0x3ae8] sm:$0xff]
  %v1944 = vld [vmem:[%s1 + $0x3af0] sm:$0xff]
  %v1945 = vld [vmem:[%s1 + $0x3af8] sm:$0xff]
  %v1946 = vld [vmem:[%s1 + $0x3b00] sm:$0xff]
  %v1947 = vld [vmem:[%s1 + $0x3b08] sm:$0xff]
  %v1948 = vld [vmem:[%s1 + $0x3b10] sm:$0xff]
  %v1949 = vld [vmem:[%s1 + $0x3b18] sm:$0xff]
  %v1950 = vld [vmem:[%s1 + $0x3b20] sm:$0xff]
  %v1951 = vld [vmem:[%s1 + $0x3b28] sm:$0xff]
  %v1952 = vld [vmem:[%s1 + $0x3b30] sm:$0xff]
  %v1953 = vld [vmem:[%s1 + $0x3b38] sm:$0xff]
  %v1954 = vld [vmem:[%s1 + $0x3b40] sm:$0xff]
  %v1955 = vld [vmem:[%s1 + $0x3b48] sm:$0xff]
  %v1956 = vld [vmem:[%s1 + $0x3b50] sm:$0xff]
  %v1957 = vld [vmem:[%s1 + $0x3b58] sm:$0xff]
  %v1958 = vld [vmem:[%s1 + $0x3b60] sm:$0xff]
  %v1959 = vld [vmem:[%s1 + $0x3b68] sm:$0xff]
  %v1960 = vld [vmem:[%s1 + $0x3b70] sm:$0xff]
  %v1961 = vld [vmem:[%s1 + $0x3b78] sm:$0xff]
  %v1962 = vld [vmem:[%s1 + $0x3b80] sm:$0xff]
  %v1963 = vld [vmem:[%s1 + $0x3b88] sm:$0xff]
  %v1964 = vld [vmem:[%s1 + $0x3b90] sm:$0xff]
  %v1965 = vld [vmem:[%s1 + $0x3b98] sm:$0xff]
  %v1966 = vld [vmem:[%s1 + $0x3ba0] sm:$0xff]
  %v1967 = vld [vmem:[%s1 + $0x3ba8] sm:$0xff]
  %v1968 = vld [vmem:[%s1 + $0x3bb0] sm:$0xff]
  %v1969 = vld [vmem:[%s1 + $0x3bb8] sm:$0xff]
  %v1970 = vld [vmem:[%s1 + $0x3bc0] sm:$0xff]
  %v1971 = vld [vmem:[%s1 + $0x3bc8] sm:$0xff]
  %v1972 = vld [vmem:[%s1 + $0x3bd0] sm:$0xff]
  %v1973 = vld [vmem:[%s1 + $0x3bd8] sm:$0xff]
  %v1974 = vld [vmem:[%s1 + $0x3be0] sm:$0xff]
  %v1975 = vld [vmem:[%s1 + $0x3be8] sm:$0xff]
  %v1976 = vld [vmem:[%s1 + $0x3bf0] sm:$0xff]
  %v1977 = vld [vmem:[%s1 + $0x3bf8] sm:$0xff]
  %v1978 = vld [vmem:[%s1 + $0x3c00] sm:$0xff]
  %v1979 = vld [vmem:[%s1 + $0x3c08] sm:$0xff]
  %v1980 = vld [vmem:[%s1 + $0x3c10] sm:$0xff]
  %v1981 = vld [vmem:[%s1 + $0x3c18] sm:$0xff]
  %v1982 = vld [vmem:[%s1 + $0x3c20] sm:$0xff]
  %v1983 = vld [vmem:[%s1 + $0x3c28] sm:$0xff]
  %v1984 = vld [vmem:[%s1 + $0x3c30] sm:$0xff]
  %v1985 = vld [vmem:[%s1 + $0x3c38] sm:$0xff]
  %v1986 = vld [vmem:[%s1 + $0x3c40] sm:$0xff]
  %v1987 = vld [vmem:[%s1 + $0x3c48] sm:$0xff]
  %v1988 = vld [vmem:[%s1 + $0x3c50] sm:$0xff]
  %v1989 = vld [vmem:[%s1 + $0x3c58] sm:$0xff]
  %v1990 = vld [vmem:[%s1 + $0x3c60] sm:$0xff]
  %v1991 = vld [vmem:[%s1 + $0x3c68] sm:$0xff]
  %v1992 = vld [vmem:[%s1 + $0x3c70] sm:$0xff]
  %v1993 = vld [vmem:[%s1 + $0x3c78] sm:$0xff]
  %v1994 = vld [vmem:[%s1 + $0x3c80] sm:$0xff]
  %v1995 = vld [vmem:[%s1 + $0x3c88] sm:$0xff]
  %v1996 = vld [vmem:[%s1 + $0x3c90] sm:$0xff]
  %v1997 = vld [vmem:[%s1 + $0x3c98] sm:$0xff]
  %v1998 = vld [vmem:[%s1 + $0x3ca0] sm:$0xff]
  %v1999 = vld [vmem:[%s1 + $0x3ca8] sm:$0xff]
  %v2000 = vld [vmem:[%s1 + $0x3cb0] sm:$0xff]
  %v2001 = vld [vmem:[%s1 + $0x3cb8] sm:$0xff]
  %v2002 = vld [vmem:[%s1 + $0x3cc0] sm:$0xff]
  %v2003 = vld [vmem:[%s1 + $0x3cc8] sm:$0xff]
  %v2004 = vld [vmem:[%s1 + $0x3cd0] sm:$0xff]
  %v2005 = vld [vmem:[%s1 + $0x3cd8] sm:$0xff]
  %v2006 = vld [vmem:[%s1 + $0x3ce0] sm:$0xff]
  %v2007 = vld [vmem:[%s1 + $0x3ce8] sm:$0xff]
  %v2008 = vld [vmem:[%s1 + $0x3cf0] sm:$0xff]
  %v2009 = vld [vmem:[%s1 + $0x3cf8] sm:$0xff]
  %v2010 = vld [vmem:[%s1 + $0x3d00] sm:$0xff]
  %v2011 = vld [vmem:[%s1 + $0x3d08] sm:$0xff]
  %v2012 = vld [vmem:[%s1 + $0x3d10] sm:$0xff]
  %v2013 = vld [vmem:[%s1 + $0x3d18] sm:$0xff]
  %v2014 = vld [vmem:[%s1 + $0x3d20] sm:$0xff]
  %v2015 = vld [vmem:[%s1 + $0x3d28] sm:$0xff]
  %v2016 = vld [vmem:[%s1 + $0x3d30] sm:$0xff]
  %v2017 = vld [vmem:[%s1 + $0x3d38] sm:$0xff]
  %v2018 = vld [vmem:[%s1 + $0x3d40] sm:$0xff]
  %v2019 = vld [vmem:[%s1 + $0x3d48] sm:$0xff]
  %v2020 = vld [vmem:[%s1 + $0x3d50] sm:$0xff]
  %v2021 = vld [vmem:[%s1 + $0x3d58] sm:$0xff]
  %v2022 = vld [vmem:[%s1 + $0x3d60] sm:$0xff]
  %v2023 = vld [vmem:[%s1 + $0x3d68] sm:$0xff]
  %v2024 = vld [vmem:[%s1 + $0x3d70] sm:$0xff]
  %v2025 = vld [vmem:[%s1 + $0x3d78] sm:$0xff]
  %v2026 = vld [vmem:[%s1 + $0x3d80] sm:$0xff]
  %v2027 = vld [vmem:[%s1 + $0x3d88] sm:$0xff]
  %v2028 = vld [vmem:[%s1 + $0x3d90] sm:$0xff]
  %v2029 = vld [vmem:[%s1 + $0x3d98] sm:$0xff]
  %v2030 = vld [vmem:[%s1 + $0x3da0] sm:$0xff]
  %v2031 = vld [vmem:[%s1 + $0x3da8] sm:$0xff]
  %v2032 = vld [vmem:[%s1 + $0x3db0] sm:$0xff]
  %v2033 = vld [vmem:[%s1 + $0x3db8] sm:$0xff]
  %v2034 = vld [vmem:[%s1 + $0x3dc0] sm:$0xff]
  %v2035 = vld [vmem:[%s1 + $0x3dc8] sm:$0xff]
  %v2036 = vld [vmem:[%s1 + $0x3dd0] sm:$0xff]
  %v2037 = vld [vmem:[%s1 + $0x3dd8] sm:$0xff]
  %v2038 = vld [vmem:[%s1 + $0x3de0] sm:$0xff]
  %v2039 = vld [vmem:[%s1 + $0x3de8] sm:$0xff]
  %v2040 = vld [vmem:[%s1 + $0x3df0] sm:$0xff]
  %v2041 = vld [vmem:[%s1 + $0x3df8] sm:$0xff]
  %v2042 = vld [vmem:[%s1 + $0x3e00] sm:$0xff]
  %v2043 = vld [vmem:[%s1 + $0x3e08] sm:$0xff]
  %v2044 = vld [vmem:[%s1 + $0x3e10] sm:$0xff]
  %v2045 = vld [vmem:[%s1 + $0x3e18] sm:$0xff]
  %v2046 = vld [vmem:[%s1 + $0x3e20] sm:$0xff]
  %v2047 = vld [vmem:[%s1 + $0x3e28] sm:$0xff]
  %v2048 = vld [vmem:[%s1 + $0x3e30] sm:$0xff]
  %v2049 = vld [vmem:[%s1 + $0x3e38] sm:$0xff]
  %v2050 = vld [vmem:[%s1 + $0x3e40] sm:$0xff]
  %v2051 = vld [vmem:[%s1 + $0x3e48] sm:$0xff]
  %v2052 = vld [vmem:[%s1 + $0x3e50] sm:$0xff]
  %v2053 = vld [vmem:[%s1 + $0x3e58] sm:$0xff]
  %v2054 = vld [vmem:[%s1 + $0x3e60] sm:$0xff]
  %v2055 = vld [vmem:[%s1 + $0x3e68] sm:$0xff]
  %v2056 = vld [vmem:[%s1 + $0x3e70] sm:$0xff]
  %v2057 = vld [vmem:[%s1 + $0x3e78] sm:$0xff]
  %v2058 = vld [vmem:[%s1 + $0x3e80] sm:$0xff]
  %v2059 = vld [vmem:[%s1 + $0x3e88] sm:$0xff]
  %v2060 = vld [vmem:[%s1 + $0x3e90] sm:$0xff]
  %v2061 = vld [vmem:[%s1 + $0x3e98] sm:$0xff]
  %v2062 = vld [vmem:[%s1 + $0x3ea0] sm:$0xff]
  %v2063 = vld [vmem:[%s1 + $0x3ea8] sm:$0xff]
  %v2064 = vld [vmem:[%s1 + $0x3eb0] sm:$0xff]
  %v2065 = vld [vmem:[%s1 + $0x3eb8] sm:$0xff]
  %v2066 = vld [vmem:[%s1 + $0x3ec0] sm:$0xff]
  %v2067 = vld [vmem:[%s1 + $0x3ec8] sm:$0xff]
  %v2068 = vld [vmem:[%s1 + $0x3ed0] sm:$0xff]
  %v2069 = vld [vmem:[%s1 + $0x3ed8] sm:$0xff]
  %v2070 = vld [vmem:[%s1 + $0x3ee0] sm:$0xff]
  %v2071 = vld [vmem:[%s1 + $0x3ee8] sm:$0xff]
  %v2072 = vld [vmem:[%s1 + $0x3ef0] sm:$0xff]
  %v2073 = vld [vmem:[%s1 + $0x3ef8] sm:$0xff]
  %v2074 = vld [vmem:[%s1 + $0x3f00] sm:$0xff]
  %v2075 = vld [vmem:[%s1 + $0x3f08] sm:$0xff]
  %v2076 = vld [vmem:[%s1 + $0x3f10] sm:$0xff]
  %v2077 = vld [vmem:[%s1 + $0x3f18] sm:$0xff]
  %v2078 = vld [vmem:[%s1 + $0x3f20] sm:$0xff]
  %v2079 = vld [vmem:[%s1 + $0x3f28] sm:$0xff]
  %v2080 = vld [vmem:[%s1 + $0x3f30] sm:$0xff]
  %v2081 = vld [vmem:[%s1 + $0x3f38] sm:$0xff]
  %v2082 = vld [vmem:[%s1 + $0x3f40] sm:$0xff]
  %v2083 = vld [vmem:[%s1 + $0x3f48] sm:$0xff]
  %v2084 = vld [vmem:[%s1 + $0x3f50] sm:$0xff]
  %v2085 = vld [vmem:[%s1 + $0x3f58] sm:$0xff]
  %v2086 = vld [vmem:[%s1 + $0x3f60] sm:$0xff]
  %v2087 = vld [vmem:[%s1 + $0x3f68] sm:$0xff]
  %v2088 = vld [vmem:[%s1 + $0x3f70] sm:$0xff]
  %v2089 = vld [vmem:[%s1 + $0x3f78] sm:$0xff]
  %v2090 = vld [vmem:[%s1 + $0x3f80] sm:$0xff]
  %v2091 = vld [vmem:[%s1 + $0x3f88] sm:$0xff]
  %v2092 = vld [vmem:[%s1 + $0x3f90] sm:$0xff]
  %v2093 = vld [vmem:[%s1 + $0x3f98] sm:$0xff]
  %v2094 = vld [vmem:[%s1 + $0x3fa0] sm:$0xff]
  %v2095 = vld [vmem:[%s1 + $0x3fa8] sm:$0xff]
  %v2096 = vld [vmem:[%s1 + $0x3fb0] sm:$0xff]
  %v2097 = vld [vmem:[%s1 + $0x3fb8] sm:$0xff]
  %v2098 = vld [vmem:[%s1 + $0x3fc0] sm:$0xff]
  %v2099 = vld [vmem:[%s1 + $0x3fc8] sm:$0xff]
  %v2100 = vld [vmem:[%s1 + $0x3fd0] sm:$0xff]
  %v2101 = vld [vmem:[%s1 + $0x3fd8] sm:$0xff]
  %v2102 = vld [vmem:[%s1 + $0x3fe0] sm:$0xff]
  %v2103 = vld [vmem:[%s1 + $0x3fe8] sm:$0xff]
  %v2104 = vld [vmem:[%s1 + $0x3ff0] sm:$0xff]
  %v2105 = vld [vmem:[%s1 + $0x3ff8] sm:$0xff]
  %v2122 = vcombine.high %v42, %v42
  %v2124 = vunpack.c.l.s4 1983009808
  %v2125 = vunpack.c.0.s8 %v2124
  %v2126 = vlaneseq
  %v2127 = vshrl.u32 %v2126, 7
  %v2128 = vsub.s32 %v2125, %v2127
  %v2129 = vrot.slane %v42, %v2128
  %v2131 = vunpack.c.l.s4 1983009808
  %v2132 = vunpack.c.0.s8 %v2131
  %v2133 = vlaneseq
  %v2134 = vshrl.u32 %v2133, 7
  %v2135 = vsub.s32 %v2132, %v2134
  %v2136 = vrot.slane %v2122, %v2135
  %v2137 = vcombine.high %v2129, %v2129
  %v2138 = vcombine.high %v2136, %v2136
  %v2139 = vcombine.high %v43, %v43
  %v2141 = vunpack.c.l.s4 1983009808
  %v2142 = vunpack.c.0.s8 %v2141
  %v2143 = vlaneseq
  %v2144 = vshrl.u32 %v2143, 7
  %v2145 = vsub.s32 %v2142, %v2144
  %v2146 = vrot.slane %v43, %v2145
  %v2148 = vunpack.c.l.s4 1983009808
  %v2149 = vunpack.c.0.s8 %v2148
  %v2150 = vlaneseq
  %v2151 = vshrl.u32 %v2150, 7
  %v2152 = vsub.s32 %v2149, %v2151
  %v2153 = vrot.slane %v2139, %v2152
  %v2154 = vcombine.high %v2146, %v2146
  %v2155 = vcombine.high %v2153, %v2153
  %v2156 = vcombine.high %v44, %v44
  %v2158 = vunpack.c.l.s4 1983009808
  %v2159 = vunpack.c.0.s8 %v2158
  %v2160 = vlaneseq
  %v2161 = vshrl.u32 %v2160, 7
  %v2162 = vsub.s32 %v2159, %v2161
  %v2163 = vrot.slane %v44, %v2162
  %v2165 = vunpack.c.l.s4 1983009808
  %v2166 = vunpack.c.0.s8 %v2165
  %v2167 = vlaneseq
  %v2168 = vshrl.u32 %v2167, 7
  %v2169 = vsub.s32 %v2166, %v2168
  %v2170 = vrot.slane %v2156, %v2169
  %v2171 = vcombine.high %v2163, %v2163
  %v2172 = vcombine.high %v2170, %v2170
  %v2173 = vcombine.high %v45, %v45
  %v2175 = vunpack.c.l.s4 1983009808
  %v2176 = vunpack.c.0.s8 %v2175
  %v2177 = vlaneseq
  %v2178 = vshrl.u32 %v2177, 7
  %v2179 = vsub.s32 %v2176, %v2178
  %v2180 = vrot.slane %v45, %v2179
  %v2182 = vunpack.c.l.s4 1983009808
  %v2183 = vunpack.c.0.s8 %v2182
  %v2184 = vlaneseq
  %v2185 = vshrl.u32 %v2184, 7
  %v2186 = vsub.s32 %v2183, %v2185
  %v2187 = vrot.slane %v2173, %v2186
  %v2188 = vcombine.high %v2180, %v2180
  %v2189 = vcombine.high %v2187, %v2187
  %v2190 = vcombine.high %v46, %v46
  %v2192 = vunpack.c.l.s4 1983009808
  %v2193 = vunpack.c.0.s8 %v2192
  %v2194 = vlaneseq
  %v2195 = vshrl.u32 %v2194, 7
  %v2196 = vsub.s32 %v2193, %v2195
  %v2197 = vrot.slane %v46, %v2196
  %v2199 = vunpack.c.l.s4 1983009808
  %v2200 = vunpack.c.0.s8 %v2199
  %v2201 = vlaneseq
  %v2202 = vshrl.u32 %v2201, 7
  %v2203 = vsub.s32 %v2200, %v2202
  %v2204 = vrot.slane %v2190, %v2203
  %v2205 = vcombine.high %v2197, %v2197
  %v2206 = vcombine.high %v2204, %v2204
  %v2207 = vcombine.high %v47, %v47
  %v2209 = vunpack.c.l.s4 1983009808
  %v2210 = vunpack.c.0.s8 %v2209
  %v2211 = vlaneseq
  %v2212 = vshrl.u32 %v2211, 7
  %v2213 = vsub.s32 %v2210, %v2212
  %v2214 = vrot.slane %v47, %v2213
  %v2216 = vunpack.c.l.s4 1983009808
  %v2217 = vunpack.c.0.s8 %v2216
  %v2218 = vlaneseq
  %v2219 = vshrl.u32 %v2218, 7
  %v2220 = vsub.s32 %v2217, %v2219
  %v2221 = vrot.slane %v2207, %v2220
  %v2222 = vcombine.high %v2214, %v2214
  %v2223 = vcombine.high %v2221, %v2221
  %v2224 = vcombine.high %v48, %v48
  %v2226 = vunpack.c.l.s4 1983009808
  %v2227 = vunpack.c.0.s8 %v2226
  %v2228 = vlaneseq
  %v2229 = vshrl.u32 %v2228, 7
  %v2230 = vsub.s32 %v2227, %v2229
  %v2231 = vrot.slane %v48, %v2230
  %v2233 = vunpack.c.l.s4 1983009808
  %v2234 = vunpack.c.0.s8 %v2233
  %v2235 = vlaneseq
  %v2236 = vshrl.u32 %v2235, 7
  %v2237 = vsub.s32 %v2234, %v2236
  %v2238 = vrot.slane %v2224, %v2237
  %v2239 = vcombine.high %v2231, %v2231
  %v2240 = vcombine.high %v2238, %v2238
  %v2241 = vcombine.high %v49, %v49
  %v2243 = vunpack.c.l.s4 1983009808
  %v2244 = vunpack.c.0.s8 %v2243
  %v2245 = vlaneseq
  %v2246 = vshrl.u32 %v2245, 7
  %v2247 = vsub.s32 %v2244, %v2246
  %v2248 = vrot.slane %v49, %v2247
  %v2250 = vunpack.c.l.s4 1983009808
  %v2251 = vunpack.c.0.s8 %v2250
  %v2252 = vlaneseq
  %v2253 = vshrl.u32 %v2252, 7
  %v2254 = vsub.s32 %v2251, %v2253
  %v2255 = vrot.slane %v2241, %v2254
  %v2256 = vcombine.high %v2248, %v2248
  %v2257 = vcombine.high %v2255, %v2255
  %v2258 = vcombine.high %v50, %v50
  %v2260 = vunpack.c.l.s4 1983009808
  %v2261 = vunpack.c.0.s8 %v2260
  %v2262 = vlaneseq
  %v2263 = vshrl.u32 %v2262, 7
  %v2264 = vsub.s32 %v2261, %v2263
  %v2265 = vrot.slane %v50, %v2264
  %v2267 = vunpack.c.l.s4 1983009808
  %v2268 = vunpack.c.0.s8 %v2267
  %v2269 = vlaneseq
  %v2270 = vshrl.u32 %v2269, 7
  %v2271 = vsub.s32 %v2268, %v2270
  %v2272 = vrot.slane %v2258, %v2271
  %v2273 = vcombine.high %v2265, %v2265
  %v2274 = vcombine.high %v2272, %v2272
  %v2275 = vcombine.high %v51, %v51
  %v2277 = vunpack.c.l.s4 1983009808
  %v2278 = vunpack.c.0.s8 %v2277
  %v2279 = vlaneseq
  %v2280 = vshrl.u32 %v2279, 7
  %v2281 = vsub.s32 %v2278, %v2280
  %v2282 = vrot.slane %v51, %v2281
  %v2284 = vunpack.c.l.s4 1983009808
  %v2285 = vunpack.c.0.s8 %v2284
  %v2286 = vlaneseq
  %v2287 = vshrl.u32 %v2286, 7
  %v2288 = vsub.s32 %v2285, %v2287
  %v2289 = vrot.slane %v2275, %v2288
  %v2290 = vcombine.high %v2282, %v2282
  %v2291 = vcombine.high %v2289, %v2289
  %v2292 = vcombine.high %v52, %v52
  %v2294 = vunpack.c.l.s4 1983009808
  %v2295 = vunpack.c.0.s8 %v2294
  %v2296 = vlaneseq
  %v2297 = vshrl.u32 %v2296, 7
  %v2298 = vsub.s32 %v2295, %v2297
  %v2299 = vrot.slane %v52, %v2298
  %v2301 = vunpack.c.l.s4 1983009808
  %v2302 = vunpack.c.0.s8 %v2301
  %v2303 = vlaneseq
  %v2304 = vshrl.u32 %v2303, 7
  %v2305 = vsub.s32 %v2302, %v2304
  %v2306 = vrot.slane %v2292, %v2305
  %v2307 = vcombine.high %v2299, %v2299
  %v2308 = vcombine.high %v2306, %v2306
  %v2309 = vcombine.high %v53, %v53
  %v2311 = vunpack.c.l.s4 1983009808
  %v2312 = vunpack.c.0.s8 %v2311
  %v2313 = vlaneseq
  %v2314 = vshrl.u32 %v2313, 7
  %v2315 = vsub.s32 %v2312, %v2314
  %v2316 = vrot.slane %v53, %v2315
  %v2318 = vunpack.c.l.s4 1983009808
  %v2319 = vunpack.c.0.s8 %v2318
  %v2320 = vlaneseq
  %v2321 = vshrl.u32 %v2320, 7
  %v2322 = vsub.s32 %v2319, %v2321
  %v2323 = vrot.slane %v2309, %v2322
  %v2324 = vcombine.high %v2316, %v2316
  %v2325 = vcombine.high %v2323, %v2323
  %v2326 = vcombine.high %v54, %v54
  %v2328 = vunpack.c.l.s4 1983009808
  %v2329 = vunpack.c.0.s8 %v2328
  %v2330 = vlaneseq
  %v2331 = vshrl.u32 %v2330, 7
  %v2332 = vsub.s32 %v2329, %v2331
  %v2333 = vrot.slane %v54, %v2332
  %v2335 = vunpack.c.l.s4 1983009808
  %v2336 = vunpack.c.0.s8 %v2335
  %v2337 = vlaneseq
  %v2338 = vshrl.u32 %v2337, 7
  %v2339 = vsub.s32 %v2336, %v2338
  %v2340 = vrot.slane %v2326, %v2339
  %v2341 = vcombine.high %v2333, %v2333
  %v2342 = vcombine.high %v2340, %v2340
  %v2343 = vcombine.high %v55, %v55
  %v2345 = vunpack.c.l.s4 1983009808
  %v2346 = vunpack.c.0.s8 %v2345
  %v2347 = vlaneseq
  %v2348 = vshrl.u32 %v2347, 7
  %v2349 = vsub.s32 %v2346, %v2348
  %v2350 = vrot.slane %v55, %v2349
  %v2352 = vunpack.c.l.s4 1983009808
  %v2353 = vunpack.c.0.s8 %v2352
  %v2354 = vlaneseq
  %v2355 = vshrl.u32 %v2354, 7
  %v2356 = vsub.s32 %v2353, %v2355
  %v2357 = vrot.slane %v2343, %v2356
  %v2358 = vcombine.high %v2350, %v2350
  %v2359 = vcombine.high %v2357, %v2357
  %v2360 = vcombine.high %v56, %v56
  %v2362 = vunpack.c.l.s4 1983009808
  %v2363 = vunpack.c.0.s8 %v2362
  %v2364 = vlaneseq
  %v2365 = vshrl.u32 %v2364, 7
  %v2366 = vsub.s32 %v2363, %v2365
  %v2367 = vrot.slane %v56, %v2366
  %v2369 = vunpack.c.l.s4 1983009808
  %v2370 = vunpack.c.0.s8 %v2369
  %v2371 = vlaneseq
  %v2372 = vshrl.u32 %v2371, 7
  %v2373 = vsub.s32 %v2370, %v2372
  %v2374 = vrot.slane %v2360, %v2373
  %v2375 = vcombine.high %v2367, %v2367
  %v2376 = vcombine.high %v2374, %v2374
  %v2377 = vcombine.high %v57, %v57
  %v2379 = vunpack.c.l.s4 1983009808
  %v2380 = vunpack.c.0.s8 %v2379
  %v2381 = vlaneseq
  %v2382 = vshrl.u32 %v2381, 7
  %v2383 = vsub.s32 %v2380, %v2382
  %v2384 = vrot.slane %v57, %v2383
  %v2386 = vunpack.c.l.s4 1983009808
  %v2387 = vunpack.c.0.s8 %v2386
  %v2388 = vlaneseq
  %v2389 = vshrl.u32 %v2388, 7
  %v2390 = vsub.s32 %v2387, %v2389
  %v2391 = vrot.slane %v2377, %v2390
  %v2392 = vcombine.high %v2384, %v2384
  %v2393 = vcombine.high %v2391, %v2391
  %2458 = vmatprep.subr.mxu0 %v59
  %2459 = vmatpush1.msra.mxu0 %v58
  %2460 = vmatprep.subr.mxu0 %v61
  %2461 = vmatpush1.msra.mxu0 %v60
  %2462 = vmatprep.subr.mxu0 %v63
  %2463 = vmatpush1.msra.mxu0 %v62
  %2464 = vmatprep.subr.mxu0 %v65
  %2465 = vmatpush1.msra.mxu0 %v64
  %2466 = vmatprep.subr.mxu0 %v67
  %2467 = vmatpush1.msra.mxu0 %v66
  %2468 = vmatprep.subr.mxu0 %v69
  %2469 = vmatpush1.msra.mxu0 %v68
  %2470 = vmatprep.subr.mxu0 %v71
  %2471 = vmatpush1.msra.mxu0 %v70
  %2472 = vmatprep.subr.mxu0 %v73
  %2473 = vmatpush1.msra.mxu0 %v72
  %2474 = vmatprep.subr.mxu0 %v75
  %2475 = vmatpush1.msra.mxu0 %v74
  %2476 = vmatprep.subr.mxu0 %v77
  %2477 = vmatpush1.msra.mxu0 %v76
  %2478 = vmatprep.subr.mxu0 %v79
  %2479 = vmatpush1.msra.mxu0 %v78
  %2480 = vmatprep.subr.mxu0 %v81
  %2481 = vmatpush1.msra.mxu0 %v80
  %2482 = vmatprep.subr.mxu0 %v83
  %2483 = vmatpush1.msra.mxu0 %v82
  %2484 = vmatprep.subr.mxu0 %v85
  %2485 = vmatpush1.msra.mxu0 %v84
  %2486 = vmatprep.subr.mxu0 %v87
  %2487 = vmatpush1.msra.mxu0 %v86
  %2488 = vmatprep.subr.mxu0 %v89
  %2489 = vmatpush1.msra.mxu0 %v88
  %2490 = vmatprep.subr.mxu0 %v91
  %2491 = vmatpush1.msra.mxu0 %v90
  %2492 = vmatprep.subr.mxu0 %v93
  %2493 = vmatpush1.msra.mxu0 %v92
  %2494 = vmatprep.subr.mxu0 %v95
  %2495 = vmatpush1.msra.mxu0 %v94
  %2496 = vmatprep.subr.mxu0 %v97
  %2497 = vmatpush1.msra.mxu0 %v96
  %2498 = vmatprep.subr.mxu0 %v99
  %2499 = vmatpush1.msra.mxu0 %v98
  %2500 = vmatprep.subr.mxu0 %v101
  %2501 = vmatpush1.msra.mxu0 %v100
  %2502 = vmatprep.subr.mxu0 %v103
  %2503 = vmatpush1.msra.mxu0 %v102
  %2504 = vmatprep.subr.mxu0 %v105
  %2505 = vmatpush1.msra.mxu0 %v104
  %2506 = vmatprep.subr.mxu0 %v107
  %2507 = vmatpush1.msra.mxu0 %v106
  %2508 = vmatprep.subr.mxu0 %v109
  %2509 = vmatpush1.msra.mxu0 %v108
  %2510 = vmatprep.subr.mxu0 %v111
  %2511 = vmatpush1.msra.mxu0 %v110
  %2512 = vmatprep.subr.mxu0 %v113
  %2513 = vmatpush1.msra.mxu0 %v112
  %2514 = vmatprep.subr.mxu0 %v115
  %2515 = vmatpush1.msra.mxu0 %v114
  %2516 = vmatprep.subr.mxu0 %v117
  %2517 = vmatpush1.msra.mxu0 %v116
  %2518 = vmatprep.subr.mxu0 %v119
  %2519 = vmatpush1.msra.mxu0 %v118
  %2520 = vmatprep.subr.mxu0 %v121
  %2521 = vmatpush1.msra.mxu0 %v120
  %2522 = vmatprep.mubr.f32.mxu0 %v2137
  %2523 = vmatmul.mubr.f32.gmra.mrb[0].mxu0 %v2129
  %v2524 = vpop.f32.mrb[0].mxu0
  %v2525 = vadd.f32 0.0, %v2524
  %v2526 = vpop.f32.mrb[0].mxu0
  %v2527 = vadd.f32 0.0, %v2526
  %2528 = vdwg.mxu0
  %2529 = vmatprep.subr.mxu0 %v123
  %2530 = vmatpush1.msra.mxu0 %v122
  %2531 = vmatprep.subr.mxu0 %v125
  %2532 = vmatpush1.msra.mxu0 %v124
  %2533 = vmatprep.subr.mxu0 %v127
  %2534 = vmatpush1.msra.mxu0 %v126
  %2535 = vmatprep.subr.mxu0 %v129
  %2536 = vmatpush1.msra.mxu0 %v128
  %2537 = vmatprep.subr.mxu0 %v131
  %2538 = vmatpush1.msra.mxu0 %v130
  %2539 = vmatprep.subr.mxu0 %v133
  %2540 = vmatpush1.msra.mxu0 %v132
  %2541 = vmatprep.subr.mxu0 %v135
  %2542 = vmatpush1.msra.mxu0 %v134
  %2543 = vmatprep.subr.mxu0 %v137
  %2544 = vmatpush1.msra.mxu0 %v136
  %2545 = vmatprep.subr.mxu0 %v139
  %2546 = vmatpush1.msra.mxu0 %v138
  %2547 = vmatprep.subr.mxu0 %v141
  %2548 = vmatpush1.msra.mxu0 %v140
  %2549 = vmatprep.subr.mxu0 %v143
  %2550 = vmatpush1.msra.mxu0 %v142
  %2551 = vmatprep.subr.mxu0 %v145
  %2552 = vmatpush1.msra.mxu0 %v144
  %2553 = vmatprep.subr.mxu0 %v147
  %2554 = vmatpush1.msra.mxu0 %v146
  %2555 = vmatprep.subr.mxu0 %v149
  %2556 = vmatpush1.msra.mxu0 %v148
  %2557 = vmatprep.subr.mxu0 %v151
  %2558 = vmatpush1.msra.mxu0 %v150
  %2559 = vmatprep.subr.mxu0 %v153
  %2560 = vmatpush1.msra.mxu0 %v152
  %2561 = vmatprep.subr.mxu0 %v155
  %2562 = vmatpush1.msra.mxu0 %v154
  %2563 = vmatprep.subr.mxu0 %v157
  %2564 = vmatpush1.msra.mxu0 %v156
  %2565 = vmatprep.subr.mxu0 %v159
  %2566 = vmatpush1.msra.mxu0 %v158
  %2567 = vmatprep.subr.mxu0 %v161
  %2568 = vmatpush1.msra.mxu0 %v160
  %2569 = vmatprep.subr.mxu0 %v163
  %2570 = vmatpush1.msra.mxu0 %v162
  %2571 = vmatprep.subr.mxu0 %v165
  %2572 = vmatpush1.msra.mxu0 %v164
  %2573 = vmatprep.subr.mxu0 %v167
  %2574 = vmatpush1.msra.mxu0 %v166
  %2575 = vmatprep.subr.mxu0 %v169
  %2576 = vmatpush1.msra.mxu0 %v168
  %2577 = vmatprep.subr.mxu0 %v171
  %2578 = vmatpush1.msra.mxu0 %v170
  %2579 = vmatprep.subr.mxu0 %v173
  %2580 = vmatpush1.msra.mxu0 %v172
  %2581 = vmatprep.subr.mxu0 %v175
  %2582 = vmatpush1.msra.mxu0 %v174
  %2583 = vmatprep.subr.mxu0 %v177
  %2584 = vmatpush1.msra.mxu0 %v176
  %2585 = vmatprep.subr.mxu0 %v179
  %2586 = vmatpush1.msra.mxu0 %v178
  %2587 = vmatprep.subr.mxu0 %v181
  %2588 = vmatpush1.msra.mxu0 %v180
  %2589 = vmatprep.subr.mxu0 %v183
  %2590 = vmatpush1.msra.mxu0 %v182
  %2591 = vmatprep.subr.mxu0 %v185
  %2592 = vmatpush1.msra.mxu0 %v184
  %2593 = vmatprep.mubr.f32.mxu0 %v2138
  %2594 = vmatmul.mubr.f32.gmra.mrb[0].mxu0 %v2136
  %v2595 = vpop.f32.mrb[0].mxu0
  %v2596 = vadd.f32 %v2525, %v2595
  %v2597 = vpop.f32.mrb[0].mxu0
  %v2598 = vadd.f32 %v2527, %v2597
  %2599 = vdwg.mxu0
  %2600 = vmatprep.subr.mxu0 %v187
  %2601 = vmatpush1.msra.mxu0 %v186
  %2602 = vmatprep.subr.mxu0 %v189
  %2603 = vmatpush1.msra.mxu0 %v188
  %2604 = vmatprep.subr.mxu0 %v191
  %2605 = vmatpush1.msra.mxu0 %v190
  %2606 = vmatprep.subr.mxu0 %v193
  %2607 = vmatpush1.msra.mxu0 %v192
  %2608 = vmatprep.subr.mxu0 %v195
  %2609 = vmatpush1.msra.mxu0 %v194
  %2610 = vmatprep.subr.mxu0 %v197
  %2611 = vmatpush1.msra.mxu0 %v196
  %2612 = vmatprep.subr.mxu0 %v199
  %2613 = vmatpush1.msra.mxu0 %v198
  %2614 = vmatprep.subr.mxu0 %v201
  %2615 = vmatpush1.msra.mxu0 %v200
  %2616 = vmatprep.subr.mxu0 %v203
  %2617 = vmatpush1.msra.mxu0 %v202
  %2618 = vmatprep.subr.mxu0 %v205
  %2619 = vmatpush1.msra.mxu0 %v204
  %2620 = vmatprep.subr.mxu0 %v207
  %2621 = vmatpush1.msra.mxu0 %v206
  %2622 = vmatprep.subr.mxu0 %v209
  %2623 = vmatpush1.msra.mxu0 %v208
  %2624 = vmatprep.subr.mxu0 %v211
  %2625 = vmatpush1.msra.mxu0 %v210
  %2626 = vmatprep.subr.mxu0 %v213
  %2627 = vmatpush1.msra.mxu0 %v212
  %2628 = vmatprep.subr.mxu0 %v215
  %2629 = vmatpush1.msra.mxu0 %v214
  %2630 = vmatprep.subr.mxu0 %v217
  %2631 = vmatpush1.msra.mxu0 %v216
  %2632 = vmatprep.subr.mxu0 %v219
  %2633 = vmatpush1.msra.mxu0 %v218
  %2634 = vmatprep.subr.mxu0 %v221
  %2635 = vmatpush1.msra.mxu0 %v220
  %2636 = vmatprep.subr.mxu0 %v223
  %2637 = vmatpush1.msra.mxu0 %v222
  %2638 = vmatprep.subr.mxu0 %v225
  %2639 = vmatpush1.msra.mxu0 %v224
  %2640 = vmatprep.subr.mxu0 %v227
  %2641 = vmatpush1.msra.mxu0 %v226
  %2642 = vmatprep.subr.mxu0 %v229
  %2643 = vmatpush1.msra.mxu0 %v228
  %2644 = vmatprep.subr.mxu0 %v231
  %2645 = vmatpush1.msra.mxu0 %v230
  %2646 = vmatprep.subr.mxu0 %v233
  %2647 = vmatpush1.msra.mxu0 %v232
  %2648 = vmatprep.subr.mxu0 %v235
  %2649 = vmatpush1.msra.mxu0 %v234
  %2650 = vmatprep.subr.mxu0 %v237
  %2651 = vmatpush1.msra.mxu0 %v236
  %2652 = vmatprep.subr.mxu0 %v239
  %2653 = vmatpush1.msra.mxu0 %v238
  %2654 = vmatprep.subr.mxu0 %v241
  %2655 = vmatpush1.msra.mxu0 %v240
  %2656 = vmatprep.subr.mxu0 %v243
  %2657 = vmatpush1.msra.mxu0 %v242
  %2658 = vmatprep.subr.mxu0 %v245
  %2659 = vmatpush1.msra.mxu0 %v244
  %2660 = vmatprep.subr.mxu0 %v247
  %2661 = vmatpush1.msra.mxu0 %v246
  %2662 = vmatprep.subr.mxu0 %v249
  %2663 = vmatpush1.msra.mxu0 %v248
  %2664 = vmatprep.mubr.f32.mxu0 %v2154
  %2665 = vmatmul.mubr.f32.gmra.mrb[0].mxu0 %v2146
  %v2666 = vpop.f32.mrb[0].mxu0
  %v2667 = vadd.f32 %v2596, %v2666
  %v2668 = vpop.f32.mrb[0].mxu0
  %v2669 = vadd.f32 %v2598, %v2668
  %2670 = vdwg.mxu0
  %2671 = vmatprep.subr.mxu0 %v251
  %2672 = vmatpush1.msra.mxu0 %v250
  %2673 = vmatprep.subr.mxu0 %v253
  %2674 = vmatpush1.msra.mxu0 %v252
  %2675 = vmatprep.subr.mxu0 %v255
  %2676 = vmatpush1.msra.mxu0 %v254
  %2677 = vmatprep.subr.mxu0 %v257
  %2678 = vmatpush1.msra.mxu0 %v256
  %2679 = vmatprep.subr.mxu0 %v259
  %2680 = vmatpush1.msra.mxu0 %v258
  %2681 = vmatprep.subr.mxu0 %v261
  %2682 = vmatpush1.msra.mxu0 %v260
  %2683 = vmatprep.subr.mxu0 %v263
  %2684 = vmatpush1.msra.mxu0 %v262
  %2685 = vmatprep.subr.mxu0 %v265
  %2686 = vmatpush1.msra.mxu0 %v264
  %2687 = vmatprep.subr.mxu0 %v267
  %2688 = vmatpush1.msra.mxu0 %v266
  %2689 = vmatprep.subr.mxu0 %v269
  %2690 = vmatpush1.msra.mxu0 %v268
  %2691 = vmatprep.subr.mxu0 %v271
  %2692 = vmatpush1.msra.mxu0 %v270
  %2693 = vmatprep.subr.mxu0 %v273
  %2694 = vmatpush1.msra.mxu0 %v272
  %2695 = vmatprep.subr.mxu0 %v275
  %2696 = vmatpush1.msra.mxu0 %v274
  %2697 = vmatprep.subr.mxu0 %v277
  %2698 = vmatpush1.msra.mxu0 %v276
  %2699 = vmatprep.subr.mxu0 %v279
  %2700 = vmatpush1.msra.mxu0 %v278
  %2701 = vmatprep.subr.mxu0 %v281
  %2702 = vmatpush1.msra.mxu0 %v280
  %2703 = vmatprep.subr.mxu0 %v283
  %2704 = vmatpush1.msra.mxu0 %v282
  %2705 = vmatprep.subr.mxu0 %v285
  %2706 = vmatpush1.msra.mxu0 %v284
  %2707 = vmatprep.subr.mxu0 %v287
  %2708 = vmatpush1.msra.mxu0 %v286
  %2709 = vmatprep.subr.mxu0 %v289
  %2710 = vmatpush1.msra.mxu0 %v288
  %2711 = vmatprep.subr.mxu0 %v291
  %2712 = vmatpush1.msra.mxu0 %v290
  %2713 = vmatprep.subr.mxu0 %v293
  %2714 = vmatpush1.msra.mxu0 %v292
  %2715 = vmatprep.subr.mxu0 %v295
  %2716 = vmatpush1.msra.mxu0 %v294
  %2717 = vmatprep.subr.mxu0 %v297
  %2718 = vmatpush1.msra.mxu0 %v296
  %2719 = vmatprep.subr.mxu0 %v299
  %2720 = vmatpush1.msra.mxu0 %v298
  %2721 = vmatprep.subr.mxu0 %v301
  %2722 = vmatpush1.msra.mxu0 %v300
  %2723 = vmatprep.subr.mxu0 %v303
  %2724 = vmatpush1.msra.mxu0 %v302
  %2725 = vmatprep.subr.mxu0 %v305
  %2726 = vmatpush1.msra.mxu0 %v304
  %2727 = vmatprep.subr.mxu0 %v307
  %2728 = vmatpush1.msra.mxu0 %v306
  %2729 = vmatprep.subr.mxu0 %v309
  %2730 = vmatpush1.msra.mxu0 %v308
  %2731 = vmatprep.subr.mxu0 %v311
  %2732 = vmatpush1.msra.mxu0 %v310
  %2733 = vmatprep.subr.mxu0 %v313
  %2734 = vmatpush1.msra.mxu0 %v312
  %2735 = vmatprep.mubr.f32.mxu0 %v2155
  %2736 = vmatmul.mubr.f32.gmra.mrb[0].mxu0 %v2153
  %v2737 = vpop.f32.mrb[0].mxu0
  %v2738 = vadd.f32 %v2667, %v2737
  %v2739 = vpop.f32.mrb[0].mxu0
  %v2740 = vadd.f32 %v2669, %v2739
  %2741 = vdwg.mxu0
  %2742 = vmatprep.subr.mxu0 %v315
  %2743 = vmatpush1.msra.mxu0 %v314
  %2744 = vmatprep.subr.mxu0 %v317
  %2745 = vmatpush1.msra.mxu0 %v316
  %2746 = vmatprep.subr.mxu0 %v319
  %2747 = vmatpush1.msra.mxu0 %v318
  %2748 = vmatprep.subr.mxu0 %v321
  %2749 = vmatpush1.msra.mxu0 %v320
  %2750 = vmatprep.subr.mxu0 %v323
  %2751 = vmatpush1.msra.mxu0 %v322
  %2752 = vmatprep.subr.mxu0 %v325
  %2753 = vmatpush1.msra.mxu0 %v324
  %2754 = vmatprep.subr.mxu0 %v327
  %2755 = vmatpush1.msra.mxu0 %v326
  %2756 = vmatprep.subr.mxu0 %v329
  %2757 = vmatpush1.msra.mxu0 %v328
  %2758 = vmatprep.subr.mxu0 %v331
  %2759 = vmatpush1.msra.mxu0 %v330
  %2760 = vmatprep.subr.mxu0 %v333
  %2761 = vmatpush1.msra.mxu0 %v332
  %2762 = vmatprep.subr.mxu0 %v335
  %2763 = vmatpush1.msra.mxu0 %v334
  %2764 = vmatprep.subr.mxu0 %v337
  %2765 = vmatpush1.msra.mxu0 %v336
  %2766 = vmatprep.subr.mxu0 %v339
  %2767 = vmatpush1.msra.mxu0 %v338
  %2768 = vmatprep.subr.mxu0 %v341
  %2769 = vmatpush1.msra.mxu0 %v340
  %2770 = vmatprep.subr.mxu0 %v343
  %2771 = vmatpush1.msra.mxu0 %v342
  %2772 = vmatprep.subr.mxu0 %v345
  %2773 = vmatpush1.msra.mxu0 %v344
  %2774 = vmatprep.subr.mxu0 %v347
  %2775 = vmatpush1.msra.mxu0 %v346
  %2776 = vmatprep.subr.mxu0 %v349
  %2777 = vmatpush1.msra.mxu0 %v348
  %2778 = vmatprep.subr.mxu0 %v351
  %2779 = vmatpush1.msra.mxu0 %v350
  %2780 = vmatprep.subr.mxu0 %v353
  %2781 = vmatpush1.msra.mxu0 %v352
  %2782 = vmatprep.subr.mxu0 %v355
  %2783 = vmatpush1.msra.mxu0 %v354
  %2784 = vmatprep.subr.mxu0 %v357
  %2785 = vmatpush1.msra.mxu0 %v356
  %2786 = vmatprep.subr.mxu0 %v359
  %2787 = vmatpush1.msra.mxu0 %v358
  %2788 = vmatprep.subr.mxu0 %v361
  %2789 = vmatpush1.msra.mxu0 %v360
  %2790 = vmatprep.subr.mxu0 %v363
  %2791 = vmatpush1.msra.mxu0 %v362
  %2792 = vmatprep.subr.mxu0 %v365
  %2793 = vmatpush1.msra.mxu0 %v364
  %2794 = vmatprep.subr.mxu0 %v367
  %2795 = vmatpush1.msra.mxu0 %v366
  %2796 = vmatprep.subr.mxu0 %v369
  %2797 = vmatpush1.msra.mxu0 %v368
  %2798 = vmatprep.subr.mxu0 %v371
  %2799 = vmatpush1.msra.mxu0 %v370
  %2800 = vmatprep.subr.mxu0 %v373
  %2801 = vmatpush1.msra.mxu0 %v372
  %2802 = vmatprep.subr.mxu0 %v375
  %2803 = vmatpush1.msra.mxu0 %v374
  %2804 = vmatprep.subr.mxu0 %v377
  %2805 = vmatpush1.msra.mxu0 %v376
  %2806 = vmatprep.mubr.f32.mxu0 %v2171
  %2807 = vmatmul.mubr.f32.gmra.mrb[0].mxu0 %v2163
  %v2808 = vpop.f32.mrb[0].mxu0
  %v2809 = vadd.f32 %v2738, %v2808
  %v2810 = vpop.f32.mrb[0].mxu0
  %v2811 = vadd.f32 %v2740, %v2810
  %2812 = vdwg.mxu0
  %2813 = vmatprep.subr.mxu0 %v379
  %2814 = vmatpush1.msra.mxu0 %v378
  %2815 = vmatprep.subr.mxu0 %v381
  %2816 = vmatpush1.msra.mxu0 %v380
  %2817 = vmatprep.subr.mxu0 %v383
  %2818 = vmatpush1.msra.mxu0 %v382
  %2819 = vmatprep.subr.mxu0 %v385
  %2820 = vmatpush1.msra.mxu0 %v384
  %2821 = vmatprep.subr.mxu0 %v387
  %2822 = vmatpush1.msra.mxu0 %v386
  %2823 = vmatprep.subr.mxu0 %v389
  %2824 = vmatpush1.msra.mxu0 %v388
  %2825 = vmatprep.subr.mxu0 %v391
  %2826 = vmatpush1.msra.mxu0 %v390
  %2827 = vmatprep.subr.mxu0 %v393
  %2828 = vmatpush1.msra.mxu0 %v392
  %2829 = vmatprep.subr.mxu0 %v395
  %2830 = vmatpush1.msra.mxu0 %v394
  %2831 = vmatprep.subr.mxu0 %v397
  %2832 = vmatpush1.msra.mxu0 %v396
  %2833 = vmatprep.subr.mxu0 %v399
  %2834 = vmatpush1.msra.mxu0 %v398
  %2835 = vmatprep.subr.mxu0 %v401
  %2836 = vmatpush1.msra.mxu0 %v400
  %2837 = vmatprep.subr.mxu0 %v403
  %2838 = vmatpush1.msra.mxu0 %v402
  %2839 = vmatprep.subr.mxu0 %v405
  %2840 = vmatpush1.msra.mxu0 %v404
  %2841 = vmatprep.subr.mxu0 %v407
  %2842 = vmatpush1.msra.mxu0 %v406
  %2843 = vmatprep.subr.mxu0 %v409
  %2844 = vmatpush1.msra.mxu0 %v408
  %2845 = vmatprep.subr.mxu0 %v411
  %2846 = vmatpush1.msra.mxu0 %v410
  %2847 = vmatprep.subr.mxu0 %v413
  %2848 = vmatpush1.msra.mxu0 %v412
  %2849 = vmatprep.subr.mxu0 %v415
  %2850 = vmatpush1.msra.mxu0 %v414
  %2851 = vmatprep.subr.mxu0 %v417
  %2852 = vmatpush1.msra.mxu0 %v416
  %2853 = vmatprep.subr.mxu0 %v419
  %2854 = vmatpush1.msra.mxu0 %v418
  %2855 = vmatprep.subr.mxu0 %v421
  %2856 = vmatpush1.msra.mxu0 %v420
  %2857 = vmatprep.subr.mxu0 %v423
  %2858 = vmatpush1.msra.mxu0 %v422
  %2859 = vmatprep.subr.mxu0 %v425
  %2860 = vmatpush1.msra.mxu0 %v424
  %2861 = vmatprep.subr.mxu0 %v427
  %2862 = vmatpush1.msra.mxu0 %v426
  %2863 = vmatprep.subr.mxu0 %v429
  %2864 = vmatpush1.msra.mxu0 %v428
  %2865 = vmatprep.subr.mxu0 %v431
  %2866 = vmatpush1.msra.mxu0 %v430
  %2867 = vmatprep.subr.mxu0 %v433
  %2868 = vmatpush1.msra.mxu0 %v432
  %2869 = vmatprep.subr.mxu0 %v435
  %2870 = vmatpush1.msra.mxu0 %v434
  %2871 = vmatprep.subr.mxu0 %v437
  %2872 = vmatpush1.msra.mxu0 %v436
  %2873 = vmatprep.subr.mxu0 %v439
  %2874 = vmatpush1.msra.mxu0 %v438
  %2875 = vmatprep.subr.mxu0 %v441
  %2876 = vmatpush1.msra.mxu0 %v440
  %2877 = vmatprep.mubr.f32.mxu0 %v2172
  %2878 = vmatmul.mubr.f32.gmra.mrb[0].mxu0 %v2170
  %v2879 = vpop.f32.mrb[0].mxu0
  %v2880 = vadd.f32 %v2809, %v2879
  %v2881 = vpop.f32.mrb[0].mxu0
  %v2882 = vadd.f32 %v2811, %v2881
  %2883 = vdwg.mxu0
  %2884 = vmatprep.subr.mxu0 %v443
  %2885 = vmatpush1.msra.mxu0 %v442
  %2886 = vmatprep.subr.mxu0 %v445
  %2887 = vmatpush1.msra.mxu0 %v444
  %2888 = vmatprep.subr.mxu0 %v447
  %2889 = vmatpush1.msra.mxu0 %v446
  %2890 = vmatprep.subr.mxu0 %v449
  %2891 = vmatpush1.msra.mxu0 %v448
  %2892 = vmatprep.subr.mxu0 %v451
  %2893 = vmatpush1.msra.mxu0 %v450
  %2894 = vmatprep.subr.mxu0 %v453
  %2895 = vmatpush1.msra.mxu0 %v452
  %2896 = vmatprep.subr.mxu0 %v455
  %2897 = vmatpush1.msra.mxu0 %v454
  %2898 = vmatprep.subr.mxu0 %v457
  %2899 = vmatpush1.msra.mxu0 %v456
  %2900 = vmatprep.subr.mxu0 %v459
  %2901 = vmatpush1.msra.mxu0 %v458
  %2902 = vmatprep.subr.mxu0 %v461
  %2903 = vmatpush1.msra.mxu0 %v460
  %2904 = vmatprep.subr.mxu0 %v463
  %2905 = vmatpush1.msra.mxu0 %v462
  %2906 = vmatprep.subr.mxu0 %v465
  %2907 = vmatpush1.msra.mxu0 %v464
  %2908 = vmatprep.subr.mxu0 %v467
  %2909 = vmatpush1.msra.mxu0 %v466
  %2910 = vmatprep.subr.mxu0 %v469
  %2911 = vmatpush1.msra.mxu0 %v468
  %2912 = vmatprep.subr.mxu0 %v471
  %2913 = vmatpush1.msra.mxu0 %v470
  %2914 = vmatprep.subr.mxu0 %v473
  %2915 = vmatpush1.msra.mxu0 %v472
  %2916 = vmatprep.subr.mxu0 %v475
  %2917 = vmatpush1.msra.mxu0 %v474
  %2918 = vmatprep.subr.mxu0 %v477
  %2919 = vmatpush1.msra.mxu0 %v476
  %2920 = vmatprep.subr.mxu0 %v479
  %2921 = vmatpush1.msra.mxu0 %v478
  %2922 = vmatprep.subr.mxu0 %v481
  %2923 = vmatpush1.msra.mxu0 %v480
  %2924 = vmatprep.subr.mxu0 %v483
  %2925 = vmatpush1.msra.mxu0 %v482
  %2926 = vmatprep.subr.mxu0 %v485
  %2927 = vmatpush1.msra.mxu0 %v484
  %2928 = vmatprep.subr.mxu0 %v487
  %2929 = vmatpush1.msra.mxu0 %v486
  %2930 = vmatprep.subr.mxu0 %v489
  %2931 = vmatpush1.msra.mxu0 %v488
  %2932 = vmatprep.subr.mxu0 %v491
  %2933 = vmatpush1.msra.mxu0 %v490
  %2934 = vmatprep.subr.mxu0 %v493
  %2935 = vmatpush1.msra.mxu0 %v492
  %2936 = vmatprep.subr.mxu0 %v495
  %2937 = vmatpush1.msra.mxu0 %v494
  %2938 = vmatprep.subr.mxu0 %v497
  %2939 = vmatpush1.msra.mxu0 %v496
  %2940 = vmatprep.subr.mxu0 %v499
  %2941 = vmatpush1.msra.mxu0 %v498
  %2942 = vmatprep.subr.mxu0 %v501
  %2943 = vmatpush1.msra.mxu0 %v500
  %2944 = vmatprep.subr.mxu0 %v503
  %2945 = vmatpush1.msra.mxu0 %v502
  %2946 = vmatprep.subr.mxu0 %v505
  %2947 = vmatpush1.msra.mxu0 %v504
  %2948 = vmatprep.mubr.f32.mxu0 %v2188
  %2949 = vmatmul.mubr.f32.gmra.mrb[0].mxu0 %v2180
  %v2950 = vpop.f32.mrb[0].mxu0
  %v2951 = vadd.f32 %v2880, %v2950
  %v2952 = vpop.f32.mrb[0].mxu0
  %v2953 = vadd.f32 %v2882, %v2952
  %2954 = vdwg.mxu0
  %2955 = vmatprep.subr.mxu0 %v507
  %2956 = vmatpush1.msra.mxu0 %v506
  %2957 = vmatprep.subr.mxu0 %v509
  %2958 = vmatpush1.msra.mxu0 %v508
  %2959 = vmatprep.subr.mxu0 %v511
  %2960 = vmatpush1.msra.mxu0 %v510
  %2961 = vmatprep.subr.mxu0 %v513
  %2962 = vmatpush1.msra.mxu0 %v512
  %2963 = vmatprep.subr.mxu0 %v515
  %2964 = vmatpush1.msra.mxu0 %v514
  %2965 = vmatprep.subr.mxu0 %v517
  %2966 = vmatpush1.msra.mxu0 %v516
  %2967 = vmatprep.subr.mxu0 %v519
  %2968 = vmatpush1.msra.mxu0 %v518
  %2969 = vmatprep.subr.mxu0 %v521
  %2970 = vmatpush1.msra.mxu0 %v520
  %2971 = vmatprep.subr.mxu0 %v523
  %2972 = vmatpush1.msra.mxu0 %v522
  %2973 = vmatprep.subr.mxu0 %v525
  %2974 = vmatpush1.msra.mxu0 %v524
  %2975 = vmatprep.subr.mxu0 %v527
  %2976 = vmatpush1.msra.mxu0 %v526
  %2977 = vmatprep.subr.mxu0 %v529
  %2978 = vmatpush1.msra.mxu0 %v528
  %2979 = vmatprep.subr.mxu0 %v531
  %2980 = vmatpush1.msra.mxu0 %v530
  %2981 = vmatprep.subr.mxu0 %v533
  %2982 = vmatpush1.msra.mxu0 %v532
  %2983 = vmatprep.subr.mxu0 %v535
  %2984 = vmatpush1.msra.mxu0 %v534
  %2985 = vmatprep.subr.mxu0 %v537
  %2986 = vmatpush1.msra.mxu0 %v536
  %2987 = vmatprep.subr.mxu0 %v539
  %2988 = vmatpush1.msra.mxu0 %v538
  %2989 = vmatprep.subr.mxu0 %v541
  %2990 = vmatpush1.msra.mxu0 %v540
  %2991 = vmatprep.subr.mxu0 %v543
  %2992 = vmatpush1.msra.mxu0 %v542
  %2993 = vmatprep.subr.mxu0 %v545
  %2994 = vmatpush1.msra.mxu0 %v544
  %2995 = vmatprep.subr.mxu0 %v547
  %2996 = vmatpush1.msra.mxu0 %v546
  %2997 = vmatprep.subr.mxu0 %v549
  %2998 = vmatpush1.msra.mxu0 %v548
  %2999 = vmatprep.subr.mxu0 %v551
  %3000 = vmatpush1.msra.mxu0 %v550
  %3001 = vmatprep.subr.mxu0 %v553
  %3002 = vmatpush1.msra.mxu0 %v552
  %3003 = vmatprep.subr.mxu0 %v555
  %3004 = vmatpush1.msra.mxu0 %v554
  %3005 = vmatprep.subr.mxu0 %v557
  %3006 = vmatpush1.msra.mxu0 %v556
  %3007 = vmatprep.subr.mxu0 %v559
  %3008 = vmatpush1.msra.mxu0 %v558
  %3009 = vmatprep.subr.mxu0 %v561
  %3010 = vmatpush1.msra.mxu0 %v560
  %3011 = vmatprep.subr.mxu0 %v563
  %3012 = vmatpush1.msra.mxu0 %v562
  %3013 = vmatprep.subr.mxu0 %v565
  %3014 = vmatpush1.msra.mxu0 %v564
  %3015 = vmatprep.subr.mxu0 %v567
  %3016 = vmatpush1.msra.mxu0 %v566
  %3017 = vmatprep.subr.mxu0 %v569
  %3018 = vmatpush1.msra.mxu0 %v568
  %3019 = vmatprep.mubr.f32.mxu0 %v2189
  %3020 = vmatmul.mubr.f32.gmra.mrb[0].mxu0 %v2187
  %v3021 = vpop.f32.mrb[0].mxu0
  %v3022 = vadd.f32 %v2951, %v3021
  %v3023 = vpop.f32.mrb[0].mxu0
  %v3024 = vadd.f32 %v2953, %v3023
  %3025 = vdwg.mxu0
  %3026 = vmatprep.subr.mxu0 %v571
  %3027 = vmatpush1.msra.mxu0 %v570
  %3028 = vmatprep.subr.mxu0 %v573
  %3029 = vmatpush1.msra.mxu0 %v572
  %3030 = vmatprep.subr.mxu0 %v575
  %3031 = vmatpush1.msra.mxu0 %v574
  %3032 = vmatprep.subr.mxu0 %v577
  %3033 = vmatpush1.msra.mxu0 %v576
  %3034 = vmatprep.subr.mxu0 %v579
  %3035 = vmatpush1.msra.mxu0 %v578
  %3036 = vmatprep.subr.mxu0 %v581
  %3037 = vmatpush1.msra.mxu0 %v580
  %3038 = vmatprep.subr.mxu0 %v583
  %3039 = vmatpush1.msra.mxu0 %v582
  %3040 = vmatprep.subr.mxu0 %v585
  %3041 = vmatpush1.msra.mxu0 %v584
  %3042 = vmatprep.subr.mxu0 %v587
  %3043 = vmatpush1.msra.mxu0 %v586
  %3044 = vmatprep.subr.mxu0 %v589
  %3045 = vmatpush1.msra.mxu0 %v588
  %3046 = vmatprep.subr.mxu0 %v591
  %3047 = vmatpush1.msra.mxu0 %v590
  %3048 = vmatprep.subr.mxu0 %v593
  %3049 = vmatpush1.msra.mxu0 %v592
  %3050 = vmatprep.subr.mxu0 %v595
  %3051 = vmatpush1.msra.mxu0 %v594
  %3052 = vmatprep.subr.mxu0 %v597
  %3053 = vmatpush1.msra.mxu0 %v596
  %3054 = vmatprep.subr.mxu0 %v599
  %3055 = vmatpush1.msra.mxu0 %v598
  %3056 = vmatprep.subr.mxu0 %v601
  %3057 = vmatpush1.msra.mxu0 %v600
  %3058 = vmatprep.subr.mxu0 %v603
  %3059 = vmatpush1.msra.mxu0 %v602
  %3060 = vmatprep.subr.mxu0 %v605
  %3061 = vmatpush1.msra.mxu0 %v604
  %3062 = vmatprep.subr.mxu0 %v607
  %3063 = vmatpush1.msra.mxu0 %v606
  %3064 = vmatprep.subr.mxu0 %v609
  %3065 = vmatpush1.msra.mxu0 %v608
  %3066 = vmatprep.subr.mxu0 %v611
  %3067 = vmatpush1.msra.mxu0 %v610
  %3068 = vmatprep.subr.mxu0 %v613
  %3069 = vmatpush1.msra.mxu0 %v612
  %3070 = vmatprep.subr.mxu0 %v615
  %3071 = vmatpush1.msra.mxu0 %v614
  %3072 = vmatprep.subr.mxu0 %v617
  %3073 = vmatpush1.msra.mxu0 %v616
  %3074 = vmatprep.subr.mxu0 %v619
  %3075 = vmatpush1.msra.mxu0 %v618
  %3076 = vmatprep.subr.mxu0 %v621
  %3077 = vmatpush1.msra.mxu0 %v620
  %3078 = vmatprep.subr.mxu0 %v623
  %3079 = vmatpush1.msra.mxu0 %v622
  %3080 = vmatprep.subr.mxu0 %v625
  %3081 = vmatpush1.msra.mxu0 %v624
  %3082 = vmatprep.subr.mxu0 %v627
  %3083 = vmatpush1.msra.mxu0 %v626
  %3084 = vmatprep.subr.mxu0 %v629
  %3085 = vmatpush1.msra.mxu0 %v628
  %3086 = vmatprep.subr.mxu0 %v631
  %3087 = vmatpush1.msra.mxu0 %v630
  %3088 = vmatprep.subr.mxu0 %v633
  %3089 = vmatpush1.msra.mxu0 %v632
  %3090 = vmatprep.mubr.f32.mxu0 %v2205
  %3091 = vmatmul.mubr.f32.gmra.mrb[0].mxu0 %v2197
  %v3092 = vpop.f32.mrb[0].mxu0
  %v3093 = vadd.f32 %v3022, %v3092
  %v3094 = vpop.f32.mrb[0].mxu0
  %v3095 = vadd.f32 %v3024, %v3094
  %3096 = vdwg.mxu0
  %3097 = vmatprep.subr.mxu0 %v635
  %3098 = vmatpush1.msra.mxu0 %v634
  %3099 = vmatprep.subr.mxu0 %v637
  %3100 = vmatpush1.msra.mxu0 %v636
  %3101 = vmatprep.subr.mxu0 %v639
  %3102 = vmatpush1.msra.mxu0 %v638
  %3103 = vmatprep.subr.mxu0 %v641
  %3104 = vmatpush1.msra.mxu0 %v640
  %3105 = vmatprep.subr.mxu0 %v643
  %3106 = vmatpush1.msra.mxu0 %v642
  %3107 = vmatprep.subr.mxu0 %v645
  %3108 = vmatpush1.msra.mxu0 %v644
  %3109 = vmatprep.subr.mxu0 %v647
  %3110 = vmatpush1.msra.mxu0 %v646
  %3111 = vmatprep.subr.mxu0 %v649
  %3112 = vmatpush1.msra.mxu0 %v648
  %3113 = vmatprep.subr.mxu0 %v651
  %3114 = vmatpush1.msra.mxu0 %v650
  %3115 = vmatprep.subr.mxu0 %v653
  %3116 = vmatpush1.msra.mxu0 %v652
  %3117 = vmatprep.subr.mxu0 %v655
  %3118 = vmatpush1.msra.mxu0 %v654
  %3119 = vmatprep.subr.mxu0 %v657
  %3120 = vmatpush1.msra.mxu0 %v656
  %3121 = vmatprep.subr.mxu0 %v659
  %3122 = vmatpush1.msra.mxu0 %v658
  %3123 = vmatprep.subr.mxu0 %v661
  %3124 = vmatpush1.msra.mxu0 %v660
  %3125 = vmatprep.subr.mxu0 %v663
  %3126 = vmatpush1.msra.mxu0 %v662
  %3127 = vmatprep.subr.mxu0 %v665
  %3128 = vmatpush1.msra.mxu0 %v664
  %3129 = vmatprep.subr.mxu0 %v667
  %3130 = vmatpush1.msra.mxu0 %v666
  %3131 = vmatprep.subr.mxu0 %v669
  %3132 = vmatpush1.msra.mxu0 %v668
  %3133 = vmatprep.subr.mxu0 %v671
  %3134 = vmatpush1.msra.mxu0 %v670
  %3135 = vmatprep.subr.mxu0 %v673
  %3136 = vmatpush1.msra.mxu0 %v672
  %3137 = vmatprep.subr.mxu0 %v675
  %3138 = vmatpush1.msra.mxu0 %v674
  %3139 = vmatprep.subr.mxu0 %v677
  %3140 = vmatpush1.msra.mxu0 %v676
  %3141 = vmatprep.subr.mxu0 %v679
  %3142 = vmatpush1.msra.mxu0 %v678
  %3143 = vmatprep.subr.mxu0 %v681
  %3144 = vmatpush1.msra.mxu0 %v680
  %3145 = vmatprep.subr.mxu0 %v683
  %3146 = vmatpush1.msra.mxu0 %v682
  %3147 = vmatprep.subr.mxu0 %v685
  %3148 = vmatpush1.msra.mxu0 %v684
  %3149 = vmatprep.subr.mxu0 %v687
  %3150 = vmatpush1.msra.mxu0 %v686
  %3151 = vmatprep.subr.mxu0 %v689
  %3152 = vmatpush1.msra.mxu0 %v688
  %3153 = vmatprep.subr.mxu0 %v691
  %3154 = vmatpush1.msra.mxu0 %v690
  %3155 = vmatprep.subr.mxu0 %v693
  %3156 = vmatpush1.msra.mxu0 %v692
  %3157 = vmatprep.subr.mxu0 %v695
  %3158 = vmatpush1.msra.mxu0 %v694
  %3159 = vmatprep.subr.mxu0 %v697
  %3160 = vmatpush1.msra.mxu0 %v696
  %3161 = vmatprep.mubr.f32.mxu0 %v2206
  %3162 = vmatmul.mubr.f32.gmra.mrb[0].mxu0 %v2204
  %v3163 = vpop.f32.mrb[0].mxu0
  %v3164 = vadd.f32 %v3093, %v3163
  %v3165 = vpop.f32.mrb[0].mxu0
  %v3166 = vadd.f32 %v3095, %v3165
  %3167 = vdwg.mxu0
  %3168 = vmatprep.subr.mxu0 %v699
  %3169 = vmatpush1.msra.mxu0 %v698
  %3170 = vmatprep.subr.mxu0 %v701
  %3171 = vmatpush1.msra.mxu0 %v700
  %3172 = vmatprep.subr.mxu0 %v703
  %3173 = vmatpush1.msra.mxu0 %v702
  %3174 = vmatprep.subr.mxu0 %v705
  %3175 = vmatpush1.msra.mxu0 %v704
  %3176 = vmatprep.subr.mxu0 %v707
  %3177 = vmatpush1.msra.mxu0 %v706
  %3178 = vmatprep.subr.mxu0 %v709
  %3179 = vmatpush1.msra.mxu0 %v708
  %3180 = vmatprep.subr.mxu0 %v711
  %3181 = vmatpush1.msra.mxu0 %v710
  %3182 = vmatprep.subr.mxu0 %v713
  %3183 = vmatpush1.msra.mxu0 %v712
  %3184 = vmatprep.subr.mxu0 %v715
  %3185 = vmatpush1.msra.mxu0 %v714
  %3186 = vmatprep.subr.mxu0 %v717
  %3187 = vmatpush1.msra.mxu0 %v716
  %3188 = vmatprep.subr.mxu0 %v719
  %3189 = vmatpush1.msra.mxu0 %v718
  %3190 = vmatprep.subr.mxu0 %v721
  %3191 = vmatpush1.msra.mxu0 %v720
  %3192 = vmatprep.subr.mxu0 %v723
  %3193 = vmatpush1.msra.mxu0 %v722
  %3194 = vmatprep.subr.mxu0 %v725
  %3195 = vmatpush1.msra.mxu0 %v724
  %3196 = vmatprep.subr.mxu0 %v727
  %3197 = vmatpush1.msra.mxu0 %v726
  %3198 = vmatprep.subr.mxu0 %v729
  %3199 = vmatpush1.msra.mxu0 %v728
  %3200 = vmatprep.subr.mxu0 %v731
  %3201 = vmatpush1.msra.mxu0 %v730
  %3202 = vmatprep.subr.mxu0 %v733
  %3203 = vmatpush1.msra.mxu0 %v732
  %3204 = vmatprep.subr.mxu0 %v735
  %3205 = vmatpush1.msra.mxu0 %v734
  %3206 = vmatprep.subr.mxu0 %v737
  %3207 = vmatpush1.msra.mxu0 %v736
  %3208 = vmatprep.subr.mxu0 %v739
  %3209 = vmatpush1.msra.mxu0 %v738
  %3210 = vmatprep.subr.mxu0 %v741
  %3211 = vmatpush1.msra.mxu0 %v740
  %3212 = vmatprep.subr.mxu0 %v743
  %3213 = vmatpush1.msra.mxu0 %v742
  %3214 = vmatprep.subr.mxu0 %v745
  %3215 = vmatpush1.msra.mxu0 %v744
  %3216 = vmatprep.subr.mxu0 %v747
  %3217 = vmatpush1.msra.mxu0 %v746
  %3218 = vmatprep.subr.mxu0 %v749
  %3219 = vmatpush1.msra.mxu0 %v748
  %3220 = vmatprep.subr.mxu0 %v751
  %3221 = vmatpush1.msra.mxu0 %v750
  %3222 = vmatprep.subr.mxu0 %v753
  %3223 = vmatpush1.msra.mxu0 %v752
  %3224 = vmatprep.subr.mxu0 %v755
  %3225 = vmatpush1.msra.mxu0 %v754
  %3226 = vmatprep.subr.mxu0 %v757
  %3227 = vmatpush1.msra.mxu0 %v756
  %3228 = vmatprep.subr.mxu0 %v759
  %3229 = vmatpush1.msra.mxu0 %v758
  %3230 = vmatprep.subr.mxu0 %v761
  %3231 = vmatpush1.msra.mxu0 %v760
  %3232 = vmatprep.mubr.f32.mxu0 %v2222
  %3233 = vmatmul.mubr.f32.gmra.mrb[0].mxu0 %v2214
  %v3234 = vpop.f32.mrb[0].mxu0
  %v3235 = vadd.f32 %v3164, %v3234
  %v3236 = vpop.f32.mrb[0].mxu0
  %v3237 = vadd.f32 %v3166, %v3236
  %3238 = vdwg.mxu0
  %3239 = vmatprep.subr.mxu0 %v763
  %3240 = vmatpush1.msra.mxu0 %v762
  %3241 = vmatprep.subr.mxu0 %v765
  %3242 = vmatpush1.msra.mxu0 %v764
  %3243 = vmatprep.subr.mxu0 %v767
  %3244 = vmatpush1.msra.mxu0 %v766
  %3245 = vmatprep.subr.mxu0 %v769
  %3246 = vmatpush1.msra.mxu0 %v768
  %3247 = vmatprep.subr.mxu0 %v771
  %3248 = vmatpush1.msra.mxu0 %v770
  %3249 = vmatprep.subr.mxu0 %v773
  %3250 = vmatpush1.msra.mxu0 %v772
  %3251 = vmatprep.subr.mxu0 %v775
  %3252 = vmatpush1.msra.mxu0 %v774
  %3253 = vmatprep.subr.mxu0 %v777
  %3254 = vmatpush1.msra.mxu0 %v776
  %3255 = vmatprep.subr.mxu0 %v779
  %3256 = vmatpush1.msra.mxu0 %v778
  %3257 = vmatprep.subr.mxu0 %v781
  %3258 = vmatpush1.msra.mxu0 %v780
  %3259 = vmatprep.subr.mxu0 %v783
  %3260 = vmatpush1.msra.mxu0 %v782
  %3261 = vmatprep.subr.mxu0 %v785
  %3262 = vmatpush1.msra.mxu0 %v784
  %3263 = vmatprep.subr.mxu0 %v787
  %3264 = vmatpush1.msra.mxu0 %v786
  %3265 = vmatprep.subr.mxu0 %v789
  %3266 = vmatpush1.msra.mxu0 %v788
  %3267 = vmatprep.subr.mxu0 %v791
  %3268 = vmatpush1.msra.mxu0 %v790
  %3269 = vmatprep.subr.mxu0 %v793
  %3270 = vmatpush1.msra.mxu0 %v792
  %3271 = vmatprep.subr.mxu0 %v795
  %3272 = vmatpush1.msra.mxu0 %v794
  %3273 = vmatprep.subr.mxu0 %v797
  %3274 = vmatpush1.msra.mxu0 %v796
  %3275 = vmatprep.subr.mxu0 %v799
  %3276 = vmatpush1.msra.mxu0 %v798
  %3277 = vmatprep.subr.mxu0 %v801
  %3278 = vmatpush1.msra.mxu0 %v800
  %3279 = vmatprep.subr.mxu0 %v803
  %3280 = vmatpush1.msra.mxu0 %v802
  %3281 = vmatprep.subr.mxu0 %v805
  %3282 = vmatpush1.msra.mxu0 %v804
  %3283 = vmatprep.subr.mxu0 %v807
  %3284 = vmatpush1.msra.mxu0 %v806
  %3285 = vmatprep.subr.mxu0 %v809
  %3286 = vmatpush1.msra.mxu0 %v808
  %3287 = vmatprep.subr.mxu0 %v811
  %3288 = vmatpush1.msra.mxu0 %v810
  %3289 = vmatprep.subr.mxu0 %v813
  %3290 = vmatpush1.msra.mxu0 %v812
  %3291 = vmatprep.subr.mxu0 %v815
  %3292 = vmatpush1.msra.mxu0 %v814
  %3293 = vmatprep.subr.mxu0 %v817
  %3294 = vmatpush1.msra.mxu0 %v816
  %3295 = vmatprep.subr.mxu0 %v819
  %3296 = vmatpush1.msra.mxu0 %v818
  %3297 = vmatprep.subr.mxu0 %v821
  %3298 = vmatpush1.msra.mxu0 %v820
  %3299 = vmatprep.subr.mxu0 %v823
  %3300 = vmatpush1.msra.mxu0 %v822
  %3301 = vmatprep.subr.mxu0 %v825
  %3302 = vmatpush1.msra.mxu0 %v824
  %3303 = vmatprep.mubr.f32.mxu0 %v2223
  %3304 = vmatmul.mubr.f32.gmra.mrb[0].mxu0 %v2221
  %v3305 = vpop.f32.mrb[0].mxu0
  %v3306 = vadd.f32 %v3235, %v3305
  %v3307 = vpop.f32.mrb[0].mxu0
  %v3308 = vadd.f32 %v3237, %v3307
  %3309 = vdwg.mxu0
  %3310 = vmatprep.subr.mxu0 %v827
  %3311 = vmatpush1.msra.mxu0 %v826
  %3312 = vmatprep.subr.mxu0 %v829
  %3313 = vmatpush1.msra.mxu0 %v828
  %3314 = vmatprep.subr.mxu0 %v831
  %3315 = vmatpush1.msra.mxu0 %v830
  %3316 = vmatprep.subr.mxu0 %v833
  %3317 = vmatpush1.msra.mxu0 %v832
  %3318 = vmatprep.subr.mxu0 %v835
  %3319 = vmatpush1.msra.mxu0 %v834
  %3320 = vmatprep.subr.mxu0 %v837
  %3321 = vmatpush1.msra.mxu0 %v836
  %3322 = vmatprep.subr.mxu0 %v839
  %3323 = vmatpush1.msra.mxu0 %v838
  %3324 = vmatprep.subr.mxu0 %v841
  %3325 = vmatpush1.msra.mxu0 %v840
  %3326 = vmatprep.subr.mxu0 %v843
  %3327 = vmatpush1.msra.mxu0 %v842
  %3328 = vmatprep.subr.mxu0 %v845
  %3329 = vmatpush1.msra.mxu0 %v844
  %3330 = vmatprep.subr.mxu0 %v847
  %3331 = vmatpush1.msra.mxu0 %v846
  %3332 = vmatprep.subr.mxu0 %v849
  %3333 = vmatpush1.msra.mxu0 %v848
  %3334 = vmatprep.subr.mxu0 %v851
  %3335 = vmatpush1.msra.mxu0 %v850
  %3336 = vmatprep.subr.mxu0 %v853
  %3337 = vmatpush1.msra.mxu0 %v852
  %3338 = vmatprep.subr.mxu0 %v855
  %3339 = vmatpush1.msra.mxu0 %v854
  %3340 = vmatprep.subr.mxu0 %v857
  %3341 = vmatpush1.msra.mxu0 %v856
  %3342 = vmatprep.subr.mxu0 %v859
  %3343 = vmatpush1.msra.mxu0 %v858
  %3344 = vmatprep.subr.mxu0 %v861
  %3345 = vmatpush1.msra.mxu0 %v860
  %3346 = vmatprep.subr.mxu0 %v863
  %3347 = vmatpush1.msra.mxu0 %v862
  %3348 = vmatprep.subr.mxu0 %v865
  %3349 = vmatpush1.msra.mxu0 %v864
  %3350 = vmatprep.subr.mxu0 %v867
  %3351 = vmatpush1.msra.mxu0 %v866
  %3352 = vmatprep.subr.mxu0 %v869
  %3353 = vmatpush1.msra.mxu0 %v868
  %3354 = vmatprep.subr.mxu0 %v871
  %3355 = vmatpush1.msra.mxu0 %v870
  %3356 = vmatprep.subr.mxu0 %v873
  %3357 = vmatpush1.msra.mxu0 %v872
  %3358 = vmatprep.subr.mxu0 %v875
  %3359 = vmatpush1.msra.mxu0 %v874
  %3360 = vmatprep.subr.mxu0 %v877
  %3361 = vmatpush1.msra.mxu0 %v876
  %3362 = vmatprep.subr.mxu0 %v879
  %3363 = vmatpush1.msra.mxu0 %v878
  %3364 = vmatprep.subr.mxu0 %v881
  %3365 = vmatpush1.msra.mxu0 %v880
  %3366 = vmatprep.subr.mxu0 %v883
  %3367 = vmatpush1.msra.mxu0 %v882
  %3368 = vmatprep.subr.mxu0 %v885
  %3369 = vmatpush1.msra.mxu0 %v884
  %3370 = vmatprep.subr.mxu0 %v887
  %3371 = vmatpush1.msra.mxu0 %v886
  %3372 = vmatprep.subr.mxu0 %v889
  %3373 = vmatpush1.msra.mxu0 %v888
  %3374 = vmatprep.mubr.f32.mxu0 %v2239
  %3375 = vmatmul.mubr.f32.gmra.mrb[0].mxu0 %v2231
  %v3376 = vpop.f32.mrb[0].mxu0
  %v3377 = vadd.f32 %v3306, %v3376
  %v3378 = vpop.f32.mrb[0].mxu0
  %v3379 = vadd.f32 %v3308, %v3378
  %3380 = vdwg.mxu0
  %3381 = vmatprep.subr.mxu0 %v891
  %3382 = vmatpush1.msra.mxu0 %v890
  %3383 = vmatprep.subr.mxu0 %v893
  %3384 = vmatpush1.msra.mxu0 %v892
  %3385 = vmatprep.subr.mxu0 %v895
  %3386 = vmatpush1.msra.mxu0 %v894
  %3387 = vmatprep.subr.mxu0 %v897
  %3388 = vmatpush1.msra.mxu0 %v896
  %3389 = vmatprep.subr.mxu0 %v899
  %3390 = vmatpush1.msra.mxu0 %v898
  %3391 = vmatprep.subr.mxu0 %v901
  %3392 = vmatpush1.msra.mxu0 %v900
  %3393 = vmatprep.subr.mxu0 %v903
  %3394 = vmatpush1.msra.mxu0 %v902
  %3395 = vmatprep.subr.mxu0 %v905
  %3396 = vmatpush1.msra.mxu0 %v904
  %3397 = vmatprep.subr.mxu0 %v907
  %3398 = vmatpush1.msra.mxu0 %v906
  %3399 = vmatprep.subr.mxu0 %v909
  %3400 = vmatpush1.msra.mxu0 %v908
  %3401 = vmatprep.subr.mxu0 %v911
  %3402 = vmatpush1.msra.mxu0 %v910
  %3403 = vmatprep.subr.mxu0 %v913
  %3404 = vmatpush1.msra.mxu0 %v912
  %3405 = vmatprep.subr.mxu0 %v915
  %3406 = vmatpush1.msra.mxu0 %v914
  %3407 = vmatprep.subr.mxu0 %v917
  %3408 = vmatpush1.msra.mxu0 %v916
  %3409 = vmatprep.subr.mxu0 %v919
  %3410 = vmatpush1.msra.mxu0 %v918
  %3411 = vmatprep.subr.mxu0 %v921
  %3412 = vmatpush1.msra.mxu0 %v920
  %3413 = vmatprep.subr.mxu0 %v923
  %3414 = vmatpush1.msra.mxu0 %v922
  %3415 = vmatprep.subr.mxu0 %v925
  %3416 = vmatpush1.msra.mxu0 %v924
  %3417 = vmatprep.subr.mxu0 %v927
  %3418 = vmatpush1.msra.mxu0 %v926
  %3419 = vmatprep.subr.mxu0 %v929
  %3420 = vmatpush1.msra.mxu0 %v928
  %3421 = vmatprep.subr.mxu0 %v931
  %3422 = vmatpush1.msra.mxu0 %v930
  %3423 = vmatprep.subr.mxu0 %v933
  %3424 = vmatpush1.msra.mxu0 %v932
  %3425 = vmatprep.subr.mxu0 %v935
  %3426 = vmatpush1.msra.mxu0 %v934
  %3427 = vmatprep.subr.mxu0 %v937
  %3428 = vmatpush1.msra.mxu0 %v936
  %3429 = vmatprep.subr.mxu0 %v939
  %3430 = vmatpush1.msra.mxu0 %v938
  %3431 = vmatprep.subr.mxu0 %v941
  %3432 = vmatpush1.msra.mxu0 %v940
  %3433 = vmatprep.subr.mxu0 %v943
  %3434 = vmatpush1.msra.mxu0 %v942
  %3435 = vmatprep.subr.mxu0 %v945
  %3436 = vmatpush1.msra.mxu0 %v944
  %3437 = vmatprep.subr.mxu0 %v947
  %3438 = vmatpush1.msra.mxu0 %v946
  %3439 = vmatprep.subr.mxu0 %v949
  %3440 = vmatpush1.msra.mxu0 %v948
  %3441 = vmatprep.subr.mxu0 %v951
  %3442 = vmatpush1.msra.mxu0 %v950
  %3443 = vmatprep.subr.mxu0 %v953
  %3444 = vmatpush1.msra.mxu0 %v952
  %3445 = vmatprep.mubr.f32.mxu0 %v2240
  %3446 = vmatmul.mubr.f32.gmra.mrb[0].mxu0 %v2238
  %v3447 = vpop.f32.mrb[0].mxu0
  %v3448 = vadd.f32 %v3377, %v3447
  %v3449 = vpop.f32.mrb[0].mxu0
  %v3450 = vadd.f32 %v3379, %v3449
  %3451 = vdwg.mxu0
  %3452 = vmatprep.subr.mxu0 %v955
  %3453 = vmatpush1.msra.mxu0 %v954
  %3454 = vmatprep.subr.mxu0 %v957
  %3455 = vmatpush1.msra.mxu0 %v956
  %3456 = vmatprep.subr.mxu0 %v959
  %3457 = vmatpush1.msra.mxu0 %v958
  %3458 = vmatprep.subr.mxu0 %v961
  %3459 = vmatpush1.msra.mxu0 %v960
  %3460 = vmatprep.subr.mxu0 %v963
  %3461 = vmatpush1.msra.mxu0 %v962
  %3462 = vmatprep.subr.mxu0 %v965
  %3463 = vmatpush1.msra.mxu0 %v964
  %3464 = vmatprep.subr.mxu0 %v967
  %3465 = vmatpush1.msra.mxu0 %v966
  %3466 = vmatprep.subr.mxu0 %v969
  %3467 = vmatpush1.msra.mxu0 %v968
  %3468 = vmatprep.subr.mxu0 %v971
  %3469 = vmatpush1.msra.mxu0 %v970
  %3470 = vmatprep.subr.mxu0 %v973
  %3471 = vmatpush1.msra.mxu0 %v972
  %3472 = vmatprep.subr.mxu0 %v975
  %3473 = vmatpush1.msra.mxu0 %v974
  %3474 = vmatprep.subr.mxu0 %v977
  %3475 = vmatpush1.msra.mxu0 %v976
  %3476 = vmatprep.subr.mxu0 %v979
  %3477 = vmatpush1.msra.mxu0 %v978
  %3478 = vmatprep.subr.mxu0 %v981
  %3479 = vmatpush1.msra.mxu0 %v980
  %3480 = vmatprep.subr.mxu0 %v983
  %3481 = vmatpush1.msra.mxu0 %v982
  %3482 = vmatprep.subr.mxu0 %v985
  %3483 = vmatpush1.msra.mxu0 %v984
  %3484 = vmatprep.subr.mxu0 %v987
  %3485 = vmatpush1.msra.mxu0 %v986
  %3486 = vmatprep.subr.mxu0 %v989
  %3487 = vmatpush1.msra.mxu0 %v988
  %3488 = vmatprep.subr.mxu0 %v991
  %3489 = vmatpush1.msra.mxu0 %v990
  %3490 = vmatprep.subr.mxu0 %v993
  %3491 = vmatpush1.msra.mxu0 %v992
  %3492 = vmatprep.subr.mxu0 %v995
  %3493 = vmatpush1.msra.mxu0 %v994
  %3494 = vmatprep.subr.mxu0 %v997
  %3495 = vmatpush1.msra.mxu0 %v996
  %3496 = vmatprep.subr.mxu0 %v999
  %3497 = vmatpush1.msra.mxu0 %v998
  %3498 = vmatprep.subr.mxu0 %v1001
  %3499 = vmatpush1.msra.mxu0 %v1000
  %3500 = vmatprep.subr.mxu0 %v1003
  %3501 = vmatpush1.msra.mxu0 %v1002
  %3502 = vmatprep.subr.mxu0 %v1005
  %3503 = vmatpush1.msra.mxu0 %v1004
  %3504 = vmatprep.subr.mxu0 %v1007
  %3505 = vmatpush1.msra.mxu0 %v1006
  %3506 = vmatprep.subr.mxu0 %v1009
  %3507 = vmatpush1.msra.mxu0 %v1008
  %3508 = vmatprep.subr.mxu0 %v1011
  %3509 = vmatpush1.msra.mxu0 %v1010
  %3510 = vmatprep.subr.mxu0 %v1013
  %3511 = vmatpush1.msra.mxu0 %v1012
  %3512 = vmatprep.subr.mxu0 %v1015
  %3513 = vmatpush1.msra.mxu0 %v1014
  %3514 = vmatprep.subr.mxu0 %v1017
  %3515 = vmatpush1.msra.mxu0 %v1016
  %3516 = vmatprep.mubr.f32.mxu0 %v2256
  %3517 = vmatmul.mubr.f32.gmra.mrb[0].mxu0 %v2248
  %v3518 = vpop.f32.mrb[0].mxu0
  %v3519 = vadd.f32 %v3448, %v3518
  %v3520 = vpop.f32.mrb[0].mxu0
  %v3521 = vadd.f32 %v3450, %v3520
  %3522 = vdwg.mxu0
  %3523 = vmatprep.subr.mxu0 %v1019
  %3524 = vmatpush1.msra.mxu0 %v1018
  %3525 = vmatprep.subr.mxu0 %v1021
  %3526 = vmatpush1.msra.mxu0 %v1020
  %3527 = vmatprep.subr.mxu0 %v1023
  %3528 = vmatpush1.msra.mxu0 %v1022
  %3529 = vmatprep.subr.mxu0 %v1025
  %3530 = vmatpush1.msra.mxu0 %v1024
  %3531 = vmatprep.subr.mxu0 %v1027
  %3532 = vmatpush1.msra.mxu0 %v1026
  %3533 = vmatprep.subr.mxu0 %v1029
  %3534 = vmatpush1.msra.mxu0 %v1028
  %3535 = vmatprep.subr.mxu0 %v1031
  %3536 = vmatpush1.msra.mxu0 %v1030
  %3537 = vmatprep.subr.mxu0 %v1033
  %3538 = vmatpush1.msra.mxu0 %v1032
  %3539 = vmatprep.subr.mxu0 %v1035
  %3540 = vmatpush1.msra.mxu0 %v1034
  %3541 = vmatprep.subr.mxu0 %v1037
  %3542 = vmatpush1.msra.mxu0 %v1036
  %3543 = vmatprep.subr.mxu0 %v1039
  %3544 = vmatpush1.msra.mxu0 %v1038
  %3545 = vmatprep.subr.mxu0 %v1041
  %3546 = vmatpush1.msra.mxu0 %v1040
  %3547 = vmatprep.subr.mxu0 %v1043
  %3548 = vmatpush1.msra.mxu0 %v1042
  %3549 = vmatprep.subr.mxu0 %v1045
  %3550 = vmatpush1.msra.mxu0 %v1044
  %3551 = vmatprep.subr.mxu0 %v1047
  %3552 = vmatpush1.msra.mxu0 %v1046
  %3553 = vmatprep.subr.mxu0 %v1049
  %3554 = vmatpush1.msra.mxu0 %v1048
  %3555 = vmatprep.subr.mxu0 %v1051
  %3556 = vmatpush1.msra.mxu0 %v1050
  %3557 = vmatprep.subr.mxu0 %v1053
  %3558 = vmatpush1.msra.mxu0 %v1052
  %3559 = vmatprep.subr.mxu0 %v1055
  %3560 = vmatpush1.msra.mxu0 %v1054
  %3561 = vmatprep.subr.mxu0 %v1057
  %3562 = vmatpush1.msra.mxu0 %v1056
  %3563 = vmatprep.subr.mxu0 %v1059
  %3564 = vmatpush1.msra.mxu0 %v1058
  %3565 = vmatprep.subr.mxu0 %v1061
  %3566 = vmatpush1.msra.mxu0 %v1060
  %3567 = vmatprep.subr.mxu0 %v1063
  %3568 = vmatpush1.msra.mxu0 %v1062
  %3569 = vmatprep.subr.mxu0 %v1065
  %3570 = vmatpush1.msra.mxu0 %v1064
  %3571 = vmatprep.subr.mxu0 %v1067
  %3572 = vmatpush1.msra.mxu0 %v1066
  %3573 = vmatprep.subr.mxu0 %v1069
  %3574 = vmatpush1.msra.mxu0 %v1068
  %3575 = vmatprep.subr.mxu0 %v1071
  %3576 = vmatpush1.msra.mxu0 %v1070
  %3577 = vmatprep.subr.mxu0 %v1073
  %3578 = vmatpush1.msra.mxu0 %v1072
  %3579 = vmatprep.subr.mxu0 %v1075
  %3580 = vmatpush1.msra.mxu0 %v1074
  %3581 = vmatprep.subr.mxu0 %v1077
  %3582 = vmatpush1.msra.mxu0 %v1076
  %3583 = vmatprep.subr.mxu0 %v1079
  %3584 = vmatpush1.msra.mxu0 %v1078
  %3585 = vmatprep.subr.mxu0 %v1081
  %3586 = vmatpush1.msra.mxu0 %v1080
  %3587 = vmatprep.mubr.f32.mxu0 %v2257
  %3588 = vmatmul.mubr.f32.gmra.mrb[0].mxu0 %v2255
  %v3589 = vpop.f32.mrb[0].mxu0
  %v3590 = vadd.f32 %v3519, %v3589
  %v3591 = vpop.f32.mrb[0].mxu0
  %v3592 = vadd.f32 %v3521, %v3591
  %3593 = vdwg.mxu0
  %3594 = vmatprep.subr.mxu0 %v1083
  %3595 = vmatpush1.msra.mxu0 %v1082
  %3596 = vmatprep.subr.mxu0 %v1085
  %3597 = vmatpush1.msra.mxu0 %v1084
  %3598 = vmatprep.subr.mxu0 %v1087
  %3599 = vmatpush1.msra.mxu0 %v1086
  %3600 = vmatprep.subr.mxu0 %v1089
  %3601 = vmatpush1.msra.mxu0 %v1088
  %3602 = vmatprep.subr.mxu0 %v1091
  %3603 = vmatpush1.msra.mxu0 %v1090
  %3604 = vmatprep.subr.mxu0 %v1093
  %3605 = vmatpush1.msra.mxu0 %v1092
  %3606 = vmatprep.subr.mxu0 %v1095
  %3607 = vmatpush1.msra.mxu0 %v1094
  %3608 = vmatprep.subr.mxu0 %v1097
  %3609 = vmatpush1.msra.mxu0 %v1096
  %3610 = vmatprep.subr.mxu0 %v1099
  %3611 = vmatpush1.msra.mxu0 %v1098
  %3612 = vmatprep.subr.mxu0 %v1101
  %3613 = vmatpush1.msra.mxu0 %v1100
  %3614 = vmatprep.subr.mxu0 %v1103
  %3615 = vmatpush1.msra.mxu0 %v1102
  %3616 = vmatprep.subr.mxu0 %v1105
  %3617 = vmatpush1.msra.mxu0 %v1104
  %3618 = vmatprep.subr.mxu0 %v1107
  %3619 = vmatpush1.msra.mxu0 %v1106
  %3620 = vmatprep.subr.mxu0 %v1109
  %3621 = vmatpush1.msra.mxu0 %v1108
  %3622 = vmatprep.subr.mxu0 %v1111
  %3623 = vmatpush1.msra.mxu0 %v1110
  %3624 = vmatprep.subr.mxu0 %v1113
  %3625 = vmatpush1.msra.mxu0 %v1112
  %3626 = vmatprep.subr.mxu0 %v1115
  %3627 = vmatpush1.msra.mxu0 %v1114
  %3628 = vmatprep.subr.mxu0 %v1117
  %3629 = vmatpush1.msra.mxu0 %v1116
  %3630 = vmatprep.subr.mxu0 %v1119
  %3631 = vmatpush1.msra.mxu0 %v1118
  %3632 = vmatprep.subr.mxu0 %v1121
  %3633 = vmatpush1.msra.mxu0 %v1120
  %3634 = vmatprep.subr.mxu0 %v1123
  %3635 = vmatpush1.msra.mxu0 %v1122
  %3636 = vmatprep.subr.mxu0 %v1125
  %3637 = vmatpush1.msra.mxu0 %v1124
  %3638 = vmatprep.subr.mxu0 %v1127
  %3639 = vmatpush1.msra.mxu0 %v1126
  %3640 = vmatprep.subr.mxu0 %v1129
  %3641 = vmatpush1.msra.mxu0 %v1128
  %3642 = vmatprep.subr.mxu0 %v1131
  %3643 = vmatpush1.msra.mxu0 %v1130
  %3644 = vmatprep.subr.mxu0 %v1133
  %3645 = vmatpush1.msra.mxu0 %v1132
  %3646 = vmatprep.subr.mxu0 %v1135
  %3647 = vmatpush1.msra.mxu0 %v1134
  %3648 = vmatprep.subr.mxu0 %v1137
  %3649 = vmatpush1.msra.mxu0 %v1136
  %3650 = vmatprep.subr.mxu0 %v1139
  %3651 = vmatpush1.msra.mxu0 %v1138
  %3652 = vmatprep.subr.mxu0 %v1141
  %3653 = vmatpush1.msra.mxu0 %v1140
  %3654 = vmatprep.subr.mxu0 %v1143
  %3655 = vmatpush1.msra.mxu0 %v1142
  %3656 = vmatprep.subr.mxu0 %v1145
  %3657 = vmatpush1.msra.mxu0 %v1144
  %3658 = vmatprep.mubr.f32.mxu0 %v2273
  %3659 = vmatmul.mubr.f32.gmra.mrb[0].mxu0 %v2265
  %v3660 = vpop.f32.mrb[0].mxu0
  %v3661 = vadd.f32 %v3590, %v3660
  %v3662 = vpop.f32.mrb[0].mxu0
  %v3663 = vadd.f32 %v3592, %v3662
  %3664 = vdwg.mxu0
  %3665 = vmatprep.subr.mxu0 %v1147
  %3666 = vmatpush1.msra.mxu0 %v1146
  %3667 = vmatprep.subr.mxu0 %v1149
  %3668 = vmatpush1.msra.mxu0 %v1148
  %3669 = vmatprep.subr.mxu0 %v1151
  %3670 = vmatpush1.msra.mxu0 %v1150
  %3671 = vmatprep.subr.mxu0 %v1153
  %3672 = vmatpush1.msra.mxu0 %v1152
  %3673 = vmatprep.subr.mxu0 %v1155
  %3674 = vmatpush1.msra.mxu0 %v1154
  %3675 = vmatprep.subr.mxu0 %v1157
  %3676 = vmatpush1.msra.mxu0 %v1156
  %3677 = vmatprep.subr.mxu0 %v1159
  %3678 = vmatpush1.msra.mxu0 %v1158
  %3679 = vmatprep.subr.mxu0 %v1161
  %3680 = vmatpush1.msra.mxu0 %v1160
  %3681 = vmatprep.subr.mxu0 %v1163
  %3682 = vmatpush1.msra.mxu0 %v1162
  %3683 = vmatprep.subr.mxu0 %v1165
  %3684 = vmatpush1.msra.mxu0 %v1164
  %3685 = vmatprep.subr.mxu0 %v1167
  %3686 = vmatpush1.msra.mxu0 %v1166
  %3687 = vmatprep.subr.mxu0 %v1169
  %3688 = vmatpush1.msra.mxu0 %v1168
  %3689 = vmatprep.subr.mxu0 %v1171
  %3690 = vmatpush1.msra.mxu0 %v1170
  %3691 = vmatprep.subr.mxu0 %v1173
  %3692 = vmatpush1.msra.mxu0 %v1172
  %3693 = vmatprep.subr.mxu0 %v1175
  %3694 = vmatpush1.msra.mxu0 %v1174
  %3695 = vmatprep.subr.mxu0 %v1177
  %3696 = vmatpush1.msra.mxu0 %v1176
  %3697 = vmatprep.subr.mxu0 %v1179
  %3698 = vmatpush1.msra.mxu0 %v1178
  %3699 = vmatprep.subr.mxu0 %v1181
  %3700 = vmatpush1.msra.mxu0 %v1180
  %3701 = vmatprep.subr.mxu0 %v1183
  %3702 = vmatpush1.msra.mxu0 %v1182
  %3703 = vmatprep.subr.mxu0 %v1185
  %3704 = vmatpush1.msra.mxu0 %v1184
  %3705 = vmatprep.subr.mxu0 %v1187
  %3706 = vmatpush1.msra.mxu0 %v1186
  %3707 = vmatprep.subr.mxu0 %v1189
  %3708 = vmatpush1.msra.mxu0 %v1188
  %3709 = vmatprep.subr.mxu0 %v1191
  %3710 = vmatpush1.msra.mxu0 %v1190
  %3711 = vmatprep.subr.mxu0 %v1193
  %3712 = vmatpush1.msra.mxu0 %v1192
  %3713 = vmatprep.subr.mxu0 %v1195
  %3714 = vmatpush1.msra.mxu0 %v1194
  %3715 = vmatprep.subr.mxu0 %v1197
  %3716 = vmatpush1.msra.mxu0 %v1196
  %3717 = vmatprep.subr.mxu0 %v1199
  %3718 = vmatpush1.msra.mxu0 %v1198
  %3719 = vmatprep.subr.mxu0 %v1201
  %3720 = vmatpush1.msra.mxu0 %v1200
  %3721 = vmatprep.subr.mxu0 %v1203
  %3722 = vmatpush1.msra.mxu0 %v1202
  %3723 = vmatprep.subr.mxu0 %v1205
  %3724 = vmatpush1.msra.mxu0 %v1204
  %3725 = vmatprep.subr.mxu0 %v1207
  %3726 = vmatpush1.msra.mxu0 %v1206
  %3727 = vmatprep.subr.mxu0 %v1209
  %3728 = vmatpush1.msra.mxu0 %v1208
  %3729 = vmatprep.mubr.f32.mxu0 %v2274
  %3730 = vmatmul.mubr.f32.gmra.mrb[0].mxu0 %v2272
  %v3731 = vpop.f32.mrb[0].mxu0
  %v3732 = vadd.f32 %v3661, %v3731
  %v3733 = vpop.f32.mrb[0].mxu0
  %v3734 = vadd.f32 %v3663, %v3733
  %3735 = vdwg.mxu0
  %3736 = vmatprep.subr.mxu0 %v1211
  %3737 = vmatpush1.msra.mxu0 %v1210
  %3738 = vmatprep.subr.mxu0 %v1213
  %3739 = vmatpush1.msra.mxu0 %v1212
  %3740 = vmatprep.subr.mxu0 %v1215
  %3741 = vmatpush1.msra.mxu0 %v1214
  %3742 = vmatprep.subr.mxu0 %v1217
  %3743 = vmatpush1.msra.mxu0 %v1216
  %3744 = vmatprep.subr.mxu0 %v1219
  %3745 = vmatpush1.msra.mxu0 %v1218
  %3746 = vmatprep.subr.mxu0 %v1221
  %3747 = vmatpush1.msra.mxu0 %v1220
  %3748 = vmatprep.subr.mxu0 %v1223
  %3749 = vmatpush1.msra.mxu0 %v1222
  %3750 = vmatprep.subr.mxu0 %v1225
  %3751 = vmatpush1.msra.mxu0 %v1224
  %3752 = vmatprep.subr.mxu0 %v1227
  %3753 = vmatpush1.msra.mxu0 %v1226
  %3754 = vmatprep.subr.mxu0 %v1229
  %3755 = vmatpush1.msra.mxu0 %v1228
  %3756 = vmatprep.subr.mxu0 %v1231
  %3757 = vmatpush1.msra.mxu0 %v1230
  %3758 = vmatprep.subr.mxu0 %v1233
  %3759 = vmatpush1.msra.mxu0 %v1232
  %3760 = vmatprep.subr.mxu0 %v1235
  %3761 = vmatpush1.msra.mxu0 %v1234
  %3762 = vmatprep.subr.mxu0 %v1237
  %3763 = vmatpush1.msra.mxu0 %v1236
  %3764 = vmatprep.subr.mxu0 %v1239
  %3765 = vmatpush1.msra.mxu0 %v1238
  %3766 = vmatprep.subr.mxu0 %v1241
  %3767 = vmatpush1.msra.mxu0 %v1240
  %3768 = vmatprep.subr.mxu0 %v1243
  %3769 = vmatpush1.msra.mxu0 %v1242
  %3770 = vmatprep.subr.mxu0 %v1245
  %3771 = vmatpush1.msra.mxu0 %v1244
  %3772 = vmatprep.subr.mxu0 %v1247
  %3773 = vmatpush1.msra.mxu0 %v1246
  %3774 = vmatprep.subr.mxu0 %v1249
  %3775 = vmatpush1.msra.mxu0 %v1248
  %3776 = vmatprep.subr.mxu0 %v1251
  %3777 = vmatpush1.msra.mxu0 %v1250
  %3778 = vmatprep.subr.mxu0 %v1253
  %3779 = vmatpush1.msra.mxu0 %v1252
  %3780 = vmatprep.subr.mxu0 %v1255
  %3781 = vmatpush1.msra.mxu0 %v1254
  %3782 = vmatprep.subr.mxu0 %v1257
  %3783 = vmatpush1.msra.mxu0 %v1256
  %3784 = vmatprep.subr.mxu0 %v1259
  %3785 = vmatpush1.msra.mxu0 %v1258
  %3786 = vmatprep.subr.mxu0 %v1261
  %3787 = vmatpush1.msra.mxu0 %v1260
  %3788 = vmatprep.subr.mxu0 %v1263
  %3789 = vmatpush1.msra.mxu0 %v1262
  %3790 = vmatprep.subr.mxu0 %v1265
  %3791 = vmatpush1.msra.mxu0 %v1264
  %3792 = vmatprep.subr.mxu0 %v1267
  %3793 = vmatpush1.msra.mxu0 %v1266
  %3794 = vmatprep.subr.mxu0 %v1269
  %3795 = vmatpush1.msra.mxu0 %v1268
  %3796 = vmatprep.subr.mxu0 %v1271
  %3797 = vmatpush1.msra.mxu0 %v1270
  %3798 = vmatprep.subr.mxu0 %v1273
  %3799 = vmatpush1.msra.mxu0 %v1272
  %3800 = vmatprep.mubr.f32.mxu0 %v2290
  %3801 = vmatmul.mubr.f32.gmra.mrb[0].mxu0 %v2282
  %v3802 = vpop.f32.mrb[0].mxu0
  %v3803 = vadd.f32 %v3732, %v3802
  %v3804 = vpop.f32.mrb[0].mxu0
  %v3805 = vadd.f32 %v3734, %v3804
  %3806 = vdwg.mxu0
  %3807 = vmatprep.subr.mxu0 %v1275
  %3808 = vmatpush1.msra.mxu0 %v1274
  %3809 = vmatprep.subr.mxu0 %v1277
  %3810 = vmatpush1.msra.mxu0 %v1276
  %3811 = vmatprep.subr.mxu0 %v1279
  %3812 = vmatpush1.msra.mxu0 %v1278
  %3813 = vmatprep.subr.mxu0 %v1281
  %3814 = vmatpush1.msra.mxu0 %v1280
  %3815 = vmatprep.subr.mxu0 %v1283
  %3816 = vmatpush1.msra.mxu0 %v1282
  %3817 = vmatprep.subr.mxu0 %v1285
  %3818 = vmatpush1.msra.mxu0 %v1284
  %3819 = vmatprep.subr.mxu0 %v1287
  %3820 = vmatpush1.msra.mxu0 %v1286
  %3821 = vmatprep.subr.mxu0 %v1289
  %3822 = vmatpush1.msra.mxu0 %v1288
  %3823 = vmatprep.subr.mxu0 %v1291
  %3824 = vmatpush1.msra.mxu0 %v1290
  %3825 = vmatprep.subr.mxu0 %v1293
  %3826 = vmatpush1.msra.mxu0 %v1292
  %3827 = vmatprep.subr.mxu0 %v1295
  %3828 = vmatpush1.msra.mxu0 %v1294
  %3829 = vmatprep.subr.mxu0 %v1297
  %3830 = vmatpush1.msra.mxu0 %v1296
  %3831 = vmatprep.subr.mxu0 %v1299
  %3832 = vmatpush1.msra.mxu0 %v1298
  %3833 = vmatprep.subr.mxu0 %v1301
  %3834 = vmatpush1.msra.mxu0 %v1300
  %3835 = vmatprep.subr.mxu0 %v1303
  %3836 = vmatpush1.msra.mxu0 %v1302
  %3837 = vmatprep.subr.mxu0 %v1305
  %3838 = vmatpush1.msra.mxu0 %v1304
  %3839 = vmatprep.subr.mxu0 %v1307
  %3840 = vmatpush1.msra.mxu0 %v1306
  %3841 = vmatprep.subr.mxu0 %v1309
  %3842 = vmatpush1.msra.mxu0 %v1308
  %3843 = vmatprep.subr.mxu0 %v1311
  %3844 = vmatpush1.msra.mxu0 %v1310
  %3845 = vmatprep.subr.mxu0 %v1313
  %3846 = vmatpush1.msra.mxu0 %v1312
  %3847 = vmatprep.subr.mxu0 %v1315
  %3848 = vmatpush1.msra.mxu0 %v1314
  %3849 = vmatprep.subr.mxu0 %v1317
  %3850 = vmatpush1.msra.mxu0 %v1316
  %3851 = vmatprep.subr.mxu0 %v1319
  %3852 = vmatpush1.msra.mxu0 %v1318
  %3853 = vmatprep.subr.mxu0 %v1321
  %3854 = vmatpush1.msra.mxu0 %v1320
  %3855 = vmatprep.subr.mxu0 %v1323
  %3856 = vmatpush1.msra.mxu0 %v1322
  %3857 = vmatprep.subr.mxu0 %v1325
  %3858 = vmatpush1.msra.mxu0 %v1324
  %3859 = vmatprep.subr.mxu0 %v1327
  %3860 = vmatpush1.msra.mxu0 %v1326
  %3861 = vmatprep.subr.mxu0 %v1329
  %3862 = vmatpush1.msra.mxu0 %v1328
  %3863 = vmatprep.subr.mxu0 %v1331
  %3864 = vmatpush1.msra.mxu0 %v1330
  %3865 = vmatprep.subr.mxu0 %v1333
  %3866 = vmatpush1.msra.mxu0 %v1332
  %3867 = vmatprep.subr.mxu0 %v1335
  %3868 = vmatpush1.msra.mxu0 %v1334
  %3869 = vmatprep.subr.mxu0 %v1337
  %3870 = vmatpush1.msra.mxu0 %v1336
  %3871 = vmatprep.mubr.f32.mxu0 %v2291
  %3872 = vmatmul.mubr.f32.gmra.mrb[0].mxu0 %v2289
  %v3873 = vpop.f32.mrb[0].mxu0
  %v3874 = vadd.f32 %v3803, %v3873
  %v3875 = vpop.f32.mrb[0].mxu0
  %v3876 = vadd.f32 %v3805, %v3875
  %3877 = vdwg.mxu0
  %3878 = vmatprep.subr.mxu0 %v1339
  %3879 = vmatpush1.msra.mxu0 %v1338
  %3880 = vmatprep.subr.mxu0 %v1341
  %3881 = vmatpush1.msra.mxu0 %v1340
  %3882 = vmatprep.subr.mxu0 %v1343
  %3883 = vmatpush1.msra.mxu0 %v1342
  %3884 = vmatprep.subr.mxu0 %v1345
  %3885 = vmatpush1.msra.mxu0 %v1344
  %3886 = vmatprep.subr.mxu0 %v1347
  %3887 = vmatpush1.msra.mxu0 %v1346
  %3888 = vmatprep.subr.mxu0 %v1349
  %3889 = vmatpush1.msra.mxu0 %v1348
  %3890 = vmatprep.subr.mxu0 %v1351
  %3891 = vmatpush1.msra.mxu0 %v1350
  %3892 = vmatprep.subr.mxu0 %v1353
  %3893 = vmatpush1.msra.mxu0 %v1352
  %3894 = vmatprep.subr.mxu0 %v1355
  %3895 = vmatpush1.msra.mxu0 %v1354
  %3896 = vmatprep.subr.mxu0 %v1357
  %3897 = vmatpush1.msra.mxu0 %v1356
  %3898 = vmatprep.subr.mxu0 %v1359
  %3899 = vmatpush1.msra.mxu0 %v1358
  %3900 = vmatprep.subr.mxu0 %v1361
  %3901 = vmatpush1.msra.mxu0 %v1360
  %3902 = vmatprep.subr.mxu0 %v1363
  %3903 = vmatpush1.msra.mxu0 %v1362
  %3904 = vmatprep.subr.mxu0 %v1365
  %3905 = vmatpush1.msra.mxu0 %v1364
  %3906 = vmatprep.subr.mxu0 %v1367
  %3907 = vmatpush1.msra.mxu0 %v1366
  %3908 = vmatprep.subr.mxu0 %v1369
  %3909 = vmatpush1.msra.mxu0 %v1368
  %3910 = vmatprep.subr.mxu0 %v1371
  %3911 = vmatpush1.msra.mxu0 %v1370
  %3912 = vmatprep.subr.mxu0 %v1373
  %3913 = vmatpush1.msra.mxu0 %v1372
  %3914 = vmatprep.subr.mxu0 %v1375
  %3915 = vmatpush1.msra.mxu0 %v1374
  %3916 = vmatprep.subr.mxu0 %v1377
  %3917 = vmatpush1.msra.mxu0 %v1376
  %3918 = vmatprep.subr.mxu0 %v1379
  %3919 = vmatpush1.msra.mxu0 %v1378
  %3920 = vmatprep.subr.mxu0 %v1381
  %3921 = vmatpush1.msra.mxu0 %v1380
  %3922 = vmatprep.subr.mxu0 %v1383
  %3923 = vmatpush1.msra.mxu0 %v1382
  %3924 = vmatprep.subr.mxu0 %v1385
  %3925 = vmatpush1.msra.mxu0 %v1384
  %3926 = vmatprep.subr.mxu0 %v1387
  %3927 = vmatpush1.msra.mxu0 %v1386
  %3928 = vmatprep.subr.mxu0 %v1389
  %3929 = vmatpush1.msra.mxu0 %v1388
  %3930 = vmatprep.subr.mxu0 %v1391
  %3931 = vmatpush1.msra.mxu0 %v1390
  %3932 = vmatprep.subr.mxu0 %v1393
  %3933 = vmatpush1.msra.mxu0 %v1392
  %3934 = vmatprep.subr.mxu0 %v1395
  %3935 = vmatpush1.msra.mxu0 %v1394
  %3936 = vmatprep.subr.mxu0 %v1397
  %3937 = vmatpush1.msra.mxu0 %v1396
  %3938 = vmatprep.subr.mxu0 %v1399
  %3939 = vmatpush1.msra.mxu0 %v1398
  %3940 = vmatprep.subr.mxu0 %v1401
  %3941 = vmatpush1.msra.mxu0 %v1400
  %3942 = vmatprep.mubr.f32.mxu0 %v2307
  %3943 = vmatmul.mubr.f32.gmra.mrb[0].mxu0 %v2299
  %v3944 = vpop.f32.mrb[0].mxu0
  %v3945 = vadd.f32 %v3874, %v3944
  %v3946 = vpop.f32.mrb[0].mxu0
  %v3947 = vadd.f32 %v3876, %v3946
  %3948 = vdwg.mxu0
  %3949 = vmatprep.subr.mxu0 %v1403
  %3950 = vmatpush1.msra.mxu0 %v1402
  %3951 = vmatprep.subr.mxu0 %v1405
  %3952 = vmatpush1.msra.mxu0 %v1404
  %3953 = vmatprep.subr.mxu0 %v1407
  %3954 = vmatpush1.msra.mxu0 %v1406
  %3955 = vmatprep.subr.mxu0 %v1409
  %3956 = vmatpush1.msra.mxu0 %v1408
  %3957 = vmatprep.subr.mxu0 %v1411
  %3958 = vmatpush1.msra.mxu0 %v1410
  %3959 = vmatprep.subr.mxu0 %v1413
  %3960 = vmatpush1.msra.mxu0 %v1412
  %3961 = vmatprep.subr.mxu0 %v1415
  %3962 = vmatpush1.msra.mxu0 %v1414
  %3963 = vmatprep.subr.mxu0 %v1417
  %3964 = vmatpush1.msra.mxu0 %v1416
  %3965 = vmatprep.subr.mxu0 %v1419
  %3966 = vmatpush1.msra.mxu0 %v1418
  %3967 = vmatprep.subr.mxu0 %v1421
  %3968 = vmatpush1.msra.mxu0 %v1420
  %3969 = vmatprep.subr.mxu0 %v1423
  %3970 = vmatpush1.msra.mxu0 %v1422
  %3971 = vmatprep.subr.mxu0 %v1425
  %3972 = vmatpush1.msra.mxu0 %v1424
  %3973 = vmatprep.subr.mxu0 %v1427
  %3974 = vmatpush1.msra.mxu0 %v1426
  %3975 = vmatprep.subr.mxu0 %v1429
  %3976 = vmatpush1.msra.mxu0 %v1428
  %3977 = vmatprep.subr.mxu0 %v1431
  %3978 = vmatpush1.msra.mxu0 %v1430
  %3979 = vmatprep.subr.mxu0 %v1433
  %3980 = vmatpush1.msra.mxu0 %v1432
  %3981 = vmatprep.subr.mxu0 %v1435
  %3982 = vmatpush1.msra.mxu0 %v1434
  %3983 = vmatprep.subr.mxu0 %v1437
  %3984 = vmatpush1.msra.mxu0 %v1436
  %3985 = vmatprep.subr.mxu0 %v1439
  %3986 = vmatpush1.msra.mxu0 %v1438
  %3987 = vmatprep.subr.mxu0 %v1441
  %3988 = vmatpush1.msra.mxu0 %v1440
  %3989 = vmatprep.subr.mxu0 %v1443
  %3990 = vmatpush1.msra.mxu0 %v1442
  %3991 = vmatprep.subr.mxu0 %v1445
  %3992 = vmatpush1.msra.mxu0 %v1444
  %3993 = vmatprep.subr.mxu0 %v1447
  %3994 = vmatpush1.msra.mxu0 %v1446
  %3995 = vmatprep.subr.mxu0 %v1449
  %3996 = vmatpush1.msra.mxu0 %v1448
  %3997 = vmatprep.subr.mxu0 %v1451
  %3998 = vmatpush1.msra.mxu0 %v1450
  %3999 = vmatprep.subr.mxu0 %v1453
  %4000 = vmatpush1.msra.mxu0 %v1452
  %4001 = vmatprep.subr.mxu0 %v1455
  %4002 = vmatpush1.msra.mxu0 %v1454
  %4003 = vmatprep.subr.mxu0 %v1457
  %4004 = vmatpush1.msra.mxu0 %v1456
  %4005 = vmatprep.subr.mxu0 %v1459
  %4006 = vmatpush1.msra.mxu0 %v1458
  %4007 = vmatprep.subr.mxu0 %v1461
  %4008 = vmatpush1.msra.mxu0 %v1460
  %4009 = vmatprep.subr.mxu0 %v1463
  %4010 = vmatpush1.msra.mxu0 %v1462
  %4011 = vmatprep.subr.mxu0 %v1465
  %4012 = vmatpush1.msra.mxu0 %v1464
  %4013 = vmatprep.mubr.f32.mxu0 %v2308
  %4014 = vmatmul.mubr.f32.gmra.mrb[0].mxu0 %v2306
  %v4015 = vpop.f32.mrb[0].mxu0
  %v4016 = vadd.f32 %v3945, %v4015
  %v4017 = vpop.f32.mrb[0].mxu0
  %v4018 = vadd.f32 %v3947, %v4017
  %4019 = vdwg.mxu0
  %4020 = vmatprep.subr.mxu0 %v1467
  %4021 = vmatpush1.msra.mxu0 %v1466
  %4022 = vmatprep.subr.mxu0 %v1469
  %4023 = vmatpush1.msra.mxu0 %v1468
  %4024 = vmatprep.subr.mxu0 %v1471
  %4025 = vmatpush1.msra.mxu0 %v1470
  %4026 = vmatprep.subr.mxu0 %v1473
  %4027 = vmatpush1.msra.mxu0 %v1472
  %4028 = vmatprep.subr.mxu0 %v1475
  %4029 = vmatpush1.msra.mxu0 %v1474
  %4030 = vmatprep.subr.mxu0 %v1477
  %4031 = vmatpush1.msra.mxu0 %v1476
  %4032 = vmatprep.subr.mxu0 %v1479
  %4033 = vmatpush1.msra.mxu0 %v1478
  %4034 = vmatprep.subr.mxu0 %v1481
  %4035 = vmatpush1.msra.mxu0 %v1480
  %4036 = vmatprep.subr.mxu0 %v1483
  %4037 = vmatpush1.msra.mxu0 %v1482
  %4038 = vmatprep.subr.mxu0 %v1485
  %4039 = vmatpush1.msra.mxu0 %v1484
  %4040 = vmatprep.subr.mxu0 %v1487
  %4041 = vmatpush1.msra.mxu0 %v1486
  %4042 = vmatprep.subr.mxu0 %v1489
  %4043 = vmatpush1.msra.mxu0 %v1488
  %4044 = vmatprep.subr.mxu0 %v1491
  %4045 = vmatpush1.msra.mxu0 %v1490
  %4046 = vmatprep.subr.mxu0 %v1493
  %4047 = vmatpush1.msra.mxu0 %v1492
  %4048 = vmatprep.subr.mxu0 %v1495
  %4049 = vmatpush1.msra.mxu0 %v1494
  %4050 = vmatprep.subr.mxu0 %v1497
  %4051 = vmatpush1.msra.mxu0 %v1496
  %4052 = vmatprep.subr.mxu0 %v1499
  %4053 = vmatpush1.msra.mxu0 %v1498
  %4054 = vmatprep.subr.mxu0 %v1501
  %4055 = vmatpush1.msra.mxu0 %v1500
  %4056 = vmatprep.subr.mxu0 %v1503
  %4057 = vmatpush1.msra.mxu0 %v1502
  %4058 = vmatprep.subr.mxu0 %v1505
  %4059 = vmatpush1.msra.mxu0 %v1504
  %4060 = vmatprep.subr.mxu0 %v1507
  %4061 = vmatpush1.msra.mxu0 %v1506
  %4062 = vmatprep.subr.mxu0 %v1509
  %4063 = vmatpush1.msra.mxu0 %v1508
  %4064 = vmatprep.subr.mxu0 %v1511
  %4065 = vmatpush1.msra.mxu0 %v1510
  %4066 = vmatprep.subr.mxu0 %v1513
  %4067 = vmatpush1.msra.mxu0 %v1512
  %4068 = vmatprep.subr.mxu0 %v1515
  %4069 = vmatpush1.msra.mxu0 %v1514
  %4070 = vmatprep.subr.mxu0 %v1517
  %4071 = vmatpush1.msra.mxu0 %v1516
  %4072 = vmatprep.subr.mxu0 %v1519
  %4073 = vmatpush1.msra.mxu0 %v1518
  %4074 = vmatprep.subr.mxu0 %v1521
  %4075 = vmatpush1.msra.mxu0 %v1520
  %4076 = vmatprep.subr.mxu0 %v1523
  %4077 = vmatpush1.msra.mxu0 %v1522
  %4078 = vmatprep.subr.mxu0 %v1525
  %4079 = vmatpush1.msra.mxu0 %v1524
  %4080 = vmatprep.subr.mxu0 %v1527
  %4081 = vmatpush1.msra.mxu0 %v1526
  %4082 = vmatprep.subr.mxu0 %v1529
  %4083 = vmatpush1.msra.mxu0 %v1528
  %4084 = vmatprep.mubr.f32.mxu0 %v2324
  %4085 = vmatmul.mubr.f32.gmra.mrb[0].mxu0 %v2316
  %v4086 = vpop.f32.mrb[0].mxu0
  %v4087 = vadd.f32 %v4016, %v4086
  %v4088 = vpop.f32.mrb[0].mxu0
  %v4089 = vadd.f32 %v4018, %v4088
  %4090 = vdwg.mxu0
  %4091 = vmatprep.subr.mxu0 %v1531
  %4092 = vmatpush1.msra.mxu0 %v1530
  %4093 = vmatprep.subr.mxu0 %v1533
  %4094 = vmatpush1.msra.mxu0 %v1532
  %4095 = vmatprep.subr.mxu0 %v1535
  %4096 = vmatpush1.msra.mxu0 %v1534
  %4097 = vmatprep.subr.mxu0 %v1537
  %4098 = vmatpush1.msra.mxu0 %v1536
  %4099 = vmatprep.subr.mxu0 %v1539
  %4100 = vmatpush1.msra.mxu0 %v1538
  %4101 = vmatprep.subr.mxu0 %v1541
  %4102 = vmatpush1.msra.mxu0 %v1540
  %4103 = vmatprep.subr.mxu0 %v1543
  %4104 = vmatpush1.msra.mxu0 %v1542
  %4105 = vmatprep.subr.mxu0 %v1545
  %4106 = vmatpush1.msra.mxu0 %v1544
  %4107 = vmatprep.subr.mxu0 %v1547
  %4108 = vmatpush1.msra.mxu0 %v1546
  %4109 = vmatprep.subr.mxu0 %v1549
  %4110 = vmatpush1.msra.mxu0 %v1548
  %4111 = vmatprep.subr.mxu0 %v1551
  %4112 = vmatpush1.msra.mxu0 %v1550
  %4113 = vmatprep.subr.mxu0 %v1553
  %4114 = vmatpush1.msra.mxu0 %v1552
  %4115 = vmatprep.subr.mxu0 %v1555
  %4116 = vmatpush1.msra.mxu0 %v1554
  %4117 = vmatprep.subr.mxu0 %v1557
  %4118 = vmatpush1.msra.mxu0 %v1556
  %4119 = vmatprep.subr.mxu0 %v1559
  %4120 = vmatpush1.msra.mxu0 %v1558
  %4121 = vmatprep.subr.mxu0 %v1561
  %4122 = vmatpush1.msra.mxu0 %v1560
  %4123 = vmatprep.subr.mxu0 %v1563
  %4124 = vmatpush1.msra.mxu0 %v1562
  %4125 = vmatprep.subr.mxu0 %v1565
  %4126 = vmatpush1.msra.mxu0 %v1564
  %4127 = vmatprep.subr.mxu0 %v1567
  %4128 = vmatpush1.msra.mxu0 %v1566
  %4129 = vmatprep.subr.mxu0 %v1569
  %4130 = vmatpush1.msra.mxu0 %v1568
  %4131 = vmatprep.subr.mxu0 %v1571
  %4132 = vmatpush1.msra.mxu0 %v1570
  %4133 = vmatprep.subr.mxu0 %v1573
  %4134 = vmatpush1.msra.mxu0 %v1572
  %4135 = vmatprep.subr.mxu0 %v1575
  %4136 = vmatpush1.msra.mxu0 %v1574
  %4137 = vmatprep.subr.mxu0 %v1577
  %4138 = vmatpush1.msra.mxu0 %v1576
  %4139 = vmatprep.subr.mxu0 %v1579
  %4140 = vmatpush1.msra.mxu0 %v1578
  %4141 = vmatprep.subr.mxu0 %v1581
  %4142 = vmatpush1.msra.mxu0 %v1580
  %4143 = vmatprep.subr.mxu0 %v1583
  %4144 = vmatpush1.msra.mxu0 %v1582
  %4145 = vmatprep.subr.mxu0 %v1585
  %4146 = vmatpush1.msra.mxu0 %v1584
  %4147 = vmatprep.subr.mxu0 %v1587
  %4148 = vmatpush1.msra.mxu0 %v1586
  %4149 = vmatprep.subr.mxu0 %v1589
  %4150 = vmatpush1.msra.mxu0 %v1588
  %4151 = vmatprep.subr.mxu0 %v1591
  %4152 = vmatpush1.msra.mxu0 %v1590
  %4153 = vmatprep.subr.mxu0 %v1593
  %4154 = vmatpush1.msra.mxu0 %v1592
  %4155 = vmatprep.mubr.f32.mxu0 %v2325
  %4156 = vmatmul.mubr.f32.gmra.mrb[0].mxu0 %v2323
  %v4157 = vpop.f32.mrb[0].mxu0
  %v4158 = vadd.f32 %v4087, %v4157
  %v4159 = vpop.f32.mrb[0].mxu0
  %v4160 = vadd.f32 %v4089, %v4159
  %4161 = vdwg.mxu0
  %4162 = vmatprep.subr.mxu0 %v1595
  %4163 = vmatpush1.msra.mxu0 %v1594
  %4164 = vmatprep.subr.mxu0 %v1597
  %4165 = vmatpush1.msra.mxu0 %v1596
  %4166 = vmatprep.subr.mxu0 %v1599
  %4167 = vmatpush1.msra.mxu0 %v1598
  %4168 = vmatprep.subr.mxu0 %v1601
  %4169 = vmatpush1.msra.mxu0 %v1600
  %4170 = vmatprep.subr.mxu0 %v1603
  %4171 = vmatpush1.msra.mxu0 %v1602
  %4172 = vmatprep.subr.mxu0 %v1605
  %4173 = vmatpush1.msra.mxu0 %v1604
  %4174 = vmatprep.subr.mxu0 %v1607
  %4175 = vmatpush1.msra.mxu0 %v1606
  %4176 = vmatprep.subr.mxu0 %v1609
  %4177 = vmatpush1.msra.mxu0 %v1608
  %4178 = vmatprep.subr.mxu0 %v1611
  %4179 = vmatpush1.msra.mxu0 %v1610
  %4180 = vmatprep.subr.mxu0 %v1613
  %4181 = vmatpush1.msra.mxu0 %v1612
  %4182 = vmatprep.subr.mxu0 %v1615
  %4183 = vmatpush1.msra.mxu0 %v1614
  %4184 = vmatprep.subr.mxu0 %v1617
  %4185 = vmatpush1.msra.mxu0 %v1616
  %4186 = vmatprep.subr.mxu0 %v1619
  %4187 = vmatpush1.msra.mxu0 %v1618
  %4188 = vmatprep.subr.mxu0 %v1621
  %4189 = vmatpush1.msra.mxu0 %v1620
  %4190 = vmatprep.subr.mxu0 %v1623
  %4191 = vmatpush1.msra.mxu0 %v1622
  %4192 = vmatprep.subr.mxu0 %v1625
  %4193 = vmatpush1.msra.mxu0 %v1624
  %4194 = vmatprep.subr.mxu0 %v1627
  %4195 = vmatpush1.msra.mxu0 %v1626
  %4196 = vmatprep.subr.mxu0 %v1629
  %4197 = vmatpush1.msra.mxu0 %v1628
  %4198 = vmatprep.subr.mxu0 %v1631
  %4199 = vmatpush1.msra.mxu0 %v1630
  %4200 = vmatprep.subr.mxu0 %v1633
  %4201 = vmatpush1.msra.mxu0 %v1632
  %4202 = vmatprep.subr.mxu0 %v1635
  %4203 = vmatpush1.msra.mxu0 %v1634
  %4204 = vmatprep.subr.mxu0 %v1637
  %4205 = vmatpush1.msra.mxu0 %v1636
  %4206 = vmatprep.subr.mxu0 %v1639
  %4207 = vmatpush1.msra.mxu0 %v1638
  %4208 = vmatprep.subr.mxu0 %v1641
  %4209 = vmatpush1.msra.mxu0 %v1640
  %4210 = vmatprep.subr.mxu0 %v1643
  %4211 = vmatpush1.msra.mxu0 %v1642
  %4212 = vmatprep.subr.mxu0 %v1645
  %4213 = vmatpush1.msra.mxu0 %v1644
  %4214 = vmatprep.subr.mxu0 %v1647
  %4215 = vmatpush1.msra.mxu0 %v1646
  %4216 = vmatprep.subr.mxu0 %v1649
  %4217 = vmatpush1.msra.mxu0 %v1648
  %4218 = vmatprep.subr.mxu0 %v1651
  %4219 = vmatpush1.msra.mxu0 %v1650
  %4220 = vmatprep.subr.mxu0 %v1653
  %4221 = vmatpush1.msra.mxu0 %v1652
  %4222 = vmatprep.subr.mxu0 %v1655
  %4223 = vmatpush1.msra.mxu0 %v1654
  %4224 = vmatprep.subr.mxu0 %v1657
  %4225 = vmatpush1.msra.mxu0 %v1656
  %4226 = vmatprep.mubr.f32.mxu0 %v2341
  %4227 = vmatmul.mubr.f32.gmra.mrb[0].mxu0 %v2333
  %v4228 = vpop.f32.mrb[0].mxu0
  %v4229 = vadd.f32 %v4158, %v4228
  %v4230 = vpop.f32.mrb[0].mxu0
  %v4231 = vadd.f32 %v4160, %v4230
  %4232 = vdwg.mxu0
  %4233 = vmatprep.subr.mxu0 %v1659
  %4234 = vmatpush1.msra.mxu0 %v1658
  %4235 = vmatprep.subr.mxu0 %v1661
  %4236 = vmatpush1.msra.mxu0 %v1660
  %4237 = vmatprep.subr.mxu0 %v1663
  %4238 = vmatpush1.msra.mxu0 %v1662
  %4239 = vmatprep.subr.mxu0 %v1665
  %4240 = vmatpush1.msra.mxu0 %v1664
  %4241 = vmatprep.subr.mxu0 %v1667
  %4242 = vmatpush1.msra.mxu0 %v1666
  %4243 = vmatprep.subr.mxu0 %v1669
  %4244 = vmatpush1.msra.mxu0 %v1668
  %4245 = vmatprep.subr.mxu0 %v1671
  %4246 = vmatpush1.msra.mxu0 %v1670
  %4247 = vmatprep.subr.mxu0 %v1673
  %4248 = vmatpush1.msra.mxu0 %v1672
  %4249 = vmatprep.subr.mxu0 %v1675
  %4250 = vmatpush1.msra.mxu0 %v1674
  %4251 = vmatprep.subr.mxu0 %v1677
  %4252 = vmatpush1.msra.mxu0 %v1676
  %4253 = vmatprep.subr.mxu0 %v1679
  %4254 = vmatpush1.msra.mxu0 %v1678
  %4255 = vmatprep.subr.mxu0 %v1681
  %4256 = vmatpush1.msra.mxu0 %v1680
  %4257 = vmatprep.subr.mxu0 %v1683
  %4258 = vmatpush1.msra.mxu0 %v1682
  %4259 = vmatprep.subr.mxu0 %v1685
  %4260 = vmatpush1.msra.mxu0 %v1684
  %4261 = vmatprep.subr.mxu0 %v1687
  %4262 = vmatpush1.msra.mxu0 %v1686
  %4263 = vmatprep.subr.mxu0 %v1689
  %4264 = vmatpush1.msra.mxu0 %v1688
  %4265 = vmatprep.subr.mxu0 %v1691
  %4266 = vmatpush1.msra.mxu0 %v1690
  %4267 = vmatprep.subr.mxu0 %v1693
  %4268 = vmatpush1.msra.mxu0 %v1692
  %4269 = vmatprep.subr.mxu0 %v1695
  %4270 = vmatpush1.msra.mxu0 %v1694
  %4271 = vmatprep.subr.mxu0 %v1697
  %4272 = vmatpush1.msra.mxu0 %v1696
  %4273 = vmatprep.subr.mxu0 %v1699
  %4274 = vmatpush1.msra.mxu0 %v1698
  %4275 = vmatprep.subr.mxu0 %v1701
  %4276 = vmatpush1.msra.mxu0 %v1700
  %4277 = vmatprep.subr.mxu0 %v1703
  %4278 = vmatpush1.msra.mxu0 %v1702
  %4279 = vmatprep.subr.mxu0 %v1705
  %4280 = vmatpush1.msra.mxu0 %v1704
  %4281 = vmatprep.subr.mxu0 %v1707
  %4282 = vmatpush1.msra.mxu0 %v1706
  %4283 = vmatprep.subr.mxu0 %v1709
  %4284 = vmatpush1.msra.mxu0 %v1708
  %4285 = vmatprep.subr.mxu0 %v1711
  %4286 = vmatpush1.msra.mxu0 %v1710
  %4287 = vmatprep.subr.mxu0 %v1713
  %4288 = vmatpush1.msra.mxu0 %v1712
  %4289 = vmatprep.subr.mxu0 %v1715
  %4290 = vmatpush1.msra.mxu0 %v1714
  %4291 = vmatprep.subr.mxu0 %v1717
  %4292 = vmatpush1.msra.mxu0 %v1716
  %4293 = vmatprep.subr.mxu0 %v1719
  %4294 = vmatpush1.msra.mxu0 %v1718
  %4295 = vmatprep.subr.mxu0 %v1721
  %4296 = vmatpush1.msra.mxu0 %v1720
  %4297 = vmatprep.mubr.f32.mxu0 %v2342
  %4298 = vmatmul.mubr.f32.gmra.mrb[0].mxu0 %v2340
  %v4299 = vpop.f32.mrb[0].mxu0
  %v4300 = vadd.f32 %v4229, %v4299
  %v4301 = vpop.f32.mrb[0].mxu0
  %v4302 = vadd.f32 %v4231, %v4301
  %4303 = vdwg.mxu0
  %4304 = vmatprep.subr.mxu0 %v1723
  %4305 = vmatpush1.msra.mxu0 %v1722
  %4306 = vmatprep.subr.mxu0 %v1725
  %4307 = vmatpush1.msra.mxu0 %v1724
  %4308 = vmatprep.subr.mxu0 %v1727
  %4309 = vmatpush1.msra.mxu0 %v1726
  %4310 = vmatprep.subr.mxu0 %v1729
  %4311 = vmatpush1.msra.mxu0 %v1728
  %4312 = vmatprep.subr.mxu0 %v1731
  %4313 = vmatpush1.msra.mxu0 %v1730
  %4314 = vmatprep.subr.mxu0 %v1733
  %4315 = vmatpush1.msra.mxu0 %v1732
  %4316 = vmatprep.subr.mxu0 %v1735
  %4317 = vmatpush1.msra.mxu0 %v1734
  %4318 = vmatprep.subr.mxu0 %v1737
  %4319 = vmatpush1.msra.mxu0 %v1736
  %4320 = vmatprep.subr.mxu0 %v1739
  %4321 = vmatpush1.msra.mxu0 %v1738
  %4322 = vmatprep.subr.mxu0 %v1741
  %4323 = vmatpush1.msra.mxu0 %v1740
  %4324 = vmatprep.subr.mxu0 %v1743
  %4325 = vmatpush1.msra.mxu0 %v1742
  %4326 = vmatprep.subr.mxu0 %v1745
  %4327 = vmatpush1.msra.mxu0 %v1744
  %4328 = vmatprep.subr.mxu0 %v1747
  %4329 = vmatpush1.msra.mxu0 %v1746
  %4330 = vmatprep.subr.mxu0 %v1749
  %4331 = vmatpush1.msra.mxu0 %v1748
  %4332 = vmatprep.subr.mxu0 %v1751
  %4333 = vmatpush1.msra.mxu0 %v1750
  %4334 = vmatprep.subr.mxu0 %v1753
  %4335 = vmatpush1.msra.mxu0 %v1752
  %4336 = vmatprep.subr.mxu0 %v1755
  %4337 = vmatpush1.msra.mxu0 %v1754
  %4338 = vmatprep.subr.mxu0 %v1757
  %4339 = vmatpush1.msra.mxu0 %v1756
  %4340 = vmatprep.subr.mxu0 %v1759
  %4341 = vmatpush1.msra.mxu0 %v1758
  %4342 = vmatprep.subr.mxu0 %v1761
  %4343 = vmatpush1.msra.mxu0 %v1760
  %4344 = vmatprep.subr.mxu0 %v1763
  %4345 = vmatpush1.msra.mxu0 %v1762
  %4346 = vmatprep.subr.mxu0 %v1765
  %4347 = vmatpush1.msra.mxu0 %v1764
  %4348 = vmatprep.subr.mxu0 %v1767
  %4349 = vmatpush1.msra.mxu0 %v1766
  %4350 = vmatprep.subr.mxu0 %v1769
  %4351 = vmatpush1.msra.mxu0 %v1768
  %4352 = vmatprep.subr.mxu0 %v1771
  %4353 = vmatpush1.msra.mxu0 %v1770
  %4354 = vmatprep.subr.mxu0 %v1773
  %4355 = vmatpush1.msra.mxu0 %v1772
  %4356 = vmatprep.subr.mxu0 %v1775
  %4357 = vmatpush1.msra.mxu0 %v1774
  %4358 = vmatprep.subr.mxu0 %v1777
  %4359 = vmatpush1.msra.mxu0 %v1776
  %4360 = vmatprep.subr.mxu0 %v1779
  %4361 = vmatpush1.msra.mxu0 %v1778
  %4362 = vmatprep.subr.mxu0 %v1781
  %4363 = vmatpush1.msra.mxu0 %v1780
  %4364 = vmatprep.subr.mxu0 %v1783
  %4365 = vmatpush1.msra.mxu0 %v1782
  %4366 = vmatprep.subr.mxu0 %v1785
  %4367 = vmatpush1.msra.mxu0 %v1784
  %4368 = vmatprep.mubr.f32.mxu0 %v2358
  %4369 = vmatmul.mubr.f32.gmra.mrb[0].mxu0 %v2350
  %v4370 = vpop.f32.mrb[0].mxu0
  %v4371 = vadd.f32 %v4300, %v4370
  %v4372 = vpop.f32.mrb[0].mxu0
  %v4373 = vadd.f32 %v4302, %v4372
  %4374 = vdwg.mxu0
  %4375 = vmatprep.subr.mxu0 %v1787
  %4376 = vmatpush1.msra.mxu0 %v1786
  %4377 = vmatprep.subr.mxu0 %v1789
  %4378 = vmatpush1.msra.mxu0 %v1788
  %4379 = vmatprep.subr.mxu0 %v1791
  %4380 = vmatpush1.msra.mxu0 %v1790
  %4381 = vmatprep.subr.mxu0 %v1793
  %4382 = vmatpush1.msra.mxu0 %v1792
  %4383 = vmatprep.subr.mxu0 %v1795
  %4384 = vmatpush1.msra.mxu0 %v1794
  %4385 = vmatprep.subr.mxu0 %v1797
  %4386 = vmatpush1.msra.mxu0 %v1796
  %4387 = vmatprep.subr.mxu0 %v1799
  %4388 = vmatpush1.msra.mxu0 %v1798
  %4389 = vmatprep.subr.mxu0 %v1801
  %4390 = vmatpush1.msra.mxu0 %v1800
  %4391 = vmatprep.subr.mxu0 %v1803
  %4392 = vmatpush1.msra.mxu0 %v1802
  %4393 = vmatprep.subr.mxu0 %v1805
  %4394 = vmatpush1.msra.mxu0 %v1804
  %4395 = vmatprep.subr.mxu0 %v1807
  %4396 = vmatpush1.msra.mxu0 %v1806
  %4397 = vmatprep.subr.mxu0 %v1809
  %4398 = vmatpush1.msra.mxu0 %v1808
  %4399 = vmatprep.subr.mxu0 %v1811
  %4400 = vmatpush1.msra.mxu0 %v1810
  %4401 = vmatprep.subr.mxu0 %v1813
  %4402 = vmatpush1.msra.mxu0 %v1812
  %4403 = vmatprep.subr.mxu0 %v1815
  %4404 = vmatpush1.msra.mxu0 %v1814
  %4405 = vmatprep.subr.mxu0 %v1817
  %4406 = vmatpush1.msra.mxu0 %v1816
  %4407 = vmatprep.subr.mxu0 %v1819
  %4408 = vmatpush1.msra.mxu0 %v1818
  %4409 = vmatprep.subr.mxu0 %v1821
  %4410 = vmatpush1.msra.mxu0 %v1820
  %4411 = vmatprep.subr.mxu0 %v1823
  %4412 = vmatpush1.msra.mxu0 %v1822
  %4413 = vmatprep.subr.mxu0 %v1825
  %4414 = vmatpush1.msra.mxu0 %v1824
  %4415 = vmatprep.subr.mxu0 %v1827
  %4416 = vmatpush1.msra.mxu0 %v1826
  %4417 = vmatprep.subr.mxu0 %v1829
  %4418 = vmatpush1.msra.mxu0 %v1828
  %4419 = vmatprep.subr.mxu0 %v1831
  %4420 = vmatpush1.msra.mxu0 %v1830
  %4421 = vmatprep.subr.mxu0 %v1833
  %4422 = vmatpush1.msra.mxu0 %v1832
  %4423 = vmatprep.subr.mxu0 %v1835
  %4424 = vmatpush1.msra.mxu0 %v1834
  %4425 = vmatprep.subr.mxu0 %v1837
  %4426 = vmatpush1.msra.mxu0 %v1836
  %4427 = vmatprep.subr.mxu0 %v1839
  %4428 = vmatpush1.msra.mxu0 %v1838
  %4429 = vmatprep.subr.mxu0 %v1841
  %4430 = vmatpush1.msra.mxu0 %v1840
  %4431 = vmatprep.subr.mxu0 %v1843
  %4432 = vmatpush1.msra.mxu0 %v1842
  %4433 = vmatprep.subr.mxu0 %v1845
  %4434 = vmatpush1.msra.mxu0 %v1844
  %4435 = vmatprep.subr.mxu0 %v1847
  %4436 = vmatpush1.msra.mxu0 %v1846
  %4437 = vmatprep.subr.mxu0 %v1849
  %4438 = vmatpush1.msra.mxu0 %v1848
  %4439 = vmatprep.mubr.f32.mxu0 %v2359
  %4440 = vmatmul.mubr.f32.gmra.mrb[0].mxu0 %v2357
  %v4441 = vpop.f32.mrb[0].mxu0
  %v4442 = vadd.f32 %v4371, %v4441
  %v4443 = vpop.f32.mrb[0].mxu0
  %v4444 = vadd.f32 %v4373, %v4443
  %4445 = vdwg.mxu0
  %4446 = vmatprep.subr.mxu0 %v1851
  %4447 = vmatpush1.msra.mxu0 %v1850
  %4448 = vmatprep.subr.mxu0 %v1853
  %4449 = vmatpush1.msra.mxu0 %v1852
  %4450 = vmatprep.subr.mxu0 %v1855
  %4451 = vmatpush1.msra.mxu0 %v1854
  %4452 = vmatprep.subr.mxu0 %v1857
  %4453 = vmatpush1.msra.mxu0 %v1856
  %4454 = vmatprep.subr.mxu0 %v1859
  %4455 = vmatpush1.msra.mxu0 %v1858
  %4456 = vmatprep.subr.mxu0 %v1861
  %4457 = vmatpush1.msra.mxu0 %v1860
  %4458 = vmatprep.subr.mxu0 %v1863
  %4459 = vmatpush1.msra.mxu0 %v1862
  %4460 = vmatprep.subr.mxu0 %v1865
  %4461 = vmatpush1.msra.mxu0 %v1864
  %4462 = vmatprep.subr.mxu0 %v1867
  %4463 = vmatpush1.msra.mxu0 %v1866
  %4464 = vmatprep.subr.mxu0 %v1869
  %4465 = vmatpush1.msra.mxu0 %v1868
  %4466 = vmatprep.subr.mxu0 %v1871
  %4467 = vmatpush1.msra.mxu0 %v1870
  %4468 = vmatprep.subr.mxu0 %v1873
  %4469 = vmatpush1.msra.mxu0 %v1872
  %4470 = vmatprep.subr.mxu0 %v1875
  %4471 = vmatpush1.msra.mxu0 %v1874
  %4472 = vmatprep.subr.mxu0 %v1877
  %4473 = vmatpush1.msra.mxu0 %v1876
  %4474 = vmatprep.subr.mxu0 %v1879
  %4475 = vmatpush1.msra.mxu0 %v1878
  %4476 = vmatprep.subr.mxu0 %v1881
  %4477 = vmatpush1.msra.mxu0 %v1880
  %4478 = vmatprep.subr.mxu0 %v1883
  %4479 = vmatpush1.msra.mxu0 %v1882
  %4480 = vmatprep.subr.mxu0 %v1885
  %4481 = vmatpush1.msra.mxu0 %v1884
  %4482 = vmatprep.subr.mxu0 %v1887
  %4483 = vmatpush1.msra.mxu0 %v1886
  %4484 = vmatprep.subr.mxu0 %v1889
  %4485 = vmatpush1.msra.mxu0 %v1888
  %4486 = vmatprep.subr.mxu0 %v1891
  %4487 = vmatpush1.msra.mxu0 %v1890
  %4488 = vmatprep.subr.mxu0 %v1893
  %4489 = vmatpush1.msra.mxu0 %v1892
  %4490 = vmatprep.subr.mxu0 %v1895
  %4491 = vmatpush1.msra.mxu0 %v1894
  %4492 = vmatprep.subr.mxu0 %v1897
  %4493 = vmatpush1.msra.mxu0 %v1896
  %4494 = vmatprep.subr.mxu0 %v1899
  %4495 = vmatpush1.msra.mxu0 %v1898
  %4496 = vmatprep.subr.mxu0 %v1901
  %4497 = vmatpush1.msra.mxu0 %v1900
  %4498 = vmatprep.subr.mxu0 %v1903
  %4499 = vmatpush1.msra.mxu0 %v1902
  %4500 = vmatprep.subr.mxu0 %v1905
  %4501 = vmatpush1.msra.mxu0 %v1904
  %4502 = vmatprep.subr.mxu0 %v1907
  %4503 = vmatpush1.msra.mxu0 %v1906
  %4504 = vmatprep.subr.mxu0 %v1909
  %4505 = vmatpush1.msra.mxu0 %v1908
  %4506 = vmatprep.subr.mxu0 %v1911
  %4507 = vmatpush1.msra.mxu0 %v1910
  %4508 = vmatprep.subr.mxu0 %v1913
  %4509 = vmatpush1.msra.mxu0 %v1912
  %4510 = vmatprep.mubr.f32.mxu0 %v2375
  %4511 = vmatmul.mubr.f32.gmra.mrb[0].mxu0 %v2367
  %v4512 = vpop.f32.mrb[0].mxu0
  %v4513 = vadd.f32 %v4442, %v4512
  %v4514 = vpop.f32.mrb[0].mxu0
  %v4515 = vadd.f32 %v4444, %v4514
  %4516 = vdwg.mxu0
  %4517 = vmatprep.subr.mxu0 %v1915
  %4518 = vmatpush1.msra.mxu0 %v1914
  %4519 = vmatprep.subr.mxu0 %v1917
  %4520 = vmatpush1.msra.mxu0 %v1916
  %4521 = vmatprep.subr.mxu0 %v1919
  %4522 = vmatpush1.msra.mxu0 %v1918
  %4523 = vmatprep.subr.mxu0 %v1921
  %4524 = vmatpush1.msra.mxu0 %v1920
  %4525 = vmatprep.subr.mxu0 %v1923
  %4526 = vmatpush1.msra.mxu0 %v1922
  %4527 = vmatprep.subr.mxu0 %v1925
  %4528 = vmatpush1.msra.mxu0 %v1924
  %4529 = vmatprep.subr.mxu0 %v1927
  %4530 = vmatpush1.msra.mxu0 %v1926
  %4531 = vmatprep.subr.mxu0 %v1929
  %4532 = vmatpush1.msra.mxu0 %v1928
  %4533 = vmatprep.subr.mxu0 %v1931
  %4534 = vmatpush1.msra.mxu0 %v1930
  %4535 = vmatprep.subr.mxu0 %v1933
  %4536 = vmatpush1.msra.mxu0 %v1932
  %4537 = vmatprep.subr.mxu0 %v1935
  %4538 = vmatpush1.msra.mxu0 %v1934
  %4539 = vmatprep.subr.mxu0 %v1937
  %4540 = vmatpush1.msra.mxu0 %v1936
  %4541 = vmatprep.subr.mxu0 %v1939
  %4542 = vmatpush1.msra.mxu0 %v1938
  %4543 = vmatprep.subr.mxu0 %v1941
  %4544 = vmatpush1.msra.mxu0 %v1940
  %4545 = vmatprep.subr.mxu0 %v1943
  %4546 = vmatpush1.msra.mxu0 %v1942
  %4547 = vmatprep.subr.mxu0 %v1945
  %4548 = vmatpush1.msra.mxu0 %v1944
  %4549 = vmatprep.subr.mxu0 %v1947
  %4550 = vmatpush1.msra.mxu0 %v1946
  %4551 = vmatprep.subr.mxu0 %v1949
  %4552 = vmatpush1.msra.mxu0 %v1948
  %4553 = vmatprep.subr.mxu0 %v1951
  %4554 = vmatpush1.msra.mxu0 %v1950
  %4555 = vmatprep.subr.mxu0 %v1953
  %4556 = vmatpush1.msra.mxu0 %v1952
  %4557 = vmatprep.subr.mxu0 %v1955
  %4558 = vmatpush1.msra.mxu0 %v1954
  %4559 = vmatprep.subr.mxu0 %v1957
  %4560 = vmatpush1.msra.mxu0 %v1956
  %4561 = vmatprep.subr.mxu0 %v1959
  %4562 = vmatpush1.msra.mxu0 %v1958
  %4563 = vmatprep.subr.mxu0 %v1961
  %4564 = vmatpush1.msra.mxu0 %v1960
  %4565 = vmatprep.subr.mxu0 %v1963
  %4566 = vmatpush1.msra.mxu0 %v1962
  %4567 = vmatprep.subr.mxu0 %v1965
  %4568 = vmatpush1.msra.mxu0 %v1964
  %4569 = vmatprep.subr.mxu0 %v1967
  %4570 = vmatpush1.msra.mxu0 %v1966
  %4571 = vmatprep.subr.mxu0 %v1969
  %4572 = vmatpush1.msra.mxu0 %v1968
  %4573 = vmatprep.subr.mxu0 %v1971
  %4574 = vmatpush1.msra.mxu0 %v1970
  %4575 = vmatprep.subr.mxu0 %v1973
  %4576 = vmatpush1.msra.mxu0 %v1972
  %4577 = vmatprep.subr.mxu0 %v1975
  %4578 = vmatpush1.msra.mxu0 %v1974
  %4579 = vmatprep.subr.mxu0 %v1977
  %4580 = vmatpush1.msra.mxu0 %v1976
  %4581 = vmatprep.mubr.f32.mxu0 %v2376
  %4582 = vmatmul.mubr.f32.gmra.mrb[0].mxu0 %v2374
  %v4583 = vpop.f32.mrb[0].mxu0
  %v4584 = vadd.f32 %v4513, %v4583
  %v4585 = vpop.f32.mrb[0].mxu0
  %v4586 = vadd.f32 %v4515, %v4585
  %4587 = vdwg.mxu0
  %4588 = vmatprep.subr.mxu0 %v1979
  %4589 = vmatpush1.msra.mxu0 %v1978
  %4590 = vmatprep.subr.mxu0 %v1981
  %4591 = vmatpush1.msra.mxu0 %v1980
  %4592 = vmatprep.subr.mxu0 %v1983
  %4593 = vmatpush1.msra.mxu0 %v1982
  %4594 = vmatprep.subr.mxu0 %v1985
  %4595 = vmatpush1.msra.mxu0 %v1984
  %4596 = vmatprep.subr.mxu0 %v1987
  %4597 = vmatpush1.msra.mxu0 %v1986
  %4598 = vmatprep.subr.mxu0 %v1989
  %4599 = vmatpush1.msra.mxu0 %v1988
  %4600 = vmatprep.subr.mxu0 %v1991
  %4601 = vmatpush1.msra.mxu0 %v1990
  %4602 = vmatprep.subr.mxu0 %v1993
  %4603 = vmatpush1.msra.mxu0 %v1992
  %4604 = vmatprep.subr.mxu0 %v1995
  %4605 = vmatpush1.msra.mxu0 %v1994
  %4606 = vmatprep.subr.mxu0 %v1997
  %4607 = vmatpush1.msra.mxu0 %v1996
  %4608 = vmatprep.subr.mxu0 %v1999
  %4609 = vmatpush1.msra.mxu0 %v1998
  %4610 = vmatprep.subr.mxu0 %v2001
  %4611 = vmatpush1.msra.mxu0 %v2000
  %4612 = vmatprep.subr.mxu0 %v2003
  %4613 = vmatpush1.msra.mxu0 %v2002
  %4614 = vmatprep.subr.mxu0 %v2005
  %4615 = vmatpush1.msra.mxu0 %v2004
  %4616 = vmatprep.subr.mxu0 %v2007
  %4617 = vmatpush1.msra.mxu0 %v2006
  %4618 = vmatprep.subr.mxu0 %v2009
  %4619 = vmatpush1.msra.mxu0 %v2008
  %4620 = vmatprep.subr.mxu0 %v2011
  %4621 = vmatpush1.msra.mxu0 %v2010
  %4622 = vmatprep.subr.mxu0 %v2013
  %4623 = vmatpush1.msra.mxu0 %v2012
  %4624 = vmatprep.subr.mxu0 %v2015
  %4625 = vmatpush1.msra.mxu0 %v2014
  %4626 = vmatprep.subr.mxu0 %v2017
  %4627 = vmatpush1.msra.mxu0 %v2016
  %4628 = vmatprep.subr.mxu0 %v2019
  %4629 = vmatpush1.msra.mxu0 %v2018
  %4630 = vmatprep.subr.mxu0 %v2021
  %4631 = vmatpush1.msra.mxu0 %v2020
  %4632 = vmatprep.subr.mxu0 %v2023
  %4633 = vmatpush1.msra.mxu0 %v2022
  %4634 = vmatprep.subr.mxu0 %v2025
  %4635 = vmatpush1.msra.mxu0 %v2024
  %4636 = vmatprep.subr.mxu0 %v2027
  %4637 = vmatpush1.msra.mxu0 %v2026
  %4638 = vmatprep.subr.mxu0 %v2029
  %4639 = vmatpush1.msra.mxu0 %v2028
  %4640 = vmatprep.subr.mxu0 %v2031
  %4641 = vmatpush1.msra.mxu0 %v2030
  %4642 = vmatprep.subr.mxu0 %v2033
  %4643 = vmatpush1.msra.mxu0 %v2032
  %4644 = vmatprep.subr.mxu0 %v2035
  %4645 = vmatpush1.msra.mxu0 %v2034
  %4646 = vmatprep.subr.mxu0 %v2037
  %4647 = vmatpush1.msra.mxu0 %v2036
  %4648 = vmatprep.subr.mxu0 %v2039
  %4649 = vmatpush1.msra.mxu0 %v2038
  %4650 = vmatprep.subr.mxu0 %v2041
  %4651 = vmatpush1.msra.mxu0 %v2040
  %4652 = vmatprep.mubr.f32.mxu0 %v2392
  %4653 = vmatmul.mubr.f32.gmra.mrb[0].mxu0 %v2384
  %v4654 = vpop.f32.mrb[0].mxu0
  %v4655 = vadd.f32 %v4584, %v4654
  %v4656 = vpop.f32.mrb[0].mxu0
  %v4657 = vadd.f32 %v4586, %v4656
  %4658 = vdwg.mxu0
  %4659 = vmatprep.subr.mxu0 %v2043
  %4660 = vmatpush1.msra.mxu0 %v2042
  %4661 = vmatprep.subr.mxu0 %v2045
  %4662 = vmatpush1.msra.mxu0 %v2044
  %4663 = vmatprep.subr.mxu0 %v2047
  %4664 = vmatpush1.msra.mxu0 %v2046
  %4665 = vmatprep.subr.mxu0 %v2049
  %4666 = vmatpush1.msra.mxu0 %v2048
  %4667 = vmatprep.subr.mxu0 %v2051
  %4668 = vmatpush1.msra.mxu0 %v2050
  %4669 = vmatprep.subr.mxu0 %v2053
  %4670 = vmatpush1.msra.mxu0 %v2052
  %4671 = vmatprep.subr.mxu0 %v2055
  %4672 = vmatpush1.msra.mxu0 %v2054
  %4673 = vmatprep.subr.mxu0 %v2057
  %4674 = vmatpush1.msra.mxu0 %v2056
  %4675 = vmatprep.subr.mxu0 %v2059
  %4676 = vmatpush1.msra.mxu0 %v2058
  %4677 = vmatprep.subr.mxu0 %v2061
  %4678 = vmatpush1.msra.mxu0 %v2060
  %4679 = vmatprep.subr.mxu0 %v2063
  %4680 = vmatpush1.msra.mxu0 %v2062
  %4681 = vmatprep.subr.mxu0 %v2065
  %4682 = vmatpush1.msra.mxu0 %v2064
  %4683 = vmatprep.subr.mxu0 %v2067
  %4684 = vmatpush1.msra.mxu0 %v2066
  %4685 = vmatprep.subr.mxu0 %v2069
  %4686 = vmatpush1.msra.mxu0 %v2068
  %4687 = vmatprep.subr.mxu0 %v2071
  %4688 = vmatpush1.msra.mxu0 %v2070
  %4689 = vmatprep.subr.mxu0 %v2073
  %4690 = vmatpush1.msra.mxu0 %v2072
  %4691 = vmatprep.subr.mxu0 %v2075
  %4692 = vmatpush1.msra.mxu0 %v2074
  %4693 = vmatprep.subr.mxu0 %v2077
  %4694 = vmatpush1.msra.mxu0 %v2076
  %4695 = vmatprep.subr.mxu0 %v2079
  %4696 = vmatpush1.msra.mxu0 %v2078
  %4697 = vmatprep.subr.mxu0 %v2081
  %4698 = vmatpush1.msra.mxu0 %v2080
  %4699 = vmatprep.subr.mxu0 %v2083
  %4700 = vmatpush1.msra.mxu0 %v2082
  %4701 = vmatprep.subr.mxu0 %v2085
  %4702 = vmatpush1.msra.mxu0 %v2084
  %4703 = vmatprep.subr.mxu0 %v2087
  %4704 = vmatpush1.msra.mxu0 %v2086
  %4705 = vmatprep.subr.mxu0 %v2089
  %4706 = vmatpush1.msra.mxu0 %v2088
  %4707 = vmatprep.subr.mxu0 %v2091
  %4708 = vmatpush1.msra.mxu0 %v2090
  %4709 = vmatprep.subr.mxu0 %v2093
  %4710 = vmatpush1.msra.mxu0 %v2092
  %4711 = vmatprep.subr.mxu0 %v2095
  %4712 = vmatpush1.msra.mxu0 %v2094
  %4713 = vmatprep.subr.mxu0 %v2097
  %4714 = vmatpush1.msra.mxu0 %v2096
  %4715 = vmatprep.subr.mxu0 %v2099
  %4716 = vmatpush1.msra.mxu0 %v2098
  %4717 = vmatprep.subr.mxu0 %v2101
  %4718 = vmatpush1.msra.mxu0 %v2100
  %4719 = vmatprep.subr.mxu0 %v2103
  %4720 = vmatpush1.msra.mxu0 %v2102
  %4721 = vmatprep.subr.mxu0 %v2105
  %4722 = vmatpush1.msra.mxu0 %v2104
  %4723 = vmatprep.mubr.f32.mxu0 %v2393
  %4724 = vmatmul.mubr.f32.gmra.mrb[0].mxu0 %v2391
  %v4725 = vpop.f32.mrb[0].mxu0
  %v4726 = vadd.f32 %v4655, %v4725
  %v4727 = vpop.f32.mrb[0].mxu0
  %v4728 = vadd.f32 %v4657, %v4727
  %4729 = vdwg.mxu0
  %v4730 = vld [vmem:[%s2] sm:$0x3]
  %v4732 = vlaneseq
  %v4733 = vshrl.u32 %v4732, 7
  %v4734 = vsub.s32 0, %v4733
  %v4735 = vrot.slane %v4730, %v4734
  %v4736 = vlaneseq
  %v4737 = vshrl.u32 %v4736, 7
  %v4738 = vsub.s32 1, %v4737
  %v4739 = vrot.slane %v4730, %v4738
  %v4742 = vmul.f32 %v4726, %v4735
  %v4743 = vmul.f32 %v4728, %v4739
  %v4744 = vld [vmem:[%s3] sm:$0x3]
  %v4746 = vlaneseq
  %v4747 = vshrl.u32 %v4746, 7
  %v4748 = vsub.s32 0, %v4747
  %v4749 = vrot.slane %v4744, %v4748
  %v4750 = vlaneseq
  %v4751 = vshrl.u32 %v4750, 7
  %v4752 = vsub.s32 1, %v4751
  %v4753 = vrot.slane %v4744, %v4752
  %v4756 = vadd.f32 %v4742, %v4749
  %v4757 = vadd.f32 %v4743, %v4753
  %v4758 = vmax.f32 %v4756, 0.0
  %v4759 = vmax.f32 %v4757, 0.0
  %v4760 = vld [vmem:[%s5] sm:$0xff]
  %v4761 = vld [vmem:[%s5 + $0x8] sm:$0xff]
  %v4762 = vld [vmem:[%s5 + $0x10] sm:$0xff]
  %v4763 = vld [vmem:[%s5 + $0x18] sm:$0xff]
  %v4764 = vld [vmem:[%s5 + $0x20] sm:$0xff]
  %v4765 = vld [vmem:[%s5 + $0x28] sm:$0xff]
  %v4766 = vld [vmem:[%s5 + $0x30] sm:$0xff]
  %v4767 = vld [vmem:[%s5 + $0x38] sm:$0xff]
  %v4768 = vld [vmem:[%s5 + $0x40] sm:$0xff]
  %v4769 = vld [vmem:[%s5 + $0x48] sm:$0xff]
  %v4770 = vld [vmem:[%s5 + $0x50] sm:$0xff]
  %v4771 = vld [vmem:[%s5 + $0x58] sm:$0xff]
  %v4772 = vld [vmem:[%s5 + $0x60] sm:$0xff]
  %v4773 = vld [vmem:[%s5 + $0x68] sm:$0xff]
  %v4774 = vld [vmem:[%s5 + $0x70] sm:$0xff]
  %v4775 = vld [vmem:[%s5 + $0x78] sm:$0xff]
  %v4776 = vld [vmem:[%s5 + $0x80] sm:$0xff]
  %v4777 = vld [vmem:[%s5 + $0x88] sm:$0xff]
  %v4778 = vld [vmem:[%s5 + $0x90] sm:$0xff]
  %v4779 = vld [vmem:[%s5 + $0x98] sm:$0xff]
  %v4780 = vld [vmem:[%s5 + $0xa0] sm:$0xff]
  %v4781 = vld [vmem:[%s5 + $0xa8] sm:$0xff]
  %v4782 = vld [vmem:[%s5 + $0xb0] sm:$0xff]
  %v4783 = vld [vmem:[%s5 + $0xb8] sm:$0xff]
  %v4784 = vld [vmem:[%s6] sm:$0x1]
  %v4786 = vlaneseq
  %v4787 = vshrl.u32 %v4786, 7
  %v4788 = vsub.s32 0, %v4787
  %v4789 = vrot.slane %v4784, %v4788
  %vm4791 = vcmask 523264
  %v4793 = vsel %vm4791, %v4759, 0
  %4795 = vmatprep.subr.mxu0 0.0
  %4796 = vmatpush1.msra.mxu0 %v4760
  %4797 = vmatprep.subr.mxu0 0.0
  %4798 = vmatpush1.msra.mxu0 %v4761
  %4799 = vmatprep.subr.mxu0 0.0
  %4800 = vmatpush1.msra.mxu0 %v4762
  %4801 = vmatprep.subr.mxu0 0.0
  %4802 = vmatpush1.msra.mxu0 %v4763
  %4803 = vmatprep.subr.mxu0 0.0
  %4804 = vmatpush1.msra.mxu0 %v4764
  %4805 = vmatprep.subr.mxu0 0.0
  %4806 = vmatpush1.msra.mxu0 %v4765
  %4807 = vmatprep.subr.mxu0 0.0
  %4808 = vmatpush1.msra.mxu0 %v4766
  %4809 = vmatprep.subr.mxu0 0.0
  %4810 = vmatpush1.msra.mxu0 %v4767
  %4811 = vmatprep.subr.mxu0 0.0
  %4812 = vmatpush1.msra.mxu0 %v4768
  %4813 = vmatprep.subr.mxu0 0.0
  %4814 = vmatpush1.msra.mxu0 %v4769
  %4815 = vmatprep.subr.mxu0 0.0
  %4816 = vmatpush1.msra.mxu0 %v4770
  %4817 = vmatprep.subr.mxu0 0.0
  %4818 = vmatpush1.msra.mxu0 %v4771
  %4819 = vmatprep.subr.mxu0 0.0
  %4820 = vmatpush1.msra.mxu0 %v4772
  %4821 = vmatprep.subr.mxu0 0.0
  %4822 = vmatpush1.msra.mxu0 %v4773
  %4823 = vmatprep.subr.mxu0 0.0
  %4824 = vmatpush1.msra.mxu0 %v4774
  %4825 = vmatprep.subr.mxu0 0.0
  %4826 = vmatpush1.msra.mxu0 %v4775
  %4827 = vmatprep.subr.mxu0 0.0
  %4828 = vmatpush1.msra.mxu0 %v4776
  %4829 = vmatprep.subr.mxu0 0.0
  %4830 = vmatpush1.msra.mxu0 %v4777
  %4831 = vmatprep.subr.mxu0 0.0
  %4832 = vmatpush1.msra.mxu0 %v4778
  %4833 = vmatprep.subr.mxu0 0.0
  %4834 = vmatpush1.msra.mxu0 %v4779
  %4835 = vmatprep.subr.mxu0 0.0
  %4836 = vmatpush1.msra.mxu0 %v4780
  %4837 = vmatprep.subr.mxu0 0.0
  %4838 = vmatpush1.msra.mxu0 %v4781
  %4839 = vmatprep.subr.mxu0 0.0
  %4840 = vmatpush1.msra.mxu0 %v4782
  %4841 = vmatprep.subr.mxu0 0.0
  %4842 = vmatpush1.msra.mxu0 %v4783
  %4843 = vmatprep.subr.mxu0 0.0
  %4844 = vmatpush1.msra.mxu0 0.0
  %4845 = vmatprep.subr.mxu0 0.0
  %4846 = vmatpush1.msra.mxu0 0.0
  %4847 = vmatprep.subr.mxu0 0.0
  %4848 = vmatpush1.msra.mxu0 0.0
  %4849 = vmatprep.subr.mxu0 0.0
  %4850 = vmatpush1.msra.mxu0 0.0
  %4851 = vmatprep.subr.mxu0 0.0
  %4852 = vmatpush1.msra.mxu0 0.0
  %4853 = vmatprep.subr.mxu0 0.0
  %4854 = vmatpush1.msra.mxu0 0.0
  %4855 = vmatprep.subr.mxu0 0.0
  %4856 = vmatpush1.msra.mxu0 0.0
  %4857 = vmatprep.subr.mxu0 0.0
  %4858 = vmatpush1.msra.mxu0 0.0
  %4859 = vmatprep.mubr.f32.mxu0 %v4793
  %4860 = vmatmul.mubr.f32.gmra.mrb[0].mxu0 %v4758
  %v4861 = vpop.f32.mrb[0].mxu0
  %v4862 = vadd.f32 %v4789, %v4861
  %v4863 = vpop.f32.mrb[0].mxu0
  %4864 = vdwg.mxu0
  %v4865 = vmul.f32 %v4862, 1.442695
  %v4866 = vpow.pop %v4865
  %v4867 = vld [vmem:[%s4] sm:$0x3]
  %v4868 = vmul.f32 %v4866, %v4867
  %vm4869 = vcmask 1041408
  %v4870 = vsel %vm4869, %v4868, 0.0
  %4871 = vadd.xlane.f32.xlu0 %v4870
  %v4872 = vpop.xlane.xlu0 %4871
  %v4873 = vrot.slane %v4872, 4
  %v4874 = vadd.f32 %v4872, %v4873
  %v4875 = vrot.slane %v4874, 2
  %v4876 = vadd.f32 %v4874, %v4875
  %v4877 = vrot.slane %v4876, 1
  %v4878 = vadd.f32 %v4876, %v4877
  %s4879 = vtos %v4878
  %v4880 = vstv %s4879
  %v4881 = vrcp.pop %v4880
  %v4882 = vmul.f32 %v4868, %v4881
  %4883 = vst [vmem:[%s11] sm:$0x3] %v4882
  %v4884 = vld [vmem:[%s7] sm:$0xff]
  %v4885 = vld [vmem:[%s7 + $0x8] sm:$0xff]
  %v4886 = vld [vmem:[%s7 + $0x10] sm:$0xff]
  %v4887 = vld [vmem:[%s7 + $0x18] sm:$0xff]
  %v4888 = vld [vmem:[%s7 + $0x20] sm:$0xff]
  %v4889 = vld [vmem:[%s7 + $0x28] sm:$0xff]
  %v4890 = vld [vmem:[%s7 + $0x30] sm:$0xff]
  %v4891 = vld [vmem:[%s7 + $0x38] sm:$0xff]
  %v4892 = vld [vmem:[%s7 + $0x40] sm:$0xff]
  %v4893 = vld [vmem:[%s7 + $0x48] sm:$0xff]
  %v4894 = vld [vmem:[%s7 + $0x50] sm:$0xff]
  %v4895 = vld [vmem:[%s7 + $0x58] sm:$0xff]
  %v4896 = vld [vmem:[%s7 + $0x60] sm:$0xff]
  %v4897 = vld [vmem:[%s7 + $0x68] sm:$0xff]
  %v4898 = vld [vmem:[%s7 + $0x70] sm:$0xff]
  %v4899 = vld [vmem:[%s7 + $0x78] sm:$0xff]
  %v4900 = vld [vmem:[%s7 + $0x80] sm:$0xff]
  %v4901 = vld [vmem:[%s7 + $0x88] sm:$0xff]
  %v4902 = vld [vmem:[%s7 + $0x90] sm:$0xff]
  %v4903 = vld [vmem:[%s7 + $0x98] sm:$0xff]
  %v4904 = vld [vmem:[%s7 + $0xa0] sm:$0xff]
  %v4905 = vld [vmem:[%s7 + $0xa8] sm:$0xff]
  %v4906 = vld [vmem:[%s7 + $0xb0] sm:$0xff]
  %v4907 = vld [vmem:[%s7 + $0xb8] sm:$0xff]
  %v4908 = vld [vmem:[%s8] sm:$0x1]
  %v4910 = vlaneseq
  %v4911 = vshrl.u32 %v4910, 7
  %v4912 = vsub.s32 0, %v4911
  %v4913 = vrot.slane %v4908, %v4912
  %4915 = vmatprep.subr.mxu0 0.0
  %4916 = vmatpush1.msra.mxu0 %v4884
  %4917 = vmatprep.subr.mxu0 0.0
  %4918 = vmatpush1.msra.mxu0 %v4885
  %4919 = vmatprep.subr.mxu0 0.0
  %4920 = vmatpush1.msra.mxu0 %v4886
  %4921 = vmatprep.subr.mxu0 0.0
  %4922 = vmatpush1.msra.mxu0 %v4887
  %4923 = vmatprep.subr.mxu0 0.0
  %4924 = vmatpush1.msra.mxu0 %v4888
  %4925 = vmatprep.subr.mxu0 0.0
  %4926 = vmatpush1.msra.mxu0 %v4889
  %4927 = vmatprep.subr.mxu0 0.0
  %4928 = vmatpush1.msra.mxu0 %v4890
  %4929 = vmatprep.subr.mxu0 0.0
  %4930 = vmatpush1.msra.mxu0 %v4891
  %4931 = vmatprep.subr.mxu0 0.0
  %4932 = vmatpush1.msra.mxu0 %v4892
  %4933 = vmatprep.subr.mxu0 0.0
  %4934 = vmatpush1.msra.mxu0 %v4893
  %4935 = vmatprep.subr.mxu0 0.0
  %4936 = vmatpush1.msra.mxu0 %v4894
  %4937 = vmatprep.subr.mxu0 0.0
  %4938 = vmatpush1.msra.mxu0 %v4895
  %4939 = vmatprep.subr.mxu0 0.0
  %4940 = vmatpush1.msra.mxu0 %v4896
  %4941 = vmatprep.subr.mxu0 0.0
  %4942 = vmatpush1.msra.mxu0 %v4897
  %4943 = vmatprep.subr.mxu0 0.0
  %4944 = vmatpush1.msra.mxu0 %v4898
  %4945 = vmatprep.subr.mxu0 0.0
  %4946 = vmatpush1.msra.mxu0 %v4899
  %4947 = vmatprep.subr.mxu0 0.0
  %4948 = vmatpush1.msra.mxu0 %v4900
  %4949 = vmatprep.subr.mxu0 0.0
  %4950 = vmatpush1.msra.mxu0 %v4901
  %4951 = vmatprep.subr.mxu0 0.0
  %4952 = vmatpush1.msra.mxu0 %v4902
  %4953 = vmatprep.subr.mxu0 0.0
  %4954 = vmatpush1.msra.mxu0 %v4903
  %4955 = vmatprep.subr.mxu0 0.0
  %4956 = vmatpush1.msra.mxu0 %v4904
  %4957 = vmatprep.subr.mxu0 0.0
  %4958 = vmatpush1.msra.mxu0 %v4905
  %4959 = vmatprep.subr.mxu0 0.0
  %4960 = vmatpush1.msra.mxu0 %v4906
  %4961 = vmatprep.subr.mxu0 0.0
  %4962 = vmatpush1.msra.mxu0 %v4907
  %4963 = vmatprep.subr.mxu0 0.0
  %4964 = vmatpush1.msra.mxu0 0.0
  %4965 = vmatprep.subr.mxu0 0.0
  %4966 = vmatpush1.msra.mxu0 0.0
  %4967 = vmatprep.subr.mxu0 0.0
  %4968 = vmatpush1.msra.mxu0 0.0
  %4969 = vmatprep.subr.mxu0 0.0
  %4970 = vmatpush1.msra.mxu0 0.0
  %4971 = vmatprep.subr.mxu0 0.0
  %4972 = vmatpush1.msra.mxu0 0.0
  %4973 = vmatprep.subr.mxu0 0.0
  %4974 = vmatpush1.msra.mxu0 0.0
  %4975 = vmatprep.subr.mxu0 0.0
  %4976 = vmatpush1.msra.mxu0 0.0
  %4977 = vmatprep.subr.mxu0 0.0
  %4978 = vmatpush1.msra.mxu0 0.0
  %4979 = vmatprep.mubr.f32.mxu0 %v4793
  %4980 = vmatmul.mubr.f32.gmra.mrb[0].mxu0 %v4758
  %v4981 = vpop.f32.mrb[0].mxu0
  %v4982 = vadd.f32 %v4913, %v4981
  %v4983 = vpop.f32.mrb[0].mxu0
  %4984 = vdwg.mxu0
  %v4985 = vmax.f32 %v4982, 0.0
  %v4986 = vld [vmem:[%s9] sm:$0xff]
  %v4987 = vld [vmem:[%s9 + $0x8] sm:$0xff]
  %v4988 = vld [vmem:[%s9 + $0x10] sm:$0xff]
  %v4989 = vld [vmem:[%s9 + $0x18] sm:$0xff]
  %v4990 = vld [vmem:[#allocation2] sm:$0x1]
  %v4992 = vlaneseq
  %v4993 = vshrl.u32 %v4992, 7
  %v4994 = vsub.s32 0, %v4993
  %v4995 = vrot.slane %v4990, %v4994
  %vm4997 = vcmask 261120
  %v4999 = vsel %vm4997, %v4985, 0
  %5001 = vmatprep.subr.mxu0 0.0
  %5002 = vmatpush1.msra.mxu0 %v4986
  %5003 = vmatprep.subr.mxu0 0.0
  %5004 = vmatpush1.msra.mxu0 %v4987
  %5005 = vmatprep.subr.mxu0 0.0
  %5006 = vmatpush1.msra.mxu0 %v4988
  %5007 = vmatprep.subr.mxu0 0.0
  %5008 = vmatpush1.msra.mxu0 %v4989
  %5009 = vmatprep.subr.mxu0 0.0
  %5010 = vmatpush1.msra.mxu0 0.0
  %5011 = vmatprep.subr.mxu0 0.0
  %5012 = vmatpush1.msra.mxu0 0.0
  %5013 = vmatprep.subr.mxu0 0.0
  %5014 = vmatpush1.msra.mxu0 0.0
  %5015 = vmatprep.subr.mxu0 0.0
  %5016 = vmatpush1.msra.mxu0 0.0
  %5017 = vmatprep.subr.mxu0 0.0
  %5018 = vmatpush1.msra.mxu0 0.0
  %5019 = vmatprep.subr.mxu0 0.0
  %5020 = vmatpush1.msra.mxu0 0.0
  %5021 = vmatprep.subr.mxu0 0.0
  %5022 = vmatpush1.msra.mxu0 0.0
  %5023 = vmatprep.subr.mxu0 0.0
  %5024 = vmatpush1.msra.mxu0 0.0
  %5025 = vmatprep.subr.mxu0 0.0
  %5026 = vmatpush1.msra.mxu0 0.0
  %5027 = vmatprep.subr.mxu0 0.0
  %5028 = vmatpush1.msra.mxu0 0.0
  %5029 = vmatprep.subr.mxu0 0.0
  %5030 = vmatpush1.msra.mxu0 0.0
  %5031 = vmatprep.subr.mxu0 0.0
  %5032 = vmatpush1.msra.mxu0 0.0
  %5033 = vmatprep.subr.mxu0 0.0
  %5034 = vmatpush1.msra.mxu0 0.0
  %5035 = vmatprep.subr.mxu0 0.0
  %5036 = vmatpush1.msra.mxu0 0.0
  %5037 = vmatprep.subr.mxu0 0.0
  %5038 = vmatpush1.msra.mxu0 0.0
  %5039 = vmatprep.subr.mxu0 0.0
  %5040 = vmatpush1.msra.mxu0 0.0
  %5041 = vmatprep.subr.mxu0 0.0
  %5042 = vmatpush1.msra.mxu0 0.0
  %5043 = vmatprep.subr.mxu0 0.0
  %5044 = vmatpush1.msra.mxu0 0.0
  %5045 = vmatprep.subr.mxu0 0.0
  %5046 = vmatpush1.msra.mxu0 0.0
  %5047 = vmatprep.subr.mxu0 0.0
  %5048 = vmatpush1.msra.mxu0 0.0
  %5049 = vmatprep.subr.mxu0 0.0
  %5050 = vmatpush1.msra.mxu0 0.0
  %5051 = vmatprep.subr.mxu0 0.0
  %5052 = vmatpush1.msra.mxu0 0.0
  %5053 = vmatprep.subr.mxu0 0.0
  %5054 = vmatpush1.msra.mxu0 0.0
  %5055 = vmatprep.subr.mxu0 0.0
  %5056 = vmatpush1.msra.mxu0 0.0
  %5057 = vmatprep.subr.mxu0 0.0
  %5058 = vmatpush1.msra.mxu0 0.0
  %5059 = vmatprep.subr.mxu0 0.0
  %5060 = vmatpush1.msra.mxu0 0.0
  %5061 = vmatprep.subr.mxu0 0.0
  %5062 = vmatpush1.msra.mxu0 0.0
  %5063 = vmatprep.subr.mxu0 0.0
  %5064 = vmatpush1.msra.mxu0 0.0
  %5065 = vmatprep.mubr.f32.mxu0 0.0
  %5066 = vmatmul.mubr.f32.gmra.mrb[0].mxu0 %v4999
  %v5067 = vpop.f32.mrb[0].mxu0
  %v5068 = vadd.f32 %v4995, %v5067
  %v5069 = vpop.f32.mrb[0].mxu0
  %5070 = vdwg.mxu0
  %v5071 = vtanh.pop %v5068
  %vm5072 = vcmask 1024
  %5073 = vst.msk [vmem:[%s12] sm:$0x3] %vm5072, %v5071
  // Predicated region
  $region46: #{_lambda_.3} parent=0 // pred_check
    _
  $region47: #{_lambda_.3} parent=0 // pred_check_branch
    %5075 = sbr.rel (0) target = $region49
  $region48: #{_lambda_.3} parent=0 // pred_region
    _
  $region49: #{_lambda_.3} parent=0 // pred_fallthru
    _
  // Predicated region
  $region50: #{_lambda_.3} parent=0 // pred_check
    _
  $region51: #{_lambda_.3} parent=0 // pred_check_branch
    %5077 = sbr.rel (0) target = $region53
  $region52: #{_lambda_.3} parent=0 // pred_region
    _
  $region53: #{_lambda_.3} parent=0 // pred_fallthru
    _
  // Predicated region
  $region54: #{_lambda_.3} parent=0 // pred_check
    _
  $region55: #{_lambda_.3} parent=0 // pred_check_branch
    %5079 = sbr.rel (0) target = $region57
  $region56: #{_lambda_.3} parent=0 // pred_region
    _
  $region57: #{_lambda_.3} parent=0 // pred_fallthru
    _
  // Predicated region
  $region58: #{_lambda_.3} parent=0 // pred_check
    _
  $region59: #{_lambda_.3} parent=0 // pred_check_branch
    %5081 = sbr.rel (0) target = $region61
  $region60: #{_lambda_.3} parent=0 // pred_region
    _
  $region61: #{_lambda_.3} parent=0 // pred_fallthru
    _

</llo_original>
